<compile_context>
chip_gen: v7x
topology: tpu7x:2x2x1
jax: 0.10.0
libtpu: 0.0.40
codegen_flags: <defaults>
</compile_context>

<pallas_src>
import functools

import jax
import jax.numpy as jnp
from jax import lax
from jax.experimental import pallas as pl
from jax.experimental.pallas import tpu as pltpu


# ---------------------------------------------------------------------------
# Fused FPN kernel: everything in one invocation, intermediates in VMEM.
# ---------------------------------------------------------------------------
def _fpn_kernel(x1_ref, x2_ref, x3_ref,
                w1_ref, b1_ref, w2_ref, b2_ref, w3_ref, b3_ref,
                wm2_ref, bm2_ref, wm1_ref, bm1_ref,
                p2_ref, p1_ref,
                o1_ref, o2_ref, o3_ref,
                pad2_ref, pad1_ref,
                *, shapes, leaky):
    (n, h1, w1, _), (_, h2, w2, _), (_, h3, w3, _) = shapes
    cout = o1_ref.shape[-1]
    f32, bf16 = jnp.float32, jnp.bfloat16

    def lrelu(y):
        return jnp.where(y >= 0.0, y, leaky * y)

    def conv1x1(x_ref, w_ref, b_ref):
        # 1x1 conv + folded-BN bias + LeakyReLU (bf16 x bf16 -> f32 on MXU)
        y = jnp.dot(x_ref[...], w_ref[...], preferred_element_type=f32)
        return lrelu(y + b_ref[...])

    def merge3x3(t2d, hh, ww, wm_ref, bm_ref, pad_ref):
        # In-kernel im2col: zero-padded halo scratch + 9 accumulating dots.
        m = n * hh * ww
        pad_ref[...] = jnp.zeros(pad_ref.shape, pad_ref.dtype)
        pad_ref[:, 1:hh + 1, 1:ww + 1, :] = t2d.reshape(n, hh, ww, cout)
        acc = jnp.zeros((m, cout), f32)
        for tap in range(9):
            dy, dx = tap // 3, tap % 3
            patch = pad_ref[:, dy:dy + hh, dx:dx + ww, :]
            patch = patch.reshape(m, cout).astype(bf16)
            acc = acc + jnp.dot(patch, wm_ref[tap * cout:(tap + 1) * cout, :],
                                preferred_element_type=f32)
        return lrelu(acc + bm_ref[...])

    # --- lateral 1x1 convs ---------------------------------------------------
    o3 = conv1x1(x3_ref, w3_ref, b3_ref)     # (N*H3*W3, Cout) f32
    o2 = conv1x1(x2_ref, w2_ref, b2_ref)     # (N*H2*W2, Cout) f32
    o1 = conv1x1(x1_ref, w1_ref, b1_ref)     # (N*H1*W1, Cout) f32
    o3_ref[...] = o3

    # --- top-down: nearest upsample (0/1 GEMM) + add + 3x3 merge -------------
    up3 = jnp.dot(p2_ref[...], o3.astype(bf16), preferred_element_type=f32)
    o2m = merge3x3(o2 + up3, h2, w2, wm2_ref, bm2_ref, pad2_ref)
    o2_ref[...] = o2m

    up2 = jnp.dot(p1_ref[...], o2m.astype(bf16), preferred_element_type=f32)
    o1m = merge3x3(o1 + up2, h1, w1, wm1_ref, bm1_ref, pad1_ref)
    o1_ref[...] = o1m


# ---------------------------------------------------------------------------
# Host-side wrapper.
# ---------------------------------------------------------------------------
def _nearest_expand(n, h_out, w_out, h_in, w_in):
    """0/1 matrix P such that P @ flat(x) == flat(nearest_resize(x)), per batch.

    Uses the PyTorch nearest rule: src = floor(dst * in / out).
    """
    src_h = (jnp.arange(h_out) * h_in) // h_out
    src_w = (jnp.arange(w_out) * w_in) // w_out
    src = (jnp.arange(n)[:, None, None] * (h_in * w_in)
           + src_h[None, :, None] * w_in
           + src_w[None, None, :]).reshape(n * h_out * w_out)
    return jax.nn.one_hot(src, n * h_in * w_in, dtype=jnp.bfloat16)


def fpn_forward(inputs, params):
    xs = list(inputs.values())               # same as `list(input.values())`
    shapes = tuple(x.shape for x in xs)
    (n, h1, w1, c1), (_, h2, w2, c2), (_, h3, w3, c3) = shapes
    cout = params["output1"]["b"].shape[-1]
    leaky = params["leaky"]

    x1 = xs[0].reshape(n * h1 * w1, c1).astype(jnp.bfloat16)
    x2 = xs[1].reshape(n * h2 * w2, c2).astype(jnp.bfloat16)
    x3 = xs[2].reshape(n * h3 * w3, c3).astype(jnp.bfloat16)
    p2 = _nearest_expand(n, h2, w2, h3, w3)   # (M2, M3) 0/1, bf16
    p1 = _nearest_expand(n, h1, w1, h2, w2)   # (M1, M2) 0/1, bf16

    vmem = pl.BlockSpec(memory_space=pltpu.MemorySpace.VMEM)
    out_shape = (jax.ShapeDtypeStruct((n * h1 * w1, cout), jnp.float32),
                 jax.ShapeDtypeStruct((n * h2 * w2, cout), jnp.float32),
                 jax.ShapeDtypeStruct((n * h3 * w3, cout), jnp.float32))

    o1, o2, o3 = pl.pallas_call(
        functools.partial(_fpn_kernel, shapes=shapes, leaky=leaky),
        out_shape=out_shape,
        in_specs=[vmem] * 15,
        out_specs=(vmem, vmem, vmem),
        scratch_shapes=[
            pltpu.VMEM((n, h2 + 2, w2 + 2, cout), jnp.float32),  # merge2 halo
            pltpu.VMEM((n, h1 + 2, w1 + 2, cout), jnp.float32),  # merge1 halo
        ],
    )(x1, x2, x3,
      params["output1"]["w"], params["output1"]["b"],
      params["output2"]["w"], params["output2"]["b"],
      params["output3"]["w"], params["output3"]["b"],
      params["merge2"]["w"], params["merge2"]["b"],
      params["merge1"]["w"], params["merge1"]["b"],
      p2, p1)

    return [o1.reshape(n, h1, w1, cout),
            o2.reshape(n, h2, w2, cout),
            o3.reshape(n, h3, w3, cout)]


# ---------------------------------------------------------------------------
# Deterministic parameter construction (conv weights with BN scale folded in).
# ---------------------------------------------------------------------------
def init_fpn_params(key, in_channels_list, out_channels):
    leaky = 0.1 if out_channels <= 64 else 0.0
    eps = 1e-5
    names = ["output1", "output2", "output3", "merge1", "merge2"]
    ksizes = [1, 1, 1, 3, 3]
    cins = [in_channels_list[0], in_channels_list[1], in_channels_list[2],
            out_channels, out_channels]
    params = {"leaky": leaky}
    raw = {}
    for name, k, cin in zip(names, ksizes, cins):
        key, kw, kg, kb, km, kv = jax.random.split(key, 6)
        w = 0.1 * jax.random.normal(kw, (k, k, cin, out_channels), jnp.float32)  # HWIO
        gamma = 1.0 + 0.1 * jax.random.normal(kg, (out_channels,), jnp.float32)
        beta = 0.1 * jax.random.normal(kb, (out_channels,), jnp.float32)
        mean = 0.1 * jax.random.normal(km, (out_channels,), jnp.float32)
        var = jax.nn.softplus(jax.random.normal(kv, (out_channels,), jnp.float32)) + 0.5
        scale = gamma / jnp.sqrt(var + eps)
        shift = beta - mean * scale
        w_folded = w * scale                       # BN scale folded into weights
        params[name] = {
            "w": w_folded.reshape(k * k * cin, out_channels).astype(jnp.bfloat16),
            "b": shift.reshape(1, out_channels),   # remaining BN shift (f32 bias)
        }
        raw[name] = {"w": w_folded, "b": shift.reshape(1, out_channels)}
    return params, raw, leaky


# ---------------------------------------------------------------------------
# Pure-JAX reference (mirrors the kernel's bf16-operand / f32-accum numerics).
# ---------------------------------------------------------------------------
def _nearest_resize(x_nhwc, out_h, out_w):
    # PyTorch F.interpolate(mode='nearest'): src = floor(dst * in / out).
    _, h, w, _ = x_nhwc.shape
    rows = (jnp.arange(out_h) * h) // out_h
    cols = (jnp.arange(out_w) * w) // out_w
    return x_nhwc[:, rows][:, :, cols]


def fpn_reference(inputs, raw, leaky):
    bf16 = jnp.bfloat16

    def cbl(x, p, pad):
        y = lax.conv_general_dilated(
            x.astype(bf16), p["w"].astype(bf16), (1, 1), pad,
            dimension_numbers=("NHWC", "HWIO", "NHWC"),
            preferred_element_type=jnp.float32)
        y = y + p["b"]
        return jnp.where(y >= 0, y, leaky * y)

    def up(x, oh, ow):
        # kernel routes the upsample through a bf16 GEMM; mirror that rounding
        return _nearest_resize(x.astype(bf16).astype(jnp.float32), oh, ow)

    xs = list(inputs.values())
    o1 = cbl(xs[0], raw["output1"], "VALID")
    o2 = cbl(xs[1], raw["output2"], "VALID")
    o3 = cbl(xs[2], raw["output3"], "VALID")
    up3 = up(o3, o2.shape[1], o2.shape[2])
    o2 = cbl(o2 + up3, raw["merge2"], [(1, 1), (1, 1)])
    up2 = up(o2, o1.shape[1], o1.shape[2])
    o1 = cbl(o1 + up2, raw["merge1"], [(1, 1), (1, 1)])
    return [o1, o2, o3]


if __name__ == "__main__":
    in_channels_list = [8, 16, 32]
    out_channels = 16                         # <= 64  ->  leaky = 0.1
    n = 2

    key = jax.random.PRNGKey(0)
    key, k1, k2, k3 = jax.random.split(key, 4)
    # NHWC feature pyramid (equivalent PyTorch NCHW shapes:
    #  [2,8,16,16], [2,16,8,8], [2,32,4,4])
    inputs = {
        "feat1": jax.random.normal(k1, (n, 16, 16, in_channels_list[0]), jnp.float32),
        "feat2": jax.random.normal(k2, (n, 8, 8, in_channels_list[1]), jnp.float32),
        "feat3": jax.random.normal(k3, (n, 4, 4, in_channels_list[2]), jnp.float32),
    }
    params, raw, leaky = init_fpn_params(key, in_channels_list, out_channels)

    outs = jax.block_until_ready(fpn_forward(inputs, params))
    refs = fpn_reference(inputs, raw, leaky)

    for o, r in zip(outs, refs):
        assert o.shape == r.shape, (o.shape, r.shape)
        err = float(jnp.max(jnp.abs(o - r)))
        assert jnp.allclose(o, r, atol=2e-3, rtol=2e-3), err

    print("KERNEL_OK")
</pallas_src>

<mosaic_0001>
module attributes {stable_mosaic.version = 11 : i64} {
  func.func @_fpn_kernel(%arg0: memref<512x8xbf16, #tpu.memory_space<vmem>>, %arg1: memref<128x16xbf16, #tpu.memory_space<vmem>>, %arg2: memref<32x32xbf16, #tpu.memory_space<vmem>>, %arg3: memref<8x16xbf16, #tpu.memory_space<vmem>>, %arg4: memref<1x16xf32, #tpu.memory_space<vmem>>, %arg5: memref<16x16xbf16, #tpu.memory_space<vmem>>, %arg6: memref<1x16xf32, #tpu.memory_space<vmem>>, %arg7: memref<32x16xbf16, #tpu.memory_space<vmem>>, %arg8: memref<1x16xf32, #tpu.memory_space<vmem>>, %arg9: memref<144x16xbf16, #tpu.memory_space<vmem>>, %arg10: memref<1x16xf32, #tpu.memory_space<vmem>>, %arg11: memref<144x16xbf16, #tpu.memory_space<vmem>>, %arg12: memref<1x16xf32, #tpu.memory_space<vmem>>, %arg13: memref<128x32xbf16, #tpu.memory_space<vmem>>, %arg14: memref<512x128xbf16, #tpu.memory_space<vmem>>, %arg15: memref<512x16xf32, #tpu.memory_space<vmem>>, %arg16: memref<128x16xf32, #tpu.memory_space<vmem>>, %arg17: memref<32x16xf32, #tpu.memory_space<vmem>>, %arg18: memref<2x10x10x16xf32, #tpu.memory_space<vmem>>, %arg19: memref<2x18x18x16xf32, #tpu.memory_space<vmem>>) attributes {dimension_semantics = [], scalar_prefetch = 0 : i64, scratch_operands = 2 : i64, tpu.core_type = #tpu.core_type<tc>} {
    %c0 = arith.constant 0 : index
    %c0_0 = arith.constant 0 : index
    %0 = vector.load %arg2[%c0, %c0_0] : memref<32x32xbf16, #tpu.memory_space<vmem>>, vector<32x32xbf16>
    %c0_1 = arith.constant 0 : index
    %c0_2 = arith.constant 0 : index
    %1 = vector.load %arg7[%c0_1, %c0_2] : memref<32x16xbf16, #tpu.memory_space<vmem>>, vector<32x16xbf16>
    %cst = arith.constant dense<0.000000e+00> : vector<32x16xf32>
    %2 = tpu.matmul %0, %1, %cst {dimension_numbers = #tpu.dot_dimension_numbers<[1], [0], [0], [1], [0, 0, 1, 1], [], []>} : vector<32x32xbf16>, vector<32x16xbf16>, vector<32x16xf32> -> vector<32x16xf32>
    %c0_3 = arith.constant 0 : index
    %c0_4 = arith.constant 0 : index
    %3 = vector.load %arg8[%c0_3, %c0_4] : memref<1x16xf32, #tpu.memory_space<vmem>>, vector<1x16xf32>
    %4 = vector.broadcast %3 : vector<1x16xf32> to vector<32x16xf32>
    %5 = arith.addf %2, %4 : vector<32x16xf32>
    %cst_5 = arith.constant 0.000000e+00 : f32
    %6 = vector.broadcast %cst_5 : f32 to vector<32x16xf32>
    %7 = arith.cmpf oge, %5, %6 : vector<32x16xf32>
    %cst_6 = arith.constant 1.000000e-01 : f32
    %8 = vector.broadcast %cst_6 : f32 to vector<32x16xf32>
    %9 = arith.mulf %8, %5 : vector<32x16xf32>
    %10 = arith.select %7, %5, %9 : vector<32x16xi1>, vector<32x16xf32>
    %c0_7 = arith.constant 0 : index
    %c0_8 = arith.constant 0 : index
    %11 = vector.load %arg1[%c0_7, %c0_8] : memref<128x16xbf16, #tpu.memory_space<vmem>>, vector<128x16xbf16>
    %c0_9 = arith.constant 0 : index
    %c0_10 = arith.constant 0 : index
    %12 = vector.load %arg5[%c0_9, %c0_10] : memref<16x16xbf16, #tpu.memory_space<vmem>>, vector<16x16xbf16>
    %cst_11 = arith.constant dense<0.000000e+00> : vector<128x16xf32>
    %13 = tpu.matmul %11, %12, %cst_11 {dimension_numbers = #tpu.dot_dimension_numbers<[1], [0], [0], [1], [0, 0, 1, 1], [], []>} : vector<128x16xbf16>, vector<16x16xbf16>, vector<128x16xf32> -> vector<128x16xf32>
    %c0_12 = arith.constant 0 : index
    %c0_13 = arith.constant 0 : index
    %14 = vector.load %arg6[%c0_12, %c0_13] : memref<1x16xf32, #tpu.memory_space<vmem>>, vector<1x16xf32>
    %15 = vector.broadcast %14 : vector<1x16xf32> to vector<128x16xf32>
    %16 = arith.addf %13, %15 : vector<128x16xf32>
    %cst_14 = arith.constant 0.000000e+00 : f32
    %17 = vector.broadcast %cst_14 : f32 to vector<128x16xf32>
    %18 = arith.cmpf oge, %16, %17 : vector<128x16xf32>
    %cst_15 = arith.constant 1.000000e-01 : f32
    %19 = vector.broadcast %cst_15 : f32 to vector<128x16xf32>
    %20 = arith.mulf %19, %16 : vector<128x16xf32>
    %21 = arith.select %18, %16, %20 : vector<128x16xi1>, vector<128x16xf32>
    %c0_16 = arith.constant 0 : index
    %c0_17 = arith.constant 0 : index
    %22 = vector.load %arg0[%c0_16, %c0_17] : memref<512x8xbf16, #tpu.memory_space<vmem>>, vector<512x8xbf16>
    %c0_18 = arith.constant 0 : index
    %c0_19 = arith.constant 0 : index
    %23 = vector.load %arg3[%c0_18, %c0_19] : memref<8x16xbf16, #tpu.memory_space<vmem>>, vector<8x16xbf16>
    %cst_20 = arith.constant dense<0.000000e+00> : vector<512x16xf32>
    %24 = tpu.matmul %22, %23, %cst_20 {dimension_numbers = #tpu.dot_dimension_numbers<[1], [0], [0], [1], [0, 0, 1, 1], [], []>} : vector<512x8xbf16>, vector<8x16xbf16>, vector<512x16xf32> -> vector<512x16xf32>
    %c0_21 = arith.constant 0 : index
    %c0_22 = arith.constant 0 : index
    %25 = vector.load %arg4[%c0_21, %c0_22] : memref<1x16xf32, #tpu.memory_space<vmem>>, vector<1x16xf32>
    %26 = vector.broadcast %25 : vector<1x16xf32> to vector<512x16xf32>
    %27 = arith.addf %24, %26 : vector<512x16xf32>
    %cst_23 = arith.constant 0.000000e+00 : f32
    %28 = vector.broadcast %cst_23 : f32 to vector<512x16xf32>
    %29 = arith.cmpf oge, %27, %28 : vector<512x16xf32>
    %cst_24 = arith.constant 1.000000e-01 : f32
    %30 = vector.broadcast %cst_24 : f32 to vector<512x16xf32>
    %31 = arith.mulf %30, %27 : vector<512x16xf32>
    %32 = arith.select %29, %27, %31 : vector<512x16xi1>, vector<512x16xf32>
    %c0_25 = arith.constant 0 : index
    %c0_26 = arith.constant 0 : index
    %33 = vector.load %arg17[%c0_25, %c0_26] : memref<32x16xf32, #tpu.memory_space<vmem>>, vector<32x16xf32>
    tpu.vector_store %arg17[%c0_25, %c0_26], %10 {strides = array<i32>} : memref<32x16xf32, #tpu.memory_space<vmem>>, vector<32x16xf32>,
    %c0_27 = arith.constant 0 : index
    %c0_28 = arith.constant 0 : index
    %34 = vector.load %arg13[%c0_27, %c0_28] : memref<128x32xbf16, #tpu.memory_space<vmem>>, vector<128x32xbf16>
    %35 = arith.truncf %10 : vector<32x16xf32> to vector<32x16xbf16>
    %cst_29 = arith.constant dense<0.000000e+00> : vector<128x16xf32>
    %36 = tpu.matmul %34, %35, %cst_29 {dimension_numbers = #tpu.dot_dimension_numbers<[1], [0], [0], [1], [0, 0, 1, 1], [], []>} : vector<128x32xbf16>, vector<32x16xbf16>, vector<128x16xf32> -> vector<128x16xf32>
    %37 = arith.addf %21, %36 : vector<128x16xf32>
    %cst_30 = arith.constant 0.000000e+00 : f32
    %38 = vector.broadcast %cst_30 : f32 to vector<2x10x10x16xf32>
    %c0_31 = arith.constant 0 : index
    %c0_32 = arith.constant 0 : index
    %c0_33 = arith.constant 0 : index
    %c0_34 = arith.constant 0 : index
    %39 = vector.load %arg18[%c0_31, %c0_32, %c0_33, %c0_34] : memref<2x10x10x16xf32, #tpu.memory_space<vmem>>, vector<2x10x10x16xf32>
    tpu.vector_store %arg18[%c0_31, %c0_32, %c0_33, %c0_34], %38 {strides = array<i32>} : memref<2x10x10x16xf32, #tpu.memory_space<vmem>>, vector<2x10x10x16xf32>,
    %40 = vector.shape_cast %37 : vector<128x16xf32> to vector<2x8x8x16xf32>
    %c0_35 = arith.constant 0 : index
    %c1 = arith.constant 1 : index
    %c1_36 = arith.constant 1 : index
    %c0_37 = arith.constant 0 : index
    %41 = vector.load %arg18[%c0_35, %c1, %c1_36, %c0_37] : memref<2x10x10x16xf32, #tpu.memory_space<vmem>>, vector<2x8x8x16xf32>
    tpu.vector_store %arg18[%c0_35, %c1, %c1_36, %c0_37], %40 {strides = array<i32>} : memref<2x10x10x16xf32, #tpu.memory_space<vmem>>, vector<2x8x8x16xf32>,
    %cst_38 = arith.constant 0.000000e+00 : f32
    %42 = vector.broadcast %cst_38 : f32 to vector<128x16xf32>
    %c0_39 = arith.constant 0 : index
    %c0_40 = arith.constant 0 : index
    %c0_41 = arith.constant 0 : index
    %c0_42 = arith.constant 0 : index
    %43 = vector.load %arg18[%c0_39, %c0_40, %c0_41, %c0_42] : memref<2x10x10x16xf32, #tpu.memory_space<vmem>>, vector<2x8x8x16xf32>
    %44 = vector.shape_cast %43 : vector<2x8x8x16xf32> to vector<128x16xf32>
    %45 = arith.truncf %44 : vector<128x16xf32> to vector<128x16xbf16>
    %c0_43 = arith.constant 0 : index
    %c0_44 = arith.constant 0 : index
    %46 = vector.load %arg9[%c0_43, %c0_44] : memref<144x16xbf16, #tpu.memory_space<vmem>>, vector<16x16xbf16>
    %cst_45 = arith.constant dense<0.000000e+00> : vector<128x16xf32>
    %47 = tpu.matmul %45, %46, %cst_45 {dimension_numbers = #tpu.dot_dimension_numbers<[1], [0], [0], [1], [0, 0, 1, 1], [], []>} : vector<128x16xbf16>, vector<16x16xbf16>, vector<128x16xf32> -> vector<128x16xf32>
    %48 = arith.addf %42, %47 : vector<128x16xf32>
    %c0_46 = arith.constant 0 : index
    %c0_47 = arith.constant 0 : index
    %c1_48 = arith.constant 1 : index
    %c0_49 = arith.constant 0 : index
    %49 = vector.load %arg18[%c0_46, %c0_47, %c1_48, %c0_49] : memref<2x10x10x16xf32, #tpu.memory_space<vmem>>, vector<2x8x8x16xf32>
    %50 = vector.shape_cast %49 : vector<2x8x8x16xf32> to vector<128x16xf32>
    %51 = arith.truncf %50 : vector<128x16xf32> to vector<128x16xbf16>
    %c16 = arith.constant 16 : index
    %c0_50 = arith.constant 0 : index
    %52 = vector.load %arg9[%c16, %c0_50] : memref<144x16xbf16, #tpu.memory_space<vmem>>, vector<16x16xbf16>
    %cst_51 = arith.constant dense<0.000000e+00> : vector<128x16xf32>
    %53 = tpu.matmul %51, %52, %cst_51 {dimension_numbers = #tpu.dot_dimension_numbers<[1], [0], [0], [1], [0, 0, 1, 1], [], []>} : vector<128x16xbf16>, vector<16x16xbf16>, vector<128x16xf32> -> vector<128x16xf32>
    %54 = arith.addf %48, %53 : vector<128x16xf32>
    %c0_52 = arith.constant 0 : index
    %c0_53 = arith.constant 0 : index
    %c2 = arith.constant 2 : index
    %c0_54 = arith.constant 0 : index
    %55 = vector.load %arg18[%c0_52, %c0_53, %c2, %c0_54] : memref<2x10x10x16xf32, #tpu.memory_space<vmem>>, vector<2x8x8x16xf32>
    %56 = vector.shape_cast %55 : vector<2x8x8x16xf32> to vector<128x16xf32>
    %57 = arith.truncf %56 : vector<128x16xf32> to vector<128x16xbf16>
    %c32 = arith.constant 32 : index
    %c0_55 = arith.constant 0 : index
    %58 = vector.load %arg9[%c32, %c0_55] : memref<144x16xbf16, #tpu.memory_space<vmem>>, vector<16x16xbf16>
    %cst_56 = arith.constant dense<0.000000e+00> : vector<128x16xf32>
    %59 = tpu.matmul %57, %58, %cst_56 {dimension_numbers = #tpu.dot_dimension_numbers<[1], [0], [0], [1], [0, 0, 1, 1], [], []>} : vector<128x16xbf16>, vector<16x16xbf16>, vector<128x16xf32> -> vector<128x16xf32>
    %60 = arith.addf %54, %59 : vector<128x16xf32>
    %c0_57 = arith.constant 0 : index
    %c1_58 = arith.constant 1 : index
    %c0_59 = arith.constant 0 : index
    %c0_60 = arith.constant 0 : index
    %61 = vector.load %arg18[%c0_57, %c1_58, %c0_59, %c0_60] : memref<2x10x10x16xf32, #tpu.memory_space<vmem>>, vector<2x8x8x16xf32>
    %62 = vector.shape_cast %61 : vector<2x8x8x16xf32> to vector<128x16xf32>
    %63 = arith.truncf %62 : vector<128x16xf32> to vector<128x16xbf16>
    %c48 = arith.constant 48 : index
    %c0_61 = arith.constant 0 : index
    %64 = vector.load %arg9[%c48, %c0_61] : memref<144x16xbf16, #tpu.memory_space<vmem>>, vector<16x16xbf16>
    %cst_62 = arith.constant dense<0.000000e+00> : vector<128x16xf32>
    %65 = tpu.matmul %63, %64, %cst_62 {dimension_numbers = #tpu.dot_dimension_numbers<[1], [0], [0], [1], [0, 0, 1, 1], [], []>} : vector<128x16xbf16>, vector<16x16xbf16>, vector<128x16xf32> -> vector<128x16xf32>
    %66 = arith.addf %60, %65 : vector<128x16xf32>
    %c0_63 = arith.constant 0 : index
    %c1_64 = arith.constant 1 : index
    %c1_65 = arith.constant 1 : index
    %c0_66 = arith.constant 0 : index
    %67 = vector.load %arg18[%c0_63, %c1_64, %c1_65, %c0_66] : memref<2x10x10x16xf32, #tpu.memory_space<vmem>>, vector<2x8x8x16xf32>
    %68 = vector.shape_cast %67 : vector<2x8x8x16xf32> to vector<128x16xf32>
    %69 = arith.truncf %68 : vector<128x16xf32> to vector<128x16xbf16>
    %c64 = arith.constant 64 : index
    %c0_67 = arith.constant 0 : index
    %70 = vector.load %arg9[%c64, %c0_67] : memref<144x16xbf16, #tpu.memory_space<vmem>>, vector<16x16xbf16>
    %cst_68 = arith.constant dense<0.000000e+00> : vector<128x16xf32>
    %71 = tpu.matmul %69, %70, %cst_68 {dimension_numbers = #tpu.dot_dimension_numbers<[1], [0], [0], [1], [0, 0, 1, 1], [], []>} : vector<128x16xbf16>, vector<16x16xbf16>, vector<128x16xf32> -> vector<128x16xf32>
    %72 = arith.addf %66, %71 : vector<128x16xf32>
    %c0_69 = arith.constant 0 : index
    %c1_70 = arith.constant 1 : index
    %c2_71 = arith.constant 2 : index
    %c0_72 = arith.constant 0 : index
    %73 = vector.load %arg18[%c0_69, %c1_70, %c2_71, %c0_72] : memref<2x10x10x16xf32, #tpu.memory_space<vmem>>, vector<2x8x8x16xf32>
    %74 = vector.shape_cast %73 : vector<2x8x8x16xf32> to vector<128x16xf32>
    %75 = arith.truncf %74 : vector<128x16xf32> to vector<128x16xbf16>
    %c80 = arith.constant 80 : index
    %c0_73 = arith.constant 0 : index
    %76 = vector.load %arg9[%c80, %c0_73] : memref<144x16xbf16, #tpu.memory_space<vmem>>, vector<16x16xbf16>
    %cst_74 = arith.constant dense<0.000000e+00> : vector<128x16xf32>
    %77 = tpu.matmul %75, %76, %cst_74 {dimension_numbers = #tpu.dot_dimension_numbers<[1], [0], [0], [1], [0, 0, 1, 1], [], []>} : vector<128x16xbf16>, vector<16x16xbf16>, vector<128x16xf32> -> vector<128x16xf32>
    %78 = arith.addf %72, %77 : vector<128x16xf32>
    %c0_75 = arith.constant 0 : index
    %c2_76 = arith.constant 2 : index
    %c0_77 = arith.constant 0 : index
    %c0_78 = arith.constant 0 : index
    %79 = vector.load %arg18[%c0_75, %c2_76, %c0_77, %c0_78] : memref<2x10x10x16xf32, #tpu.memory_space<vmem>>, vector<2x8x8x16xf32>
    %80 = vector.shape_cast %79 : vector<2x8x8x16xf32> to vector<128x16xf32>
    %81 = arith.truncf %80 : vector<128x16xf32> to vector<128x16xbf16>
    %c96 = arith.constant 96 : index
    %c0_79 = arith.constant 0 : index
    %82 = vector.load %arg9[%c96, %c0_79] : memref<144x16xbf16, #tpu.memory_space<vmem>>, vector<16x16xbf16>
    %cst_80 = arith.constant dense<0.000000e+00> : vector<128x16xf32>
    %83 = tpu.matmul %81, %82, %cst_80 {dimension_numbers = #tpu.dot_dimension_numbers<[1], [0], [0], [1], [0, 0, 1, 1], [], []>} : vector<128x16xbf16>, vector<16x16xbf16>, vector<128x16xf32> -> vector<128x16xf32>
    %84 = arith.addf %78, %83 : vector<128x16xf32>
    %c0_81 = arith.constant 0 : index
    %c2_82 = arith.constant 2 : index
    %c1_83 = arith.constant 1 : index
    %c0_84 = arith.constant 0 : index
    %85 = vector.load %arg18[%c0_81, %c2_82, %c1_83, %c0_84] : memref<2x10x10x16xf32, #tpu.memory_space<vmem>>, vector<2x8x8x16xf32>
    %86 = vector.shape_cast %85 : vector<2x8x8x16xf32> to vector<128x16xf32>
    %87 = arith.truncf %86 : vector<128x16xf32> to vector<128x16xbf16>
    %c112 = arith.constant 112 : index
    %c0_85 = arith.constant 0 : index
    %88 = vector.load %arg9[%c112, %c0_85] : memref<144x16xbf16, #tpu.memory_space<vmem>>, vector<16x16xbf16>
    %cst_86 = arith.constant dense<0.000000e+00> : vector<128x16xf32>
    %89 = tpu.matmul %87, %88, %cst_86 {dimension_numbers = #tpu.dot_dimension_numbers<[1], [0], [0], [1], [0, 0, 1, 1], [], []>} : vector<128x16xbf16>, vector<16x16xbf16>, vector<128x16xf32> -> vector<128x16xf32>
    %90 = arith.addf %84, %89 : vector<128x16xf32>
    %c0_87 = arith.constant 0 : index
    %c2_88 = arith.constant 2 : index
    %c2_89 = arith.constant 2 : index
    %c0_90 = arith.constant 0 : index
    %91 = vector.load %arg18[%c0_87, %c2_88, %c2_89, %c0_90] : memref<2x10x10x16xf32, #tpu.memory_space<vmem>>, vector<2x8x8x16xf32>
    %92 = vector.shape_cast %91 : vector<2x8x8x16xf32> to vector<128x16xf32>
    %93 = arith.truncf %92 : vector<128x16xf32> to vector<128x16xbf16>
    %c128 = arith.constant 128 : index
    %c0_91 = arith.constant 0 : index
    %94 = vector.load %arg9[%c128, %c0_91] : memref<144x16xbf16, #tpu.memory_space<vmem>>, vector<16x16xbf16>
    %cst_92 = arith.constant dense<0.000000e+00> : vector<128x16xf32>
    %95 = tpu.matmul %93, %94, %cst_92 {dimension_numbers = #tpu.dot_dimension_numbers<[1], [0], [0], [1], [0, 0, 1, 1], [], []>} : vector<128x16xbf16>, vector<16x16xbf16>, vector<128x16xf32> -> vector<128x16xf32>
    %96 = arith.addf %90, %95 : vector<128x16xf32>
    %c0_93 = arith.constant 0 : index
    %c0_94 = arith.constant 0 : index
    %97 = vector.load %arg10[%c0_93, %c0_94] : memref<1x16xf32, #tpu.memory_space<vmem>>, vector<1x16xf32>
    %98 = vector.broadcast %97 : vector<1x16xf32> to vector<128x16xf32>
    %99 = arith.addf %96, %98 : vector<128x16xf32>
    %cst_95 = arith.constant 0.000000e+00 : f32
    %100 = vector.broadcast %cst_95 : f32 to vector<128x16xf32>
    %101 = arith.cmpf oge, %99, %100 : vector<128x16xf32>
    %cst_96 = arith.constant 1.000000e-01 : f32
    %102 = vector.broadcast %cst_96 : f32 to vector<128x16xf32>
    %103 = arith.mulf %102, %99 : vector<128x16xf32>
    %104 = arith.select %101, %99, %103 : vector<128x16xi1>, vector<128x16xf32>
    %c0_97 = arith.constant 0 : index
    %c0_98 = arith.constant 0 : index
    %105 = vector.load %arg16[%c0_97, %c0_98] : memref<128x16xf32, #tpu.memory_space<vmem>>, vector<128x16xf32>
    tpu.vector_store %arg16[%c0_97, %c0_98], %104 {strides = array<i32>} : memref<128x16xf32, #tpu.memory_space<vmem>>, vector<128x16xf32>,
    %c0_99 = arith.constant 0 : index
    %c0_100 = arith.constant 0 : index
    %106 = vector.load %arg14[%c0_99, %c0_100] : memref<512x128xbf16, #tpu.memory_space<vmem>>, vector<512x128xbf16>
    %107 = arith.truncf %104 : vector<128x16xf32> to vector<128x16xbf16>
    %cst_101 = arith.constant dense<0.000000e+00> : vector<512x16xf32>
    %108 = tpu.matmul %106, %107, %cst_101 {dimension_numbers = #tpu.dot_dimension_numbers<[1], [0], [0], [1], [0, 0, 1, 1], [], []>} : vector<512x128xbf16>, vector<128x16xbf16>, vector<512x16xf32> -> vector<512x16xf32>
    %109 = arith.addf %32, %108 : vector<512x16xf32>
    %cst_102 = arith.constant 0.000000e+00 : f32
    %110 = vector.broadcast %cst_102 : f32 to vector<2x18x18x16xf32>
    %c0_103 = arith.constant 0 : index
    %c0_104 = arith.constant 0 : index
    %c0_105 = arith.constant 0 : index
    %c0_106 = arith.constant 0 : index
    %111 = vector.load %arg19[%c0_103, %c0_104, %c0_105, %c0_106] : memref<2x18x18x16xf32, #tpu.memory_space<vmem>>, vector<2x18x18x16xf32>
    tpu.vector_store %arg19[%c0_103, %c0_104, %c0_105, %c0_106], %110 {strides = array<i32>} : memref<2x18x18x16xf32, #tpu.memory_space<vmem>>, vector<2x18x18x16xf32>,
    %112 = vector.shape_cast %109 : vector<512x16xf32> to vector<2x16x16x16xf32>
    %c0_107 = arith.constant 0 : index
    %c1_108 = arith.constant 1 : index
    %c1_109 = arith.constant 1 : index
    %c0_110 = arith.constant 0 : index
    %113 = vector.load %arg19[%c0_107, %c1_108, %c1_109, %c0_110] : memref<2x18x18x16xf32, #tpu.memory_space<vmem>>, vector<2x16x16x16xf32>
    tpu.vector_store %arg19[%c0_107, %c1_108, %c1_109, %c0_110], %112 {strides = array<i32>} : memref<2x18x18x16xf32, #tpu.memory_space<vmem>>, vector<2x16x16x16xf32>,
    %cst_111 = arith.constant 0.000000e+00 : f32
    %114 = vector.broadcast %cst_111 : f32 to vector<512x16xf32>
    %c0_112 = arith.constant 0 : index
    %c0_113 = arith.constant 0 : index
    %c0_114 = arith.constant 0 : index
    %c0_115 = arith.constant 0 : index
    %115 = vector.load %arg19[%c0_112, %c0_113, %c0_114, %c0_115] : memref<2x18x18x16xf32, #tpu.memory_space<vmem>>, vector<2x16x16x16xf32>
    %116 = vector.shape_cast %115 : vector<2x16x16x16xf32> to vector<512x16xf32>
    %117 = arith.truncf %116 : vector<512x16xf32> to vector<512x16xbf16>
    %c0_116 = arith.constant 0 : index
    %c0_117 = arith.constant 0 : index
    %118 = vector.load %arg11[%c0_116, %c0_117] : memref<144x16xbf16, #tpu.memory_space<vmem>>, vector<16x16xbf16>
    %cst_118 = arith.constant dense<0.000000e+00> : vector<512x16xf32>
    %119 = tpu.matmul %117, %118, %cst_118 {dimension_numbers = #tpu.dot_dimension_numbers<[1], [0], [0], [1], [0, 0, 1, 1], [], []>} : vector<512x16xbf16>, vector<16x16xbf16>, vector<512x16xf32> -> vector<512x16xf32>
    %120 = arith.addf %114, %119 : vector<512x16xf32>
    %c0_119 = arith.constant 0 : index
    %c0_120 = arith.constant 0 : index
    %c1_121 = arith.constant 1 : index
    %c0_122 = arith.constant 0 : index
    %121 = vector.load %arg19[%c0_119, %c0_120, %c1_121, %c0_122] : memref<2x18x18x16xf32, #tpu.memory_space<vmem>>, vector<2x16x16x16xf32>
    %122 = vector.shape_cast %121 : vector<2x16x16x16xf32> to vector<512x16xf32>
    %123 = arith.truncf %122 : vector<512x16xf32> to vector<512x16xbf16>
    %c16_123 = arith.constant 16 : index
    %c0_124 = arith.constant 0 : index
    %124 = vector.load %arg11[%c16_123, %c0_124] : memref<144x16xbf16, #tpu.memory_space<vmem>>, vector<16x16xbf16>
    %cst_125 = arith.constant dense<0.000000e+00> : vector<512x16xf32>
    %125 = tpu.matmul %123, %124, %cst_125 {dimension_numbers = #tpu.dot_dimension_numbers<[1], [0], [0], [1], [0, 0, 1, 1], [], []>} : vector<512x16xbf16>, vector<16x16xbf16>, vector<512x16xf32> -> vector<512x16xf32>
    %126 = arith.addf %120, %125 : vector<512x16xf32>
    %c0_126 = arith.constant 0 : index
    %c0_127 = arith.constant 0 : index
    %c2_128 = arith.constant 2 : index
    %c0_129 = arith.constant 0 : index
    %127 = vector.load %arg19[%c0_126, %c0_127, %c2_128, %c0_129] : memref<2x18x18x16xf32, #tpu.memory_space<vmem>>, vector<2x16x16x16xf32>
    %128 = vector.shape_cast %127 : vector<2x16x16x16xf32> to vector<512x16xf32>
    %129 = arith.truncf %128 : vector<512x16xf32> to vector<512x16xbf16>
    %c32_130 = arith.constant 32 : index
    %c0_131 = arith.constant 0 : index
    %130 = vector.load %arg11[%c32_130, %c0_131] : memref<144x16xbf16, #tpu.memory_space<vmem>>, vector<16x16xbf16>
    %cst_132 = arith.constant dense<0.000000e+00> : vector<512x16xf32>
    %131 = tpu.matmul %129, %130, %cst_132 {dimension_numbers = #tpu.dot_dimension_numbers<[1], [0], [0], [1], [0, 0, 1, 1], [], []>} : vector<512x16xbf16>, vector<16x16xbf16>, vector<512x16xf32> -> vector<512x16xf32>
    %132 = arith.addf %126, %131 : vector<512x16xf32>
    %c0_133 = arith.constant 0 : index
    %c1_134 = arith.constant 1 : index
    %c0_135 = arith.constant 0 : index
    %c0_136 = arith.constant 0 : index
    %133 = vector.load %arg19[%c0_133, %c1_134, %c0_135, %c0_136] : memref<2x18x18x16xf32, #tpu.memory_space<vmem>>, vector<2x16x16x16xf32>
    %134 = vector.shape_cast %133 : vector<2x16x16x16xf32> to vector<512x16xf32>
    %135 = arith.truncf %134 : vector<512x16xf32> to vector<512x16xbf16>
    %c48_137 = arith.constant 48 : index
    %c0_138 = arith.constant 0 : index
    %136 = vector.load %arg11[%c48_137, %c0_138] : memref<144x16xbf16, #tpu.memory_space<vmem>>, vector<16x16xbf16>
    %cst_139 = arith.constant dense<0.000000e+00> : vector<512x16xf32>
    %137 = tpu.matmul %135, %136, %cst_139 {dimension_numbers = #tpu.dot_dimension_numbers<[1], [0], [0], [1], [0, 0, 1, 1], [], []>} : vector<512x16xbf16>, vector<16x16xbf16>, vector<512x16xf32> -> vector<512x16xf32>
    %138 = arith.addf %132, %137 : vector<512x16xf32>
    %c0_140 = arith.constant 0 : index
    %c1_141 = arith.constant 1 : index
    %c1_142 = arith.constant 1 : index
    %c0_143 = arith.constant 0 : index
    %139 = vector.load %arg19[%c0_140, %c1_141, %c1_142, %c0_143] : memref<2x18x18x16xf32, #tpu.memory_space<vmem>>, vector<2x16x16x16xf32>
    %140 = vector.shape_cast %139 : vector<2x16x16x16xf32> to vector<512x16xf32>
    %141 = arith.truncf %140 : vector<512x16xf32> to vector<512x16xbf16>
    %c64_144 = arith.constant 64 : index
    %c0_145 = arith.constant 0 : index
    %142 = vector.load %arg11[%c64_144, %c0_145] : memref<144x16xbf16, #tpu.memory_space<vmem>>, vector<16x16xbf16>
    %cst_146 = arith.constant dense<0.000000e+00> : vector<512x16xf32>
    %143 = tpu.matmul %141, %142, %cst_146 {dimension_numbers = #tpu.dot_dimension_numbers<[1], [0], [0], [1], [0, 0, 1, 1], [], []>} : vector<512x16xbf16>, vector<16x16xbf16>, vector<512x16xf32> -> vector<512x16xf32>
    %144 = arith.addf %138, %143 : vector<512x16xf32>
    %c0_147 = arith.constant 0 : index
    %c1_148 = arith.constant 1 : index
    %c2_149 = arith.constant 2 : index
    %c0_150 = arith.constant 0 : index
    %145 = vector.load %arg19[%c0_147, %c1_148, %c2_149, %c0_150] : memref<2x18x18x16xf32, #tpu.memory_space<vmem>>, vector<2x16x16x16xf32>
    %146 = vector.shape_cast %145 : vector<2x16x16x16xf32> to vector<512x16xf32>
    %147 = arith.truncf %146 : vector<512x16xf32> to vector<512x16xbf16>
    %c80_151 = arith.constant 80 : index
    %c0_152 = arith.constant 0 : index
    %148 = vector.load %arg11[%c80_151, %c0_152] : memref<144x16xbf16, #tpu.memory_space<vmem>>, vector<16x16xbf16>
    %cst_153 = arith.constant dense<0.000000e+00> : vector<512x16xf32>
    %149 = tpu.matmul %147, %148, %cst_153 {dimension_numbers = #tpu.dot_dimension_numbers<[1], [0], [0], [1], [0, 0, 1, 1], [], []>} : vector<512x16xbf16>, vector<16x16xbf16>, vector<512x16xf32> -> vector<512x16xf32>
    %150 = arith.addf %144, %149 : vector<512x16xf32>
    %c0_154 = arith.constant 0 : index
    %c2_155 = arith.constant 2 : index
    %c0_156 = arith.constant 0 : index
    %c0_157 = arith.constant 0 : index
    %151 = vector.load %arg19[%c0_154, %c2_155, %c0_156, %c0_157] : memref<2x18x18x16xf32, #tpu.memory_space<vmem>>, vector<2x16x16x16xf32>
    %152 = vector.shape_cast %151 : vector<2x16x16x16xf32> to vector<512x16xf32>
    %153 = arith.truncf %152 : vector<512x16xf32> to vector<512x16xbf16>
    %c96_158 = arith.constant 96 : index
    %c0_159 = arith.constant 0 : index
    %154 = vector.load %arg11[%c96_158, %c0_159] : memref<144x16xbf16, #tpu.memory_space<vmem>>, vector<16x16xbf16>
    %cst_160 = arith.constant dense<0.000000e+00> : vector<512x16xf32>
    %155 = tpu.matmul %153, %154, %cst_160 {dimension_numbers = #tpu.dot_dimension_numbers<[1], [0], [0], [1], [0, 0, 1, 1], [], []>} : vector<512x16xbf16>, vector<16x16xbf16>, vector<512x16xf32> -> vector<512x16xf32>
    %156 = arith.addf %150, %155 : vector<512x16xf32>
    %c0_161 = arith.constant 0 : index
    %c2_162 = arith.constant 2 : index
    %c1_163 = arith.constant 1 : index
    %c0_164 = arith.constant 0 : index
    %157 = vector.load %arg19[%c0_161, %c2_162, %c1_163, %c0_164] : memref<2x18x18x16xf32, #tpu.memory_space<vmem>>, vector<2x16x16x16xf32>
    %158 = vector.shape_cast %157 : vector<2x16x16x16xf32> to vector<512x16xf32>
    %159 = arith.truncf %158 : vector<512x16xf32> to vector<512x16xbf16>
    %c112_165 = arith.constant 112 : index
    %c0_166 = arith.constant 0 : index
    %160 = vector.load %arg11[%c112_165, %c0_166] : memref<144x16xbf16, #tpu.memory_space<vmem>>, vector<16x16xbf16>
    %cst_167 = arith.constant dense<0.000000e+00> : vector<512x16xf32>
    %161 = tpu.matmul %159, %160, %cst_167 {dimension_numbers = #tpu.dot_dimension_numbers<[1], [0], [0], [1], [0, 0, 1, 1], [], []>} : vector<512x16xbf16>, vector<16x16xbf16>, vector<512x16xf32> -> vector<512x16xf32>
    %162 = arith.addf %156, %161 : vector<512x16xf32>
    %c0_168 = arith.constant 0 : index
    %c2_169 = arith.constant 2 : index
    %c2_170 = arith.constant 2 : index
    %c0_171 = arith.constant 0 : index
    %163 = vector.load %arg19[%c0_168, %c2_169, %c2_170, %c0_171] : memref<2x18x18x16xf32, #tpu.memory_space<vmem>>, vector<2x16x16x16xf32>
    %164 = vector.shape_cast %163 : vector<2x16x16x16xf32> to vector<512x16xf32>
    %165 = arith.truncf %164 : vector<512x16xf32> to vector<512x16xbf16>
    %c128_172 = arith.constant 128 : index
    %c0_173 = arith.constant 0 : index
    %166 = vector.load %arg11[%c128_172, %c0_173] : memref<144x16xbf16, #tpu.memory_space<vmem>>, vector<16x16xbf16>
    %cst_174 = arith.constant dense<0.000000e+00> : vector<512x16xf32>
    %167 = tpu.matmul %165, %166, %cst_174 {dimension_numbers = #tpu.dot_dimension_numbers<[1], [0], [0], [1], [0, 0, 1, 1], [], []>} : vector<512x16xbf16>, vector<16x16xbf16>, vector<512x16xf32> -> vector<512x16xf32>
    %168 = arith.addf %162, %167 : vector<512x16xf32>
    %c0_175 = arith.constant 0 : index
    %c0_176 = arith.constant 0 : index
    %169 = vector.load %arg12[%c0_175, %c0_176] : memref<1x16xf32, #tpu.memory_space<vmem>>, vector<1x16xf32>
    %170 = vector.broadcast %169 : vector<1x16xf32> to vector<512x16xf32>
    %171 = arith.addf %168, %170 : vector<512x16xf32>
    %cst_177 = arith.constant 0.000000e+00 : f32
    %172 = vector.broadcast %cst_177 : f32 to vector<512x16xf32>
    %173 = arith.cmpf oge, %171, %172 : vector<512x16xf32>
    %cst_178 = arith.constant 1.000000e-01 : f32
    %174 = vector.broadcast %cst_178 : f32 to vector<512x16xf32>
    %175 = arith.mulf %174, %171 : vector<512x16xf32>
    %176 = arith.select %173, %171, %175 : vector<512x16xi1>, vector<512x16xf32>
    %c0_179 = arith.constant 0 : index
    %c0_180 = arith.constant 0 : index
    %177 = vector.load %arg15[%c0_179, %c0_180] : memref<512x16xf32, #tpu.memory_space<vmem>>, vector<512x16xf32>
    tpu.vector_store %arg15[%c0_179, %c0_180], %176 {strides = array<i32>} : memref<512x16xf32, #tpu.memory_space<vmem>>, vector<512x16xf32>,
    return
  }
}

</mosaic_0001>

<llo_original>
// kernel: tpu_custom_call.1
$region0: #{tpu_custom_call.1}
  #allocation0 [shape = 'u32[]', space=smem, size = 0x4, offset = 0x4, fixed_abs, tag = 'smem constant byte address 0x4 - core index']
  #allocation1 [shape = 'u32[144,128]{1,0:T(1,128)}', space=vmem, size = 0x12000, scoped, tag = 'internal scratch']
  #allocation2 [shape = 'f32[2,10,10,16]{3,2,1,0:T(8,128)}', space=vmem, size = 0x28000, scoped, tag = 'scratch operand']
  #allocation3 [shape = 'f32[2,18,18,16]{3,2,1,0:T(8,128)}', space=vmem, size = 0x6c000, scoped, tag = 'scratch operand']
  %s0 = inlined_call_operand.vmem [shape: bf16[512,8], index: 0, kind: input, shape index: {}]
  %s1 = inlined_call_operand.vmem [shape: bf16[128,16], index: 1, kind: input, shape index: {}]
  %s2 = inlined_call_operand.vmem [shape: bf16[32,32], index: 2, kind: input, shape index: {}]
  %s3 = inlined_call_operand.vmem [shape: bf16[8,16], index: 3, kind: input, shape index: {}]
  %s4 = inlined_call_operand.vmem [shape: f32[1,16], index: 4, kind: input, shape index: {}]
  %s5 = inlined_call_operand.vmem [shape: bf16[16,16], index: 5, kind: input, shape index: {}]
  %s6 = inlined_call_operand.vmem [shape: f32[1,16], index: 6, kind: input, shape index: {}]
  %s7 = inlined_call_operand.vmem [shape: bf16[32,16], index: 7, kind: input, shape index: {}]
  %s8 = inlined_call_operand.vmem [shape: f32[1,16], index: 8, kind: input, shape index: {}]
  %s9 = inlined_call_operand.vmem [shape: bf16[144,16], index: 9, kind: input, shape index: {}]
  %s10 = inlined_call_operand.vmem [shape: f32[1,16], index: 10, kind: input, shape index: {}]
  %s11 = inlined_call_operand.vmem [shape: bf16[144,16], index: 11, kind: input, shape index: {}]
  %s12 = inlined_call_operand.vmem [shape: f32[1,16], index: 12, kind: input, shape index: {}]
  %s13 = inlined_call_operand.vmem [shape: bf16[128,32], index: 13, kind: input, shape index: {}]
  %s14 = inlined_call_operand.vmem [shape: bf16[512,128], index: 14, kind: input, shape index: {}]
  %s15 = inlined_call_operand.vmem [shape: f32[512,16], index: 15, kind: output, shape index: {0}]
  %s16 = inlined_call_operand.vmem [shape: f32[128,16], index: 16, kind: output, shape index: {1}]
  %s17 = inlined_call_operand.vmem [shape: f32[32,16], index: 17, kind: output, shape index: {2}]
  %18 = xla_tuple %s15, %s16, %s17
  %s19 = sld [smem:[#allocation0]]
  $region86: #{tpu_custom_call.1} parent=0
    _
  %s21 = ssub.s32 1, %s19
  %s22 = scalar_select 0, %s21, %s19
  // Predicated region
  $region2: #{tpu_custom_call.1} parent=0 // pred_check
    _
  $region3: #{tpu_custom_call.1} parent=0 // pred_check_branch
    %24 = sbr.rel (0) target = $region5
  $region4: #{tpu_custom_call.1} parent=0 // pred_region
    _
  $region5: #{tpu_custom_call.1} parent=0 // pred_fallthru
    _
  // Predicated region
  $region6: #{tpu_custom_call.1} parent=0 // pred_check
    _
  $region7: #{tpu_custom_call.1} parent=0 // pred_check_branch
    %26 = sbr.rel (0) target = $region9
  $region8: #{tpu_custom_call.1} parent=0 // pred_region
    _
  $region9: #{tpu_custom_call.1} parent=0 // pred_fallthru
    _
  // Predicated region
  $region10: #{tpu_custom_call.1} parent=0 // pred_check
    _
  $region11: #{tpu_custom_call.1} parent=0 // pred_check_branch
    %28 = sbr.rel (0) target = $region13
  $region12: #{tpu_custom_call.1} parent=0 // pred_region
    _
  $region13: #{tpu_custom_call.1} parent=0 // pred_fallthru
    _
  // Predicated region
  $region14: #{tpu_custom_call.1} parent=0 // pred_check
    _
  $region15: #{tpu_custom_call.1} parent=0 // pred_check_branch
    %30 = sbr.rel (0) target = $region17
  $region16: #{tpu_custom_call.1} parent=0 // pred_region
    _
  $region17: #{tpu_custom_call.1} parent=0 // pred_fallthru
    _
  // Predicated region
  $region18: #{tpu_custom_call.1} parent=0 // pred_check
    _
  $region19: #{tpu_custom_call.1} parent=0 // pred_check_branch
    %32 = sbr.rel (0) target = $region21
  $region20: #{tpu_custom_call.1} parent=0 // pred_region
    _
  $region21: #{tpu_custom_call.1} parent=0 // pred_fallthru
    _
  // Predicated region
  $region22: #{tpu_custom_call.1} parent=0 // pred_check
    _
  $region23: #{tpu_custom_call.1} parent=0 // pred_check_branch
    %34 = sbr.rel (0) target = $region25
  $region24: #{tpu_custom_call.1} parent=0 // pred_region
    _
  $region25: #{tpu_custom_call.1} parent=0 // pred_fallthru
    _
  // Predicated region
  $region26: #{tpu_custom_call.1} parent=0 // pred_check
    _
  $region27: #{tpu_custom_call.1} parent=0 // pred_check_branch
    %36 = sbr.rel (0) target = $region29
  $region28: #{tpu_custom_call.1} parent=0 // pred_region
    _
  $region29: #{tpu_custom_call.1} parent=0 // pred_fallthru
    _
  // Predicated region
  $region30: #{tpu_custom_call.1} parent=0 // pred_check
    _
  $region31: #{tpu_custom_call.1} parent=0 // pred_check_branch
    %38 = sbr.rel (0) target = $region33
  $region32: #{tpu_custom_call.1} parent=0 // pred_region
    _
  $region33: #{tpu_custom_call.1} parent=0 // pred_fallthru
    _
  // Predicated region
  $region34: #{tpu_custom_call.1} parent=0 // pred_check
    _
  $region35: #{tpu_custom_call.1} parent=0 // pred_check_branch
    %40 = sbr.rel (0) target = $region37
  $region36: #{tpu_custom_call.1} parent=0 // pred_region
    _
  $region37: #{tpu_custom_call.1} parent=0 // pred_fallthru
    _
  // Predicated region
  $region38: #{tpu_custom_call.1} parent=0 // pred_check
    _
  $region39: #{tpu_custom_call.1} parent=0 // pred_check_branch
    %42 = sbr.rel (0) target = $region41
  $region40: #{tpu_custom_call.1} parent=0 // pred_region
    _
  $region41: #{tpu_custom_call.1} parent=0 // pred_fallthru
    _
  // Predicated region
  $region42: #{tpu_custom_call.1} parent=0 // pred_check
    _
  $region43: #{tpu_custom_call.1} parent=0 // pred_check_branch
    %44 = sbr.rel (0) target = $region45
  $region44: #{tpu_custom_call.1} parent=0 // pred_region
    _
  $region45: #{tpu_custom_call.1} parent=0 // pred_fallthru
    _
  // Predicated region
  $region46: #{tpu_custom_call.1} parent=0 // pred_check
    _
  $region47: #{tpu_custom_call.1} parent=0 // pred_check_branch
    %46 = sbr.rel (0) target = $region49
  $region48: #{tpu_custom_call.1} parent=0 // pred_region
    _
  $region49: #{tpu_custom_call.1} parent=0 // pred_fallthru
    _
  // Predicated region
  $region50: #{tpu_custom_call.1} parent=0 // pred_check
    _
  $region51: #{tpu_custom_call.1} parent=0 // pred_check_branch
    %48 = sbr.rel (0) target = $region53
  $region52: #{tpu_custom_call.1} parent=0 // pred_region
    _
  $region53: #{tpu_custom_call.1} parent=0 // pred_fallthru
    _
  // Predicated region
  $region54: #{tpu_custom_call.1} parent=0 // pred_check
    _
  $region55: #{tpu_custom_call.1} parent=0 // pred_check_branch
    %50 = sbr.rel (0) target = $region57
  $region56: #{tpu_custom_call.1} parent=0 // pred_region
    _
  $region57: #{tpu_custom_call.1} parent=0 // pred_fallthru
    _
  // Predicated region
  $region58: #{tpu_custom_call.1} parent=0 // pred_check
    _
  $region59: #{tpu_custom_call.1} parent=0 // pred_check_branch
    %52 = sbr.rel (0) target = $region61
  $region60: #{tpu_custom_call.1} parent=0 // pred_region
    _
  $region61: #{tpu_custom_call.1} parent=0 // pred_fallthru
    _
  %v54 = vld [vmem:[%s2] sm:$0xf]
  %v55 = vld [vmem:[%s2 + $0x4] sm:$0xf]
  %v56 = vld [vmem:[%s2 + $0x8] sm:$0xf]
  %v57 = vld [vmem:[%s2 + $0xc] sm:$0xf]
  %v58 = vld [vmem:[%s7] sm:$0xf]
  %v59 = vld [vmem:[%s7 + $0x4] sm:$0xf]
  %v60 = vld [vmem:[%s7 + $0x8] sm:$0xf]
  %v61 = vld [vmem:[%s7 + $0xc] sm:$0xf]
  %v62 = vld [vmem:[%s8] sm:$0x1]
  %v64 = vlaneseq
  %v65 = vshrl.u32 %v64, 7
  %v66 = vsub.s32 0, %v65
  %v67 = vrot.slane %v62, %v66
  %v73 = vunpack.c.l.b16 %v54
  %v74 = vunpack.c.l.b16 %v55
  %v75 = vunpack.c.l.b16 %v56
  %v76 = vunpack.c.l.b16 %v57
  %v77 = vpack.c.b16 %v74, %v73
  %v78 = vpack.c.b16 %v76, %v75
  %v83 = vunpack.c.l.b16 %v58
  %v84 = vunpack.c.l.b16 %v59
  %v85 = vunpack.c.l.b16 %v60
  %v86 = vunpack.c.l.b16 %v61
  %v87 = vpack.c.b16 %v84, %v83
  %v88 = vpack.c.b16 %v86, %v85
  %vm91 = vcmask 261120
  %v93 = vsel %vm91, %v77, 0
  %v96 = vsel %vm91, %v78, 0
  %98 = vmatprep.subr.bf16.mxu0 0
  %99 = vmatpush1.bf16.msra.mxu0 %v87
  %100 = vmatprep.subr.bf16.mxu0 0
  %101 = vmatpush1.bf16.msra.mxu0 %v88
  %102 = vmatprep.subr.bf16.mxu0 0
  %103 = vmatpush1.bf16.msra.mxu0 0
  %104 = vmatprep.subr.bf16.mxu0 0
  %105 = vmatpush1.bf16.msra.mxu0 0
  %106 = vmatprep.subr.bf16.mxu0 0
  %107 = vmatpush1.bf16.msra.mxu0 0
  %108 = vmatprep.subr.bf16.mxu0 0
  %109 = vmatpush1.bf16.msra.mxu0 0
  %110 = vmatprep.subr.bf16.mxu0 0
  %111 = vmatpush1.bf16.msra.mxu0 0
  %112 = vmatprep.subr.bf16.mxu0 0
  %113 = vmatpush1.bf16.msra.mxu0 0
  %114 = vmatprep.subr.bf16.mxu0 0
  %115 = vmatpush1.bf16.msra.mxu0 0
  %116 = vmatprep.subr.bf16.mxu0 0
  %117 = vmatpush1.bf16.msra.mxu0 0
  %118 = vmatprep.subr.bf16.mxu0 0
  %119 = vmatpush1.bf16.msra.mxu0 0
  %120 = vmatprep.subr.bf16.mxu0 0
  %121 = vmatpush1.bf16.msra.mxu0 0
  %122 = vmatprep.subr.bf16.mxu0 0
  %123 = vmatpush1.bf16.msra.mxu0 0
  %124 = vmatprep.subr.bf16.mxu0 0
  %125 = vmatpush1.bf16.msra.mxu0 0
  %126 = vmatprep.subr.bf16.mxu0 0
  %127 = vmatpush1.bf16.msra.mxu0 0
  %128 = vmatprep.subr.bf16.mxu0 0
  %129 = vmatpush1.bf16.msra.mxu0 0
  %130 = vmatprep.mubr.bf16.mxu0 0
  %131 = vmatmul.mubr.bf16.gmra.mrb[0].mxu0 %v93
  %v132 = vpop.f32.mrb[0].mxu0
  %v133 = vadd.f32 %v67, %v132
  %v134 = vpop.f32.mrb[0].mxu0
  %v135 = vpop.f32.mrb[0].mxu0
  %v136 = vadd.f32 %v67, %v135
  %v137 = vpop.f32.mrb[0].mxu0
  %138 = vmatprep.mubr.bf16.mxu0 0
  %139 = vmatmul.mubr.bf16.gmra.mrb[0].mxu0 %v96
  %v140 = vpop.f32.mrb[0].mxu0
  %v141 = vadd.f32 %v67, %v140
  %v142 = vpop.f32.mrb[0].mxu0
  %v143 = vpop.f32.mrb[0].mxu0
  %v144 = vadd.f32 %v67, %v143
  %v145 = vpop.f32.mrb[0].mxu0
  %146 = vdwg.mxu0
  %vm147 = vcmp.ge.f32.partialorder %v133, 0.0
  %vm148 = vcmp.ge.f32.partialorder %v136, 0.0
  %vm149 = vcmp.ge.f32.partialorder %v141, 0.0
  %vm150 = vcmp.ge.f32.partialorder %v144, 0.0
  %v151 = vmul.f32 %v133, 0.1
  %v152 = vmul.f32 %v136, 0.1
  %v153 = vmul.f32 %v141, 0.1
  %v154 = vmul.f32 %v144, 0.1
  %v155 = vsel %vm147, %v133, %v151
  %v156 = vsel %vm148, %v136, %v152
  %v157 = vsel %vm149, %v141, %v153
  %v158 = vsel %vm150, %v144, %v154
  %v159 = vld [vmem:[%s1] sm:$0xf]
  %v160 = vld [vmem:[%s1 + $0x4] sm:$0xf]
  %v161 = vld [vmem:[%s1 + $0x8] sm:$0xf]
  %v162 = vld [vmem:[%s1 + $0xc] sm:$0xf]
  %v163 = vld [vmem:[%s1 + $0x10] sm:$0xf]
  %v164 = vld [vmem:[%s1 + $0x14] sm:$0xf]
  %v165 = vld [vmem:[%s1 + $0x18] sm:$0xf]
  %v166 = vld [vmem:[%s1 + $0x1c] sm:$0xf]
  %v167 = vld [vmem:[%s1 + $0x20] sm:$0xf]
  %v168 = vld [vmem:[%s1 + $0x24] sm:$0xf]
  %v169 = vld [vmem:[%s1 + $0x28] sm:$0xf]
  %v170 = vld [vmem:[%s1 + $0x2c] sm:$0xf]
  %v171 = vld [vmem:[%s1 + $0x30] sm:$0xf]
  %v172 = vld [vmem:[%s1 + $0x34] sm:$0xf]
  %v173 = vld [vmem:[%s1 + $0x38] sm:$0xf]
  %v174 = vld [vmem:[%s1 + $0x3c] sm:$0xf]
  %v175 = vld [vmem:[%s5] sm:$0xf]
  %v176 = vld [vmem:[%s5 + $0x4] sm:$0xf]
  %v177 = vld [vmem:[%s6] sm:$0x1]
  %v179 = vlaneseq
  %v180 = vshrl.u32 %v179, 7
  %v181 = vsub.s32 0, %v180
  %v182 = vrot.slane %v177, %v181
  %v200 = vunpack.c.l.b16 %v159
  %v201 = vunpack.c.l.b16 %v160
  %v202 = vunpack.c.l.b16 %v161
  %v203 = vunpack.c.l.b16 %v162
  %v204 = vunpack.c.l.b16 %v163
  %v205 = vunpack.c.l.b16 %v164
  %v206 = vunpack.c.l.b16 %v165
  %v207 = vunpack.c.l.b16 %v166
  %v208 = vunpack.c.l.b16 %v167
  %v209 = vunpack.c.l.b16 %v168
  %v210 = vunpack.c.l.b16 %v169
  %v211 = vunpack.c.l.b16 %v170
  %v212 = vunpack.c.l.b16 %v171
  %v213 = vunpack.c.l.b16 %v172
  %v214 = vunpack.c.l.b16 %v173
  %v215 = vunpack.c.l.b16 %v174
  %v216 = vpack.c.b16 %v201, %v200
  %v217 = vpack.c.b16 %v203, %v202
  %v218 = vpack.c.b16 %v205, %v204
  %v219 = vpack.c.b16 %v207, %v206
  %v220 = vpack.c.b16 %v209, %v208
  %v221 = vpack.c.b16 %v211, %v210
  %v222 = vpack.c.b16 %v213, %v212
  %v223 = vpack.c.b16 %v215, %v214
  %v226 = vunpack.c.l.b16 %v175
  %v227 = vunpack.c.l.b16 %v176
  %v228 = vpack.c.b16 %v227, %v226
  %vm230 = vcmask 130048
  %v232 = vsel %vm230, %v216, 0
  %v235 = vsel %vm230, %v217, 0
  %v238 = vsel %vm230, %v218, 0
  %v241 = vsel %vm230, %v219, 0
  %v244 = vsel %vm230, %v220, 0
  %v247 = vsel %vm230, %v221, 0
  %v250 = vsel %vm230, %v222, 0
  %v253 = vsel %vm230, %v223, 0
  %255 = vmatprep.subr.bf16.mxu0 0
  %256 = vmatpush1.bf16.msra.mxu0 %v228
  %257 = vmatprep.subr.bf16.mxu0 0
  %258 = vmatpush1.bf16.msra.mxu0 0
  %259 = vmatprep.subr.bf16.mxu0 0
  %260 = vmatpush1.bf16.msra.mxu0 0
  %261 = vmatprep.subr.bf16.mxu0 0
  %262 = vmatpush1.bf16.msra.mxu0 0
  %263 = vmatprep.subr.bf16.mxu0 0
  %264 = vmatpush1.bf16.msra.mxu0 0
  %265 = vmatprep.subr.bf16.mxu0 0
  %266 = vmatpush1.bf16.msra.mxu0 0
  %267 = vmatprep.subr.bf16.mxu0 0
  %268 = vmatpush1.bf16.msra.mxu0 0
  %269 = vmatprep.subr.bf16.mxu0 0
  %270 = vmatpush1.bf16.msra.mxu0 0
  %271 = vmatprep.subr.bf16.mxu0 0
  %272 = vmatpush1.bf16.msra.mxu0 0
  %273 = vmatprep.subr.bf16.mxu0 0
  %274 = vmatpush1.bf16.msra.mxu0 0
  %275 = vmatprep.subr.bf16.mxu0 0
  %276 = vmatpush1.bf16.msra.mxu0 0
  %277 = vmatprep.subr.bf16.mxu0 0
  %278 = vmatpush1.bf16.msra.mxu0 0
  %279 = vmatprep.subr.bf16.mxu0 0
  %280 = vmatpush1.bf16.msra.mxu0 0
  %281 = vmatprep.subr.bf16.mxu0 0
  %282 = vmatpush1.bf16.msra.mxu0 0
  %283 = vmatprep.subr.bf16.mxu0 0
  %284 = vmatpush1.bf16.msra.mxu0 0
  %285 = vmatprep.subr.bf16.mxu0 0
  %286 = vmatpush1.bf16.msra.mxu0 0
  %287 = vmatprep.mubr.bf16.mxu0 0
  %288 = vmatmul.mubr.bf16.gmra.mrb[0].mxu0 %v232
  %v289 = vpop.f32.mrb[0].mxu0
  %v290 = vadd.f32 %v182, %v289
  %v291 = vpop.f32.mrb[0].mxu0
  %v292 = vpop.f32.mrb[0].mxu0
  %v293 = vadd.f32 %v182, %v292
  %v294 = vpop.f32.mrb[0].mxu0
  %295 = vmatprep.mubr.bf16.mxu0 0
  %296 = vmatmul.mubr.bf16.gmra.mrb[0].mxu0 %v235
  %v297 = vpop.f32.mrb[0].mxu0
  %v298 = vadd.f32 %v182, %v297
  %v299 = vpop.f32.mrb[0].mxu0
  %v300 = vpop.f32.mrb[0].mxu0
  %v301 = vadd.f32 %v182, %v300
  %v302 = vpop.f32.mrb[0].mxu0
  %303 = vmatprep.mubr.bf16.mxu0 0
  %304 = vmatmul.mubr.bf16.gmra.mrb[0].mxu0 %v238
  %v305 = vpop.f32.mrb[0].mxu0
  %v306 = vadd.f32 %v182, %v305
  %v307 = vpop.f32.mrb[0].mxu0
  %v308 = vpop.f32.mrb[0].mxu0
  %v309 = vadd.f32 %v182, %v308
  %v310 = vpop.f32.mrb[0].mxu0
  %311 = vmatprep.mubr.bf16.mxu0 0
  %312 = vmatmul.mubr.bf16.gmra.mrb[0].mxu0 %v241
  %v313 = vpop.f32.mrb[0].mxu0
  %v314 = vadd.f32 %v182, %v313
  %v315 = vpop.f32.mrb[0].mxu0
  %v316 = vpop.f32.mrb[0].mxu0
  %v317 = vadd.f32 %v182, %v316
  %v318 = vpop.f32.mrb[0].mxu0
  %319 = vmatprep.mubr.bf16.mxu0 0
  %320 = vmatmul.mubr.bf16.gmra.mrb[0].mxu0 %v244
  %v321 = vpop.f32.mrb[0].mxu0
  %v322 = vadd.f32 %v182, %v321
  %v323 = vpop.f32.mrb[0].mxu0
  %v324 = vpop.f32.mrb[0].mxu0
  %v325 = vadd.f32 %v182, %v324
  %v326 = vpop.f32.mrb[0].mxu0
  %327 = vmatprep.mubr.bf16.mxu0 0
  %328 = vmatmul.mubr.bf16.gmra.mrb[0].mxu0 %v247
  %v329 = vpop.f32.mrb[0].mxu0
  %v330 = vadd.f32 %v182, %v329
  %v331 = vpop.f32.mrb[0].mxu0
  %v332 = vpop.f32.mrb[0].mxu0
  %v333 = vadd.f32 %v182, %v332
  %v334 = vpop.f32.mrb[0].mxu0
  %335 = vmatprep.mubr.bf16.mxu0 0
  %336 = vmatmul.mubr.bf16.gmra.mrb[0].mxu0 %v250
  %v337 = vpop.f32.mrb[0].mxu0
  %v338 = vadd.f32 %v182, %v337
  %v339 = vpop.f32.mrb[0].mxu0
  %v340 = vpop.f32.mrb[0].mxu0
  %v341 = vadd.f32 %v182, %v340
  %v342 = vpop.f32.mrb[0].mxu0
  %343 = vmatprep.mubr.bf16.mxu0 0
  %344 = vmatmul.mubr.bf16.gmra.mrb[0].mxu0 %v253
  %v345 = vpop.f32.mrb[0].mxu0
  %v346 = vadd.f32 %v182, %v345
  %v347 = vpop.f32.mrb[0].mxu0
  %v348 = vpop.f32.mrb[0].mxu0
  %v349 = vadd.f32 %v182, %v348
  %v350 = vpop.f32.mrb[0].mxu0
  %351 = vdwg.mxu0
  %vm352 = vcmp.ge.f32.partialorder %v290, 0.0
  %vm353 = vcmp.ge.f32.partialorder %v293, 0.0
  %vm354 = vcmp.ge.f32.partialorder %v298, 0.0
  %vm355 = vcmp.ge.f32.partialorder %v301, 0.0
  %vm356 = vcmp.ge.f32.partialorder %v306, 0.0
  %vm357 = vcmp.ge.f32.partialorder %v309, 0.0
  %vm358 = vcmp.ge.f32.partialorder %v314, 0.0
  %vm359 = vcmp.ge.f32.partialorder %v317, 0.0
  %vm360 = vcmp.ge.f32.partialorder %v322, 0.0
  %vm361 = vcmp.ge.f32.partialorder %v325, 0.0
  %vm362 = vcmp.ge.f32.partialorder %v330, 0.0
  %vm363 = vcmp.ge.f32.partialorder %v333, 0.0
  %vm364 = vcmp.ge.f32.partialorder %v338, 0.0
  %vm365 = vcmp.ge.f32.partialorder %v341, 0.0
  %vm366 = vcmp.ge.f32.partialorder %v346, 0.0
  %vm367 = vcmp.ge.f32.partialorder %v349, 0.0
  %v368 = vmul.f32 %v290, 0.1
  %v369 = vmul.f32 %v293, 0.1
  %v370 = vmul.f32 %v298, 0.1
  %v371 = vmul.f32 %v301, 0.1
  %v372 = vmul.f32 %v306, 0.1
  %v373 = vmul.f32 %v309, 0.1
  %v374 = vmul.f32 %v314, 0.1
  %v375 = vmul.f32 %v317, 0.1
  %v376 = vmul.f32 %v322, 0.1
  %v377 = vmul.f32 %v325, 0.1
  %v378 = vmul.f32 %v330, 0.1
  %v379 = vmul.f32 %v333, 0.1
  %v380 = vmul.f32 %v338, 0.1
  %v381 = vmul.f32 %v341, 0.1
  %v382 = vmul.f32 %v346, 0.1
  %v383 = vmul.f32 %v349, 0.1
  %v384 = vsel %vm352, %v290, %v368
  %v385 = vsel %vm353, %v293, %v369
  %v386 = vsel %vm354, %v298, %v370
  %v387 = vsel %vm355, %v301, %v371
  %v388 = vsel %vm356, %v306, %v372
  %v389 = vsel %vm357, %v309, %v373
  %v390 = vsel %vm358, %v314, %v374
  %v391 = vsel %vm359, %v317, %v375
  %v392 = vsel %vm360, %v322, %v376
  %v393 = vsel %vm361, %v325, %v377
  %v394 = vsel %vm362, %v330, %v378
  %v395 = vsel %vm363, %v333, %v379
  %v396 = vsel %vm364, %v338, %v380
  %v397 = vsel %vm365, %v341, %v381
  %v398 = vsel %vm366, %v346, %v382
  %v399 = vsel %vm367, %v349, %v383
  %v400 = vld [vmem:[%s0] sm:$0xf]
  %v401 = vld [vmem:[%s0 + $0x4] sm:$0xf]
  %v402 = vld [vmem:[%s0 + $0x8] sm:$0xf]
  %v403 = vld [vmem:[%s0 + $0xc] sm:$0xf]
  %v404 = vld [vmem:[%s0 + $0x10] sm:$0xf]
  %v405 = vld [vmem:[%s0 + $0x14] sm:$0xf]
  %v406 = vld [vmem:[%s0 + $0x18] sm:$0xf]
  %v407 = vld [vmem:[%s0 + $0x1c] sm:$0xf]
  %v408 = vld [vmem:[%s0 + $0x20] sm:$0xf]
  %v409 = vld [vmem:[%s0 + $0x24] sm:$0xf]
  %v410 = vld [vmem:[%s0 + $0x28] sm:$0xf]
  %v411 = vld [vmem:[%s0 + $0x2c] sm:$0xf]
  %v412 = vld [vmem:[%s0 + $0x30] sm:$0xf]
  %v413 = vld [vmem:[%s0 + $0x34] sm:$0xf]
  %v414 = vld [vmem:[%s0 + $0x38] sm:$0xf]
  %v415 = vld [vmem:[%s0 + $0x3c] sm:$0xf]
  %v416 = vld [vmem:[%s0 + $0x40] sm:$0xf]
  %v417 = vld [vmem:[%s0 + $0x44] sm:$0xf]
  %v418 = vld [vmem:[%s0 + $0x48] sm:$0xf]
  %v419 = vld [vmem:[%s0 + $0x4c] sm:$0xf]
  %v420 = vld [vmem:[%s0 + $0x50] sm:$0xf]
  %v421 = vld [vmem:[%s0 + $0x54] sm:$0xf]
  %v422 = vld [vmem:[%s0 + $0x58] sm:$0xf]
  %v423 = vld [vmem:[%s0 + $0x5c] sm:$0xf]
  %v424 = vld [vmem:[%s0 + $0x60] sm:$0xf]
  %v425 = vld [vmem:[%s0 + $0x64] sm:$0xf]
  %v426 = vld [vmem:[%s0 + $0x68] sm:$0xf]
  %v427 = vld [vmem:[%s0 + $0x6c] sm:$0xf]
  %v428 = vld [vmem:[%s0 + $0x70] sm:$0xf]
  %v429 = vld [vmem:[%s0 + $0x74] sm:$0xf]
  %v430 = vld [vmem:[%s0 + $0x78] sm:$0xf]
  %v431 = vld [vmem:[%s0 + $0x7c] sm:$0xf]
  %v432 = vld [vmem:[%s0 + $0x80] sm:$0xf]
  %v433 = vld [vmem:[%s0 + $0x84] sm:$0xf]
  %v434 = vld [vmem:[%s0 + $0x88] sm:$0xf]
  %v435 = vld [vmem:[%s0 + $0x8c] sm:$0xf]
  %v436 = vld [vmem:[%s0 + $0x90] sm:$0xf]
  %v437 = vld [vmem:[%s0 + $0x94] sm:$0xf]
  %v438 = vld [vmem:[%s0 + $0x98] sm:$0xf]
  %v439 = vld [vmem:[%s0 + $0x9c] sm:$0xf]
  %v440 = vld [vmem:[%s0 + $0xa0] sm:$0xf]
  %v441 = vld [vmem:[%s0 + $0xa4] sm:$0xf]
  %v442 = vld [vmem:[%s0 + $0xa8] sm:$0xf]
  %v443 = vld [vmem:[%s0 + $0xac] sm:$0xf]
  %v444 = vld [vmem:[%s0 + $0xb0] sm:$0xf]
  %v445 = vld [vmem:[%s0 + $0xb4] sm:$0xf]
  %v446 = vld [vmem:[%s0 + $0xb8] sm:$0xf]
  %v447 = vld [vmem:[%s0 + $0xbc] sm:$0xf]
  %v448 = vld [vmem:[%s0 + $0xc0] sm:$0xf]
  %v449 = vld [vmem:[%s0 + $0xc4] sm:$0xf]
  %v450 = vld [vmem:[%s0 + $0xc8] sm:$0xf]
  %v451 = vld [vmem:[%s0 + $0xcc] sm:$0xf]
  %v452 = vld [vmem:[%s0 + $0xd0] sm:$0xf]
  %v453 = vld [vmem:[%s0 + $0xd4] sm:$0xf]
  %v454 = vld [vmem:[%s0 + $0xd8] sm:$0xf]
  %v455 = vld [vmem:[%s0 + $0xdc] sm:$0xf]
  %v456 = vld [vmem:[%s0 + $0xe0] sm:$0xf]
  %v457 = vld [vmem:[%s0 + $0xe4] sm:$0xf]
  %v458 = vld [vmem:[%s0 + $0xe8] sm:$0xf]
  %v459 = vld [vmem:[%s0 + $0xec] sm:$0xf]
  %v460 = vld [vmem:[%s0 + $0xf0] sm:$0xf]
  %v461 = vld [vmem:[%s0 + $0xf4] sm:$0xf]
  %v462 = vld [vmem:[%s0 + $0xf8] sm:$0xf]
  %v463 = vld [vmem:[%s0 + $0xfc] sm:$0xf]
  %v464 = vld [vmem:[%s3] sm:$0xf]
  %v465 = vld [vmem:[%s4] sm:$0x1]
  %v467 = vlaneseq
  %v468 = vshrl.u32 %v467, 7
  %v469 = vsub.s32 0, %v468
  %v470 = vrot.slane %v465, %v469
  %v536 = vunpack.c.l.b16 %v400
  %v537 = vunpack.c.l.b16 %v401
  %v538 = vunpack.c.l.b16 %v402
  %v539 = vunpack.c.l.b16 %v403
  %v540 = vunpack.c.l.b16 %v404
  %v541 = vunpack.c.l.b16 %v405
  %v542 = vunpack.c.l.b16 %v406
  %v543 = vunpack.c.l.b16 %v407
  %v544 = vunpack.c.l.b16 %v408
  %v545 = vunpack.c.l.b16 %v409
  %v546 = vunpack.c.l.b16 %v410
  %v547 = vunpack.c.l.b16 %v411
  %v548 = vunpack.c.l.b16 %v412
  %v549 = vunpack.c.l.b16 %v413
  %v550 = vunpack.c.l.b16 %v414
  %v551 = vunpack.c.l.b16 %v415
  %v552 = vunpack.c.l.b16 %v416
  %v553 = vunpack.c.l.b16 %v417
  %v554 = vunpack.c.l.b16 %v418
  %v555 = vunpack.c.l.b16 %v419
  %v556 = vunpack.c.l.b16 %v420
  %v557 = vunpack.c.l.b16 %v421
  %v558 = vunpack.c.l.b16 %v422
  %v559 = vunpack.c.l.b16 %v423
  %v560 = vunpack.c.l.b16 %v424
  %v561 = vunpack.c.l.b16 %v425
  %v562 = vunpack.c.l.b16 %v426
  %v563 = vunpack.c.l.b16 %v427
  %v564 = vunpack.c.l.b16 %v428
  %v565 = vunpack.c.l.b16 %v429
  %v566 = vunpack.c.l.b16 %v430
  %v567 = vunpack.c.l.b16 %v431
  %v568 = vunpack.c.l.b16 %v432
  %v569 = vunpack.c.l.b16 %v433
  %v570 = vunpack.c.l.b16 %v434
  %v571 = vunpack.c.l.b16 %v435
  %v572 = vunpack.c.l.b16 %v436
  %v573 = vunpack.c.l.b16 %v437
  %v574 = vunpack.c.l.b16 %v438
  %v575 = vunpack.c.l.b16 %v439
  %v576 = vunpack.c.l.b16 %v440
  %v577 = vunpack.c.l.b16 %v441
  %v578 = vunpack.c.l.b16 %v442
  %v579 = vunpack.c.l.b16 %v443
  %v580 = vunpack.c.l.b16 %v444
  %v581 = vunpack.c.l.b16 %v445
  %v582 = vunpack.c.l.b16 %v446
  %v583 = vunpack.c.l.b16 %v447
  %v584 = vunpack.c.l.b16 %v448
  %v585 = vunpack.c.l.b16 %v449
  %v586 = vunpack.c.l.b16 %v450
  %v587 = vunpack.c.l.b16 %v451
  %v588 = vunpack.c.l.b16 %v452
  %v589 = vunpack.c.l.b16 %v453
  %v590 = vunpack.c.l.b16 %v454
  %v591 = vunpack.c.l.b16 %v455
  %v592 = vunpack.c.l.b16 %v456
  %v593 = vunpack.c.l.b16 %v457
  %v594 = vunpack.c.l.b16 %v458
  %v595 = vunpack.c.l.b16 %v459
  %v596 = vunpack.c.l.b16 %v460
  %v597 = vunpack.c.l.b16 %v461
  %v598 = vunpack.c.l.b16 %v462
  %v599 = vunpack.c.l.b16 %v463
  %v600 = vpack.c.b16 %v537, %v536
  %v601 = vpack.c.b16 %v539, %v538
  %v602 = vpack.c.b16 %v541, %v540
  %v603 = vpack.c.b16 %v543, %v542
  %v604 = vpack.c.b16 %v545, %v544
  %v605 = vpack.c.b16 %v547, %v546
  %v606 = vpack.c.b16 %v549, %v548
  %v607 = vpack.c.b16 %v551, %v550
  %v608 = vpack.c.b16 %v553, %v552
  %v609 = vpack.c.b16 %v555, %v554
  %v610 = vpack.c.b16 %v557, %v556
  %v611 = vpack.c.b16 %v559, %v558
  %v612 = vpack.c.b16 %v561, %v560
  %v613 = vpack.c.b16 %v563, %v562
  %v614 = vpack.c.b16 %v565, %v564
  %v615 = vpack.c.b16 %v567, %v566
  %v616 = vpack.c.b16 %v569, %v568
  %v617 = vpack.c.b16 %v571, %v570
  %v618 = vpack.c.b16 %v573, %v572
  %v619 = vpack.c.b16 %v575, %v574
  %v620 = vpack.c.b16 %v577, %v576
  %v621 = vpack.c.b16 %v579, %v578
  %v622 = vpack.c.b16 %v581, %v580
  %v623 = vpack.c.b16 %v583, %v582
  %v624 = vpack.c.b16 %v585, %v584
  %v625 = vpack.c.b16 %v587, %v586
  %v626 = vpack.c.b16 %v589, %v588
  %v627 = vpack.c.b16 %v591, %v590
  %v628 = vpack.c.b16 %v593, %v592
  %v629 = vpack.c.b16 %v595, %v594
  %v630 = vpack.c.b16 %v597, %v596
  %v631 = vpack.c.b16 %v599, %v598
  %vm632 = vcmask 64512
  %v634 = vsel %vm632, %v600, 0
  %v637 = vsel %vm632, %v601, 0
  %v640 = vsel %vm632, %v602, 0
  %v643 = vsel %vm632, %v603, 0
  %v646 = vsel %vm632, %v604, 0
  %v649 = vsel %vm632, %v605, 0
  %v652 = vsel %vm632, %v606, 0
  %v655 = vsel %vm632, %v607, 0
  %v658 = vsel %vm632, %v608, 0
  %v661 = vsel %vm632, %v609, 0
  %v664 = vsel %vm632, %v610, 0
  %v667 = vsel %vm632, %v611, 0
  %v670 = vsel %vm632, %v612, 0
  %v673 = vsel %vm632, %v613, 0
  %v676 = vsel %vm632, %v614, 0
  %v679 = vsel %vm632, %v615, 0
  %v682 = vsel %vm632, %v616, 0
  %v685 = vsel %vm632, %v617, 0
  %v688 = vsel %vm632, %v618, 0
  %v691 = vsel %vm632, %v619, 0
  %v694 = vsel %vm632, %v620, 0
  %v697 = vsel %vm632, %v621, 0
  %v700 = vsel %vm632, %v622, 0
  %v703 = vsel %vm632, %v623, 0
  %v706 = vsel %vm632, %v624, 0
  %v709 = vsel %vm632, %v625, 0
  %v712 = vsel %vm632, %v626, 0
  %v715 = vsel %vm632, %v627, 0
  %v718 = vsel %vm632, %v628, 0
  %v721 = vsel %vm632, %v629, 0
  %v724 = vsel %vm632, %v630, 0
  %v727 = vsel %vm632, %v631, 0
  %vm729 = vcmask 1043456
  %v731 = vsel %vm729, %v464, 0
  %733 = vmatprep.subr.bf16.mxu0 0
  %734 = vmatpush1.bf16.msra.mxu0 %v731
  %735 = vmatprep.subr.bf16.mxu0 0
  %736 = vmatpush1.bf16.msra.mxu0 0
  %737 = vmatprep.subr.bf16.mxu0 0
  %738 = vmatpush1.bf16.msra.mxu0 0
  %739 = vmatprep.subr.bf16.mxu0 0
  %740 = vmatpush1.bf16.msra.mxu0 0
  %741 = vmatprep.subr.bf16.mxu0 0
  %742 = vmatpush1.bf16.msra.mxu0 0
  %743 = vmatprep.subr.bf16.mxu0 0
  %744 = vmatpush1.bf16.msra.mxu0 0
  %745 = vmatprep.subr.bf16.mxu0 0
  %746 = vmatpush1.bf16.msra.mxu0 0
  %747 = vmatprep.subr.bf16.mxu0 0
  %748 = vmatpush1.bf16.msra.mxu0 0
  %749 = vmatprep.subr.bf16.mxu0 0
  %750 = vmatpush1.bf16.msra.mxu0 0
  %751 = vmatprep.subr.bf16.mxu0 0
  %752 = vmatpush1.bf16.msra.mxu0 0
  %753 = vmatprep.subr.bf16.mxu0 0
  %754 = vmatpush1.bf16.msra.mxu0 0
  %755 = vmatprep.subr.bf16.mxu0 0
  %756 = vmatpush1.bf16.msra.mxu0 0
  %757 = vmatprep.subr.bf16.mxu0 0
  %758 = vmatpush1.bf16.msra.mxu0 0
  %759 = vmatprep.subr.bf16.mxu0 0
  %760 = vmatpush1.bf16.msra.mxu0 0
  %761 = vmatprep.subr.bf16.mxu0 0
  %762 = vmatpush1.bf16.msra.mxu0 0
  %763 = vmatprep.subr.bf16.mxu0 0
  %764 = vmatpush1.bf16.msra.mxu0 0
  %765 = vmatprep.mubr.bf16.mxu0 0
  %766 = vmatmul.mubr.bf16.gmra.mrb[0].mxu0 %v634
  %v767 = vpop.f32.mrb[0].mxu0
  %v768 = vadd.f32 %v470, %v767
  %v769 = vpop.f32.mrb[0].mxu0
  %v770 = vpop.f32.mrb[0].mxu0
  %v771 = vadd.f32 %v470, %v770
  %v772 = vpop.f32.mrb[0].mxu0
  %773 = vmatprep.mubr.bf16.mxu0 0
  %774 = vmatmul.mubr.bf16.gmra.mrb[0].mxu0 %v637
  %v775 = vpop.f32.mrb[0].mxu0
  %v776 = vadd.f32 %v470, %v775
  %v777 = vpop.f32.mrb[0].mxu0
  %v778 = vpop.f32.mrb[0].mxu0
  %v779 = vadd.f32 %v470, %v778
  %v780 = vpop.f32.mrb[0].mxu0
  %781 = vmatprep.mubr.bf16.mxu0 0
  %782 = vmatmul.mubr.bf16.gmra.mrb[0].mxu0 %v640
  %v783 = vpop.f32.mrb[0].mxu0
  %v784 = vadd.f32 %v470, %v783
  %v785 = vpop.f32.mrb[0].mxu0
  %v786 = vpop.f32.mrb[0].mxu0
  %v787 = vadd.f32 %v470, %v786
  %v788 = vpop.f32.mrb[0].mxu0
  %789 = vmatprep.mubr.bf16.mxu0 0
  %790 = vmatmul.mubr.bf16.gmra.mrb[0].mxu0 %v643
  %v791 = vpop.f32.mrb[0].mxu0
  %v792 = vadd.f32 %v470, %v791
  %v793 = vpop.f32.mrb[0].mxu0
  %v794 = vpop.f32.mrb[0].mxu0
  %v795 = vadd.f32 %v470, %v794
  %v796 = vpop.f32.mrb[0].mxu0
  %797 = vmatprep.mubr.bf16.mxu0 0
  %798 = vmatmul.mubr.bf16.gmra.mrb[0].mxu0 %v646
  %v799 = vpop.f32.mrb[0].mxu0
  %v800 = vadd.f32 %v470, %v799
  %v801 = vpop.f32.mrb[0].mxu0
  %v802 = vpop.f32.mrb[0].mxu0
  %v803 = vadd.f32 %v470, %v802
  %v804 = vpop.f32.mrb[0].mxu0
  %805 = vmatprep.mubr.bf16.mxu0 0
  %806 = vmatmul.mubr.bf16.gmra.mrb[0].mxu0 %v649
  %v807 = vpop.f32.mrb[0].mxu0
  %v808 = vadd.f32 %v470, %v807
  %v809 = vpop.f32.mrb[0].mxu0
  %v810 = vpop.f32.mrb[0].mxu0
  %v811 = vadd.f32 %v470, %v810
  %v812 = vpop.f32.mrb[0].mxu0
  %813 = vmatprep.mubr.bf16.mxu0 0
  %814 = vmatmul.mubr.bf16.gmra.mrb[0].mxu0 %v652
  %v815 = vpop.f32.mrb[0].mxu0
  %v816 = vadd.f32 %v470, %v815
  %v817 = vpop.f32.mrb[0].mxu0
  %v818 = vpop.f32.mrb[0].mxu0
  %v819 = vadd.f32 %v470, %v818
  %v820 = vpop.f32.mrb[0].mxu0
  %821 = vmatprep.mubr.bf16.mxu0 0
  %822 = vmatmul.mubr.bf16.gmra.mrb[0].mxu0 %v655
  %v823 = vpop.f32.mrb[0].mxu0
  %v824 = vadd.f32 %v470, %v823
  %v825 = vpop.f32.mrb[0].mxu0
  %v826 = vpop.f32.mrb[0].mxu0
  %v827 = vadd.f32 %v470, %v826
  %v828 = vpop.f32.mrb[0].mxu0
  %829 = vmatprep.mubr.bf16.mxu0 0
  %830 = vmatmul.mubr.bf16.gmra.mrb[0].mxu0 %v658
  %v831 = vpop.f32.mrb[0].mxu0
  %v832 = vadd.f32 %v470, %v831
  %v833 = vpop.f32.mrb[0].mxu0
  %v834 = vpop.f32.mrb[0].mxu0
  %v835 = vadd.f32 %v470, %v834
  %v836 = vpop.f32.mrb[0].mxu0
  %837 = vmatprep.mubr.bf16.mxu0 0
  %838 = vmatmul.mubr.bf16.gmra.mrb[0].mxu0 %v661
  %v839 = vpop.f32.mrb[0].mxu0
  %v840 = vadd.f32 %v470, %v839
  %v841 = vpop.f32.mrb[0].mxu0
  %v842 = vpop.f32.mrb[0].mxu0
  %v843 = vadd.f32 %v470, %v842
  %v844 = vpop.f32.mrb[0].mxu0
  %845 = vmatprep.mubr.bf16.mxu0 0
  %846 = vmatmul.mubr.bf16.gmra.mrb[0].mxu0 %v664
  %v847 = vpop.f32.mrb[0].mxu0
  %v848 = vadd.f32 %v470, %v847
  %v849 = vpop.f32.mrb[0].mxu0
  %v850 = vpop.f32.mrb[0].mxu0
  %v851 = vadd.f32 %v470, %v850
  %v852 = vpop.f32.mrb[0].mxu0
  %853 = vmatprep.mubr.bf16.mxu0 0
  %854 = vmatmul.mubr.bf16.gmra.mrb[0].mxu0 %v667
  %v855 = vpop.f32.mrb[0].mxu0
  %v856 = vadd.f32 %v470, %v855
  %v857 = vpop.f32.mrb[0].mxu0
  %v858 = vpop.f32.mrb[0].mxu0
  %v859 = vadd.f32 %v470, %v858
  %v860 = vpop.f32.mrb[0].mxu0
  %861 = vmatprep.mubr.bf16.mxu0 0
  %862 = vmatmul.mubr.bf16.gmra.mrb[0].mxu0 %v670
  %v863 = vpop.f32.mrb[0].mxu0
  %v864 = vadd.f32 %v470, %v863
  %v865 = vpop.f32.mrb[0].mxu0
  %v866 = vpop.f32.mrb[0].mxu0
  %v867 = vadd.f32 %v470, %v866
  %v868 = vpop.f32.mrb[0].mxu0
  %869 = vmatprep.mubr.bf16.mxu0 0
  %870 = vmatmul.mubr.bf16.gmra.mrb[0].mxu0 %v673
  %v871 = vpop.f32.mrb[0].mxu0
  %v872 = vadd.f32 %v470, %v871
  %v873 = vpop.f32.mrb[0].mxu0
  %v874 = vpop.f32.mrb[0].mxu0
  %v875 = vadd.f32 %v470, %v874
  %v876 = vpop.f32.mrb[0].mxu0
  %877 = vmatprep.mubr.bf16.mxu0 0
  %878 = vmatmul.mubr.bf16.gmra.mrb[0].mxu0 %v676
  %v879 = vpop.f32.mrb[0].mxu0
  %v880 = vadd.f32 %v470, %v879
  %v881 = vpop.f32.mrb[0].mxu0
  %v882 = vpop.f32.mrb[0].mxu0
  %v883 = vadd.f32 %v470, %v882
  %v884 = vpop.f32.mrb[0].mxu0
  %885 = vmatprep.mubr.bf16.mxu0 0
  %886 = vmatmul.mubr.bf16.gmra.mrb[0].mxu0 %v679
  %v887 = vpop.f32.mrb[0].mxu0
  %v888 = vadd.f32 %v470, %v887
  %v889 = vpop.f32.mrb[0].mxu0
  %v890 = vpop.f32.mrb[0].mxu0
  %v891 = vadd.f32 %v470, %v890
  %v892 = vpop.f32.mrb[0].mxu0
  %893 = vmatprep.mubr.bf16.mxu0 0
  %894 = vmatmul.mubr.bf16.gmra.mrb[0].mxu0 %v682
  %v895 = vpop.f32.mrb[0].mxu0
  %v896 = vadd.f32 %v470, %v895
  %v897 = vpop.f32.mrb[0].mxu0
  %v898 = vpop.f32.mrb[0].mxu0
  %v899 = vadd.f32 %v470, %v898
  %v900 = vpop.f32.mrb[0].mxu0
  %901 = vmatprep.mubr.bf16.mxu0 0
  %902 = vmatmul.mubr.bf16.gmra.mrb[0].mxu0 %v685
  %v903 = vpop.f32.mrb[0].mxu0
  %v904 = vadd.f32 %v470, %v903
  %v905 = vpop.f32.mrb[0].mxu0
  %v906 = vpop.f32.mrb[0].mxu0
  %v907 = vadd.f32 %v470, %v906
  %v908 = vpop.f32.mrb[0].mxu0
  %909 = vmatprep.mubr.bf16.mxu0 0
  %910 = vmatmul.mubr.bf16.gmra.mrb[0].mxu0 %v688
  %v911 = vpop.f32.mrb[0].mxu0
  %v912 = vadd.f32 %v470, %v911
  %v913 = vpop.f32.mrb[0].mxu0
  %v914 = vpop.f32.mrb[0].mxu0
  %v915 = vadd.f32 %v470, %v914
  %v916 = vpop.f32.mrb[0].mxu0
  %917 = vmatprep.mubr.bf16.mxu0 0
  %918 = vmatmul.mubr.bf16.gmra.mrb[0].mxu0 %v691
  %v919 = vpop.f32.mrb[0].mxu0
  %v920 = vadd.f32 %v470, %v919
  %v921 = vpop.f32.mrb[0].mxu0
  %v922 = vpop.f32.mrb[0].mxu0
  %v923 = vadd.f32 %v470, %v922
  %v924 = vpop.f32.mrb[0].mxu0
  %925 = vmatprep.mubr.bf16.mxu0 0
  %926 = vmatmul.mubr.bf16.gmra.mrb[0].mxu0 %v694
  %v927 = vpop.f32.mrb[0].mxu0
  %v928 = vadd.f32 %v470, %v927
  %v929 = vpop.f32.mrb[0].mxu0
  %v930 = vpop.f32.mrb[0].mxu0
  %v931 = vadd.f32 %v470, %v930
  %v932 = vpop.f32.mrb[0].mxu0
  %933 = vmatprep.mubr.bf16.mxu0 0
  %934 = vmatmul.mubr.bf16.gmra.mrb[0].mxu0 %v697
  %v935 = vpop.f32.mrb[0].mxu0
  %v936 = vadd.f32 %v470, %v935
  %v937 = vpop.f32.mrb[0].mxu0
  %v938 = vpop.f32.mrb[0].mxu0
  %v939 = vadd.f32 %v470, %v938
  %v940 = vpop.f32.mrb[0].mxu0
  %941 = vmatprep.mubr.bf16.mxu0 0
  %942 = vmatmul.mubr.bf16.gmra.mrb[0].mxu0 %v700
  %v943 = vpop.f32.mrb[0].mxu0
  %v944 = vadd.f32 %v470, %v943
  %v945 = vpop.f32.mrb[0].mxu0
  %v946 = vpop.f32.mrb[0].mxu0
  %v947 = vadd.f32 %v470, %v946
  %v948 = vpop.f32.mrb[0].mxu0
  %949 = vmatprep.mubr.bf16.mxu0 0
  %950 = vmatmul.mubr.bf16.gmra.mrb[0].mxu0 %v703
  %v951 = vpop.f32.mrb[0].mxu0
  %v952 = vadd.f32 %v470, %v951
  %v953 = vpop.f32.mrb[0].mxu0
  %v954 = vpop.f32.mrb[0].mxu0
  %v955 = vadd.f32 %v470, %v954
  %v956 = vpop.f32.mrb[0].mxu0
  %957 = vmatprep.mubr.bf16.mxu0 0
  %958 = vmatmul.mubr.bf16.gmra.mrb[0].mxu0 %v706
  %v959 = vpop.f32.mrb[0].mxu0
  %v960 = vadd.f32 %v470, %v959
  %v961 = vpop.f32.mrb[0].mxu0
  %v962 = vpop.f32.mrb[0].mxu0
  %v963 = vadd.f32 %v470, %v962
  %v964 = vpop.f32.mrb[0].mxu0
  %965 = vmatprep.mubr.bf16.mxu0 0
  %966 = vmatmul.mubr.bf16.gmra.mrb[0].mxu0 %v709
  %v967 = vpop.f32.mrb[0].mxu0
  %v968 = vadd.f32 %v470, %v967
  %v969 = vpop.f32.mrb[0].mxu0
  %v970 = vpop.f32.mrb[0].mxu0
  %v971 = vadd.f32 %v470, %v970
  %v972 = vpop.f32.mrb[0].mxu0
  %973 = vmatprep.mubr.bf16.mxu0 0
  %974 = vmatmul.mubr.bf16.gmra.mrb[0].mxu0 %v712
  %v975 = vpop.f32.mrb[0].mxu0
  %v976 = vadd.f32 %v470, %v975
  %v977 = vpop.f32.mrb[0].mxu0
  %v978 = vpop.f32.mrb[0].mxu0
  %v979 = vadd.f32 %v470, %v978
  %v980 = vpop.f32.mrb[0].mxu0
  %981 = vmatprep.mubr.bf16.mxu0 0
  %982 = vmatmul.mubr.bf16.gmra.mrb[0].mxu0 %v715
  %v983 = vpop.f32.mrb[0].mxu0
  %v984 = vadd.f32 %v470, %v983
  %v985 = vpop.f32.mrb[0].mxu0
  %v986 = vpop.f32.mrb[0].mxu0
  %v987 = vadd.f32 %v470, %v986
  %v988 = vpop.f32.mrb[0].mxu0
  %989 = vmatprep.mubr.bf16.mxu0 0
  %990 = vmatmul.mubr.bf16.gmra.mrb[0].mxu0 %v718
  %v991 = vpop.f32.mrb[0].mxu0
  %v992 = vadd.f32 %v470, %v991
  %v993 = vpop.f32.mrb[0].mxu0
  %v994 = vpop.f32.mrb[0].mxu0
  %v995 = vadd.f32 %v470, %v994
  %v996 = vpop.f32.mrb[0].mxu0
  %997 = vmatprep.mubr.bf16.mxu0 0
  %998 = vmatmul.mubr.bf16.gmra.mrb[0].mxu0 %v721
  %v999 = vpop.f32.mrb[0].mxu0
  %v1000 = vadd.f32 %v470, %v999
  %v1001 = vpop.f32.mrb[0].mxu0
  %v1002 = vpop.f32.mrb[0].mxu0
  %v1003 = vadd.f32 %v470, %v1002
  %v1004 = vpop.f32.mrb[0].mxu0
  %1005 = vmatprep.mubr.bf16.mxu0 0
  %1006 = vmatmul.mubr.bf16.gmra.mrb[0].mxu0 %v724
  %v1007 = vpop.f32.mrb[0].mxu0
  %v1008 = vadd.f32 %v470, %v1007
  %v1009 = vpop.f32.mrb[0].mxu0
  %v1010 = vpop.f32.mrb[0].mxu0
  %v1011 = vadd.f32 %v470, %v1010
  %v1012 = vpop.f32.mrb[0].mxu0
  %1013 = vmatprep.mubr.bf16.mxu0 0
  %1014 = vmatmul.mubr.bf16.gmra.mrb[0].mxu0 %v727
  %v1015 = vpop.f32.mrb[0].mxu0
  %v1016 = vadd.f32 %v470, %v1015
  %v1017 = vpop.f32.mrb[0].mxu0
  %v1018 = vpop.f32.mrb[0].mxu0
  %v1019 = vadd.f32 %v470, %v1018
  %v1020 = vpop.f32.mrb[0].mxu0
  %1021 = vdwg.mxu0
  %vm1022 = vcmp.ge.f32.partialorder %v768, 0.0
  %vm1023 = vcmp.ge.f32.partialorder %v771, 0.0
  %vm1024 = vcmp.ge.f32.partialorder %v776, 0.0
  %vm1025 = vcmp.ge.f32.partialorder %v779, 0.0
  %vm1026 = vcmp.ge.f32.partialorder %v784, 0.0
  %vm1027 = vcmp.ge.f32.partialorder %v787, 0.0
  %vm1028 = vcmp.ge.f32.partialorder %v792, 0.0
  %vm1029 = vcmp.ge.f32.partialorder %v795, 0.0
  %vm1030 = vcmp.ge.f32.partialorder %v800, 0.0
  %vm1031 = vcmp.ge.f32.partialorder %v803, 0.0
  %vm1032 = vcmp.ge.f32.partialorder %v808, 0.0
  %vm1033 = vcmp.ge.f32.partialorder %v811, 0.0
  %vm1034 = vcmp.ge.f32.partialorder %v816, 0.0
  %vm1035 = vcmp.ge.f32.partialorder %v819, 0.0
  %vm1036 = vcmp.ge.f32.partialorder %v824, 0.0
  %vm1037 = vcmp.ge.f32.partialorder %v827, 0.0
  %vm1038 = vcmp.ge.f32.partialorder %v832, 0.0
  %vm1039 = vcmp.ge.f32.partialorder %v835, 0.0
  %vm1040 = vcmp.ge.f32.partialorder %v840, 0.0
  %vm1041 = vcmp.ge.f32.partialorder %v843, 0.0
  %vm1042 = vcmp.ge.f32.partialorder %v848, 0.0
  %vm1043 = vcmp.ge.f32.partialorder %v851, 0.0
  %vm1044 = vcmp.ge.f32.partialorder %v856, 0.0
  %vm1045 = vcmp.ge.f32.partialorder %v859, 0.0
  %vm1046 = vcmp.ge.f32.partialorder %v864, 0.0
  %vm1047 = vcmp.ge.f32.partialorder %v867, 0.0
  %vm1048 = vcmp.ge.f32.partialorder %v872, 0.0
  %vm1049 = vcmp.ge.f32.partialorder %v875, 0.0
  %vm1050 = vcmp.ge.f32.partialorder %v880, 0.0
  %vm1051 = vcmp.ge.f32.partialorder %v883, 0.0
  %vm1052 = vcmp.ge.f32.partialorder %v888, 0.0
  %vm1053 = vcmp.ge.f32.partialorder %v891, 0.0
  %vm1054 = vcmp.ge.f32.partialorder %v896, 0.0
  %vm1055 = vcmp.ge.f32.partialorder %v899, 0.0
  %vm1056 = vcmp.ge.f32.partialorder %v904, 0.0
  %vm1057 = vcmp.ge.f32.partialorder %v907, 0.0
  %vm1058 = vcmp.ge.f32.partialorder %v912, 0.0
  %vm1059 = vcmp.ge.f32.partialorder %v915, 0.0
  %vm1060 = vcmp.ge.f32.partialorder %v920, 0.0
  %vm1061 = vcmp.ge.f32.partialorder %v923, 0.0
  %vm1062 = vcmp.ge.f32.partialorder %v928, 0.0
  %vm1063 = vcmp.ge.f32.partialorder %v931, 0.0
  %vm1064 = vcmp.ge.f32.partialorder %v936, 0.0
  %vm1065 = vcmp.ge.f32.partialorder %v939, 0.0
  %vm1066 = vcmp.ge.f32.partialorder %v944, 0.0
  %vm1067 = vcmp.ge.f32.partialorder %v947, 0.0
  %vm1068 = vcmp.ge.f32.partialorder %v952, 0.0
  %vm1069 = vcmp.ge.f32.partialorder %v955, 0.0
  %vm1070 = vcmp.ge.f32.partialorder %v960, 0.0
  %vm1071 = vcmp.ge.f32.partialorder %v963, 0.0
  %vm1072 = vcmp.ge.f32.partialorder %v968, 0.0
  %vm1073 = vcmp.ge.f32.partialorder %v971, 0.0
  %vm1074 = vcmp.ge.f32.partialorder %v976, 0.0
  %vm1075 = vcmp.ge.f32.partialorder %v979, 0.0
  %vm1076 = vcmp.ge.f32.partialorder %v984, 0.0
  %vm1077 = vcmp.ge.f32.partialorder %v987, 0.0
  %vm1078 = vcmp.ge.f32.partialorder %v992, 0.0
  %vm1079 = vcmp.ge.f32.partialorder %v995, 0.0
  %vm1080 = vcmp.ge.f32.partialorder %v1000, 0.0
  %vm1081 = vcmp.ge.f32.partialorder %v1003, 0.0
  %vm1082 = vcmp.ge.f32.partialorder %v1008, 0.0
  %vm1083 = vcmp.ge.f32.partialorder %v1011, 0.0
  %vm1084 = vcmp.ge.f32.partialorder %v1016, 0.0
  %vm1085 = vcmp.ge.f32.partialorder %v1019, 0.0
  %v1086 = vmul.f32 %v768, 0.1
  %v1087 = vmul.f32 %v771, 0.1
  %v1088 = vmul.f32 %v776, 0.1
  %v1089 = vmul.f32 %v779, 0.1
  %v1090 = vmul.f32 %v784, 0.1
  %v1091 = vmul.f32 %v787, 0.1
  %v1092 = vmul.f32 %v792, 0.1
  %v1093 = vmul.f32 %v795, 0.1
  %v1094 = vmul.f32 %v800, 0.1
  %v1095 = vmul.f32 %v803, 0.1
  %v1096 = vmul.f32 %v808, 0.1
  %v1097 = vmul.f32 %v811, 0.1
  %v1098 = vmul.f32 %v816, 0.1
  %v1099 = vmul.f32 %v819, 0.1
  %v1100 = vmul.f32 %v824, 0.1
  %v1101 = vmul.f32 %v827, 0.1
  %v1102 = vmul.f32 %v832, 0.1
  %v1103 = vmul.f32 %v835, 0.1
  %v1104 = vmul.f32 %v840, 0.1
  %v1105 = vmul.f32 %v843, 0.1
  %v1106 = vmul.f32 %v848, 0.1
  %v1107 = vmul.f32 %v851, 0.1
  %v1108 = vmul.f32 %v856, 0.1
  %v1109 = vmul.f32 %v859, 0.1
  %v1110 = vmul.f32 %v864, 0.1
  %v1111 = vmul.f32 %v867, 0.1
  %v1112 = vmul.f32 %v872, 0.1
  %v1113 = vmul.f32 %v875, 0.1
  %v1114 = vmul.f32 %v880, 0.1
  %v1115 = vmul.f32 %v883, 0.1
  %v1116 = vmul.f32 %v888, 0.1
  %v1117 = vmul.f32 %v891, 0.1
  %v1118 = vmul.f32 %v896, 0.1
  %v1119 = vmul.f32 %v899, 0.1
  %v1120 = vmul.f32 %v904, 0.1
  %v1121 = vmul.f32 %v907, 0.1
  %v1122 = vmul.f32 %v912, 0.1
  %v1123 = vmul.f32 %v915, 0.1
  %v1124 = vmul.f32 %v920, 0.1
  %v1125 = vmul.f32 %v923, 0.1
  %v1126 = vmul.f32 %v928, 0.1
  %v1127 = vmul.f32 %v931, 0.1
  %v1128 = vmul.f32 %v936, 0.1
  %v1129 = vmul.f32 %v939, 0.1
  %v1130 = vmul.f32 %v944, 0.1
  %v1131 = vmul.f32 %v947, 0.1
  %v1132 = vmul.f32 %v952, 0.1
  %v1133 = vmul.f32 %v955, 0.1
  %v1134 = vmul.f32 %v960, 0.1
  %v1135 = vmul.f32 %v963, 0.1
  %v1136 = vmul.f32 %v968, 0.1
  %v1137 = vmul.f32 %v971, 0.1
  %v1138 = vmul.f32 %v976, 0.1
  %v1139 = vmul.f32 %v979, 0.1
  %v1140 = vmul.f32 %v984, 0.1
  %v1141 = vmul.f32 %v987, 0.1
  %v1142 = vmul.f32 %v992, 0.1
  %v1143 = vmul.f32 %v995, 0.1
  %v1144 = vmul.f32 %v1000, 0.1
  %v1145 = vmul.f32 %v1003, 0.1
  %v1146 = vmul.f32 %v1008, 0.1
  %v1147 = vmul.f32 %v1011, 0.1
  %v1148 = vmul.f32 %v1016, 0.1
  %v1149 = vmul.f32 %v1019, 0.1
  %v1150 = vsel %vm1022, %v768, %v1086
  %v1151 = vsel %vm1023, %v771, %v1087
  %v1152 = vsel %vm1024, %v776, %v1088
  %v1153 = vsel %vm1025, %v779, %v1089
  %v1154 = vsel %vm1026, %v784, %v1090
  %v1155 = vsel %vm1027, %v787, %v1091
  %v1156 = vsel %vm1028, %v792, %v1092
  %v1157 = vsel %vm1029, %v795, %v1093
  %v1158 = vsel %vm1030, %v800, %v1094
  %v1159 = vsel %vm1031, %v803, %v1095
  %v1160 = vsel %vm1032, %v808, %v1096
  %v1161 = vsel %vm1033, %v811, %v1097
  %v1162 = vsel %vm1034, %v816, %v1098
  %v1163 = vsel %vm1035, %v819, %v1099
  %v1164 = vsel %vm1036, %v824, %v1100
  %v1165 = vsel %vm1037, %v827, %v1101
  %v1166 = vsel %vm1038, %v832, %v1102
  %v1167 = vsel %vm1039, %v835, %v1103
  %v1168 = vsel %vm1040, %v840, %v1104
  %v1169 = vsel %vm1041, %v843, %v1105
  %v1170 = vsel %vm1042, %v848, %v1106
  %v1171 = vsel %vm1043, %v851, %v1107
  %v1172 = vsel %vm1044, %v856, %v1108
  %v1173 = vsel %vm1045, %v859, %v1109
  %v1174 = vsel %vm1046, %v864, %v1110
  %v1175 = vsel %vm1047, %v867, %v1111
  %v1176 = vsel %vm1048, %v872, %v1112
  %v1177 = vsel %vm1049, %v875, %v1113
  %v1178 = vsel %vm1050, %v880, %v1114
  %v1179 = vsel %vm1051, %v883, %v1115
  %v1180 = vsel %vm1052, %v888, %v1116
  %v1181 = vsel %vm1053, %v891, %v1117
  %v1182 = vsel %vm1054, %v896, %v1118
  %v1183 = vsel %vm1055, %v899, %v1119
  %v1184 = vsel %vm1056, %v904, %v1120
  %v1185 = vsel %vm1057, %v907, %v1121
  %v1186 = vsel %vm1058, %v912, %v1122
  %v1187 = vsel %vm1059, %v915, %v1123
  %v1188 = vsel %vm1060, %v920, %v1124
  %v1189 = vsel %vm1061, %v923, %v1125
  %v1190 = vsel %vm1062, %v928, %v1126
  %v1191 = vsel %vm1063, %v931, %v1127
  %v1192 = vsel %vm1064, %v936, %v1128
  %v1193 = vsel %vm1065, %v939, %v1129
  %v1194 = vsel %vm1066, %v944, %v1130
  %v1195 = vsel %vm1067, %v947, %v1131
  %v1196 = vsel %vm1068, %v952, %v1132
  %v1197 = vsel %vm1069, %v955, %v1133
  %v1198 = vsel %vm1070, %v960, %v1134
  %v1199 = vsel %vm1071, %v963, %v1135
  %v1200 = vsel %vm1072, %v968, %v1136
  %v1201 = vsel %vm1073, %v971, %v1137
  %v1202 = vsel %vm1074, %v976, %v1138
  %v1203 = vsel %vm1075, %v979, %v1139
  %v1204 = vsel %vm1076, %v984, %v1140
  %v1205 = vsel %vm1077, %v987, %v1141
  %v1206 = vsel %vm1078, %v992, %v1142
  %v1207 = vsel %vm1079, %v995, %v1143
  %v1208 = vsel %vm1080, %v1000, %v1144
  %v1209 = vsel %vm1081, %v1003, %v1145
  %v1210 = vsel %vm1082, %v1008, %v1146
  %v1211 = vsel %vm1083, %v1011, %v1147
  %v1212 = vsel %vm1084, %v1016, %v1148
  %v1213 = vsel %vm1085, %v1019, %v1149
  %1214 = vst.msk [vmem:[%s17] sm:$0xff] %vm230, %v155
  %1215 = vst.msk [vmem:[%s17 + $0x8] sm:$0xff] %vm230, %v156
  %1216 = vst.msk [vmem:[%s17 + $0x10] sm:$0xff] %vm230, %v157
  %1217 = vst.msk [vmem:[%s17 + $0x18] sm:$0xff] %vm230, %v158
  %v1218 = vld [vmem:[%s13] sm:$0xf]
  %v1219 = vld [vmem:[%s13 + $0x4] sm:$0xf]
  %v1220 = vld [vmem:[%s13 + $0x8] sm:$0xf]
  %v1221 = vld [vmem:[%s13 + $0xc] sm:$0xf]
  %v1222 = vld [vmem:[%s13 + $0x10] sm:$0xf]
  %v1223 = vld [vmem:[%s13 + $0x14] sm:$0xf]
  %v1224 = vld [vmem:[%s13 + $0x18] sm:$0xf]
  %v1225 = vld [vmem:[%s13 + $0x1c] sm:$0xf]
  %v1226 = vld [vmem:[%s13 + $0x20] sm:$0xf]
  %v1227 = vld [vmem:[%s13 + $0x24] sm:$0xf]
  %v1228 = vld [vmem:[%s13 + $0x28] sm:$0xf]
  %v1229 = vld [vmem:[%s13 + $0x2c] sm:$0xf]
  %v1230 = vld [vmem:[%s13 + $0x30] sm:$0xf]
  %v1231 = vld [vmem:[%s13 + $0x34] sm:$0xf]
  %v1232 = vld [vmem:[%s13 + $0x38] sm:$0xf]
  %v1233 = vld [vmem:[%s13 + $0x3c] sm:$0xf]
  %v1234 = vpack.c.bf16 %v156, %v155
  %v1235 = vpack.c.bf16 %v158, %v157
  %v1252 = vunpack.c.l.b16 %v1218
  %v1253 = vunpack.c.l.b16 %v1219
  %v1254 = vunpack.c.l.b16 %v1220
  %v1255 = vunpack.c.l.b16 %v1221
  %v1256 = vunpack.c.l.b16 %v1222
  %v1257 = vunpack.c.l.b16 %v1223
  %v1258 = vunpack.c.l.b16 %v1224
  %v1259 = vunpack.c.l.b16 %v1225
  %v1260 = vunpack.c.l.b16 %v1226
  %v1261 = vunpack.c.l.b16 %v1227
  %v1262 = vunpack.c.l.b16 %v1228
  %v1263 = vunpack.c.l.b16 %v1229
  %v1264 = vunpack.c.l.b16 %v1230
  %v1265 = vunpack.c.l.b16 %v1231
  %v1266 = vunpack.c.l.b16 %v1232
  %v1267 = vunpack.c.l.b16 %v1233
  %v1268 = vpack.c.b16 %v1253, %v1252
  %v1269 = vpack.c.b16 %v1255, %v1254
  %v1270 = vpack.c.b16 %v1257, %v1256
  %v1271 = vpack.c.b16 %v1259, %v1258
  %v1272 = vpack.c.b16 %v1261, %v1260
  %v1273 = vpack.c.b16 %v1263, %v1262
  %v1274 = vpack.c.b16 %v1265, %v1264
  %v1275 = vpack.c.b16 %v1267, %v1266
  %v1277 = vsel %vm91, %v1268, 0
  %v1280 = vsel %vm91, %v1269, 0
  %v1283 = vsel %vm91, %v1270, 0
  %v1286 = vsel %vm91, %v1271, 0
  %v1289 = vsel %vm91, %v1272, 0
  %v1292 = vsel %vm91, %v1273, 0
  %v1295 = vsel %vm91, %v1274, 0
  %v1298 = vsel %vm91, %v1275, 0
  %1300 = vmatprep.subr.bf16.mxu0 0
  %1301 = vmatpush1.bf16.msra.mxu0 %v1234
  %1302 = vmatprep.subr.bf16.mxu0 0
  %1303 = vmatpush1.bf16.msra.mxu0 %v1235
  %1304 = vmatprep.subr.bf16.mxu0 0
  %1305 = vmatpush1.bf16.msra.mxu0 0
  %1306 = vmatprep.subr.bf16.mxu0 0
  %1307 = vmatpush1.bf16.msra.mxu0 0
  %1308 = vmatprep.subr.bf16.mxu0 0
  %1309 = vmatpush1.bf16.msra.mxu0 0
  %1310 = vmatprep.subr.bf16.mxu0 0
  %1311 = vmatpush1.bf16.msra.mxu0 0
  %1312 = vmatprep.subr.bf16.mxu0 0
  %1313 = vmatpush1.bf16.msra.mxu0 0
  %1314 = vmatprep.subr.bf16.mxu0 0
  %1315 = vmatpush1.bf16.msra.mxu0 0
  %1316 = vmatprep.subr.bf16.mxu0 0
  %1317 = vmatpush1.bf16.msra.mxu0 0
  %1318 = vmatprep.subr.bf16.mxu0 0
  %1319 = vmatpush1.bf16.msra.mxu0 0
  %1320 = vmatprep.subr.bf16.mxu0 0
  %1321 = vmatpush1.bf16.msra.mxu0 0
  %1322 = vmatprep.subr.bf16.mxu0 0
  %1323 = vmatpush1.bf16.msra.mxu0 0
  %1324 = vmatprep.subr.bf16.mxu0 0
  %1325 = vmatpush1.bf16.msra.mxu0 0
  %1326 = vmatprep.subr.bf16.mxu0 0
  %1327 = vmatpush1.bf16.msra.mxu0 0
  %1328 = vmatprep.subr.bf16.mxu0 0
  %1329 = vmatpush1.bf16.msra.mxu0 0
  %1330 = vmatprep.subr.bf16.mxu0 0
  %1331 = vmatpush1.bf16.msra.mxu0 0
  %1332 = vmatprep.mubr.bf16.mxu0 0
  %1333 = vmatmul.mubr.bf16.gmra.mrb[0].mxu0 %v1277
  %v1334 = vpop.f32.mrb[0].mxu0
  %v1335 = vadd.f32 0.0, %v1334
  %v1336 = vpop.f32.mrb[0].mxu0
  %v1337 = vpop.f32.mrb[0].mxu0
  %v1338 = vadd.f32 0.0, %v1337
  %v1339 = vpop.f32.mrb[0].mxu0
  %1340 = vmatprep.mubr.bf16.mxu0 0
  %1341 = vmatmul.mubr.bf16.gmra.mrb[0].mxu0 %v1280
  %v1342 = vpop.f32.mrb[0].mxu0
  %v1343 = vadd.f32 0.0, %v1342
  %v1344 = vpop.f32.mrb[0].mxu0
  %v1345 = vpop.f32.mrb[0].mxu0
  %v1346 = vadd.f32 0.0, %v1345
  %v1347 = vpop.f32.mrb[0].mxu0
  %1348 = vmatprep.mubr.bf16.mxu0 0
  %1349 = vmatmul.mubr.bf16.gmra.mrb[0].mxu0 %v1283
  %v1350 = vpop.f32.mrb[0].mxu0
  %v1351 = vadd.f32 0.0, %v1350
  %v1352 = vpop.f32.mrb[0].mxu0
  %v1353 = vpop.f32.mrb[0].mxu0
  %v1354 = vadd.f32 0.0, %v1353
  %v1355 = vpop.f32.mrb[0].mxu0
  %1356 = vmatprep.mubr.bf16.mxu0 0
  %1357 = vmatmul.mubr.bf16.gmra.mrb[0].mxu0 %v1286
  %v1358 = vpop.f32.mrb[0].mxu0
  %v1359 = vadd.f32 0.0, %v1358
  %v1360 = vpop.f32.mrb[0].mxu0
  %v1361 = vpop.f32.mrb[0].mxu0
  %v1362 = vadd.f32 0.0, %v1361
  %v1363 = vpop.f32.mrb[0].mxu0
  %1364 = vmatprep.mubr.bf16.mxu0 0
  %1365 = vmatmul.mubr.bf16.gmra.mrb[0].mxu0 %v1289
  %v1366 = vpop.f32.mrb[0].mxu0
  %v1367 = vadd.f32 0.0, %v1366
  %v1368 = vpop.f32.mrb[0].mxu0
  %v1369 = vpop.f32.mrb[0].mxu0
  %v1370 = vadd.f32 0.0, %v1369
  %v1371 = vpop.f32.mrb[0].mxu0
  %1372 = vmatprep.mubr.bf16.mxu0 0
  %1373 = vmatmul.mubr.bf16.gmra.mrb[0].mxu0 %v1292
  %v1374 = vpop.f32.mrb[0].mxu0
  %v1375 = vadd.f32 0.0, %v1374
  %v1376 = vpop.f32.mrb[0].mxu0
  %v1377 = vpop.f32.mrb[0].mxu0
  %v1378 = vadd.f32 0.0, %v1377
  %v1379 = vpop.f32.mrb[0].mxu0
  %1380 = vmatprep.mubr.bf16.mxu0 0
  %1381 = vmatmul.mubr.bf16.gmra.mrb[0].mxu0 %v1295
  %v1382 = vpop.f32.mrb[0].mxu0
  %v1383 = vadd.f32 0.0, %v1382
  %v1384 = vpop.f32.mrb[0].mxu0
  %v1385 = vpop.f32.mrb[0].mxu0
  %v1386 = vadd.f32 0.0, %v1385
  %v1387 = vpop.f32.mrb[0].mxu0
  %1388 = vmatprep.mubr.bf16.mxu0 0
  %1389 = vmatmul.mubr.bf16.gmra.mrb[0].mxu0 %v1298
  %v1390 = vpop.f32.mrb[0].mxu0
  %v1391 = vadd.f32 0.0, %v1390
  %v1392 = vpop.f32.mrb[0].mxu0
  %v1393 = vpop.f32.mrb[0].mxu0
  %v1394 = vadd.f32 0.0, %v1393
  %v1395 = vpop.f32.mrb[0].mxu0
  %1396 = vdwg.mxu0
  %v1397 = vadd.f32 %v384, %v1335
  %v1398 = vadd.f32 %v385, %v1338
  %v1399 = vadd.f32 %v386, %v1343
  %v1400 = vadd.f32 %v387, %v1346
  %v1401 = vadd.f32 %v388, %v1351
  %v1402 = vadd.f32 %v389, %v1354
  %v1403 = vadd.f32 %v390, %v1359
  %v1404 = vadd.f32 %v391, %v1362
  %v1405 = vadd.f32 %v392, %v1367
  %v1406 = vadd.f32 %v393, %v1370
  %v1407 = vadd.f32 %v394, %v1375
  %v1408 = vadd.f32 %v395, %v1378
  %v1409 = vadd.f32 %v396, %v1383
  %v1410 = vadd.f32 %v397, %v1386
  %v1411 = vadd.f32 %v398, %v1391
  %v1412 = vadd.f32 %v399, %v1394
  %1413 = vst.msk [vmem:[#allocation2] sm:$0xff] %vm230, 0.0
  %vm1414 = vcmask 123904
  %1415 = vst.msk [vmem:[#allocation2 + $0x8] sm:$0x3] %vm1414, 0.0
  %1416 = vst.msk [vmem:[#allocation2 + $0x10] sm:$0xff] %vm230, 0.0
  %1417 = vst.msk [vmem:[#allocation2 + $0x18] sm:$0x3] %vm1414, 0.0
  %1418 = vst.msk [vmem:[#allocation2 + $0x20] sm:$0xff] %vm230, 0.0
  %1419 = vst.msk [vmem:[#allocation2 + $0x28] sm:$0x3] %vm1414, 0.0
  %1420 = vst.msk [vmem:[#allocation2 + $0x30] sm:$0xff] %vm230, 0.0
  %1421 = vst.msk [vmem:[#allocation2 + $0x38] sm:$0x3] %vm1414, 0.0
  %1422 = vst.msk [vmem:[#allocation2 + $0x40] sm:$0xff] %vm230, 0.0
  %1423 = vst.msk [vmem:[#allocation2 + $0x48] sm:$0x3] %vm1414, 0.0
  %1424 = vst.msk [vmem:[#allocation2 + $0x50] sm:$0xff] %vm230, 0.0
  %1425 = vst.msk [vmem:[#allocation2 + $0x58] sm:$0x3] %vm1414, 0.0
  %1426 = vst.msk [vmem:[#allocation2 + $0x60] sm:$0xff] %vm230, 0.0
  %1427 = vst.msk [vmem:[#allocation2 + $0x68] sm:$0x3] %vm1414, 0.0
  %1428 = vst.msk [vmem:[#allocation2 + $0x70] sm:$0xff] %vm230, 0.0
  %1429 = vst.msk [vmem:[#allocation2 + $0x78] sm:$0x3] %vm1414, 0.0
  %1430 = vst.msk [vmem:[#allocation2 + $0x80] sm:$0xff] %vm230, 0.0
  %1431 = vst.msk [vmem:[#allocation2 + $0x88] sm:$0x3] %vm1414, 0.0
  %1432 = vst.msk [vmem:[#allocation2 + $0x90] sm:$0xff] %vm230, 0.0
  %1433 = vst.msk [vmem:[#allocation2 + $0x98] sm:$0x3] %vm1414, 0.0
  %1434 = vst.msk [vmem:[#allocation2 + $0xa0] sm:$0xff] %vm230, 0.0
  %1435 = vst.msk [vmem:[#allocation2 + $0xa8] sm:$0x3] %vm1414, 0.0
  %1436 = vst.msk [vmem:[#allocation2 + $0xb0] sm:$0xff] %vm230, 0.0
  %1437 = vst.msk [vmem:[#allocation2 + $0xb8] sm:$0x3] %vm1414, 0.0
  %1438 = vst.msk [vmem:[#allocation2 + $0xc0] sm:$0xff] %vm230, 0.0
  %1439 = vst.msk [vmem:[#allocation2 + $0xc8] sm:$0x3] %vm1414, 0.0
  %1440 = vst.msk [vmem:[#allocation2 + $0xd0] sm:$0xff] %vm230, 0.0
  %1441 = vst.msk [vmem:[#allocation2 + $0xd8] sm:$0x3] %vm1414, 0.0
  %1442 = vst.msk [vmem:[#allocation2 + $0xe0] sm:$0xff] %vm230, 0.0
  %1443 = vst.msk [vmem:[#allocation2 + $0xe8] sm:$0x3] %vm1414, 0.0
  %1444 = vst.msk [vmem:[#allocation2 + $0xf0] sm:$0xff] %vm230, 0.0
  %1445 = vst.msk [vmem:[#allocation2 + $0xf8] sm:$0x3] %vm1414, 0.0
  %1446 = vst.msk [vmem:[#allocation2 + $0x100] sm:$0xff] %vm230, 0.0
  %1447 = vst.msk [vmem:[#allocation2 + $0x108] sm:$0x3] %vm1414, 0.0
  %1448 = vst.msk [vmem:[#allocation2 + $0x110] sm:$0xff] %vm230, 0.0
  %1449 = vst.msk [vmem:[#allocation2 + $0x118] sm:$0x3] %vm1414, 0.0
  %1450 = vst.msk [vmem:[#allocation2 + $0x120] sm:$0xff] %vm230, 0.0
  %1451 = vst.msk [vmem:[#allocation2 + $0x128] sm:$0x3] %vm1414, 0.0
  %1452 = vst.msk [vmem:[#allocation2 + $0x130] sm:$0xff] %vm230, 0.0
  %1453 = vst.msk [vmem:[#allocation2 + $0x138] sm:$0x3] %vm1414, 0.0
  %s1454 = scalar_lea.vmem [#allocation2], 16
  %1455 = vst.msk [vmem:[%s1454 + $0x1] sm:$0xff] %vm230, %v1397
  %1456 = vst.msk [vmem:[%s1454 + $0x11] sm:$0xff] %vm230, %v1398
  %1457 = vst.msk [vmem:[%s1454 + $0x21] sm:$0xff] %vm230, %v1399
  %1458 = vst.msk [vmem:[%s1454 + $0x31] sm:$0xff] %vm230, %v1400
  %1459 = vst.msk [vmem:[%s1454 + $0x41] sm:$0xff] %vm230, %v1401
  %1460 = vst.msk [vmem:[%s1454 + $0x51] sm:$0xff] %vm230, %v1402
  %1461 = vst.msk [vmem:[%s1454 + $0x61] sm:$0xff] %vm230, %v1403
  %1462 = vst.msk [vmem:[%s1454 + $0x71] sm:$0xff] %vm230, %v1404
  %1463 = vst.msk [vmem:[%s1454 + $0xa1] sm:$0xff] %vm230, %v1405
  %1464 = vst.msk [vmem:[%s1454 + $0xb1] sm:$0xff] %vm230, %v1406
  %1465 = vst.msk [vmem:[%s1454 + $0xc1] sm:$0xff] %vm230, %v1407
  %1466 = vst.msk [vmem:[%s1454 + $0xd1] sm:$0xff] %vm230, %v1408
  %1467 = vst.msk [vmem:[%s1454 + $0xe1] sm:$0xff] %vm230, %v1409
  %1468 = vst.msk [vmem:[%s1454 + $0xf1] sm:$0xff] %vm230, %v1410
  %1469 = vst.msk [vmem:[%s1454 + $0x101] sm:$0xff] %vm230, %v1411
  %1470 = vst.msk [vmem:[%s1454 + $0x111] sm:$0xff] %vm230, %v1412
  %v1471 = vld [vmem:[#allocation2] sm:$0xff]
  %v1472 = vld [vmem:[#allocation2 + $0x10] sm:$0xff]
  %v1473 = vld [vmem:[#allocation2 + $0x20] sm:$0xff]
  %v1474 = vld [vmem:[#allocation2 + $0x30] sm:$0xff]
  %v1475 = vld [vmem:[#allocation2 + $0x40] sm:$0xff]
  %v1476 = vld [vmem:[#allocation2 + $0x50] sm:$0xff]
  %v1477 = vld [vmem:[#allocation2 + $0x60] sm:$0xff]
  %v1478 = vld [vmem:[#allocation2 + $0x70] sm:$0xff]
  %v1479 = vld [vmem:[#allocation2 + $0xa0] sm:$0xff]
  %v1480 = vld [vmem:[#allocation2 + $0xb0] sm:$0xff]
  %v1481 = vld [vmem:[#allocation2 + $0xc0] sm:$0xff]
  %v1482 = vld [vmem:[#allocation2 + $0xd0] sm:$0xff]
  %v1483 = vld [vmem:[#allocation2 + $0xe0] sm:$0xff]
  %v1484 = vld [vmem:[#allocation2 + $0xf0] sm:$0xff]
  %v1485 = vld [vmem:[#allocation2 + $0x100] sm:$0xff]
  %v1486 = vld [vmem:[#allocation2 + $0x110] sm:$0xff]
  %v1487 = vpack.c.bf16 %v1472, %v1471
  %v1488 = vpack.c.bf16 %v1474, %v1473
  %v1489 = vpack.c.bf16 %v1476, %v1475
  %v1490 = vpack.c.bf16 %v1478, %v1477
  %v1491 = vpack.c.bf16 %v1480, %v1479
  %v1492 = vpack.c.bf16 %v1482, %v1481
  %v1493 = vpack.c.bf16 %v1484, %v1483
  %v1494 = vpack.c.bf16 %v1486, %v1485
  %v1495 = vld [vmem:[%s9] sm:$0xf]
  %v1496 = vld [vmem:[%s9 + $0x4] sm:$0xf]
  %v1497 = vld [vmem:[#allocation2 + $0x1] sm:$0xff]
  %v1498 = vld [vmem:[#allocation2 + $0x11] sm:$0xff]
  %v1499 = vld [vmem:[#allocation2 + $0x21] sm:$0xff]
  %v1500 = vld [vmem:[#allocation2 + $0x31] sm:$0xff]
  %v1501 = vld [vmem:[#allocation2 + $0x41] sm:$0xff]
  %v1502 = vld [vmem:[#allocation2 + $0x51] sm:$0xff]
  %v1503 = vld [vmem:[#allocation2 + $0x61] sm:$0xff]
  %v1504 = vld [vmem:[#allocation2 + $0x71] sm:$0xff]
  %v1505 = vld [vmem:[#allocation2 + $0xa1] sm:$0xff]
  %v1506 = vld [vmem:[#allocation2 + $0xb1] sm:$0xff]
  %v1507 = vld [vmem:[#allocation2 + $0xc1] sm:$0xff]
  %v1508 = vld [vmem:[#allocation2 + $0xd1] sm:$0xff]
  %v1509 = vld [vmem:[#allocation2 + $0xe1] sm:$0xff]
  %v1510 = vld [vmem:[#allocation2 + $0xf1] sm:$0xff]
  %v1511 = vld [vmem:[#allocation2 + $0x101] sm:$0xff]
  %v1512 = vld [vmem:[#allocation2 + $0x111] sm:$0xff]
  %v1513 = vpack.c.bf16 %v1498, %v1497
  %v1514 = vpack.c.bf16 %v1500, %v1499
  %v1515 = vpack.c.bf16 %v1502, %v1501
  %v1516 = vpack.c.bf16 %v1504, %v1503
  %v1517 = vpack.c.bf16 %v1506, %v1505
  %v1518 = vpack.c.bf16 %v1508, %v1507
  %v1519 = vpack.c.bf16 %v1510, %v1509
  %v1520 = vpack.c.bf16 %v1512, %v1511
  %v1521 = vld [vmem:[%s9 + $0x8] sm:$0xf]
  %v1522 = vld [vmem:[%s9 + $0xc] sm:$0xf]
  %v1525 = vunpack.c.l.b16 %v1521
  %v1526 = vunpack.c.l.b16 %v1522
  %v1527 = vpack.c.b16 %v1526, %v1525
  %v1530 = vsel %vm230, %v1513, 0
  %v1533 = vsel %vm230, %v1514, 0
  %v1536 = vsel %vm230, %v1515, 0
  %v1539 = vsel %vm230, %v1516, 0
  %v1542 = vsel %vm230, %v1517, 0
  %v1545 = vsel %vm230, %v1518, 0
  %v1548 = vsel %vm230, %v1519, 0
  %v1551 = vsel %vm230, %v1520, 0
  %1553 = vmatprep.subr.bf16.mxu0 0
  %1554 = vmatpush1.bf16.msra.mxu0 %v1527
  %1555 = vmatprep.subr.bf16.mxu0 0
  %1556 = vmatpush1.bf16.msra.mxu0 0
  %1557 = vmatprep.subr.bf16.mxu0 0
  %1558 = vmatpush1.bf16.msra.mxu0 0
  %1559 = vmatprep.subr.bf16.mxu0 0
  %1560 = vmatpush1.bf16.msra.mxu0 0
  %1561 = vmatprep.subr.bf16.mxu0 0
  %1562 = vmatpush1.bf16.msra.mxu0 0
  %1563 = vmatprep.subr.bf16.mxu0 0
  %1564 = vmatpush1.bf16.msra.mxu0 0
  %1565 = vmatprep.subr.bf16.mxu0 0
  %1566 = vmatpush1.bf16.msra.mxu0 0
  %1567 = vmatprep.subr.bf16.mxu0 0
  %1568 = vmatpush1.bf16.msra.mxu0 0
  %1569 = vmatprep.subr.bf16.mxu0 0
  %1570 = vmatpush1.bf16.msra.mxu0 0
  %1571 = vmatprep.subr.bf16.mxu0 0
  %1572 = vmatpush1.bf16.msra.mxu0 0
  %1573 = vmatprep.subr.bf16.mxu0 0
  %1574 = vmatpush1.bf16.msra.mxu0 0
  %1575 = vmatprep.subr.bf16.mxu0 0
  %1576 = vmatpush1.bf16.msra.mxu0 0
  %1577 = vmatprep.subr.bf16.mxu0 0
  %1578 = vmatpush1.bf16.msra.mxu0 0
  %1579 = vmatprep.subr.bf16.mxu0 0
  %1580 = vmatpush1.bf16.msra.mxu0 0
  %1581 = vmatprep.subr.bf16.mxu0 0
  %1582 = vmatpush1.bf16.msra.mxu0 0
  %1583 = vmatprep.subr.bf16.mxu0 0
  %1584 = vmatpush1.bf16.msra.mxu0 0
  %1585 = vmatprep.mubr.bf16.mxu0 0
  %1586 = vmatmul.mubr.bf16.gmra.mrb[0].mxu0 %v1530
  %v1587 = vpop.f32.mrb[0].mxu0
  %v1588 = vadd.f32 0.0, %v1587
  %v1589 = vpop.f32.mrb[0].mxu0
  %v1590 = vpop.f32.mrb[0].mxu0
  %v1591 = vadd.f32 0.0, %v1590
  %v1592 = vpop.f32.mrb[0].mxu0
  %1593 = vmatprep.mubr.bf16.mxu0 0
  %1594 = vmatmul.mubr.bf16.gmra.mrb[0].mxu0 %v1533
  %v1595 = vpop.f32.mrb[0].mxu0
  %v1596 = vadd.f32 0.0, %v1595
  %v1597 = vpop.f32.mrb[0].mxu0
  %v1598 = vpop.f32.mrb[0].mxu0
  %v1599 = vadd.f32 0.0, %v1598
  %v1600 = vpop.f32.mrb[0].mxu0
  %1601 = vmatprep.mubr.bf16.mxu0 0
  %1602 = vmatmul.mubr.bf16.gmra.mrb[0].mxu0 %v1536
  %v1603 = vpop.f32.mrb[0].mxu0
  %v1604 = vadd.f32 0.0, %v1603
  %v1605 = vpop.f32.mrb[0].mxu0
  %v1606 = vpop.f32.mrb[0].mxu0
  %v1607 = vadd.f32 0.0, %v1606
  %v1608 = vpop.f32.mrb[0].mxu0
  %1609 = vmatprep.mubr.bf16.mxu0 0
  %1610 = vmatmul.mubr.bf16.gmra.mrb[0].mxu0 %v1539
  %v1611 = vpop.f32.mrb[0].mxu0
  %v1612 = vadd.f32 0.0, %v1611
  %v1613 = vpop.f32.mrb[0].mxu0
  %v1614 = vpop.f32.mrb[0].mxu0
  %v1615 = vadd.f32 0.0, %v1614
  %v1616 = vpop.f32.mrb[0].mxu0
  %1617 = vmatprep.mubr.bf16.mxu0 0
  %1618 = vmatmul.mubr.bf16.gmra.mrb[0].mxu0 %v1542
  %v1619 = vpop.f32.mrb[0].mxu0
  %v1620 = vadd.f32 0.0, %v1619
  %v1621 = vpop.f32.mrb[0].mxu0
  %v1622 = vpop.f32.mrb[0].mxu0
  %v1623 = vadd.f32 0.0, %v1622
  %v1624 = vpop.f32.mrb[0].mxu0
  %1625 = vmatprep.mubr.bf16.mxu0 0
  %1626 = vmatmul.mubr.bf16.gmra.mrb[0].mxu0 %v1545
  %v1627 = vpop.f32.mrb[0].mxu0
  %v1628 = vadd.f32 0.0, %v1627
  %v1629 = vpop.f32.mrb[0].mxu0
  %v1630 = vpop.f32.mrb[0].mxu0
  %v1631 = vadd.f32 0.0, %v1630
  %v1632 = vpop.f32.mrb[0].mxu0
  %1633 = vmatprep.mubr.bf16.mxu0 0
  %1634 = vmatmul.mubr.bf16.gmra.mrb[0].mxu0 %v1548
  %v1635 = vpop.f32.mrb[0].mxu0
  %v1636 = vadd.f32 0.0, %v1635
  %v1637 = vpop.f32.mrb[0].mxu0
  %v1638 = vpop.f32.mrb[0].mxu0
  %v1639 = vadd.f32 0.0, %v1638
  %v1640 = vpop.f32.mrb[0].mxu0
  %1641 = vmatprep.mubr.bf16.mxu0 0
  %1642 = vmatmul.mubr.bf16.gmra.mrb[0].mxu0 %v1551
  %v1643 = vpop.f32.mrb[0].mxu0
  %v1644 = vadd.f32 0.0, %v1643
  %v1645 = vpop.f32.mrb[0].mxu0
  %v1646 = vpop.f32.mrb[0].mxu0
  %v1647 = vadd.f32 0.0, %v1646
  %v1648 = vpop.f32.mrb[0].mxu0
  %1649 = vdwg.mxu0
  %v1652 = vunpack.c.l.b16 %v1495
  %v1653 = vunpack.c.l.b16 %v1496
  %v1654 = vpack.c.b16 %v1653, %v1652
  %v1657 = vsel %vm230, %v1487, 0
  %v1660 = vsel %vm230, %v1488, 0
  %v1663 = vsel %vm230, %v1489, 0
  %v1666 = vsel %vm230, %v1490, 0
  %v1669 = vsel %vm230, %v1491, 0
  %v1672 = vsel %vm230, %v1492, 0
  %v1675 = vsel %vm230, %v1493, 0
  %v1678 = vsel %vm230, %v1494, 0
  %1680 = vmatprep.subr.bf16.mxu0 0
  %1681 = vmatpush1.bf16.msra.mxu0 %v1654
  %1682 = vmatprep.subr.bf16.mxu0 0
  %1683 = vmatpush1.bf16.msra.mxu0 0
  %1684 = vmatprep.subr.bf16.mxu0 0
  %1685 = vmatpush1.bf16.msra.mxu0 0
  %1686 = vmatprep.subr.bf16.mxu0 0
  %1687 = vmatpush1.bf16.msra.mxu0 0
  %1688 = vmatprep.subr.bf16.mxu0 0
  %1689 = vmatpush1.bf16.msra.mxu0 0
  %1690 = vmatprep.subr.bf16.mxu0 0
  %1691 = vmatpush1.bf16.msra.mxu0 0
  %1692 = vmatprep.subr.bf16.mxu0 0
  %1693 = vmatpush1.bf16.msra.mxu0 0
  %1694 = vmatprep.subr.bf16.mxu0 0
  %1695 = vmatpush1.bf16.msra.mxu0 0
  %1696 = vmatprep.subr.bf16.mxu0 0
  %1697 = vmatpush1.bf16.msra.mxu0 0
  %1698 = vmatprep.subr.bf16.mxu0 0
  %1699 = vmatpush1.bf16.msra.mxu0 0
  %1700 = vmatprep.subr.bf16.mxu0 0
  %1701 = vmatpush1.bf16.msra.mxu0 0
  %1702 = vmatprep.subr.bf16.mxu0 0
  %1703 = vmatpush1.bf16.msra.mxu0 0
  %1704 = vmatprep.subr.bf16.mxu0 0
  %1705 = vmatpush1.bf16.msra.mxu0 0
  %1706 = vmatprep.subr.bf16.mxu0 0
  %1707 = vmatpush1.bf16.msra.mxu0 0
  %1708 = vmatprep.subr.bf16.mxu0 0
  %1709 = vmatpush1.bf16.msra.mxu0 0
  %1710 = vmatprep.subr.bf16.mxu0 0
  %1711 = vmatpush1.bf16.msra.mxu0 0
  %1712 = vmatprep.mubr.bf16.mxu0 0
  %1713 = vmatmul.mubr.bf16.gmra.mrb[0].mxu0 %v1657
  %v1714 = vpop.f32.mrb[0].mxu0
  %v1715 = vadd.f32 %v1588, %v1714
  %v1716 = vpop.f32.mrb[0].mxu0
  %v1717 = vpop.f32.mrb[0].mxu0
  %v1718 = vadd.f32 %v1591, %v1717
  %v1719 = vpop.f32.mrb[0].mxu0
  %1720 = vmatprep.mubr.bf16.mxu0 0
  %1721 = vmatmul.mubr.bf16.gmra.mrb[0].mxu0 %v1660
  %v1722 = vpop.f32.mrb[0].mxu0
  %v1723 = vadd.f32 %v1596, %v1722
  %v1724 = vpop.f32.mrb[0].mxu0
  %v1725 = vpop.f32.mrb[0].mxu0
  %v1726 = vadd.f32 %v1599, %v1725
  %v1727 = vpop.f32.mrb[0].mxu0
  %1728 = vmatprep.mubr.bf16.mxu0 0
  %1729 = vmatmul.mubr.bf16.gmra.mrb[0].mxu0 %v1663
  %v1730 = vpop.f32.mrb[0].mxu0
  %v1731 = vadd.f32 %v1604, %v1730
  %v1732 = vpop.f32.mrb[0].mxu0
  %v1733 = vpop.f32.mrb[0].mxu0
  %v1734 = vadd.f32 %v1607, %v1733
  %v1735 = vpop.f32.mrb[0].mxu0
  %1736 = vmatprep.mubr.bf16.mxu0 0
  %1737 = vmatmul.mubr.bf16.gmra.mrb[0].mxu0 %v1666
  %v1738 = vpop.f32.mrb[0].mxu0
  %v1739 = vadd.f32 %v1612, %v1738
  %v1740 = vpop.f32.mrb[0].mxu0
  %v1741 = vpop.f32.mrb[0].mxu0
  %v1742 = vadd.f32 %v1615, %v1741
  %v1743 = vpop.f32.mrb[0].mxu0
  %1744 = vmatprep.mubr.bf16.mxu0 0
  %1745 = vmatmul.mubr.bf16.gmra.mrb[0].mxu0 %v1669
  %v1746 = vpop.f32.mrb[0].mxu0
  %v1747 = vadd.f32 %v1620, %v1746
  %v1748 = vpop.f32.mrb[0].mxu0
  %v1749 = vpop.f32.mrb[0].mxu0
  %v1750 = vadd.f32 %v1623, %v1749
  %v1751 = vpop.f32.mrb[0].mxu0
  %1752 = vmatprep.mubr.bf16.mxu0 0
  %1753 = vmatmul.mubr.bf16.gmra.mrb[0].mxu0 %v1672
  %v1754 = vpop.f32.mrb[0].mxu0
  %v1755 = vadd.f32 %v1628, %v1754
  %v1756 = vpop.f32.mrb[0].mxu0
  %v1757 = vpop.f32.mrb[0].mxu0
  %v1758 = vadd.f32 %v1631, %v1757
  %v1759 = vpop.f32.mrb[0].mxu0
  %1760 = vmatprep.mubr.bf16.mxu0 0
  %1761 = vmatmul.mubr.bf16.gmra.mrb[0].mxu0 %v1675
  %v1762 = vpop.f32.mrb[0].mxu0
  %v1763 = vadd.f32 %v1636, %v1762
  %v1764 = vpop.f32.mrb[0].mxu0
  %v1765 = vpop.f32.mrb[0].mxu0
  %v1766 = vadd.f32 %v1639, %v1765
  %v1767 = vpop.f32.mrb[0].mxu0
  %1768 = vmatprep.mubr.bf16.mxu0 0
  %1769 = vmatmul.mubr.bf16.gmra.mrb[0].mxu0 %v1678
  %v1770 = vpop.f32.mrb[0].mxu0
  %v1771 = vadd.f32 %v1644, %v1770
  %v1772 = vpop.f32.mrb[0].mxu0
  %v1773 = vpop.f32.mrb[0].mxu0
  %v1774 = vadd.f32 %v1647, %v1773
  %v1775 = vpop.f32.mrb[0].mxu0
  %1776 = vdwg.mxu0
  %v1777 = vld [vmem:[#allocation2 + $0x2] sm:$0xff]
  %v1778 = vld [vmem:[#allocation2 + $0x12] sm:$0xff]
  %v1779 = vld [vmem:[#allocation2 + $0x22] sm:$0xff]
  %v1780 = vld [vmem:[#allocation2 + $0x32] sm:$0xff]
  %v1781 = vld [vmem:[#allocation2 + $0x42] sm:$0xff]
  %v1782 = vld [vmem:[#allocation2 + $0x52] sm:$0xff]
  %v1783 = vld [vmem:[#allocation2 + $0x62] sm:$0xff]
  %v1784 = vld [vmem:[#allocation2 + $0x72] sm:$0xff]
  %v1785 = vld [vmem:[#allocation2 + $0xa2] sm:$0xff]
  %v1786 = vld [vmem:[#allocation2 + $0xb2] sm:$0xff]
  %v1787 = vld [vmem:[#allocation2 + $0xc2] sm:$0xff]
  %v1788 = vld [vmem:[#allocation2 + $0xd2] sm:$0xff]
  %v1789 = vld [vmem:[#allocation2 + $0xe2] sm:$0xff]
  %v1790 = vld [vmem:[#allocation2 + $0xf2] sm:$0xff]
  %v1791 = vld [vmem:[#allocation2 + $0x102] sm:$0xff]
  %v1792 = vld [vmem:[#allocation2 + $0x112] sm:$0xff]
  %v1793 = vpack.c.bf16 %v1778, %v1777
  %v1794 = vpack.c.bf16 %v1780, %v1779
  %v1795 = vpack.c.bf16 %v1782, %v1781
  %v1796 = vpack.c.bf16 %v1784, %v1783
  %v1797 = vpack.c.bf16 %v1786, %v1785
  %v1798 = vpack.c.bf16 %v1788, %v1787
  %v1799 = vpack.c.bf16 %v1790, %v1789
  %v1800 = vpack.c.bf16 %v1792, %v1791
  %v1801 = vld [vmem:[%s9 + $0x10] sm:$0xf]
  %v1802 = vld [vmem:[%s9 + $0x14] sm:$0xf]
  %v1805 = vunpack.c.l.b16 %v1801
  %v1806 = vunpack.c.l.b16 %v1802
  %v1807 = vpack.c.b16 %v1806, %v1805
  %v1810 = vsel %vm230, %v1793, 0
  %v1813 = vsel %vm230, %v1794, 0
  %v1816 = vsel %vm230, %v1795, 0
  %v1819 = vsel %vm230, %v1796, 0
  %v1822 = vsel %vm230, %v1797, 0
  %v1825 = vsel %vm230, %v1798, 0
  %v1828 = vsel %vm230, %v1799, 0
  %v1831 = vsel %vm230, %v1800, 0
  %1833 = vmatprep.subr.bf16.mxu0 0
  %1834 = vmatpush1.bf16.msra.mxu0 %v1807
  %1835 = vmatprep.subr.bf16.mxu0 0
  %1836 = vmatpush1.bf16.msra.mxu0 0
  %1837 = vmatprep.subr.bf16.mxu0 0
  %1838 = vmatpush1.bf16.msra.mxu0 0
  %1839 = vmatprep.subr.bf16.mxu0 0
  %1840 = vmatpush1.bf16.msra.mxu0 0
  %1841 = vmatprep.subr.bf16.mxu0 0
  %1842 = vmatpush1.bf16.msra.mxu0 0
  %1843 = vmatprep.subr.bf16.mxu0 0
  %1844 = vmatpush1.bf16.msra.mxu0 0
  %1845 = vmatprep.subr.bf16.mxu0 0
  %1846 = vmatpush1.bf16.msra.mxu0 0
  %1847 = vmatprep.subr.bf16.mxu0 0
  %1848 = vmatpush1.bf16.msra.mxu0 0
  %1849 = vmatprep.subr.bf16.mxu0 0
  %1850 = vmatpush1.bf16.msra.mxu0 0
  %1851 = vmatprep.subr.bf16.mxu0 0
  %1852 = vmatpush1.bf16.msra.mxu0 0
  %1853 = vmatprep.subr.bf16.mxu0 0
  %1854 = vmatpush1.bf16.msra.mxu0 0
  %1855 = vmatprep.subr.bf16.mxu0 0
  %1856 = vmatpush1.bf16.msra.mxu0 0
  %1857 = vmatprep.subr.bf16.mxu0 0
  %1858 = vmatpush1.bf16.msra.mxu0 0
  %1859 = vmatprep.subr.bf16.mxu0 0
  %1860 = vmatpush1.bf16.msra.mxu0 0
  %1861 = vmatprep.subr.bf16.mxu0 0
  %1862 = vmatpush1.bf16.msra.mxu0 0
  %1863 = vmatprep.subr.bf16.mxu0 0
  %1864 = vmatpush1.bf16.msra.mxu0 0
  %1865 = vmatprep.mubr.bf16.mxu0 0
  %1866 = vmatmul.mubr.bf16.gmra.mrb[0].mxu0 %v1810
  %v1867 = vpop.f32.mrb[0].mxu0
  %v1868 = vadd.f32 0.0, %v1867
  %v1869 = vpop.f32.mrb[0].mxu0
  %v1870 = vpop.f32.mrb[0].mxu0
  %v1871 = vadd.f32 0.0, %v1870
  %v1872 = vpop.f32.mrb[0].mxu0
  %1873 = vmatprep.mubr.bf16.mxu0 0
  %1874 = vmatmul.mubr.bf16.gmra.mrb[0].mxu0 %v1813
  %v1875 = vpop.f32.mrb[0].mxu0
  %v1876 = vadd.f32 0.0, %v1875
  %v1877 = vpop.f32.mrb[0].mxu0
  %v1878 = vpop.f32.mrb[0].mxu0
  %v1879 = vadd.f32 0.0, %v1878
  %v1880 = vpop.f32.mrb[0].mxu0
  %1881 = vmatprep.mubr.bf16.mxu0 0
  %1882 = vmatmul.mubr.bf16.gmra.mrb[0].mxu0 %v1816
  %v1883 = vpop.f32.mrb[0].mxu0
  %v1884 = vadd.f32 0.0, %v1883
  %v1885 = vpop.f32.mrb[0].mxu0
  %v1886 = vpop.f32.mrb[0].mxu0
  %v1887 = vadd.f32 0.0, %v1886
  %v1888 = vpop.f32.mrb[0].mxu0
  %1889 = vmatprep.mubr.bf16.mxu0 0
  %1890 = vmatmul.mubr.bf16.gmra.mrb[0].mxu0 %v1819
  %v1891 = vpop.f32.mrb[0].mxu0
  %v1892 = vadd.f32 0.0, %v1891
  %v1893 = vpop.f32.mrb[0].mxu0
  %v1894 = vpop.f32.mrb[0].mxu0
  %v1895 = vadd.f32 0.0, %v1894
  %v1896 = vpop.f32.mrb[0].mxu0
  %1897 = vmatprep.mubr.bf16.mxu0 0
  %1898 = vmatmul.mubr.bf16.gmra.mrb[0].mxu0 %v1822
  %v1899 = vpop.f32.mrb[0].mxu0
  %v1900 = vadd.f32 0.0, %v1899
  %v1901 = vpop.f32.mrb[0].mxu0
  %v1902 = vpop.f32.mrb[0].mxu0
  %v1903 = vadd.f32 0.0, %v1902
  %v1904 = vpop.f32.mrb[0].mxu0
  %1905 = vmatprep.mubr.bf16.mxu0 0
  %1906 = vmatmul.mubr.bf16.gmra.mrb[0].mxu0 %v1825
  %v1907 = vpop.f32.mrb[0].mxu0
  %v1908 = vadd.f32 0.0, %v1907
  %v1909 = vpop.f32.mrb[0].mxu0
  %v1910 = vpop.f32.mrb[0].mxu0
  %v1911 = vadd.f32 0.0, %v1910
  %v1912 = vpop.f32.mrb[0].mxu0
  %1913 = vmatprep.mubr.bf16.mxu0 0
  %1914 = vmatmul.mubr.bf16.gmra.mrb[0].mxu0 %v1828
  %v1915 = vpop.f32.mrb[0].mxu0
  %v1916 = vadd.f32 0.0, %v1915
  %v1917 = vpop.f32.mrb[0].mxu0
  %v1918 = vpop.f32.mrb[0].mxu0
  %v1919 = vadd.f32 0.0, %v1918
  %v1920 = vpop.f32.mrb[0].mxu0
  %1921 = vmatprep.mubr.bf16.mxu0 0
  %1922 = vmatmul.mubr.bf16.gmra.mrb[0].mxu0 %v1831
  %v1923 = vpop.f32.mrb[0].mxu0
  %v1924 = vadd.f32 0.0, %v1923
  %v1925 = vpop.f32.mrb[0].mxu0
  %v1926 = vpop.f32.mrb[0].mxu0
  %v1927 = vadd.f32 0.0, %v1926
  %v1928 = vpop.f32.mrb[0].mxu0
  %1929 = vdwg.mxu0
  %v1930 = vadd.f32 %v1715, %v1868
  %v1931 = vadd.f32 %v1718, %v1871
  %v1932 = vadd.f32 %v1723, %v1876
  %v1933 = vadd.f32 %v1726, %v1879
  %v1934 = vadd.f32 %v1731, %v1884
  %v1935 = vadd.f32 %v1734, %v1887
  %v1936 = vadd.f32 %v1739, %v1892
  %v1937 = vadd.f32 %v1742, %v1895
  %v1938 = vadd.f32 %v1747, %v1900
  %v1939 = vadd.f32 %v1750, %v1903
  %v1940 = vadd.f32 %v1755, %v1908
  %v1941 = vadd.f32 %v1758, %v1911
  %v1942 = vadd.f32 %v1763, %v1916
  %v1943 = vadd.f32 %v1766, %v1919
  %v1944 = vadd.f32 %v1771, %v1924
  %v1945 = vadd.f32 %v1774, %v1927
  %v1946 = vld [vmem:[%s1454] sm:$0xff]
  %v1947 = vld [vmem:[%s1454 + $0x10] sm:$0xff]
  %v1948 = vld [vmem:[%s1454 + $0x20] sm:$0xff]
  %v1949 = vld [vmem:[%s1454 + $0x30] sm:$0xff]
  %v1950 = vld [vmem:[%s1454 + $0x40] sm:$0xff]
  %v1951 = vld [vmem:[%s1454 + $0x50] sm:$0xff]
  %v1952 = vld [vmem:[%s1454 + $0x60] sm:$0xff]
  %v1953 = vld [vmem:[%s1454 + $0x70] sm:$0xff]
  %v1954 = vld [vmem:[%s1454 + $0xa0] sm:$0xff]
  %v1955 = vld [vmem:[%s1454 + $0xb0] sm:$0xff]
  %v1956 = vld [vmem:[%s1454 + $0xc0] sm:$0xff]
  %v1957 = vld [vmem:[%s1454 + $0xd0] sm:$0xff]
  %v1958 = vld [vmem:[%s1454 + $0xe0] sm:$0xff]
  %v1959 = vld [vmem:[%s1454 + $0xf0] sm:$0xff]
  %v1960 = vld [vmem:[%s1454 + $0x100] sm:$0xff]
  %v1961 = vld [vmem:[%s1454 + $0x110] sm:$0xff]
  %v1962 = vpack.c.bf16 %v1947, %v1946
  %v1963 = vpack.c.bf16 %v1949, %v1948
  %v1964 = vpack.c.bf16 %v1951, %v1950
  %v1965 = vpack.c.bf16 %v1953, %v1952
  %v1966 = vpack.c.bf16 %v1955, %v1954
  %v1967 = vpack.c.bf16 %v1957, %v1956
  %v1968 = vpack.c.bf16 %v1959, %v1958
  %v1969 = vpack.c.bf16 %v1961, %v1960
  %v1970 = vld [vmem:[%s9 + $0x18] sm:$0xf]
  %v1971 = vld [vmem:[%s9 + $0x1c] sm:$0xf]
  %v1974 = vunpack.c.l.b16 %v1970
  %v1975 = vunpack.c.l.b16 %v1971
  %v1976 = vpack.c.b16 %v1975, %v1974
  %v1979 = vsel %vm230, %v1962, 0
  %v1982 = vsel %vm230, %v1963, 0
  %v1985 = vsel %vm230, %v1964, 0
  %v1988 = vsel %vm230, %v1965, 0
  %v1991 = vsel %vm230, %v1966, 0
  %v1994 = vsel %vm230, %v1967, 0
  %v1997 = vsel %vm230, %v1968, 0
  %v2000 = vsel %vm230, %v1969, 0
  %2002 = vmatprep.subr.bf16.mxu0 0
  %2003 = vmatpush1.bf16.msra.mxu0 %v1976
  %2004 = vmatprep.subr.bf16.mxu0 0
  %2005 = vmatpush1.bf16.msra.mxu0 0
  %2006 = vmatprep.subr.bf16.mxu0 0
  %2007 = vmatpush1.bf16.msra.mxu0 0
  %2008 = vmatprep.subr.bf16.mxu0 0
  %2009 = vmatpush1.bf16.msra.mxu0 0
  %2010 = vmatprep.subr.bf16.mxu0 0
  %2011 = vmatpush1.bf16.msra.mxu0 0
  %2012 = vmatprep.subr.bf16.mxu0 0
  %2013 = vmatpush1.bf16.msra.mxu0 0
  %2014 = vmatprep.subr.bf16.mxu0 0
  %2015 = vmatpush1.bf16.msra.mxu0 0
  %2016 = vmatprep.subr.bf16.mxu0 0
  %2017 = vmatpush1.bf16.msra.mxu0 0
  %2018 = vmatprep.subr.bf16.mxu0 0
  %2019 = vmatpush1.bf16.msra.mxu0 0
  %2020 = vmatprep.subr.bf16.mxu0 0
  %2021 = vmatpush1.bf16.msra.mxu0 0
  %2022 = vmatprep.subr.bf16.mxu0 0
  %2023 = vmatpush1.bf16.msra.mxu0 0
  %2024 = vmatprep.subr.bf16.mxu0 0
  %2025 = vmatpush1.bf16.msra.mxu0 0
  %2026 = vmatprep.subr.bf16.mxu0 0
  %2027 = vmatpush1.bf16.msra.mxu0 0
  %2028 = vmatprep.subr.bf16.mxu0 0
  %2029 = vmatpush1.bf16.msra.mxu0 0
  %2030 = vmatprep.subr.bf16.mxu0 0
  %2031 = vmatpush1.bf16.msra.mxu0 0
  %2032 = vmatprep.subr.bf16.mxu0 0
  %2033 = vmatpush1.bf16.msra.mxu0 0
  %2034 = vmatprep.mubr.bf16.mxu0 0
  %2035 = vmatmul.mubr.bf16.gmra.mrb[0].mxu0 %v1979
  %v2036 = vpop.f32.mrb[0].mxu0
  %v2037 = vadd.f32 0.0, %v2036
  %v2038 = vpop.f32.mrb[0].mxu0
  %v2039 = vpop.f32.mrb[0].mxu0
  %v2040 = vadd.f32 0.0, %v2039
  %v2041 = vpop.f32.mrb[0].mxu0
  %2042 = vmatprep.mubr.bf16.mxu0 0
  %2043 = vmatmul.mubr.bf16.gmra.mrb[0].mxu0 %v1982
  %v2044 = vpop.f32.mrb[0].mxu0
  %v2045 = vadd.f32 0.0, %v2044
  %v2046 = vpop.f32.mrb[0].mxu0
  %v2047 = vpop.f32.mrb[0].mxu0
  %v2048 = vadd.f32 0.0, %v2047
  %v2049 = vpop.f32.mrb[0].mxu0
  %2050 = vmatprep.mubr.bf16.mxu0 0
  %2051 = vmatmul.mubr.bf16.gmra.mrb[0].mxu0 %v1985
  %v2052 = vpop.f32.mrb[0].mxu0
  %v2053 = vadd.f32 0.0, %v2052
  %v2054 = vpop.f32.mrb[0].mxu0
  %v2055 = vpop.f32.mrb[0].mxu0
  %v2056 = vadd.f32 0.0, %v2055
  %v2057 = vpop.f32.mrb[0].mxu0
  %2058 = vmatprep.mubr.bf16.mxu0 0
  %2059 = vmatmul.mubr.bf16.gmra.mrb[0].mxu0 %v1988
  %v2060 = vpop.f32.mrb[0].mxu0
  %v2061 = vadd.f32 0.0, %v2060
  %v2062 = vpop.f32.mrb[0].mxu0
  %v2063 = vpop.f32.mrb[0].mxu0
  %v2064 = vadd.f32 0.0, %v2063
  %v2065 = vpop.f32.mrb[0].mxu0
  %2066 = vmatprep.mubr.bf16.mxu0 0
  %2067 = vmatmul.mubr.bf16.gmra.mrb[0].mxu0 %v1991
  %v2068 = vpop.f32.mrb[0].mxu0
  %v2069 = vadd.f32 0.0, %v2068
  %v2070 = vpop.f32.mrb[0].mxu0
  %v2071 = vpop.f32.mrb[0].mxu0
  %v2072 = vadd.f32 0.0, %v2071
  %v2073 = vpop.f32.mrb[0].mxu0
  %2074 = vmatprep.mubr.bf16.mxu0 0
  %2075 = vmatmul.mubr.bf16.gmra.mrb[0].mxu0 %v1994
  %v2076 = vpop.f32.mrb[0].mxu0
  %v2077 = vadd.f32 0.0, %v2076
  %v2078 = vpop.f32.mrb[0].mxu0
  %v2079 = vpop.f32.mrb[0].mxu0
  %v2080 = vadd.f32 0.0, %v2079
  %v2081 = vpop.f32.mrb[0].mxu0
  %2082 = vmatprep.mubr.bf16.mxu0 0
  %2083 = vmatmul.mubr.bf16.gmra.mrb[0].mxu0 %v1997
  %v2084 = vpop.f32.mrb[0].mxu0
  %v2085 = vadd.f32 0.0, %v2084
  %v2086 = vpop.f32.mrb[0].mxu0
  %v2087 = vpop.f32.mrb[0].mxu0
  %v2088 = vadd.f32 0.0, %v2087
  %v2089 = vpop.f32.mrb[0].mxu0
  %2090 = vmatprep.mubr.bf16.mxu0 0
  %2091 = vmatmul.mubr.bf16.gmra.mrb[0].mxu0 %v2000
  %v2092 = vpop.f32.mrb[0].mxu0
  %v2093 = vadd.f32 0.0, %v2092
  %v2094 = vpop.f32.mrb[0].mxu0
  %v2095 = vpop.f32.mrb[0].mxu0
  %v2096 = vadd.f32 0.0, %v2095
  %v2097 = vpop.f32.mrb[0].mxu0
  %2098 = vdwg.mxu0
  %v2099 = vadd.f32 %v1930, %v2037
  %v2100 = vadd.f32 %v1931, %v2040
  %v2101 = vadd.f32 %v1932, %v2045
  %v2102 = vadd.f32 %v1933, %v2048
  %v2103 = vadd.f32 %v1934, %v2053
  %v2104 = vadd.f32 %v1935, %v2056
  %v2105 = vadd.f32 %v1936, %v2061
  %v2106 = vadd.f32 %v1937, %v2064
  %v2107 = vadd.f32 %v1938, %v2069
  %v2108 = vadd.f32 %v1939, %v2072
  %v2109 = vadd.f32 %v1940, %v2077
  %v2110 = vadd.f32 %v1941, %v2080
  %v2111 = vadd.f32 %v1942, %v2085
  %v2112 = vadd.f32 %v1943, %v2088
  %v2113 = vadd.f32 %v1944, %v2093
  %v2114 = vadd.f32 %v1945, %v2096
  %v2115 = vld [vmem:[%s1454 + $0x1] sm:$0xff]
  %v2116 = vld [vmem:[%s1454 + $0x11] sm:$0xff]
  %v2117 = vld [vmem:[%s1454 + $0x21] sm:$0xff]
  %v2118 = vld [vmem:[%s1454 + $0x31] sm:$0xff]
  %v2119 = vld [vmem:[%s1454 + $0x41] sm:$0xff]
  %v2120 = vld [vmem:[%s1454 + $0x51] sm:$0xff]
  %v2121 = vld [vmem:[%s1454 + $0x61] sm:$0xff]
  %v2122 = vld [vmem:[%s1454 + $0x71] sm:$0xff]
  %v2123 = vld [vmem:[%s1454 + $0xa1] sm:$0xff]
  %v2124 = vld [vmem:[%s1454 + $0xb1] sm:$0xff]
  %v2125 = vld [vmem:[%s1454 + $0xc1] sm:$0xff]
  %v2126 = vld [vmem:[%s1454 + $0xd1] sm:$0xff]
  %v2127 = vld [vmem:[%s1454 + $0xe1] sm:$0xff]
  %v2128 = vld [vmem:[%s1454 + $0xf1] sm:$0xff]
  %v2129 = vld [vmem:[%s1454 + $0x101] sm:$0xff]
  %v2130 = vld [vmem:[%s1454 + $0x111] sm:$0xff]
  %v2131 = vpack.c.bf16 %v2116, %v2115
  %v2132 = vpack.c.bf16 %v2118, %v2117
  %v2133 = vpack.c.bf16 %v2120, %v2119
  %v2134 = vpack.c.bf16 %v2122, %v2121
  %v2135 = vpack.c.bf16 %v2124, %v2123
  %v2136 = vpack.c.bf16 %v2126, %v2125
  %v2137 = vpack.c.bf16 %v2128, %v2127
  %v2138 = vpack.c.bf16 %v2130, %v2129
  %v2139 = vld [vmem:[%s9 + $0x20] sm:$0xf]
  %v2140 = vld [vmem:[%s9 + $0x24] sm:$0xf]
  %v2143 = vunpack.c.l.b16 %v2139
  %v2144 = vunpack.c.l.b16 %v2140
  %v2145 = vpack.c.b16 %v2144, %v2143
  %v2148 = vsel %vm230, %v2131, 0
  %v2151 = vsel %vm230, %v2132, 0
  %v2154 = vsel %vm230, %v2133, 0
  %v2157 = vsel %vm230, %v2134, 0
  %v2160 = vsel %vm230, %v2135, 0
  %v2163 = vsel %vm230, %v2136, 0
  %v2166 = vsel %vm230, %v2137, 0
  %v2169 = vsel %vm230, %v2138, 0
  %2171 = vmatprep.subr.bf16.mxu0 0
  %2172 = vmatpush1.bf16.msra.mxu0 %v2145
  %2173 = vmatprep.subr.bf16.mxu0 0
  %2174 = vmatpush1.bf16.msra.mxu0 0
  %2175 = vmatprep.subr.bf16.mxu0 0
  %2176 = vmatpush1.bf16.msra.mxu0 0
  %2177 = vmatprep.subr.bf16.mxu0 0
  %2178 = vmatpush1.bf16.msra.mxu0 0
  %2179 = vmatprep.subr.bf16.mxu0 0
  %2180 = vmatpush1.bf16.msra.mxu0 0
  %2181 = vmatprep.subr.bf16.mxu0 0
  %2182 = vmatpush1.bf16.msra.mxu0 0
  %2183 = vmatprep.subr.bf16.mxu0 0
  %2184 = vmatpush1.bf16.msra.mxu0 0
  %2185 = vmatprep.subr.bf16.mxu0 0
  %2186 = vmatpush1.bf16.msra.mxu0 0
  %2187 = vmatprep.subr.bf16.mxu0 0
  %2188 = vmatpush1.bf16.msra.mxu0 0
  %2189 = vmatprep.subr.bf16.mxu0 0
  %2190 = vmatpush1.bf16.msra.mxu0 0
  %2191 = vmatprep.subr.bf16.mxu0 0
  %2192 = vmatpush1.bf16.msra.mxu0 0
  %2193 = vmatprep.subr.bf16.mxu0 0
  %2194 = vmatpush1.bf16.msra.mxu0 0
  %2195 = vmatprep.subr.bf16.mxu0 0
  %2196 = vmatpush1.bf16.msra.mxu0 0
  %2197 = vmatprep.subr.bf16.mxu0 0
  %2198 = vmatpush1.bf16.msra.mxu0 0
  %2199 = vmatprep.subr.bf16.mxu0 0
  %2200 = vmatpush1.bf16.msra.mxu0 0
  %2201 = vmatprep.subr.bf16.mxu0 0
  %2202 = vmatpush1.bf16.msra.mxu0 0
  %2203 = vmatprep.mubr.bf16.mxu0 0
  %2204 = vmatmul.mubr.bf16.gmra.mrb[0].mxu0 %v2148
  %v2205 = vpop.f32.mrb[0].mxu0
  %v2206 = vadd.f32 0.0, %v2205
  %v2207 = vpop.f32.mrb[0].mxu0
  %v2208 = vpop.f32.mrb[0].mxu0
  %v2209 = vadd.f32 0.0, %v2208
  %v2210 = vpop.f32.mrb[0].mxu0
  %2211 = vmatprep.mubr.bf16.mxu0 0
  %2212 = vmatmul.mubr.bf16.gmra.mrb[0].mxu0 %v2151
  %v2213 = vpop.f32.mrb[0].mxu0
  %v2214 = vadd.f32 0.0, %v2213
  %v2215 = vpop.f32.mrb[0].mxu0
  %v2216 = vpop.f32.mrb[0].mxu0
  %v2217 = vadd.f32 0.0, %v2216
  %v2218 = vpop.f32.mrb[0].mxu0
  %2219 = vmatprep.mubr.bf16.mxu0 0
  %2220 = vmatmul.mubr.bf16.gmra.mrb[0].mxu0 %v2154
  %v2221 = vpop.f32.mrb[0].mxu0
  %v2222 = vadd.f32 0.0, %v2221
  %v2223 = vpop.f32.mrb[0].mxu0
  %v2224 = vpop.f32.mrb[0].mxu0
  %v2225 = vadd.f32 0.0, %v2224
  %v2226 = vpop.f32.mrb[0].mxu0
  %2227 = vmatprep.mubr.bf16.mxu0 0
  %2228 = vmatmul.mubr.bf16.gmra.mrb[0].mxu0 %v2157
  %v2229 = vpop.f32.mrb[0].mxu0
  %v2230 = vadd.f32 0.0, %v2229
  %v2231 = vpop.f32.mrb[0].mxu0
  %v2232 = vpop.f32.mrb[0].mxu0
  %v2233 = vadd.f32 0.0, %v2232
  %v2234 = vpop.f32.mrb[0].mxu0
  %2235 = vmatprep.mubr.bf16.mxu0 0
  %2236 = vmatmul.mubr.bf16.gmra.mrb[0].mxu0 %v2160
  %v2237 = vpop.f32.mrb[0].mxu0
  %v2238 = vadd.f32 0.0, %v2237
  %v2239 = vpop.f32.mrb[0].mxu0
  %v2240 = vpop.f32.mrb[0].mxu0
  %v2241 = vadd.f32 0.0, %v2240
  %v2242 = vpop.f32.mrb[0].mxu0
  %2243 = vmatprep.mubr.bf16.mxu0 0
  %2244 = vmatmul.mubr.bf16.gmra.mrb[0].mxu0 %v2163
  %v2245 = vpop.f32.mrb[0].mxu0
  %v2246 = vadd.f32 0.0, %v2245
  %v2247 = vpop.f32.mrb[0].mxu0
  %v2248 = vpop.f32.mrb[0].mxu0
  %v2249 = vadd.f32 0.0, %v2248
  %v2250 = vpop.f32.mrb[0].mxu0
  %2251 = vmatprep.mubr.bf16.mxu0 0
  %2252 = vmatmul.mubr.bf16.gmra.mrb[0].mxu0 %v2166
  %v2253 = vpop.f32.mrb[0].mxu0
  %v2254 = vadd.f32 0.0, %v2253
  %v2255 = vpop.f32.mrb[0].mxu0
  %v2256 = vpop.f32.mrb[0].mxu0
  %v2257 = vadd.f32 0.0, %v2256
  %v2258 = vpop.f32.mrb[0].mxu0
  %2259 = vmatprep.mubr.bf16.mxu0 0
  %2260 = vmatmul.mubr.bf16.gmra.mrb[0].mxu0 %v2169
  %v2261 = vpop.f32.mrb[0].mxu0
  %v2262 = vadd.f32 0.0, %v2261
  %v2263 = vpop.f32.mrb[0].mxu0
  %v2264 = vpop.f32.mrb[0].mxu0
  %v2265 = vadd.f32 0.0, %v2264
  %v2266 = vpop.f32.mrb[0].mxu0
  %2267 = vdwg.mxu0
  %v2268 = vadd.f32 %v2099, %v2206
  %v2269 = vadd.f32 %v2100, %v2209
  %v2270 = vadd.f32 %v2101, %v2214
  %v2271 = vadd.f32 %v2102, %v2217
  %v2272 = vadd.f32 %v2103, %v2222
  %v2273 = vadd.f32 %v2104, %v2225
  %v2274 = vadd.f32 %v2105, %v2230
  %v2275 = vadd.f32 %v2106, %v2233
  %v2276 = vadd.f32 %v2107, %v2238
  %v2277 = vadd.f32 %v2108, %v2241
  %v2278 = vadd.f32 %v2109, %v2246
  %v2279 = vadd.f32 %v2110, %v2249
  %v2280 = vadd.f32 %v2111, %v2254
  %v2281 = vadd.f32 %v2112, %v2257
  %v2282 = vadd.f32 %v2113, %v2262
  %v2283 = vadd.f32 %v2114, %v2265
  %v2284 = vld [vmem:[%s1454 + $0x2] sm:$0xff]
  %v2285 = vld [vmem:[%s1454 + $0x12] sm:$0xff]
  %v2286 = vld [vmem:[%s1454 + $0x22] sm:$0xff]
  %v2287 = vld [vmem:[%s1454 + $0x32] sm:$0xff]
  %v2288 = vld [vmem:[%s1454 + $0x42] sm:$0xff]
  %v2289 = vld [vmem:[%s1454 + $0x52] sm:$0xff]
  %v2290 = vld [vmem:[%s1454 + $0x62] sm:$0xff]
  %v2291 = vld [vmem:[%s1454 + $0x72] sm:$0xff]
  %v2292 = vld [vmem:[%s1454 + $0xa2] sm:$0xff]
  %v2293 = vld [vmem:[%s1454 + $0xb2] sm:$0xff]
  %v2294 = vld [vmem:[%s1454 + $0xc2] sm:$0xff]
  %v2295 = vld [vmem:[%s1454 + $0xd2] sm:$0xff]
  %v2296 = vld [vmem:[%s1454 + $0xe2] sm:$0xff]
  %v2297 = vld [vmem:[%s1454 + $0xf2] sm:$0xff]
  %v2298 = vld [vmem:[%s1454 + $0x102] sm:$0xff]
  %v2299 = vld [vmem:[%s1454 + $0x112] sm:$0xff]
  %v2300 = vpack.c.bf16 %v2285, %v2284
  %v2301 = vpack.c.bf16 %v2287, %v2286
  %v2302 = vpack.c.bf16 %v2289, %v2288
  %v2303 = vpack.c.bf16 %v2291, %v2290
  %v2304 = vpack.c.bf16 %v2293, %v2292
  %v2305 = vpack.c.bf16 %v2295, %v2294
  %v2306 = vpack.c.bf16 %v2297, %v2296
  %v2307 = vpack.c.bf16 %v2299, %v2298
  %v2308 = vld [vmem:[%s9 + $0x28] sm:$0xf]
  %v2309 = vld [vmem:[%s9 + $0x2c] sm:$0xf]
  %v2312 = vunpack.c.l.b16 %v2308
  %v2313 = vunpack.c.l.b16 %v2309
  %v2314 = vpack.c.b16 %v2313, %v2312
  %v2317 = vsel %vm230, %v2300, 0
  %v2320 = vsel %vm230, %v2301, 0
  %v2323 = vsel %vm230, %v2302, 0
  %v2326 = vsel %vm230, %v2303, 0
  %v2329 = vsel %vm230, %v2304, 0
  %v2332 = vsel %vm230, %v2305, 0
  %v2335 = vsel %vm230, %v2306, 0
  %v2338 = vsel %vm230, %v2307, 0
  %2340 = vmatprep.subr.bf16.mxu0 0
  %2341 = vmatpush1.bf16.msra.mxu0 %v2314
  %2342 = vmatprep.subr.bf16.mxu0 0
  %2343 = vmatpush1.bf16.msra.mxu0 0
  %2344 = vmatprep.subr.bf16.mxu0 0
  %2345 = vmatpush1.bf16.msra.mxu0 0
  %2346 = vmatprep.subr.bf16.mxu0 0
  %2347 = vmatpush1.bf16.msra.mxu0 0
  %2348 = vmatprep.subr.bf16.mxu0 0
  %2349 = vmatpush1.bf16.msra.mxu0 0
  %2350 = vmatprep.subr.bf16.mxu0 0
  %2351 = vmatpush1.bf16.msra.mxu0 0
  %2352 = vmatprep.subr.bf16.mxu0 0
  %2353 = vmatpush1.bf16.msra.mxu0 0
  %2354 = vmatprep.subr.bf16.mxu0 0
  %2355 = vmatpush1.bf16.msra.mxu0 0
  %2356 = vmatprep.subr.bf16.mxu0 0
  %2357 = vmatpush1.bf16.msra.mxu0 0
  %2358 = vmatprep.subr.bf16.mxu0 0
  %2359 = vmatpush1.bf16.msra.mxu0 0
  %2360 = vmatprep.subr.bf16.mxu0 0
  %2361 = vmatpush1.bf16.msra.mxu0 0
  %2362 = vmatprep.subr.bf16.mxu0 0
  %2363 = vmatpush1.bf16.msra.mxu0 0
  %2364 = vmatprep.subr.bf16.mxu0 0
  %2365 = vmatpush1.bf16.msra.mxu0 0
  %2366 = vmatprep.subr.bf16.mxu0 0
  %2367 = vmatpush1.bf16.msra.mxu0 0
  %2368 = vmatprep.subr.bf16.mxu0 0
  %2369 = vmatpush1.bf16.msra.mxu0 0
  %2370 = vmatprep.subr.bf16.mxu0 0
  %2371 = vmatpush1.bf16.msra.mxu0 0
  %2372 = vmatprep.mubr.bf16.mxu0 0
  %2373 = vmatmul.mubr.bf16.gmra.mrb[0].mxu0 %v2317
  %v2374 = vpop.f32.mrb[0].mxu0
  %v2375 = vadd.f32 0.0, %v2374
  %v2376 = vpop.f32.mrb[0].mxu0
  %v2377 = vpop.f32.mrb[0].mxu0
  %v2378 = vadd.f32 0.0, %v2377
  %v2379 = vpop.f32.mrb[0].mxu0
  %2380 = vmatprep.mubr.bf16.mxu0 0
  %2381 = vmatmul.mubr.bf16.gmra.mrb[0].mxu0 %v2320
  %v2382 = vpop.f32.mrb[0].mxu0
  %v2383 = vadd.f32 0.0, %v2382
  %v2384 = vpop.f32.mrb[0].mxu0
  %v2385 = vpop.f32.mrb[0].mxu0
  %v2386 = vadd.f32 0.0, %v2385
  %v2387 = vpop.f32.mrb[0].mxu0
  %2388 = vmatprep.mubr.bf16.mxu0 0
  %2389 = vmatmul.mubr.bf16.gmra.mrb[0].mxu0 %v2323
  %v2390 = vpop.f32.mrb[0].mxu0
  %v2391 = vadd.f32 0.0, %v2390
  %v2392 = vpop.f32.mrb[0].mxu0
  %v2393 = vpop.f32.mrb[0].mxu0
  %v2394 = vadd.f32 0.0, %v2393
  %v2395 = vpop.f32.mrb[0].mxu0
  %2396 = vmatprep.mubr.bf16.mxu0 0
  %2397 = vmatmul.mubr.bf16.gmra.mrb[0].mxu0 %v2326
  %v2398 = vpop.f32.mrb[0].mxu0
  %v2399 = vadd.f32 0.0, %v2398
  %v2400 = vpop.f32.mrb[0].mxu0
  %v2401 = vpop.f32.mrb[0].mxu0
  %v2402 = vadd.f32 0.0, %v2401
  %v2403 = vpop.f32.mrb[0].mxu0
  %2404 = vmatprep.mubr.bf16.mxu0 0
  %2405 = vmatmul.mubr.bf16.gmra.mrb[0].mxu0 %v2329
  %v2406 = vpop.f32.mrb[0].mxu0
  %v2407 = vadd.f32 0.0, %v2406
  %v2408 = vpop.f32.mrb[0].mxu0
  %v2409 = vpop.f32.mrb[0].mxu0
  %v2410 = vadd.f32 0.0, %v2409
  %v2411 = vpop.f32.mrb[0].mxu0
  %2412 = vmatprep.mubr.bf16.mxu0 0
  %2413 = vmatmul.mubr.bf16.gmra.mrb[0].mxu0 %v2332
  %v2414 = vpop.f32.mrb[0].mxu0
  %v2415 = vadd.f32 0.0, %v2414
  %v2416 = vpop.f32.mrb[0].mxu0
  %v2417 = vpop.f32.mrb[0].mxu0
  %v2418 = vadd.f32 0.0, %v2417
  %v2419 = vpop.f32.mrb[0].mxu0
  %2420 = vmatprep.mubr.bf16.mxu0 0
  %2421 = vmatmul.mubr.bf16.gmra.mrb[0].mxu0 %v2335
  %v2422 = vpop.f32.mrb[0].mxu0
  %v2423 = vadd.f32 0.0, %v2422
  %v2424 = vpop.f32.mrb[0].mxu0
  %v2425 = vpop.f32.mrb[0].mxu0
  %v2426 = vadd.f32 0.0, %v2425
  %v2427 = vpop.f32.mrb[0].mxu0
  %2428 = vmatprep.mubr.bf16.mxu0 0
  %2429 = vmatmul.mubr.bf16.gmra.mrb[0].mxu0 %v2338
  %v2430 = vpop.f32.mrb[0].mxu0
  %v2431 = vadd.f32 0.0, %v2430
  %v2432 = vpop.f32.mrb[0].mxu0
  %v2433 = vpop.f32.mrb[0].mxu0
  %v2434 = vadd.f32 0.0, %v2433
  %v2435 = vpop.f32.mrb[0].mxu0
  %2436 = vdwg.mxu0
  %v2437 = vadd.f32 %v2268, %v2375
  %v2438 = vadd.f32 %v2269, %v2378
  %v2439 = vadd.f32 %v2270, %v2383
  %v2440 = vadd.f32 %v2271, %v2386
  %v2441 = vadd.f32 %v2272, %v2391
  %v2442 = vadd.f32 %v2273, %v2394
  %v2443 = vadd.f32 %v2274, %v2399
  %v2444 = vadd.f32 %v2275, %v2402
  %v2445 = vadd.f32 %v2276, %v2407
  %v2446 = vadd.f32 %v2277, %v2410
  %v2447 = vadd.f32 %v2278, %v2415
  %v2448 = vadd.f32 %v2279, %v2418
  %v2449 = vadd.f32 %v2280, %v2423
  %v2450 = vadd.f32 %v2281, %v2426
  %v2451 = vadd.f32 %v2282, %v2431
  %v2452 = vadd.f32 %v2283, %v2434
  %s2453 = scalar_lea.vmem [#allocation2], 32
  %v2454 = vld [vmem:[%s2453] sm:$0xff]
  %v2455 = vld [vmem:[%s2453 + $0x10] sm:$0xff]
  %v2456 = vld [vmem:[%s2453 + $0x20] sm:$0xff]
  %v2457 = vld [vmem:[%s2453 + $0x30] sm:$0xff]
  %v2458 = vld [vmem:[%s2453 + $0x40] sm:$0xff]
  %v2459 = vld [vmem:[%s2453 + $0x50] sm:$0xff]
  %v2460 = vld [vmem:[%s2453 + $0x60] sm:$0xff]
  %v2461 = vld [vmem:[%s2453 + $0x70] sm:$0xff]
  %v2462 = vld [vmem:[%s2453 + $0xa0] sm:$0xff]
  %v2463 = vld [vmem:[%s2453 + $0xb0] sm:$0xff]
  %v2464 = vld [vmem:[%s2453 + $0xc0] sm:$0xff]
  %v2465 = vld [vmem:[%s2453 + $0xd0] sm:$0xff]
  %v2466 = vld [vmem:[%s2453 + $0xe0] sm:$0xff]
  %v2467 = vld [vmem:[%s2453 + $0xf0] sm:$0xff]
  %v2468 = vld [vmem:[%s2453 + $0x100] sm:$0xff]
  %v2469 = vld [vmem:[%s2453 + $0x110] sm:$0xff]
  %v2470 = vpack.c.bf16 %v2455, %v2454
  %v2471 = vpack.c.bf16 %v2457, %v2456
  %v2472 = vpack.c.bf16 %v2459, %v2458
  %v2473 = vpack.c.bf16 %v2461, %v2460
  %v2474 = vpack.c.bf16 %v2463, %v2462
  %v2475 = vpack.c.bf16 %v2465, %v2464
  %v2476 = vpack.c.bf16 %v2467, %v2466
  %v2477 = vpack.c.bf16 %v2469, %v2468
  %v2478 = vld [vmem:[%s9 + $0x30] sm:$0xf]
  %v2479 = vld [vmem:[%s9 + $0x34] sm:$0xf]
  %v2482 = vunpack.c.l.b16 %v2478
  %v2483 = vunpack.c.l.b16 %v2479
  %v2484 = vpack.c.b16 %v2483, %v2482
  %v2487 = vsel %vm230, %v2470, 0
  %v2490 = vsel %vm230, %v2471, 0
  %v2493 = vsel %vm230, %v2472, 0
  %v2496 = vsel %vm230, %v2473, 0
  %v2499 = vsel %vm230, %v2474, 0
  %v2502 = vsel %vm230, %v2475, 0
  %v2505 = vsel %vm230, %v2476, 0
  %v2508 = vsel %vm230, %v2477, 0
  %2510 = vmatprep.subr.bf16.mxu0 0
  %2511 = vmatpush1.bf16.msra.mxu0 %v2484
  %2512 = vmatprep.subr.bf16.mxu0 0
  %2513 = vmatpush1.bf16.msra.mxu0 0
  %2514 = vmatprep.subr.bf16.mxu0 0
  %2515 = vmatpush1.bf16.msra.mxu0 0
  %2516 = vmatprep.subr.bf16.mxu0 0
  %2517 = vmatpush1.bf16.msra.mxu0 0
  %2518 = vmatprep.subr.bf16.mxu0 0
  %2519 = vmatpush1.bf16.msra.mxu0 0
  %2520 = vmatprep.subr.bf16.mxu0 0
  %2521 = vmatpush1.bf16.msra.mxu0 0
  %2522 = vmatprep.subr.bf16.mxu0 0
  %2523 = vmatpush1.bf16.msra.mxu0 0
  %2524 = vmatprep.subr.bf16.mxu0 0
  %2525 = vmatpush1.bf16.msra.mxu0 0
  %2526 = vmatprep.subr.bf16.mxu0 0
  %2527 = vmatpush1.bf16.msra.mxu0 0
  %2528 = vmatprep.subr.bf16.mxu0 0
  %2529 = vmatpush1.bf16.msra.mxu0 0
  %2530 = vmatprep.subr.bf16.mxu0 0
  %2531 = vmatpush1.bf16.msra.mxu0 0
  %2532 = vmatprep.subr.bf16.mxu0 0
  %2533 = vmatpush1.bf16.msra.mxu0 0
  %2534 = vmatprep.subr.bf16.mxu0 0
  %2535 = vmatpush1.bf16.msra.mxu0 0
  %2536 = vmatprep.subr.bf16.mxu0 0
  %2537 = vmatpush1.bf16.msra.mxu0 0
  %2538 = vmatprep.subr.bf16.mxu0 0
  %2539 = vmatpush1.bf16.msra.mxu0 0
  %2540 = vmatprep.subr.bf16.mxu0 0
  %2541 = vmatpush1.bf16.msra.mxu0 0
  %2542 = vmatprep.mubr.bf16.mxu0 0
  %2543 = vmatmul.mubr.bf16.gmra.mrb[0].mxu0 %v2487
  %v2544 = vpop.f32.mrb[0].mxu0
  %v2545 = vadd.f32 0.0, %v2544
  %v2546 = vpop.f32.mrb[0].mxu0
  %v2547 = vpop.f32.mrb[0].mxu0
  %v2548 = vadd.f32 0.0, %v2547
  %v2549 = vpop.f32.mrb[0].mxu0
  %2550 = vmatprep.mubr.bf16.mxu0 0
  %2551 = vmatmul.mubr.bf16.gmra.mrb[0].mxu0 %v2490
  %v2552 = vpop.f32.mrb[0].mxu0
  %v2553 = vadd.f32 0.0, %v2552
  %v2554 = vpop.f32.mrb[0].mxu0
  %v2555 = vpop.f32.mrb[0].mxu0
  %v2556 = vadd.f32 0.0, %v2555
  %v2557 = vpop.f32.mrb[0].mxu0
  %2558 = vmatprep.mubr.bf16.mxu0 0
  %2559 = vmatmul.mubr.bf16.gmra.mrb[0].mxu0 %v2493
  %v2560 = vpop.f32.mrb[0].mxu0
  %v2561 = vadd.f32 0.0, %v2560
  %v2562 = vpop.f32.mrb[0].mxu0
  %v2563 = vpop.f32.mrb[0].mxu0
  %v2564 = vadd.f32 0.0, %v2563
  %v2565 = vpop.f32.mrb[0].mxu0
  %2566 = vmatprep.mubr.bf16.mxu0 0
  %2567 = vmatmul.mubr.bf16.gmra.mrb[0].mxu0 %v2496
  %v2568 = vpop.f32.mrb[0].mxu0
  %v2569 = vadd.f32 0.0, %v2568
  %v2570 = vpop.f32.mrb[0].mxu0
  %v2571 = vpop.f32.mrb[0].mxu0
  %v2572 = vadd.f32 0.0, %v2571
  %v2573 = vpop.f32.mrb[0].mxu0
  %2574 = vmatprep.mubr.bf16.mxu0 0
  %2575 = vmatmul.mubr.bf16.gmra.mrb[0].mxu0 %v2499
  %v2576 = vpop.f32.mrb[0].mxu0
  %v2577 = vadd.f32 0.0, %v2576
  %v2578 = vpop.f32.mrb[0].mxu0
  %v2579 = vpop.f32.mrb[0].mxu0
  %v2580 = vadd.f32 0.0, %v2579
  %v2581 = vpop.f32.mrb[0].mxu0
  %2582 = vmatprep.mubr.bf16.mxu0 0
  %2583 = vmatmul.mubr.bf16.gmra.mrb[0].mxu0 %v2502
  %v2584 = vpop.f32.mrb[0].mxu0
  %v2585 = vadd.f32 0.0, %v2584
  %v2586 = vpop.f32.mrb[0].mxu0
  %v2587 = vpop.f32.mrb[0].mxu0
  %v2588 = vadd.f32 0.0, %v2587
  %v2589 = vpop.f32.mrb[0].mxu0
  %2590 = vmatprep.mubr.bf16.mxu0 0
  %2591 = vmatmul.mubr.bf16.gmra.mrb[0].mxu0 %v2505
  %v2592 = vpop.f32.mrb[0].mxu0
  %v2593 = vadd.f32 0.0, %v2592
  %v2594 = vpop.f32.mrb[0].mxu0
  %v2595 = vpop.f32.mrb[0].mxu0
  %v2596 = vadd.f32 0.0, %v2595
  %v2597 = vpop.f32.mrb[0].mxu0
  %2598 = vmatprep.mubr.bf16.mxu0 0
  %2599 = vmatmul.mubr.bf16.gmra.mrb[0].mxu0 %v2508
  %v2600 = vpop.f32.mrb[0].mxu0
  %v2601 = vadd.f32 0.0, %v2600
  %v2602 = vpop.f32.mrb[0].mxu0
  %v2603 = vpop.f32.mrb[0].mxu0
  %v2604 = vadd.f32 0.0, %v2603
  %v2605 = vpop.f32.mrb[0].mxu0
  %2606 = vdwg.mxu0
  %v2607 = vadd.f32 %v2437, %v2545
  %v2608 = vadd.f32 %v2438, %v2548
  %v2609 = vadd.f32 %v2439, %v2553
  %v2610 = vadd.f32 %v2440, %v2556
  %v2611 = vadd.f32 %v2441, %v2561
  %v2612 = vadd.f32 %v2442, %v2564
  %v2613 = vadd.f32 %v2443, %v2569
  %v2614 = vadd.f32 %v2444, %v2572
  %v2615 = vadd.f32 %v2445, %v2577
  %v2616 = vadd.f32 %v2446, %v2580
  %v2617 = vadd.f32 %v2447, %v2585
  %v2618 = vadd.f32 %v2448, %v2588
  %v2619 = vadd.f32 %v2449, %v2593
  %v2620 = vadd.f32 %v2450, %v2596
  %v2621 = vadd.f32 %v2451, %v2601
  %v2622 = vadd.f32 %v2452, %v2604
  %v2623 = vld [vmem:[%s2453 + $0x1] sm:$0xff]
  %v2624 = vld [vmem:[%s2453 + $0x11] sm:$0xff]
  %v2625 = vld [vmem:[%s2453 + $0x21] sm:$0xff]
  %v2626 = vld [vmem:[%s2453 + $0x31] sm:$0xff]
  %v2627 = vld [vmem:[%s2453 + $0x41] sm:$0xff]
  %v2628 = vld [vmem:[%s2453 + $0x51] sm:$0xff]
  %v2629 = vld [vmem:[%s2453 + $0x61] sm:$0xff]
  %v2630 = vld [vmem:[%s2453 + $0x71] sm:$0xff]
  %v2631 = vld [vmem:[%s2453 + $0xa1] sm:$0xff]
  %v2632 = vld [vmem:[%s2453 + $0xb1] sm:$0xff]
  %v2633 = vld [vmem:[%s2453 + $0xc1] sm:$0xff]
  %v2634 = vld [vmem:[%s2453 + $0xd1] sm:$0xff]
  %v2635 = vld [vmem:[%s2453 + $0xe1] sm:$0xff]
  %v2636 = vld [vmem:[%s2453 + $0xf1] sm:$0xff]
  %v2637 = vld [vmem:[%s2453 + $0x101] sm:$0xff]
  %v2638 = vld [vmem:[%s2453 + $0x111] sm:$0xff]
  %v2639 = vpack.c.bf16 %v2624, %v2623
  %v2640 = vpack.c.bf16 %v2626, %v2625
  %v2641 = vpack.c.bf16 %v2628, %v2627
  %v2642 = vpack.c.bf16 %v2630, %v2629
  %v2643 = vpack.c.bf16 %v2632, %v2631
  %v2644 = vpack.c.bf16 %v2634, %v2633
  %v2645 = vpack.c.bf16 %v2636, %v2635
  %v2646 = vpack.c.bf16 %v2638, %v2637
  %v2647 = vld [vmem:[%s9 + $0x38] sm:$0xf]
  %v2648 = vld [vmem:[%s9 + $0x3c] sm:$0xf]
  %v2651 = vunpack.c.l.b16 %v2647
  %v2652 = vunpack.c.l.b16 %v2648
  %v2653 = vpack.c.b16 %v2652, %v2651
  %v2656 = vsel %vm230, %v2639, 0
  %v2659 = vsel %vm230, %v2640, 0
  %v2662 = vsel %vm230, %v2641, 0
  %v2665 = vsel %vm230, %v2642, 0
  %v2668 = vsel %vm230, %v2643, 0
  %v2671 = vsel %vm230, %v2644, 0
  %v2674 = vsel %vm230, %v2645, 0
  %v2677 = vsel %vm230, %v2646, 0
  %2679 = vmatprep.subr.bf16.mxu0 0
  %2680 = vmatpush1.bf16.msra.mxu0 %v2653
  %2681 = vmatprep.subr.bf16.mxu0 0
  %2682 = vmatpush1.bf16.msra.mxu0 0
  %2683 = vmatprep.subr.bf16.mxu0 0
  %2684 = vmatpush1.bf16.msra.mxu0 0
  %2685 = vmatprep.subr.bf16.mxu0 0
  %2686 = vmatpush1.bf16.msra.mxu0 0
  %2687 = vmatprep.subr.bf16.mxu0 0
  %2688 = vmatpush1.bf16.msra.mxu0 0
  %2689 = vmatprep.subr.bf16.mxu0 0
  %2690 = vmatpush1.bf16.msra.mxu0 0
  %2691 = vmatprep.subr.bf16.mxu0 0
  %2692 = vmatpush1.bf16.msra.mxu0 0
  %2693 = vmatprep.subr.bf16.mxu0 0
  %2694 = vmatpush1.bf16.msra.mxu0 0
  %2695 = vmatprep.subr.bf16.mxu0 0
  %2696 = vmatpush1.bf16.msra.mxu0 0
  %2697 = vmatprep.subr.bf16.mxu0 0
  %2698 = vmatpush1.bf16.msra.mxu0 0
  %2699 = vmatprep.subr.bf16.mxu0 0
  %2700 = vmatpush1.bf16.msra.mxu0 0
  %2701 = vmatprep.subr.bf16.mxu0 0
  %2702 = vmatpush1.bf16.msra.mxu0 0
  %2703 = vmatprep.subr.bf16.mxu0 0
  %2704 = vmatpush1.bf16.msra.mxu0 0
  %2705 = vmatprep.subr.bf16.mxu0 0
  %2706 = vmatpush1.bf16.msra.mxu0 0
  %2707 = vmatprep.subr.bf16.mxu0 0
  %2708 = vmatpush1.bf16.msra.mxu0 0
  %2709 = vmatprep.subr.bf16.mxu0 0
  %2710 = vmatpush1.bf16.msra.mxu0 0
  %2711 = vmatprep.mubr.bf16.mxu0 0
  %2712 = vmatmul.mubr.bf16.gmra.mrb[0].mxu0 %v2656
  %v2713 = vpop.f32.mrb[0].mxu0
  %v2714 = vadd.f32 0.0, %v2713
  %v2715 = vpop.f32.mrb[0].mxu0
  %v2716 = vpop.f32.mrb[0].mxu0
  %v2717 = vadd.f32 0.0, %v2716
  %v2718 = vpop.f32.mrb[0].mxu0
  %2719 = vmatprep.mubr.bf16.mxu0 0
  %2720 = vmatmul.mubr.bf16.gmra.mrb[0].mxu0 %v2659
  %v2721 = vpop.f32.mrb[0].mxu0
  %v2722 = vadd.f32 0.0, %v2721
  %v2723 = vpop.f32.mrb[0].mxu0
  %v2724 = vpop.f32.mrb[0].mxu0
  %v2725 = vadd.f32 0.0, %v2724
  %v2726 = vpop.f32.mrb[0].mxu0
  %2727 = vmatprep.mubr.bf16.mxu0 0
  %2728 = vmatmul.mubr.bf16.gmra.mrb[0].mxu0 %v2662
  %v2729 = vpop.f32.mrb[0].mxu0
  %v2730 = vadd.f32 0.0, %v2729
  %v2731 = vpop.f32.mrb[0].mxu0
  %v2732 = vpop.f32.mrb[0].mxu0
  %v2733 = vadd.f32 0.0, %v2732
  %v2734 = vpop.f32.mrb[0].mxu0
  %2735 = vmatprep.mubr.bf16.mxu0 0
  %2736 = vmatmul.mubr.bf16.gmra.mrb[0].mxu0 %v2665
  %v2737 = vpop.f32.mrb[0].mxu0
  %v2738 = vadd.f32 0.0, %v2737
  %v2739 = vpop.f32.mrb[0].mxu0
  %v2740 = vpop.f32.mrb[0].mxu0
  %v2741 = vadd.f32 0.0, %v2740
  %v2742 = vpop.f32.mrb[0].mxu0
  %2743 = vmatprep.mubr.bf16.mxu0 0
  %2744 = vmatmul.mubr.bf16.gmra.mrb[0].mxu0 %v2668
  %v2745 = vpop.f32.mrb[0].mxu0
  %v2746 = vadd.f32 0.0, %v2745
  %v2747 = vpop.f32.mrb[0].mxu0
  %v2748 = vpop.f32.mrb[0].mxu0
  %v2749 = vadd.f32 0.0, %v2748
  %v2750 = vpop.f32.mrb[0].mxu0
  %2751 = vmatprep.mubr.bf16.mxu0 0
  %2752 = vmatmul.mubr.bf16.gmra.mrb[0].mxu0 %v2671
  %v2753 = vpop.f32.mrb[0].mxu0
  %v2754 = vadd.f32 0.0, %v2753
  %v2755 = vpop.f32.mrb[0].mxu0
  %v2756 = vpop.f32.mrb[0].mxu0
  %v2757 = vadd.f32 0.0, %v2756
  %v2758 = vpop.f32.mrb[0].mxu0
  %2759 = vmatprep.mubr.bf16.mxu0 0
  %2760 = vmatmul.mubr.bf16.gmra.mrb[0].mxu0 %v2674
  %v2761 = vpop.f32.mrb[0].mxu0
  %v2762 = vadd.f32 0.0, %v2761
  %v2763 = vpop.f32.mrb[0].mxu0
  %v2764 = vpop.f32.mrb[0].mxu0
  %v2765 = vadd.f32 0.0, %v2764
  %v2766 = vpop.f32.mrb[0].mxu0
  %2767 = vmatprep.mubr.bf16.mxu0 0
  %2768 = vmatmul.mubr.bf16.gmra.mrb[0].mxu0 %v2677
  %v2769 = vpop.f32.mrb[0].mxu0
  %v2770 = vadd.f32 0.0, %v2769
  %v2771 = vpop.f32.mrb[0].mxu0
  %v2772 = vpop.f32.mrb[0].mxu0
  %v2773 = vadd.f32 0.0, %v2772
  %v2774 = vpop.f32.mrb[0].mxu0
  %2775 = vdwg.mxu0
  %v2776 = vadd.f32 %v2607, %v2714
  %v2777 = vadd.f32 %v2608, %v2717
  %v2778 = vadd.f32 %v2609, %v2722
  %v2779 = vadd.f32 %v2610, %v2725
  %v2780 = vadd.f32 %v2611, %v2730
  %v2781 = vadd.f32 %v2612, %v2733
  %v2782 = vadd.f32 %v2613, %v2738
  %v2783 = vadd.f32 %v2614, %v2741
  %v2784 = vadd.f32 %v2615, %v2746
  %v2785 = vadd.f32 %v2616, %v2749
  %v2786 = vadd.f32 %v2617, %v2754
  %v2787 = vadd.f32 %v2618, %v2757
  %v2788 = vadd.f32 %v2619, %v2762
  %v2789 = vadd.f32 %v2620, %v2765
  %v2790 = vadd.f32 %v2621, %v2770
  %v2791 = vadd.f32 %v2622, %v2773
  %v2792 = vld [vmem:[%s2453 + $0x2] sm:$0xff]
  %v2793 = vld [vmem:[%s2453 + $0x12] sm:$0xff]
  %v2794 = vld [vmem:[%s2453 + $0x22] sm:$0xff]
  %v2795 = vld [vmem:[%s2453 + $0x32] sm:$0xff]
  %v2796 = vld [vmem:[%s2453 + $0x42] sm:$0xff]
  %v2797 = vld [vmem:[%s2453 + $0x52] sm:$0xff]
  %v2798 = vld [vmem:[%s2453 + $0x62] sm:$0xff]
  %v2799 = vld [vmem:[%s2453 + $0x72] sm:$0xff]
  %v2800 = vld [vmem:[%s2453 + $0xa2] sm:$0xff]
  %v2801 = vld [vmem:[%s2453 + $0xb2] sm:$0xff]
  %v2802 = vld [vmem:[%s2453 + $0xc2] sm:$0xff]
  %v2803 = vld [vmem:[%s2453 + $0xd2] sm:$0xff]
  %v2804 = vld [vmem:[%s2453 + $0xe2] sm:$0xff]
  %v2805 = vld [vmem:[%s2453 + $0xf2] sm:$0xff]
  %v2806 = vld [vmem:[%s2453 + $0x102] sm:$0xff]
  %v2807 = vld [vmem:[%s2453 + $0x112] sm:$0xff]
  %v2808 = vpack.c.bf16 %v2793, %v2792
  %v2809 = vpack.c.bf16 %v2795, %v2794
  %v2810 = vpack.c.bf16 %v2797, %v2796
  %v2811 = vpack.c.bf16 %v2799, %v2798
  %v2812 = vpack.c.bf16 %v2801, %v2800
  %v2813 = vpack.c.bf16 %v2803, %v2802
  %v2814 = vpack.c.bf16 %v2805, %v2804
  %v2815 = vpack.c.bf16 %v2807, %v2806
  %v2816 = vld [vmem:[%s9 + $0x40] sm:$0xf]
  %v2817 = vld [vmem:[%s9 + $0x44] sm:$0xf]
  %v2820 = vunpack.c.l.b16 %v2816
  %v2821 = vunpack.c.l.b16 %v2817
  %v2822 = vpack.c.b16 %v2821, %v2820
  %v2825 = vsel %vm230, %v2808, 0
  %v2828 = vsel %vm230, %v2809, 0
  %v2831 = vsel %vm230, %v2810, 0
  %v2834 = vsel %vm230, %v2811, 0
  %v2837 = vsel %vm230, %v2812, 0
  %v2840 = vsel %vm230, %v2813, 0
  %v2843 = vsel %vm230, %v2814, 0
  %v2846 = vsel %vm230, %v2815, 0
  %2848 = vmatprep.subr.bf16.mxu0 0
  %2849 = vmatpush1.bf16.msra.mxu0 %v2822
  %2850 = vmatprep.subr.bf16.mxu0 0
  %2851 = vmatpush1.bf16.msra.mxu0 0
  %2852 = vmatprep.subr.bf16.mxu0 0
  %2853 = vmatpush1.bf16.msra.mxu0 0
  %2854 = vmatprep.subr.bf16.mxu0 0
  %2855 = vmatpush1.bf16.msra.mxu0 0
  %2856 = vmatprep.subr.bf16.mxu0 0
  %2857 = vmatpush1.bf16.msra.mxu0 0
  %2858 = vmatprep.subr.bf16.mxu0 0
  %2859 = vmatpush1.bf16.msra.mxu0 0
  %2860 = vmatprep.subr.bf16.mxu0 0
  %2861 = vmatpush1.bf16.msra.mxu0 0
  %2862 = vmatprep.subr.bf16.mxu0 0
  %2863 = vmatpush1.bf16.msra.mxu0 0
  %2864 = vmatprep.subr.bf16.mxu0 0
  %2865 = vmatpush1.bf16.msra.mxu0 0
  %2866 = vmatprep.subr.bf16.mxu0 0
  %2867 = vmatpush1.bf16.msra.mxu0 0
  %2868 = vmatprep.subr.bf16.mxu0 0
  %2869 = vmatpush1.bf16.msra.mxu0 0
  %2870 = vmatprep.subr.bf16.mxu0 0
  %2871 = vmatpush1.bf16.msra.mxu0 0
  %2872 = vmatprep.subr.bf16.mxu0 0
  %2873 = vmatpush1.bf16.msra.mxu0 0
  %2874 = vmatprep.subr.bf16.mxu0 0
  %2875 = vmatpush1.bf16.msra.mxu0 0
  %2876 = vmatprep.subr.bf16.mxu0 0
  %2877 = vmatpush1.bf16.msra.mxu0 0
  %2878 = vmatprep.subr.bf16.mxu0 0
  %2879 = vmatpush1.bf16.msra.mxu0 0
  %2880 = vmatprep.mubr.bf16.mxu0 0
  %2881 = vmatmul.mubr.bf16.gmra.mrb[0].mxu0 %v2825
  %v2882 = vpop.f32.mrb[0].mxu0
  %v2883 = vadd.f32 0.0, %v2882
  %v2884 = vpop.f32.mrb[0].mxu0
  %v2885 = vpop.f32.mrb[0].mxu0
  %v2886 = vadd.f32 0.0, %v2885
  %v2887 = vpop.f32.mrb[0].mxu0
  %2888 = vmatprep.mubr.bf16.mxu0 0
  %2889 = vmatmul.mubr.bf16.gmra.mrb[0].mxu0 %v2828
  %v2890 = vpop.f32.mrb[0].mxu0
  %v2891 = vadd.f32 0.0, %v2890
  %v2892 = vpop.f32.mrb[0].mxu0
  %v2893 = vpop.f32.mrb[0].mxu0
  %v2894 = vadd.f32 0.0, %v2893
  %v2895 = vpop.f32.mrb[0].mxu0
  %2896 = vmatprep.mubr.bf16.mxu0 0
  %2897 = vmatmul.mubr.bf16.gmra.mrb[0].mxu0 %v2831
  %v2898 = vpop.f32.mrb[0].mxu0
  %v2899 = vadd.f32 0.0, %v2898
  %v2900 = vpop.f32.mrb[0].mxu0
  %v2901 = vpop.f32.mrb[0].mxu0
  %v2902 = vadd.f32 0.0, %v2901
  %v2903 = vpop.f32.mrb[0].mxu0
  %2904 = vmatprep.mubr.bf16.mxu0 0
  %2905 = vmatmul.mubr.bf16.gmra.mrb[0].mxu0 %v2834
  %v2906 = vpop.f32.mrb[0].mxu0
  %v2907 = vadd.f32 0.0, %v2906
  %v2908 = vpop.f32.mrb[0].mxu0
  %v2909 = vpop.f32.mrb[0].mxu0
  %v2910 = vadd.f32 0.0, %v2909
  %v2911 = vpop.f32.mrb[0].mxu0
  %2912 = vmatprep.mubr.bf16.mxu0 0
  %2913 = vmatmul.mubr.bf16.gmra.mrb[0].mxu0 %v2837
  %v2914 = vpop.f32.mrb[0].mxu0
  %v2915 = vadd.f32 0.0, %v2914
  %v2916 = vpop.f32.mrb[0].mxu0
  %v2917 = vpop.f32.mrb[0].mxu0
  %v2918 = vadd.f32 0.0, %v2917
  %v2919 = vpop.f32.mrb[0].mxu0
  %2920 = vmatprep.mubr.bf16.mxu0 0
  %2921 = vmatmul.mubr.bf16.gmra.mrb[0].mxu0 %v2840
  %v2922 = vpop.f32.mrb[0].mxu0
  %v2923 = vadd.f32 0.0, %v2922
  %v2924 = vpop.f32.mrb[0].mxu0
  %v2925 = vpop.f32.mrb[0].mxu0
  %v2926 = vadd.f32 0.0, %v2925
  %v2927 = vpop.f32.mrb[0].mxu0
  %2928 = vmatprep.mubr.bf16.mxu0 0
  %2929 = vmatmul.mubr.bf16.gmra.mrb[0].mxu0 %v2843
  %v2930 = vpop.f32.mrb[0].mxu0
  %v2931 = vadd.f32 0.0, %v2930
  %v2932 = vpop.f32.mrb[0].mxu0
  %v2933 = vpop.f32.mrb[0].mxu0
  %v2934 = vadd.f32 0.0, %v2933
  %v2935 = vpop.f32.mrb[0].mxu0
  %2936 = vmatprep.mubr.bf16.mxu0 0
  %2937 = vmatmul.mubr.bf16.gmra.mrb[0].mxu0 %v2846
  %v2938 = vpop.f32.mrb[0].mxu0
  %v2939 = vadd.f32 0.0, %v2938
  %v2940 = vpop.f32.mrb[0].mxu0
  %v2941 = vpop.f32.mrb[0].mxu0
  %v2942 = vadd.f32 0.0, %v2941
  %v2943 = vpop.f32.mrb[0].mxu0
  %2944 = vdwg.mxu0
  %v2945 = vadd.f32 %v2776, %v2883
  %v2946 = vadd.f32 %v2777, %v2886
  %v2947 = vadd.f32 %v2778, %v2891
  %v2948 = vadd.f32 %v2779, %v2894
  %v2949 = vadd.f32 %v2780, %v2899
  %v2950 = vadd.f32 %v2781, %v2902
  %v2951 = vadd.f32 %v2782, %v2907
  %v2952 = vadd.f32 %v2783, %v2910
  %v2953 = vadd.f32 %v2784, %v2915
  %v2954 = vadd.f32 %v2785, %v2918
  %v2955 = vadd.f32 %v2786, %v2923
  %v2956 = vadd.f32 %v2787, %v2926
  %v2957 = vadd.f32 %v2788, %v2931
  %v2958 = vadd.f32 %v2789, %v2934
  %v2959 = vadd.f32 %v2790, %v2939
  %v2960 = vadd.f32 %v2791, %v2942
  %v2961 = vld [vmem:[%s10] sm:$0x1]
  %v2963 = vlaneseq
  %v2964 = vshrl.u32 %v2963, 7
  %v2965 = vsub.s32 0, %v2964
  %v2966 = vrot.slane %v2961, %v2965
  %v2968 = vadd.f32 %v2945, %v2966
  %v2969 = vadd.f32 %v2946, %v2966
  %v2970 = vadd.f32 %v2947, %v2966
  %v2971 = vadd.f32 %v2948, %v2966
  %v2972 = vadd.f32 %v2949, %v2966
  %v2973 = vadd.f32 %v2950, %v2966
  %v2974 = vadd.f32 %v2951, %v2966
  %v2975 = vadd.f32 %v2952, %v2966
  %v2976 = vadd.f32 %v2953, %v2966
  %v2977 = vadd.f32 %v2954, %v2966
  %v2978 = vadd.f32 %v2955, %v2966
  %v2979 = vadd.f32 %v2956, %v2966
  %v2980 = vadd.f32 %v2957, %v2966
  %v2981 = vadd.f32 %v2958, %v2966
  %v2982 = vadd.f32 %v2959, %v2966
  %v2983 = vadd.f32 %v2960, %v2966
  %vm2984 = vcmp.ge.f32.partialorder %v2968, 0.0
  %vm2985 = vcmp.ge.f32.partialorder %v2969, 0.0
  %vm2986 = vcmp.ge.f32.partialorder %v2970, 0.0
  %vm2987 = vcmp.ge.f32.partialorder %v2971, 0.0
  %vm2988 = vcmp.ge.f32.partialorder %v2972, 0.0
  %vm2989 = vcmp.ge.f32.partialorder %v2973, 0.0
  %vm2990 = vcmp.ge.f32.partialorder %v2974, 0.0
  %vm2991 = vcmp.ge.f32.partialorder %v2975, 0.0
  %vm2992 = vcmp.ge.f32.partialorder %v2976, 0.0
  %vm2993 = vcmp.ge.f32.partialorder %v2977, 0.0
  %vm2994 = vcmp.ge.f32.partialorder %v2978, 0.0
  %vm2995 = vcmp.ge.f32.partialorder %v2979, 0.0
  %vm2996 = vcmp.ge.f32.partialorder %v2980, 0.0
  %vm2997 = vcmp.ge.f32.partialorder %v2981, 0.0
  %vm2998 = vcmp.ge.f32.partialorder %v2982, 0.0
  %vm2999 = vcmp.ge.f32.partialorder %v2983, 0.0
  %v3000 = vmul.f32 %v2968, 0.1
  %v3001 = vmul.f32 %v2969, 0.1
  %v3002 = vmul.f32 %v2970, 0.1
  %v3003 = vmul.f32 %v2971, 0.1
  %v3004 = vmul.f32 %v2972, 0.1
  %v3005 = vmul.f32 %v2973, 0.1
  %v3006 = vmul.f32 %v2974, 0.1
  %v3007 = vmul.f32 %v2975, 0.1
  %v3008 = vmul.f32 %v2976, 0.1
  %v3009 = vmul.f32 %v2977, 0.1
  %v3010 = vmul.f32 %v2978, 0.1
  %v3011 = vmul.f32 %v2979, 0.1
  %v3012 = vmul.f32 %v2980, 0.1
  %v3013 = vmul.f32 %v2981, 0.1
  %v3014 = vmul.f32 %v2982, 0.1
  %v3015 = vmul.f32 %v2983, 0.1
  %v3016 = vsel %vm2984, %v2968, %v3000
  %v3017 = vsel %vm2985, %v2969, %v3001
  %v3018 = vsel %vm2986, %v2970, %v3002
  %v3019 = vsel %vm2987, %v2971, %v3003
  %v3020 = vsel %vm2988, %v2972, %v3004
  %v3021 = vsel %vm2989, %v2973, %v3005
  %v3022 = vsel %vm2990, %v2974, %v3006
  %v3023 = vsel %vm2991, %v2975, %v3007
  %v3024 = vsel %vm2992, %v2976, %v3008
  %v3025 = vsel %vm2993, %v2977, %v3009
  %v3026 = vsel %vm2994, %v2978, %v3010
  %v3027 = vsel %vm2995, %v2979, %v3011
  %v3028 = vsel %vm2996, %v2980, %v3012
  %v3029 = vsel %vm2997, %v2981, %v3013
  %v3030 = vsel %vm2998, %v2982, %v3014
  %v3031 = vsel %vm2999, %v2983, %v3015
  %3032 = vst.msk [vmem:[%s16] sm:$0xff] %vm230, %v3016
  %3033 = vst.msk [vmem:[%s16 + $0x8] sm:$0xff] %vm230, %v3017
  %3034 = vst.msk [vmem:[%s16 + $0x10] sm:$0xff] %vm230, %v3018
  %3035 = vst.msk [vmem:[%s16 + $0x18] sm:$0xff] %vm230, %v3019
  %3036 = vst.msk [vmem:[%s16 + $0x20] sm:$0xff] %vm230, %v3020
  %3037 = vst.msk [vmem:[%s16 + $0x28] sm:$0xff] %vm230, %v3021
  %3038 = vst.msk [vmem:[%s16 + $0x30] sm:$0xff] %vm230, %v3022
  %3039 = vst.msk [vmem:[%s16 + $0x38] sm:$0xff] %vm230, %v3023
  %3040 = vst.msk [vmem:[%s16 + $0x40] sm:$0xff] %vm230, %v3024
  %3041 = vst.msk [vmem:[%s16 + $0x48] sm:$0xff] %vm230, %v3025
  %3042 = vst.msk [vmem:[%s16 + $0x50] sm:$0xff] %vm230, %v3026
  %3043 = vst.msk [vmem:[%s16 + $0x58] sm:$0xff] %vm230, %v3027
  %3044 = vst.msk [vmem:[%s16 + $0x60] sm:$0xff] %vm230, %v3028
  %3045 = vst.msk [vmem:[%s16 + $0x68] sm:$0xff] %vm230, %v3029
  %3046 = vst.msk [vmem:[%s16 + $0x70] sm:$0xff] %vm230, %v3030
  %3047 = vst.msk [vmem:[%s16 + $0x78] sm:$0xff] %vm230, %v3031
  %v3048 = vld [vmem:[%s14] sm:$0xf]
  %v3049 = vld [vmem:[%s14 + $0x4] sm:$0xf]
  %v3050 = vld [vmem:[%s14 + $0x8] sm:$0xf]
  %v3051 = vld [vmem:[%s14 + $0xc] sm:$0xf]
  %v3052 = vld [vmem:[%s14 + $0x10] sm:$0xf]
  %v3053 = vld [vmem:[%s14 + $0x14] sm:$0xf]
  %v3054 = vld [vmem:[%s14 + $0x18] sm:$0xf]
  %v3055 = vld [vmem:[%s14 + $0x1c] sm:$0xf]
  %v3056 = vld [vmem:[%s14 + $0x20] sm:$0xf]
  %v3057 = vld [vmem:[%s14 + $0x24] sm:$0xf]
  %v3058 = vld [vmem:[%s14 + $0x28] sm:$0xf]
  %v3059 = vld [vmem:[%s14 + $0x2c] sm:$0xf]
  %v3060 = vld [vmem:[%s14 + $0x30] sm:$0xf]
  %v3061 = vld [vmem:[%s14 + $0x34] sm:$0xf]
  %v3062 = vld [vmem:[%s14 + $0x38] sm:$0xf]
  %v3063 = vld [vmem:[%s14 + $0x3c] sm:$0xf]
  %v3064 = vld [vmem:[%s14 + $0x40] sm:$0xf]
  %v3065 = vld [vmem:[%s14 + $0x44] sm:$0xf]
  %v3066 = vld [vmem:[%s14 + $0x48] sm:$0xf]
  %v3067 = vld [vmem:[%s14 + $0x4c] sm:$0xf]
  %v3068 = vld [vmem:[%s14 + $0x50] sm:$0xf]
  %v3069 = vld [vmem:[%s14 + $0x54] sm:$0xf]
  %v3070 = vld [vmem:[%s14 + $0x58] sm:$0xf]
  %v3071 = vld [vmem:[%s14 + $0x5c] sm:$0xf]
  %v3072 = vld [vmem:[%s14 + $0x60] sm:$0xf]
  %v3073 = vld [vmem:[%s14 + $0x64] sm:$0xf]
  %v3074 = vld [vmem:[%s14 + $0x68] sm:$0xf]
  %v3075 = vld [vmem:[%s14 + $0x6c] sm:$0xf]
  %v3076 = vld [vmem:[%s14 + $0x70] sm:$0xf]
  %v3077 = vld [vmem:[%s14 + $0x74] sm:$0xf]
  %v3078 = vld [vmem:[%s14 + $0x78] sm:$0xf]
  %v3079 = vld [vmem:[%s14 + $0x7c] sm:$0xf]
  %v3080 = vld [vmem:[%s14 + $0x80] sm:$0xf]
  %v3081 = vld [vmem:[%s14 + $0x84] sm:$0xf]
  %v3082 = vld [vmem:[%s14 + $0x88] sm:$0xf]
  %v3083 = vld [vmem:[%s14 + $0x8c] sm:$0xf]
  %v3084 = vld [vmem:[%s14 + $0x90] sm:$0xf]
  %v3085 = vld [vmem:[%s14 + $0x94] sm:$0xf]
  %v3086 = vld [vmem:[%s14 + $0x98] sm:$0xf]
  %v3087 = vld [vmem:[%s14 + $0x9c] sm:$0xf]
  %v3088 = vld [vmem:[%s14 + $0xa0] sm:$0xf]
  %v3089 = vld [vmem:[%s14 + $0xa4] sm:$0xf]
  %v3090 = vld [vmem:[%s14 + $0xa8] sm:$0xf]
  %v3091 = vld [vmem:[%s14 + $0xac] sm:$0xf]
  %v3092 = vld [vmem:[%s14 + $0xb0] sm:$0xf]
  %v3093 = vld [vmem:[%s14 + $0xb4] sm:$0xf]
  %v3094 = vld [vmem:[%s14 + $0xb8] sm:$0xf]
  %v3095 = vld [vmem:[%s14 + $0xbc] sm:$0xf]
  %v3096 = vld [vmem:[%s14 + $0xc0] sm:$0xf]
  %v3097 = vld [vmem:[%s14 + $0xc4] sm:$0xf]
  %v3098 = vld [vmem:[%s14 + $0xc8] sm:$0xf]
  %v3099 = vld [vmem:[%s14 + $0xcc] sm:$0xf]
  %v3100 = vld [vmem:[%s14 + $0xd0] sm:$0xf]
  %v3101 = vld [vmem:[%s14 + $0xd4] sm:$0xf]
  %v3102 = vld [vmem:[%s14 + $0xd8] sm:$0xf]
  %v3103 = vld [vmem:[%s14 + $0xdc] sm:$0xf]
  %v3104 = vld [vmem:[%s14 + $0xe0] sm:$0xf]
  %v3105 = vld [vmem:[%s14 + $0xe4] sm:$0xf]
  %v3106 = vld [vmem:[%s14 + $0xe8] sm:$0xf]
  %v3107 = vld [vmem:[%s14 + $0xec] sm:$0xf]
  %v3108 = vld [vmem:[%s14 + $0xf0] sm:$0xf]
  %v3109 = vld [vmem:[%s14 + $0xf4] sm:$0xf]
  %v3110 = vld [vmem:[%s14 + $0xf8] sm:$0xf]
  %v3111 = vld [vmem:[%s14 + $0xfc] sm:$0xf]
  %v3112 = vpack.c.bf16 %v3017, %v3016
  %v3113 = vpack.c.bf16 %v3019, %v3018
  %v3114 = vpack.c.bf16 %v3021, %v3020
  %v3115 = vpack.c.bf16 %v3023, %v3022
  %v3116 = vpack.c.bf16 %v3025, %v3024
  %v3117 = vpack.c.bf16 %v3027, %v3026
  %v3118 = vpack.c.bf16 %v3029, %v3028
  %v3119 = vpack.c.bf16 %v3031, %v3030
  %v3184 = vunpack.c.l.b16 %v3048
  %v3185 = vunpack.c.l.b16 %v3049
  %v3186 = vunpack.c.l.b16 %v3050
  %v3187 = vunpack.c.l.b16 %v3051
  %v3188 = vunpack.c.l.b16 %v3052
  %v3189 = vunpack.c.l.b16 %v3053
  %v3190 = vunpack.c.l.b16 %v3054
  %v3191 = vunpack.c.l.b16 %v3055
  %v3192 = vunpack.c.l.b16 %v3056
  %v3193 = vunpack.c.l.b16 %v3057
  %v3194 = vunpack.c.l.b16 %v3058
  %v3195 = vunpack.c.l.b16 %v3059
  %v3196 = vunpack.c.l.b16 %v3060
  %v3197 = vunpack.c.l.b16 %v3061
  %v3198 = vunpack.c.l.b16 %v3062
  %v3199 = vunpack.c.l.b16 %v3063
  %v3200 = vunpack.c.l.b16 %v3064
  %v3201 = vunpack.c.l.b16 %v3065
  %v3202 = vunpack.c.l.b16 %v3066
  %v3203 = vunpack.c.l.b16 %v3067
  %v3204 = vunpack.c.l.b16 %v3068
  %v3205 = vunpack.c.l.b16 %v3069
  %v3206 = vunpack.c.l.b16 %v3070
  %v3207 = vunpack.c.l.b16 %v3071
  %v3208 = vunpack.c.l.b16 %v3072
  %v3209 = vunpack.c.l.b16 %v3073
  %v3210 = vunpack.c.l.b16 %v3074
  %v3211 = vunpack.c.l.b16 %v3075
  %v3212 = vunpack.c.l.b16 %v3076
  %v3213 = vunpack.c.l.b16 %v3077
  %v3214 = vunpack.c.l.b16 %v3078
  %v3215 = vunpack.c.l.b16 %v3079
  %v3216 = vunpack.c.l.b16 %v3080
  %v3217 = vunpack.c.l.b16 %v3081
  %v3218 = vunpack.c.l.b16 %v3082
  %v3219 = vunpack.c.l.b16 %v3083
  %v3220 = vunpack.c.l.b16 %v3084
  %v3221 = vunpack.c.l.b16 %v3085
  %v3222 = vunpack.c.l.b16 %v3086
  %v3223 = vunpack.c.l.b16 %v3087
  %v3224 = vunpack.c.l.b16 %v3088
  %v3225 = vunpack.c.l.b16 %v3089
  %v3226 = vunpack.c.l.b16 %v3090
  %v3227 = vunpack.c.l.b16 %v3091
  %v3228 = vunpack.c.l.b16 %v3092
  %v3229 = vunpack.c.l.b16 %v3093
  %v3230 = vunpack.c.l.b16 %v3094
  %v3231 = vunpack.c.l.b16 %v3095
  %v3232 = vunpack.c.l.b16 %v3096
  %v3233 = vunpack.c.l.b16 %v3097
  %v3234 = vunpack.c.l.b16 %v3098
  %v3235 = vunpack.c.l.b16 %v3099
  %v3236 = vunpack.c.l.b16 %v3100
  %v3237 = vunpack.c.l.b16 %v3101
  %v3238 = vunpack.c.l.b16 %v3102
  %v3239 = vunpack.c.l.b16 %v3103
  %v3240 = vunpack.c.l.b16 %v3104
  %v3241 = vunpack.c.l.b16 %v3105
  %v3242 = vunpack.c.l.b16 %v3106
  %v3243 = vunpack.c.l.b16 %v3107
  %v3244 = vunpack.c.l.b16 %v3108
  %v3245 = vunpack.c.l.b16 %v3109
  %v3246 = vunpack.c.l.b16 %v3110
  %v3247 = vunpack.c.l.b16 %v3111
  %v3248 = vpack.c.b16 %v3185, %v3184
  %v3249 = vpack.c.b16 %v3187, %v3186
  %v3250 = vpack.c.b16 %v3189, %v3188
  %v3251 = vpack.c.b16 %v3191, %v3190
  %v3252 = vpack.c.b16 %v3193, %v3192
  %v3253 = vpack.c.b16 %v3195, %v3194
  %v3254 = vpack.c.b16 %v3197, %v3196
  %v3255 = vpack.c.b16 %v3199, %v3198
  %v3256 = vpack.c.b16 %v3201, %v3200
  %v3257 = vpack.c.b16 %v3203, %v3202
  %v3258 = vpack.c.b16 %v3205, %v3204
  %v3259 = vpack.c.b16 %v3207, %v3206
  %v3260 = vpack.c.b16 %v3209, %v3208
  %v3261 = vpack.c.b16 %v3211, %v3210
  %v3262 = vpack.c.b16 %v3213, %v3212
  %v3263 = vpack.c.b16 %v3215, %v3214
  %v3264 = vpack.c.b16 %v3217, %v3216
  %v3265 = vpack.c.b16 %v3219, %v3218
  %v3266 = vpack.c.b16 %v3221, %v3220
  %v3267 = vpack.c.b16 %v3223, %v3222
  %v3268 = vpack.c.b16 %v3225, %v3224
  %v3269 = vpack.c.b16 %v3227, %v3226
  %v3270 = vpack.c.b16 %v3229, %v3228
  %v3271 = vpack.c.b16 %v3231, %v3230
  %v3272 = vpack.c.b16 %v3233, %v3232
  %v3273 = vpack.c.b16 %v3235, %v3234
  %v3274 = vpack.c.b16 %v3237, %v3236
  %v3275 = vpack.c.b16 %v3239, %v3238
  %v3276 = vpack.c.b16 %v3241, %v3240
  %v3277 = vpack.c.b16 %v3243, %v3242
  %v3278 = vpack.c.b16 %v3245, %v3244
  %v3279 = vpack.c.b16 %v3247, %v3246
  %3312 = vmatprep.subr.bf16.mxu0 0
  %3313 = vmatpush1.bf16.msra.mxu0 %v3112
  %3314 = vmatprep.subr.bf16.mxu0 0
  %3315 = vmatpush1.bf16.msra.mxu0 %v3113
  %3316 = vmatprep.subr.bf16.mxu0 0
  %3317 = vmatpush1.bf16.msra.mxu0 %v3114
  %3318 = vmatprep.subr.bf16.mxu0 0
  %3319 = vmatpush1.bf16.msra.mxu0 %v3115
  %3320 = vmatprep.subr.bf16.mxu0 0
  %3321 = vmatpush1.bf16.msra.mxu0 %v3116
  %3322 = vmatprep.subr.bf16.mxu0 0
  %3323 = vmatpush1.bf16.msra.mxu0 %v3117
  %3324 = vmatprep.subr.bf16.mxu0 0
  %3325 = vmatpush1.bf16.msra.mxu0 %v3118
  %3326 = vmatprep.subr.bf16.mxu0 0
  %3327 = vmatpush1.bf16.msra.mxu0 %v3119
  %3328 = vmatprep.subr.bf16.mxu0 0
  %3329 = vmatpush1.bf16.msra.mxu0 0
  %3330 = vmatprep.subr.bf16.mxu0 0
  %3331 = vmatpush1.bf16.msra.mxu0 0
  %3332 = vmatprep.subr.bf16.mxu0 0
  %3333 = vmatpush1.bf16.msra.mxu0 0
  %3334 = vmatprep.subr.bf16.mxu0 0
  %3335 = vmatpush1.bf16.msra.mxu0 0
  %3336 = vmatprep.subr.bf16.mxu0 0
  %3337 = vmatpush1.bf16.msra.mxu0 0
  %3338 = vmatprep.subr.bf16.mxu0 0
  %3339 = vmatpush1.bf16.msra.mxu0 0
  %3340 = vmatprep.subr.bf16.mxu0 0
  %3341 = vmatpush1.bf16.msra.mxu0 0
  %3342 = vmatprep.subr.bf16.mxu0 0
  %3343 = vmatpush1.bf16.msra.mxu0 0
  %3344 = vmatprep.mubr.bf16.mxu0 0
  %3345 = vmatmul.mubr.bf16.gmra.mrb[0].mxu0 %v3248
  %v3346 = vpop.f32.mrb[0].mxu0
  %v3347 = vadd.f32 0.0, %v3346
  %v3348 = vpop.f32.mrb[0].mxu0
  %v3349 = vpop.f32.mrb[0].mxu0
  %v3350 = vadd.f32 0.0, %v3349
  %v3351 = vpop.f32.mrb[0].mxu0
  %3352 = vmatprep.mubr.bf16.mxu0 0
  %3353 = vmatmul.mubr.bf16.gmra.mrb[0].mxu0 %v3249
  %v3354 = vpop.f32.mrb[0].mxu0
  %v3355 = vadd.f32 0.0, %v3354
  %v3356 = vpop.f32.mrb[0].mxu0
  %v3357 = vpop.f32.mrb[0].mxu0
  %v3358 = vadd.f32 0.0, %v3357
  %v3359 = vpop.f32.mrb[0].mxu0
  %3360 = vmatprep.mubr.bf16.mxu0 0
  %3361 = vmatmul.mubr.bf16.gmra.mrb[0].mxu0 %v3250
  %v3362 = vpop.f32.mrb[0].mxu0
  %v3363 = vadd.f32 0.0, %v3362
  %v3364 = vpop.f32.mrb[0].mxu0
  %v3365 = vpop.f32.mrb[0].mxu0
  %v3366 = vadd.f32 0.0, %v3365
  %v3367 = vpop.f32.mrb[0].mxu0
  %3368 = vmatprep.mubr.bf16.mxu0 0
  %3369 = vmatmul.mubr.bf16.gmra.mrb[0].mxu0 %v3251
  %v3370 = vpop.f32.mrb[0].mxu0
  %v3371 = vadd.f32 0.0, %v3370
  %v3372 = vpop.f32.mrb[0].mxu0
  %v3373 = vpop.f32.mrb[0].mxu0
  %v3374 = vadd.f32 0.0, %v3373
  %v3375 = vpop.f32.mrb[0].mxu0
  %3376 = vmatprep.mubr.bf16.mxu0 0
  %3377 = vmatmul.mubr.bf16.gmra.mrb[0].mxu0 %v3252
  %v3378 = vpop.f32.mrb[0].mxu0
  %v3379 = vadd.f32 0.0, %v3378
  %v3380 = vpop.f32.mrb[0].mxu0
  %v3381 = vpop.f32.mrb[0].mxu0
  %v3382 = vadd.f32 0.0, %v3381
  %v3383 = vpop.f32.mrb[0].mxu0
  %3384 = vmatprep.mubr.bf16.mxu0 0
  %3385 = vmatmul.mubr.bf16.gmra.mrb[0].mxu0 %v3253
  %v3386 = vpop.f32.mrb[0].mxu0
  %v3387 = vadd.f32 0.0, %v3386
  %v3388 = vpop.f32.mrb[0].mxu0
  %v3389 = vpop.f32.mrb[0].mxu0
  %v3390 = vadd.f32 0.0, %v3389
  %v3391 = vpop.f32.mrb[0].mxu0
  %3392 = vmatprep.mubr.bf16.mxu0 0
  %3393 = vmatmul.mubr.bf16.gmra.mrb[0].mxu0 %v3254
  %v3394 = vpop.f32.mrb[0].mxu0
  %v3395 = vadd.f32 0.0, %v3394
  %v3396 = vpop.f32.mrb[0].mxu0
  %v3397 = vpop.f32.mrb[0].mxu0
  %v3398 = vadd.f32 0.0, %v3397
  %v3399 = vpop.f32.mrb[0].mxu0
  %3400 = vmatprep.mubr.bf16.mxu0 0
  %3401 = vmatmul.mubr.bf16.gmra.mrb[0].mxu0 %v3255
  %v3402 = vpop.f32.mrb[0].mxu0
  %v3403 = vadd.f32 0.0, %v3402
  %v3404 = vpop.f32.mrb[0].mxu0
  %v3405 = vpop.f32.mrb[0].mxu0
  %v3406 = vadd.f32 0.0, %v3405
  %v3407 = vpop.f32.mrb[0].mxu0
  %3408 = vmatprep.mubr.bf16.mxu0 0
  %3409 = vmatmul.mubr.bf16.gmra.mrb[0].mxu0 %v3256
  %v3410 = vpop.f32.mrb[0].mxu0
  %v3411 = vadd.f32 0.0, %v3410
  %v3412 = vpop.f32.mrb[0].mxu0
  %v3413 = vpop.f32.mrb[0].mxu0
  %v3414 = vadd.f32 0.0, %v3413
  %v3415 = vpop.f32.mrb[0].mxu0
  %3416 = vmatprep.mubr.bf16.mxu0 0
  %3417 = vmatmul.mubr.bf16.gmra.mrb[0].mxu0 %v3257
  %v3418 = vpop.f32.mrb[0].mxu0
  %v3419 = vadd.f32 0.0, %v3418
  %v3420 = vpop.f32.mrb[0].mxu0
  %v3421 = vpop.f32.mrb[0].mxu0
  %v3422 = vadd.f32 0.0, %v3421
  %v3423 = vpop.f32.mrb[0].mxu0
  %3424 = vmatprep.mubr.bf16.mxu0 0
  %3425 = vmatmul.mubr.bf16.gmra.mrb[0].mxu0 %v3258
  %v3426 = vpop.f32.mrb[0].mxu0
  %v3427 = vadd.f32 0.0, %v3426
  %v3428 = vpop.f32.mrb[0].mxu0
  %v3429 = vpop.f32.mrb[0].mxu0
  %v3430 = vadd.f32 0.0, %v3429
  %v3431 = vpop.f32.mrb[0].mxu0
  %3432 = vmatprep.mubr.bf16.mxu0 0
  %3433 = vmatmul.mubr.bf16.gmra.mrb[0].mxu0 %v3259
  %v3434 = vpop.f32.mrb[0].mxu0
  %v3435 = vadd.f32 0.0, %v3434
  %v3436 = vpop.f32.mrb[0].mxu0
  %v3437 = vpop.f32.mrb[0].mxu0
  %v3438 = vadd.f32 0.0, %v3437
  %v3439 = vpop.f32.mrb[0].mxu0
  %3440 = vmatprep.mubr.bf16.mxu0 0
  %3441 = vmatmul.mubr.bf16.gmra.mrb[0].mxu0 %v3260
  %v3442 = vpop.f32.mrb[0].mxu0
  %v3443 = vadd.f32 0.0, %v3442
  %v3444 = vpop.f32.mrb[0].mxu0
  %v3445 = vpop.f32.mrb[0].mxu0
  %v3446 = vadd.f32 0.0, %v3445
  %v3447 = vpop.f32.mrb[0].mxu0
  %3448 = vmatprep.mubr.bf16.mxu0 0
  %3449 = vmatmul.mubr.bf16.gmra.mrb[0].mxu0 %v3261
  %v3450 = vpop.f32.mrb[0].mxu0
  %v3451 = vadd.f32 0.0, %v3450
  %v3452 = vpop.f32.mrb[0].mxu0
  %v3453 = vpop.f32.mrb[0].mxu0
  %v3454 = vadd.f32 0.0, %v3453
  %v3455 = vpop.f32.mrb[0].mxu0
  %3456 = vmatprep.mubr.bf16.mxu0 0
  %3457 = vmatmul.mubr.bf16.gmra.mrb[0].mxu0 %v3262
  %v3458 = vpop.f32.mrb[0].mxu0
  %v3459 = vadd.f32 0.0, %v3458
  %v3460 = vpop.f32.mrb[0].mxu0
  %v3461 = vpop.f32.mrb[0].mxu0
  %v3462 = vadd.f32 0.0, %v3461
  %v3463 = vpop.f32.mrb[0].mxu0
  %3464 = vmatprep.mubr.bf16.mxu0 0
  %3465 = vmatmul.mubr.bf16.gmra.mrb[0].mxu0 %v3263
  %v3466 = vpop.f32.mrb[0].mxu0
  %v3467 = vadd.f32 0.0, %v3466
  %v3468 = vpop.f32.mrb[0].mxu0
  %v3469 = vpop.f32.mrb[0].mxu0
  %v3470 = vadd.f32 0.0, %v3469
  %v3471 = vpop.f32.mrb[0].mxu0
  %3472 = vmatprep.mubr.bf16.mxu0 0
  %3473 = vmatmul.mubr.bf16.gmra.mrb[0].mxu0 %v3264
  %v3474 = vpop.f32.mrb[0].mxu0
  %v3475 = vadd.f32 0.0, %v3474
  %v3476 = vpop.f32.mrb[0].mxu0
  %v3477 = vpop.f32.mrb[0].mxu0
  %v3478 = vadd.f32 0.0, %v3477
  %v3479 = vpop.f32.mrb[0].mxu0
  %3480 = vmatprep.mubr.bf16.mxu0 0
  %3481 = vmatmul.mubr.bf16.gmra.mrb[0].mxu0 %v3265
  %v3482 = vpop.f32.mrb[0].mxu0
  %v3483 = vadd.f32 0.0, %v3482
  %v3484 = vpop.f32.mrb[0].mxu0
  %v3485 = vpop.f32.mrb[0].mxu0
  %v3486 = vadd.f32 0.0, %v3485
  %v3487 = vpop.f32.mrb[0].mxu0
  %3488 = vmatprep.mubr.bf16.mxu0 0
  %3489 = vmatmul.mubr.bf16.gmra.mrb[0].mxu0 %v3266
  %v3490 = vpop.f32.mrb[0].mxu0
  %v3491 = vadd.f32 0.0, %v3490
  %v3492 = vpop.f32.mrb[0].mxu0
  %v3493 = vpop.f32.mrb[0].mxu0
  %v3494 = vadd.f32 0.0, %v3493
  %v3495 = vpop.f32.mrb[0].mxu0
  %3496 = vmatprep.mubr.bf16.mxu0 0
  %3497 = vmatmul.mubr.bf16.gmra.mrb[0].mxu0 %v3267
  %v3498 = vpop.f32.mrb[0].mxu0
  %v3499 = vadd.f32 0.0, %v3498
  %v3500 = vpop.f32.mrb[0].mxu0
  %v3501 = vpop.f32.mrb[0].mxu0
  %v3502 = vadd.f32 0.0, %v3501
  %v3503 = vpop.f32.mrb[0].mxu0
  %3504 = vmatprep.mubr.bf16.mxu0 0
  %3505 = vmatmul.mubr.bf16.gmra.mrb[0].mxu0 %v3268
  %v3506 = vpop.f32.mrb[0].mxu0
  %v3507 = vadd.f32 0.0, %v3506
  %v3508 = vpop.f32.mrb[0].mxu0
  %v3509 = vpop.f32.mrb[0].mxu0
  %v3510 = vadd.f32 0.0, %v3509
  %v3511 = vpop.f32.mrb[0].mxu0
  %3512 = vmatprep.mubr.bf16.mxu0 0
  %3513 = vmatmul.mubr.bf16.gmra.mrb[0].mxu0 %v3269
  %v3514 = vpop.f32.mrb[0].mxu0
  %v3515 = vadd.f32 0.0, %v3514
  %v3516 = vpop.f32.mrb[0].mxu0
  %v3517 = vpop.f32.mrb[0].mxu0
  %v3518 = vadd.f32 0.0, %v3517
  %v3519 = vpop.f32.mrb[0].mxu0
  %3520 = vmatprep.mubr.bf16.mxu0 0
  %3521 = vmatmul.mubr.bf16.gmra.mrb[0].mxu0 %v3270
  %v3522 = vpop.f32.mrb[0].mxu0
  %v3523 = vadd.f32 0.0, %v3522
  %v3524 = vpop.f32.mrb[0].mxu0
  %v3525 = vpop.f32.mrb[0].mxu0
  %v3526 = vadd.f32 0.0, %v3525
  %v3527 = vpop.f32.mrb[0].mxu0
  %3528 = vmatprep.mubr.bf16.mxu0 0
  %3529 = vmatmul.mubr.bf16.gmra.mrb[0].mxu0 %v3271
  %v3530 = vpop.f32.mrb[0].mxu0
  %v3531 = vadd.f32 0.0, %v3530
  %v3532 = vpop.f32.mrb[0].mxu0
  %v3533 = vpop.f32.mrb[0].mxu0
  %v3534 = vadd.f32 0.0, %v3533
  %v3535 = vpop.f32.mrb[0].mxu0
  %3536 = vmatprep.mubr.bf16.mxu0 0
  %3537 = vmatmul.mubr.bf16.gmra.mrb[0].mxu0 %v3272
  %v3538 = vpop.f32.mrb[0].mxu0
  %v3539 = vadd.f32 0.0, %v3538
  %v3540 = vpop.f32.mrb[0].mxu0
  %v3541 = vpop.f32.mrb[0].mxu0
  %v3542 = vadd.f32 0.0, %v3541
  %v3543 = vpop.f32.mrb[0].mxu0
  %3544 = vmatprep.mubr.bf16.mxu0 0
  %3545 = vmatmul.mubr.bf16.gmra.mrb[0].mxu0 %v3273
  %v3546 = vpop.f32.mrb[0].mxu0
  %v3547 = vadd.f32 0.0, %v3546
  %v3548 = vpop.f32.mrb[0].mxu0
  %v3549 = vpop.f32.mrb[0].mxu0
  %v3550 = vadd.f32 0.0, %v3549
  %v3551 = vpop.f32.mrb[0].mxu0
  %3552 = vmatprep.mubr.bf16.mxu0 0
  %3553 = vmatmul.mubr.bf16.gmra.mrb[0].mxu0 %v3274
  %v3554 = vpop.f32.mrb[0].mxu0
  %v3555 = vadd.f32 0.0, %v3554
  %v3556 = vpop.f32.mrb[0].mxu0
  %v3557 = vpop.f32.mrb[0].mxu0
  %v3558 = vadd.f32 0.0, %v3557
  %v3559 = vpop.f32.mrb[0].mxu0
  %3560 = vmatprep.mubr.bf16.mxu0 0
  %3561 = vmatmul.mubr.bf16.gmra.mrb[0].mxu0 %v3275
  %v3562 = vpop.f32.mrb[0].mxu0
  %v3563 = vadd.f32 0.0, %v3562
  %v3564 = vpop.f32.mrb[0].mxu0
  %v3565 = vpop.f32.mrb[0].mxu0
  %v3566 = vadd.f32 0.0, %v3565
  %v3567 = vpop.f32.mrb[0].mxu0
  %3568 = vmatprep.mubr.bf16.mxu0 0
  %3569 = vmatmul.mubr.bf16.gmra.mrb[0].mxu0 %v3276
  %v3570 = vpop.f32.mrb[0].mxu0
  %v3571 = vadd.f32 0.0, %v3570
  %v3572 = vpop.f32.mrb[0].mxu0
  %v3573 = vpop.f32.mrb[0].mxu0
  %v3574 = vadd.f32 0.0, %v3573
  %v3575 = vpop.f32.mrb[0].mxu0
  %3576 = vmatprep.mubr.bf16.mxu0 0
  %3577 = vmatmul.mubr.bf16.gmra.mrb[0].mxu0 %v3277
  %v3578 = vpop.f32.mrb[0].mxu0
  %v3579 = vadd.f32 0.0, %v3578
  %v3580 = vpop.f32.mrb[0].mxu0
  %v3581 = vpop.f32.mrb[0].mxu0
  %v3582 = vadd.f32 0.0, %v3581
  %v3583 = vpop.f32.mrb[0].mxu0
  %3584 = vmatprep.mubr.bf16.mxu0 0
  %3585 = vmatmul.mubr.bf16.gmra.mrb[0].mxu0 %v3278
  %v3586 = vpop.f32.mrb[0].mxu0
  %v3587 = vadd.f32 0.0, %v3586
  %v3588 = vpop.f32.mrb[0].mxu0
  %v3589 = vpop.f32.mrb[0].mxu0
  %v3590 = vadd.f32 0.0, %v3589
  %v3591 = vpop.f32.mrb[0].mxu0
  %3592 = vmatprep.mubr.bf16.mxu0 0
  %3593 = vmatmul.mubr.bf16.gmra.mrb[0].mxu0 %v3279
  %v3594 = vpop.f32.mrb[0].mxu0
  %v3595 = vadd.f32 0.0, %v3594
  %v3596 = vpop.f32.mrb[0].mxu0
  %v3597 = vpop.f32.mrb[0].mxu0
  %v3598 = vadd.f32 0.0, %v3597
  %v3599 = vpop.f32.mrb[0].mxu0
  %3600 = vdwg.mxu0
  %v3601 = vadd.f32 %v1150, %v3347
  %v3602 = vadd.f32 %v1151, %v3350
  %v3603 = vadd.f32 %v1152, %v3355
  %v3604 = vadd.f32 %v1153, %v3358
  %v3605 = vadd.f32 %v1154, %v3363
  %v3606 = vadd.f32 %v1155, %v3366
  %v3607 = vadd.f32 %v1156, %v3371
  %v3608 = vadd.f32 %v1157, %v3374
  %v3609 = vadd.f32 %v1158, %v3379
  %v3610 = vadd.f32 %v1159, %v3382
  %v3611 = vadd.f32 %v1160, %v3387
  %v3612 = vadd.f32 %v1161, %v3390
  %v3613 = vadd.f32 %v1162, %v3395
  %v3614 = vadd.f32 %v1163, %v3398
  %v3615 = vadd.f32 %v1164, %v3403
  %v3616 = vadd.f32 %v1165, %v3406
  %v3617 = vadd.f32 %v1166, %v3411
  %v3618 = vadd.f32 %v1167, %v3414
  %v3619 = vadd.f32 %v1168, %v3419
  %v3620 = vadd.f32 %v1169, %v3422
  %v3621 = vadd.f32 %v1170, %v3427
  %v3622 = vadd.f32 %v1171, %v3430
  %v3623 = vadd.f32 %v1172, %v3435
  %v3624 = vadd.f32 %v1173, %v3438
  %v3625 = vadd.f32 %v1174, %v3443
  %v3626 = vadd.f32 %v1175, %v3446
  %v3627 = vadd.f32 %v1176, %v3451
  %v3628 = vadd.f32 %v1177, %v3454
  %v3629 = vadd.f32 %v1178, %v3459
  %v3630 = vadd.f32 %v1179, %v3462
  %v3631 = vadd.f32 %v1180, %v3467
  %v3632 = vadd.f32 %v1181, %v3470
  %v3633 = vadd.f32 %v1182, %v3475
  %v3634 = vadd.f32 %v1183, %v3478
  %v3635 = vadd.f32 %v1184, %v3483
  %v3636 = vadd.f32 %v1185, %v3486
  %v3637 = vadd.f32 %v1186, %v3491
  %v3638 = vadd.f32 %v1187, %v3494
  %v3639 = vadd.f32 %v1188, %v3499
  %v3640 = vadd.f32 %v1189, %v3502
  %v3641 = vadd.f32 %v1190, %v3507
  %v3642 = vadd.f32 %v1191, %v3510
  %v3643 = vadd.f32 %v1192, %v3515
  %v3644 = vadd.f32 %v1193, %v3518
  %v3645 = vadd.f32 %v1194, %v3523
  %v3646 = vadd.f32 %v1195, %v3526
  %v3647 = vadd.f32 %v1196, %v3531
  %v3648 = vadd.f32 %v1197, %v3534
  %v3649 = vadd.f32 %v1198, %v3539
  %v3650 = vadd.f32 %v1199, %v3542
  %v3651 = vadd.f32 %v1200, %v3547
  %v3652 = vadd.f32 %v1201, %v3550
  %v3653 = vadd.f32 %v1202, %v3555
  %v3654 = vadd.f32 %v1203, %v3558
  %v3655 = vadd.f32 %v1204, %v3563
  %v3656 = vadd.f32 %v1205, %v3566
  %v3657 = vadd.f32 %v1206, %v3571
  %v3658 = vadd.f32 %v1207, %v3574
  %v3659 = vadd.f32 %v1208, %v3579
  %v3660 = vadd.f32 %v1209, %v3582
  %v3661 = vadd.f32 %v1210, %v3587
  %v3662 = vadd.f32 %v1211, %v3590
  %v3663 = vadd.f32 %v1212, %v3595
  %v3664 = vadd.f32 %v1213, %v3598
  %3665 = vst.msk [vmem:[#allocation3] sm:$0xff] %vm230, 0.0
  %3666 = vst.msk [vmem:[#allocation3 + $0x8] sm:$0xff] %vm230, 0.0
  %3667 = vst.msk [vmem:[#allocation3 + $0x10] sm:$0x3] %vm1414, 0.0
  %3668 = vst.msk [vmem:[#allocation3 + $0x18] sm:$0xff] %vm230, 0.0
  %3669 = vst.msk [vmem:[#allocation3 + $0x20] sm:$0xff] %vm230, 0.0
  %3670 = vst.msk [vmem:[#allocation3 + $0x28] sm:$0x3] %vm1414, 0.0
  %3671 = vst.msk [vmem:[#allocation3 + $0x30] sm:$0xff] %vm230, 0.0
  %3672 = vst.msk [vmem:[#allocation3 + $0x38] sm:$0xff] %vm230, 0.0
  %3673 = vst.msk [vmem:[#allocation3 + $0x40] sm:$0x3] %vm1414, 0.0
  %3674 = vst.msk [vmem:[#allocation3 + $0x48] sm:$0xff] %vm230, 0.0
  %3675 = vst.msk [vmem:[#allocation3 + $0x50] sm:$0xff] %vm230, 0.0
  %3676 = vst.msk [vmem:[#allocation3 + $0x58] sm:$0x3] %vm1414, 0.0
  %3677 = vst.msk [vmem:[#allocation3 + $0x60] sm:$0xff] %vm230, 0.0
  %3678 = vst.msk [vmem:[#allocation3 + $0x68] sm:$0xff] %vm230, 0.0
  %3679 = vst.msk [vmem:[#allocation3 + $0x70] sm:$0x3] %vm1414, 0.0
  %3680 = vst.msk [vmem:[#allocation3 + $0x78] sm:$0xff] %vm230, 0.0
  %3681 = vst.msk [vmem:[#allocation3 + $0x80] sm:$0xff] %vm230, 0.0
  %3682 = vst.msk [vmem:[#allocation3 + $0x88] sm:$0x3] %vm1414, 0.0
  %3683 = vst.msk [vmem:[#allocation3 + $0x90] sm:$0xff] %vm230, 0.0
  %3684 = vst.msk [vmem:[#allocation3 + $0x98] sm:$0xff] %vm230, 0.0
  %3685 = vst.msk [vmem:[#allocation3 + $0xa0] sm:$0x3] %vm1414, 0.0
  %3686 = vst.msk [vmem:[#allocation3 + $0xa8] sm:$0xff] %vm230, 0.0
  %3687 = vst.msk [vmem:[#allocation3 + $0xb0] sm:$0xff] %vm230, 0.0
  %3688 = vst.msk [vmem:[#allocation3 + $0xb8] sm:$0x3] %vm1414, 0.0
  %3689 = vst.msk [vmem:[#allocation3 + $0xc0] sm:$0xff] %vm230, 0.0
  %3690 = vst.msk [vmem:[#allocation3 + $0xc8] sm:$0xff] %vm230, 0.0
  %3691 = vst.msk [vmem:[#allocation3 + $0xd0] sm:$0x3] %vm1414, 0.0
  %3692 = vst.msk [vmem:[#allocation3 + $0xd8] sm:$0xff] %vm230, 0.0
  %3693 = vst.msk [vmem:[#allocation3 + $0xe0] sm:$0xff] %vm230, 0.0
  %3694 = vst.msk [vmem:[#allocation3 + $0xe8] sm:$0x3] %vm1414, 0.0
  %3695 = vst.msk [vmem:[#allocation3 + $0xf0] sm:$0xff] %vm230, 0.0
  %3696 = vst.msk [vmem:[#allocation3 + $0xf8] sm:$0xff] %vm230, 0.0
  %3697 = vst.msk [vmem:[#allocation3 + $0x100] sm:$0x3] %vm1414, 0.0
  %3698 = vst.msk [vmem:[#allocation3 + $0x108] sm:$0xff] %vm230, 0.0
  %3699 = vst.msk [vmem:[#allocation3 + $0x110] sm:$0xff] %vm230, 0.0
  %3700 = vst.msk [vmem:[#allocation3 + $0x118] sm:$0x3] %vm1414, 0.0
  %3701 = vst.msk [vmem:[#allocation3 + $0x120] sm:$0xff] %vm230, 0.0
  %3702 = vst.msk [vmem:[#allocation3 + $0x128] sm:$0xff] %vm230, 0.0
  %3703 = vst.msk [vmem:[#allocation3 + $0x130] sm:$0x3] %vm1414, 0.0
  %3704 = vst.msk [vmem:[#allocation3 + $0x138] sm:$0xff] %vm230, 0.0
  %3705 = vst.msk [vmem:[#allocation3 + $0x140] sm:$0xff] %vm230, 0.0
  %3706 = vst.msk [vmem:[#allocation3 + $0x148] sm:$0x3] %vm1414, 0.0
  %3707 = vst.msk [vmem:[#allocation3 + $0x150] sm:$0xff] %vm230, 0.0
  %3708 = vst.msk [vmem:[#allocation3 + $0x158] sm:$0xff] %vm230, 0.0
  %3709 = vst.msk [vmem:[#allocation3 + $0x160] sm:$0x3] %vm1414, 0.0
  %3710 = vst.msk [vmem:[#allocation3 + $0x168] sm:$0xff] %vm230, 0.0
  %3711 = vst.msk [vmem:[#allocation3 + $0x170] sm:$0xff] %vm230, 0.0
  %3712 = vst.msk [vmem:[#allocation3 + $0x178] sm:$0x3] %vm1414, 0.0
  %3713 = vst.msk [vmem:[#allocation3 + $0x180] sm:$0xff] %vm230, 0.0
  %3714 = vst.msk [vmem:[#allocation3 + $0x188] sm:$0xff] %vm230, 0.0
  %3715 = vst.msk [vmem:[#allocation3 + $0x190] sm:$0x3] %vm1414, 0.0
  %3716 = vst.msk [vmem:[#allocation3 + $0x198] sm:$0xff] %vm230, 0.0
  %3717 = vst.msk [vmem:[#allocation3 + $0x1a0] sm:$0xff] %vm230, 0.0
  %3718 = vst.msk [vmem:[#allocation3 + $0x1a8] sm:$0x3] %vm1414, 0.0
  %3719 = vst.msk [vmem:[#allocation3 + $0x1b0] sm:$0xff] %vm230, 0.0
  %3720 = vst.msk [vmem:[#allocation3 + $0x1b8] sm:$0xff] %vm230, 0.0
  %3721 = vst.msk [vmem:[#allocation3 + $0x1c0] sm:$0x3] %vm1414, 0.0
  %3722 = vst.msk [vmem:[#allocation3 + $0x1c8] sm:$0xff] %vm230, 0.0
  %3723 = vst.msk [vmem:[#allocation3 + $0x1d0] sm:$0xff] %vm230, 0.0
  %3724 = vst.msk [vmem:[#allocation3 + $0x1d8] sm:$0x3] %vm1414, 0.0
  %3725 = vst.msk [vmem:[#allocation3 + $0x1e0] sm:$0xff] %vm230, 0.0
  %3726 = vst.msk [vmem:[#allocation3 + $0x1e8] sm:$0xff] %vm230, 0.0
  %3727 = vst.msk [vmem:[#allocation3 + $0x1f0] sm:$0x3] %vm1414, 0.0
  %3728 = vst.msk [vmem:[#allocation3 + $0x1f8] sm:$0xff] %vm230, 0.0
  %3729 = vst.msk [vmem:[#allocation3 + $0x200] sm:$0xff] %vm230, 0.0
  %3730 = vst.msk [vmem:[#allocation3 + $0x208] sm:$0x3] %vm1414, 0.0
  %3731 = vst.msk [vmem:[#allocation3 + $0x210] sm:$0xff] %vm230, 0.0
  %3732 = vst.msk [vmem:[#allocation3 + $0x218] sm:$0xff] %vm230, 0.0
  %3733 = vst.msk [vmem:[#allocation3 + $0x220] sm:$0x3] %vm1414, 0.0
  %3734 = vst.msk [vmem:[#allocation3 + $0x228] sm:$0xff] %vm230, 0.0
  %3735 = vst.msk [vmem:[#allocation3 + $0x230] sm:$0xff] %vm230, 0.0
  %3736 = vst.msk [vmem:[#allocation3 + $0x238] sm:$0x3] %vm1414, 0.0
  %3737 = vst.msk [vmem:[#allocation3 + $0x240] sm:$0xff] %vm230, 0.0
  %3738 = vst.msk [vmem:[#allocation3 + $0x248] sm:$0xff] %vm230, 0.0
  %3739 = vst.msk [vmem:[#allocation3 + $0x250] sm:$0x3] %vm1414, 0.0
  %3740 = vst.msk [vmem:[#allocation3 + $0x258] sm:$0xff] %vm230, 0.0
  %3741 = vst.msk [vmem:[#allocation3 + $0x260] sm:$0xff] %vm230, 0.0
  %3742 = vst.msk [vmem:[#allocation3 + $0x268] sm:$0x3] %vm1414, 0.0
  %3743 = vst.msk [vmem:[#allocation3 + $0x270] sm:$0xff] %vm230, 0.0
  %3744 = vst.msk [vmem:[#allocation3 + $0x278] sm:$0xff] %vm230, 0.0
  %3745 = vst.msk [vmem:[#allocation3 + $0x280] sm:$0x3] %vm1414, 0.0
  %3746 = vst.msk [vmem:[#allocation3 + $0x288] sm:$0xff] %vm230, 0.0
  %3747 = vst.msk [vmem:[#allocation3 + $0x290] sm:$0xff] %vm230, 0.0
  %3748 = vst.msk [vmem:[#allocation3 + $0x298] sm:$0x3] %vm1414, 0.0
  %3749 = vst.msk [vmem:[#allocation3 + $0x2a0] sm:$0xff] %vm230, 0.0
  %3750 = vst.msk [vmem:[#allocation3 + $0x2a8] sm:$0xff] %vm230, 0.0
  %3751 = vst.msk [vmem:[#allocation3 + $0x2b0] sm:$0x3] %vm1414, 0.0
  %3752 = vst.msk [vmem:[#allocation3 + $0x2b8] sm:$0xff] %vm230, 0.0
  %3753 = vst.msk [vmem:[#allocation3 + $0x2c0] sm:$0xff] %vm230, 0.0
  %3754 = vst.msk [vmem:[#allocation3 + $0x2c8] sm:$0x3] %vm1414, 0.0
  %3755 = vst.msk [vmem:[#allocation3 + $0x2d0] sm:$0xff] %vm230, 0.0
  %3756 = vst.msk [vmem:[#allocation3 + $0x2d8] sm:$0xff] %vm230, 0.0
  %3757 = vst.msk [vmem:[#allocation3 + $0x2e0] sm:$0x3] %vm1414, 0.0
  %3758 = vst.msk [vmem:[#allocation3 + $0x2e8] sm:$0xff] %vm230, 0.0
  %3759 = vst.msk [vmem:[#allocation3 + $0x2f0] sm:$0xff] %vm230, 0.0
  %3760 = vst.msk [vmem:[#allocation3 + $0x2f8] sm:$0x3] %vm1414, 0.0
  %3761 = vst.msk [vmem:[#allocation3 + $0x300] sm:$0xff] %vm230, 0.0
  %3762 = vst.msk [vmem:[#allocation3 + $0x308] sm:$0xff] %vm230, 0.0
  %3763 = vst.msk [vmem:[#allocation3 + $0x310] sm:$0x3] %vm1414, 0.0
  %3764 = vst.msk [vmem:[#allocation3 + $0x318] sm:$0xff] %vm230, 0.0
  %3765 = vst.msk [vmem:[#allocation3 + $0x320] sm:$0xff] %vm230, 0.0
  %3766 = vst.msk [vmem:[#allocation3 + $0x328] sm:$0x3] %vm1414, 0.0
  %3767 = vst.msk [vmem:[#allocation3 + $0x330] sm:$0xff] %vm230, 0.0
  %3768 = vst.msk [vmem:[#allocation3 + $0x338] sm:$0xff] %vm230, 0.0
  %3769 = vst.msk [vmem:[#allocation3 + $0x340] sm:$0x3] %vm1414, 0.0
  %3770 = vst.msk [vmem:[#allocation3 + $0x348] sm:$0xff] %vm230, 0.0
  %3771 = vst.msk [vmem:[#allocation3 + $0x350] sm:$0xff] %vm230, 0.0
  %3772 = vst.msk [vmem:[#allocation3 + $0x358] sm:$0x3] %vm1414, 0.0
  %s3773 = scalar_lea.vmem [#allocation3], 24
  %3774 = vst.msk [vmem:[%s3773 + $0x1] sm:$0xff] %vm230, %v3601
  %3775 = vst.msk [vmem:[%s3773 + $0x9] sm:$0xff] %vm230, %v3602
  %3776 = vst.msk [vmem:[%s3773 + $0x19] sm:$0xff] %vm230, %v3603
  %3777 = vst.msk [vmem:[%s3773 + $0x21] sm:$0xff] %vm230, %v3604
  %3778 = vst.msk [vmem:[%s3773 + $0x31] sm:$0xff] %vm230, %v3605
  %3779 = vst.msk [vmem:[%s3773 + $0x39] sm:$0xff] %vm230, %v3606
  %3780 = vst.msk [vmem:[%s3773 + $0x49] sm:$0xff] %vm230, %v3607
  %3781 = vst.msk [vmem:[%s3773 + $0x51] sm:$0xff] %vm230, %v3608
  %3782 = vst.msk [vmem:[%s3773 + $0x61] sm:$0xff] %vm230, %v3609
  %3783 = vst.msk [vmem:[%s3773 + $0x69] sm:$0xff] %vm230, %v3610
  %3784 = vst.msk [vmem:[%s3773 + $0x79] sm:$0xff] %vm230, %v3611
  %3785 = vst.msk [vmem:[%s3773 + $0x81] sm:$0xff] %vm230, %v3612
  %3786 = vst.msk [vmem:[%s3773 + $0x91] sm:$0xff] %vm230, %v3613
  %3787 = vst.msk [vmem:[%s3773 + $0x99] sm:$0xff] %vm230, %v3614
  %3788 = vst.msk [vmem:[%s3773 + $0xa9] sm:$0xff] %vm230, %v3615
  %3789 = vst.msk [vmem:[%s3773 + $0xb1] sm:$0xff] %vm230, %v3616
  %3790 = vst.msk [vmem:[%s3773 + $0xc1] sm:$0xff] %vm230, %v3617
  %3791 = vst.msk [vmem:[%s3773 + $0xc9] sm:$0xff] %vm230, %v3618
  %3792 = vst.msk [vmem:[%s3773 + $0xd9] sm:$0xff] %vm230, %v3619
  %3793 = vst.msk [vmem:[%s3773 + $0xe1] sm:$0xff] %vm230, %v3620
  %3794 = vst.msk [vmem:[%s3773 + $0xf1] sm:$0xff] %vm230, %v3621
  %3795 = vst.msk [vmem:[%s3773 + $0xf9] sm:$0xff] %vm230, %v3622
  %3796 = vst.msk [vmem:[%s3773 + $0x109] sm:$0xff] %vm230, %v3623
  %3797 = vst.msk [vmem:[%s3773 + $0x111] sm:$0xff] %vm230, %v3624
  %3798 = vst.msk [vmem:[%s3773 + $0x121] sm:$0xff] %vm230, %v3625
  %3799 = vst.msk [vmem:[%s3773 + $0x129] sm:$0xff] %vm230, %v3626
  %3800 = vst.msk [vmem:[%s3773 + $0x139] sm:$0xff] %vm230, %v3627
  %3801 = vst.msk [vmem:[%s3773 + $0x141] sm:$0xff] %vm230, %v3628
  %3802 = vst.msk [vmem:[%s3773 + $0x151] sm:$0xff] %vm230, %v3629
  %3803 = vst.msk [vmem:[%s3773 + $0x159] sm:$0xff] %vm230, %v3630
  %3804 = vst.msk [vmem:[%s3773 + $0x169] sm:$0xff] %vm230, %v3631
  %3805 = vst.msk [vmem:[%s3773 + $0x171] sm:$0xff] %vm230, %v3632
  %3806 = vst.msk [vmem:[%s3773 + $0x1b1] sm:$0xff] %vm230, %v3633
  %3807 = vst.msk [vmem:[%s3773 + $0x1b9] sm:$0xff] %vm230, %v3634
  %3808 = vst.msk [vmem:[%s3773 + $0x1c9] sm:$0xff] %vm230, %v3635
  %3809 = vst.msk [vmem:[%s3773 + $0x1d1] sm:$0xff] %vm230, %v3636
  %3810 = vst.msk [vmem:[%s3773 + $0x1e1] sm:$0xff] %vm230, %v3637
  %3811 = vst.msk [vmem:[%s3773 + $0x1e9] sm:$0xff] %vm230, %v3638
  %3812 = vst.msk [vmem:[%s3773 + $0x1f9] sm:$0xff] %vm230, %v3639
  %3813 = vst.msk [vmem:[%s3773 + $0x201] sm:$0xff] %vm230, %v3640
  %3814 = vst.msk [vmem:[%s3773 + $0x211] sm:$0xff] %vm230, %v3641
  %3815 = vst.msk [vmem:[%s3773 + $0x219] sm:$0xff] %vm230, %v3642
  %3816 = vst.msk [vmem:[%s3773 + $0x229] sm:$0xff] %vm230, %v3643
  %3817 = vst.msk [vmem:[%s3773 + $0x231] sm:$0xff] %vm230, %v3644
  %3818 = vst.msk [vmem:[%s3773 + $0x241] sm:$0xff] %vm230, %v3645
  %3819 = vst.msk [vmem:[%s3773 + $0x249] sm:$0xff] %vm230, %v3646
  %3820 = vst.msk [vmem:[%s3773 + $0x259] sm:$0xff] %vm230, %v3647
  %3821 = vst.msk [vmem:[%s3773 + $0x261] sm:$0xff] %vm230, %v3648
  %3822 = vst.msk [vmem:[%s3773 + $0x271] sm:$0xff] %vm230, %v3649
  %3823 = vst.msk [vmem:[%s3773 + $0x279] sm:$0xff] %vm230, %v3650
  %3824 = vst.msk [vmem:[%s3773 + $0x289] sm:$0xff] %vm230, %v3651
  %3825 = vst.msk [vmem:[%s3773 + $0x291] sm:$0xff] %vm230, %v3652
  %3826 = vst.msk [vmem:[%s3773 + $0x2a1] sm:$0xff] %vm230, %v3653
  %3827 = vst.msk [vmem:[%s3773 + $0x2a9] sm:$0xff] %vm230, %v3654
  %3828 = vst.msk [vmem:[%s3773 + $0x2b9] sm:$0xff] %vm230, %v3655
  %3829 = vst.msk [vmem:[%s3773 + $0x2c1] sm:$0xff] %vm230, %v3656
  %3830 = vst.msk [vmem:[%s3773 + $0x2d1] sm:$0xff] %vm230, %v3657
  %3831 = vst.msk [vmem:[%s3773 + $0x2d9] sm:$0xff] %vm230, %v3658
  %3832 = vst.msk [vmem:[%s3773 + $0x2e9] sm:$0xff] %vm230, %v3659
  %3833 = vst.msk [vmem:[%s3773 + $0x2f1] sm:$0xff] %vm230, %v3660
  %3834 = vst.msk [vmem:[%s3773 + $0x301] sm:$0xff] %vm230, %v3661
  %3835 = vst.msk [vmem:[%s3773 + $0x309] sm:$0xff] %vm230, %v3662
  %3836 = vst.msk [vmem:[%s3773 + $0x319] sm:$0xff] %vm230, %v3663
  %3837 = vst.msk [vmem:[%s3773 + $0x321] sm:$0xff] %vm230, %v3664
  %v3838 = vld [vmem:[#allocation3] sm:$0xff]
  %v3839 = vld [vmem:[#allocation3 + $0x8] sm:$0xff]
  %v3840 = vld [vmem:[#allocation3 + $0x18] sm:$0xff]
  %v3841 = vld [vmem:[#allocation3 + $0x20] sm:$0xff]
  %v3842 = vld [vmem:[#allocation3 + $0x30] sm:$0xff]
  %v3843 = vld [vmem:[#allocation3 + $0x38] sm:$0xff]
  %v3844 = vld [vmem:[#allocation3 + $0x48] sm:$0xff]
  %v3845 = vld [vmem:[#allocation3 + $0x50] sm:$0xff]
  %v3846 = vld [vmem:[#allocation3 + $0x60] sm:$0xff]
  %v3847 = vld [vmem:[#allocation3 + $0x68] sm:$0xff]
  %v3848 = vld [vmem:[#allocation3 + $0x78] sm:$0xff]
  %v3849 = vld [vmem:[#allocation3 + $0x80] sm:$0xff]
  %v3850 = vld [vmem:[#allocation3 + $0x90] sm:$0xff]
  %v3851 = vld [vmem:[#allocation3 + $0x98] sm:$0xff]
  %v3852 = vld [vmem:[#allocation3 + $0xa8] sm:$0xff]
  %v3853 = vld [vmem:[#allocation3 + $0xb0] sm:$0xff]
  %v3854 = vld [vmem:[#allocation3 + $0xc0] sm:$0xff]
  %v3855 = vld [vmem:[#allocation3 + $0xc8] sm:$0xff]
  %v3856 = vld [vmem:[#allocation3 + $0xd8] sm:$0xff]
  %v3857 = vld [vmem:[#allocation3 + $0xe0] sm:$0xff]
  %v3858 = vld [vmem:[#allocation3 + $0xf0] sm:$0xff]
  %v3859 = vld [vmem:[#allocation3 + $0xf8] sm:$0xff]
  %v3860 = vld [vmem:[#allocation3 + $0x108] sm:$0xff]
  %v3861 = vld [vmem:[#allocation3 + $0x110] sm:$0xff]
  %v3862 = vld [vmem:[#allocation3 + $0x120] sm:$0xff]
  %v3863 = vld [vmem:[#allocation3 + $0x128] sm:$0xff]
  %v3864 = vld [vmem:[#allocation3 + $0x138] sm:$0xff]
  %v3865 = vld [vmem:[#allocation3 + $0x140] sm:$0xff]
  %v3866 = vld [vmem:[#allocation3 + $0x150] sm:$0xff]
  %v3867 = vld [vmem:[#allocation3 + $0x158] sm:$0xff]
  %v3868 = vld [vmem:[#allocation3 + $0x168] sm:$0xff]
  %v3869 = vld [vmem:[#allocation3 + $0x170] sm:$0xff]
  %v3870 = vld [vmem:[#allocation3 + $0x1b0] sm:$0xff]
  %v3871 = vld [vmem:[#allocation3 + $0x1b8] sm:$0xff]
  %v3872 = vld [vmem:[#allocation3 + $0x1c8] sm:$0xff]
  %v3873 = vld [vmem:[#allocation3 + $0x1d0] sm:$0xff]
  %v3874 = vld [vmem:[#allocation3 + $0x1e0] sm:$0xff]
  %v3875 = vld [vmem:[#allocation3 + $0x1e8] sm:$0xff]
  %v3876 = vld [vmem:[#allocation3 + $0x1f8] sm:$0xff]
  %v3877 = vld [vmem:[#allocation3 + $0x200] sm:$0xff]
  %v3878 = vld [vmem:[#allocation3 + $0x210] sm:$0xff]
  %v3879 = vld [vmem:[#allocation3 + $0x218] sm:$0xff]
  %v3880 = vld [vmem:[#allocation3 + $0x228] sm:$0xff]
  %v3881 = vld [vmem:[#allocation3 + $0x230] sm:$0xff]
  %v3882 = vld [vmem:[#allocation3 + $0x240] sm:$0xff]
  %v3883 = vld [vmem:[#allocation3 + $0x248] sm:$0xff]
  %v3884 = vld [vmem:[#allocation3 + $0x258] sm:$0xff]
  %v3885 = vld [vmem:[#allocation3 + $0x260] sm:$0xff]
  %v3886 = vld [vmem:[#allocation3 + $0x270] sm:$0xff]
  %v3887 = vld [vmem:[#allocation3 + $0x278] sm:$0xff]
  %v3888 = vld [vmem:[#allocation3 + $0x288] sm:$0xff]
  %v3889 = vld [vmem:[#allocation3 + $0x290] sm:$0xff]
  %v3890 = vld [vmem:[#allocation3 + $0x2a0] sm:$0xff]
  %v3891 = vld [vmem:[#allocation3 + $0x2a8] sm:$0xff]
  %v3892 = vld [vmem:[#allocation3 + $0x2b8] sm:$0xff]
  %v3893 = vld [vmem:[#allocation3 + $0x2c0] sm:$0xff]
  %v3894 = vld [vmem:[#allocation3 + $0x2d0] sm:$0xff]
  %v3895 = vld [vmem:[#allocation3 + $0x2d8] sm:$0xff]
  %v3896 = vld [vmem:[#allocation3 + $0x2e8] sm:$0xff]
  %v3897 = vld [vmem:[#allocation3 + $0x2f0] sm:$0xff]
  %v3898 = vld [vmem:[#allocation3 + $0x300] sm:$0xff]
  %v3899 = vld [vmem:[#allocation3 + $0x308] sm:$0xff]
  %v3900 = vld [vmem:[#allocation3 + $0x318] sm:$0xff]
  %v3901 = vld [vmem:[#allocation3 + $0x320] sm:$0xff]
  %v3902 = vpack.c.bf16 %v3839, %v3838
  %v3903 = vpack.c.bf16 %v3841, %v3840
  %v3904 = vpack.c.bf16 %v3843, %v3842
  %v3905 = vpack.c.bf16 %v3845, %v3844
  %v3906 = vpack.c.bf16 %v3847, %v3846
  %v3907 = vpack.c.bf16 %v3849, %v3848
  %v3908 = vpack.c.bf16 %v3851, %v3850
  %v3909 = vpack.c.bf16 %v3853, %v3852
  %v3910 = vpack.c.bf16 %v3855, %v3854
  %v3911 = vpack.c.bf16 %v3857, %v3856
  %v3912 = vpack.c.bf16 %v3859, %v3858
  %v3913 = vpack.c.bf16 %v3861, %v3860
  %v3914 = vpack.c.bf16 %v3863, %v3862
  %v3915 = vpack.c.bf16 %v3865, %v3864
  %v3916 = vpack.c.bf16 %v3867, %v3866
  %v3917 = vpack.c.bf16 %v3869, %v3868
  %v3918 = vpack.c.bf16 %v3871, %v3870
  %v3919 = vpack.c.bf16 %v3873, %v3872
  %v3920 = vpack.c.bf16 %v3875, %v3874
  %v3921 = vpack.c.bf16 %v3877, %v3876
  %v3922 = vpack.c.bf16 %v3879, %v3878
  %v3923 = vpack.c.bf16 %v3881, %v3880
  %v3924 = vpack.c.bf16 %v3883, %v3882
  %v3925 = vpack.c.bf16 %v3885, %v3884
  %v3926 = vpack.c.bf16 %v3887, %v3886
  %v3927 = vpack.c.bf16 %v3889, %v3888
  %v3928 = vpack.c.bf16 %v3891, %v3890
  %v3929 = vpack.c.bf16 %v3893, %v3892
  %v3930 = vpack.c.bf16 %v3895, %v3894
  %v3931 = vpack.c.bf16 %v3897, %v3896
  %v3932 = vpack.c.bf16 %v3899, %v3898
  %v3933 = vpack.c.bf16 %v3901, %v3900
  %v3934 = vld [vmem:[%s11] sm:$0xf]
  %v3935 = vld [vmem:[%s11 + $0x4] sm:$0xf]
  %v3936 = vld [vmem:[#allocation3 + $0x1] sm:$0xff]
  %v3937 = vld [vmem:[#allocation3 + $0x9] sm:$0xff]
  %v3938 = vld [vmem:[#allocation3 + $0x19] sm:$0xff]
  %v3939 = vld [vmem:[#allocation3 + $0x21] sm:$0xff]
  %v3940 = vld [vmem:[#allocation3 + $0x31] sm:$0xff]
  %v3941 = vld [vmem:[#allocation3 + $0x39] sm:$0xff]
  %v3942 = vld [vmem:[#allocation3 + $0x49] sm:$0xff]
  %v3943 = vld [vmem:[#allocation3 + $0x51] sm:$0xff]
  %v3944 = vld [vmem:[#allocation3 + $0x61] sm:$0xff]
  %v3945 = vld [vmem:[#allocation3 + $0x69] sm:$0xff]
  %v3946 = vld [vmem:[#allocation3 + $0x79] sm:$0xff]
  %v3947 = vld [vmem:[#allocation3 + $0x81] sm:$0xff]
  %v3948 = vld [vmem:[#allocation3 + $0x91] sm:$0xff]
  %v3949 = vld [vmem:[#allocation3 + $0x99] sm:$0xff]
  %v3950 = vld [vmem:[#allocation3 + $0xa9] sm:$0xff]
  %v3951 = vld [vmem:[#allocation3 + $0xb1] sm:$0xff]
  %v3952 = vld [vmem:[#allocation3 + $0xc1] sm:$0xff]
  %v3953 = vld [vmem:[#allocation3 + $0xc9] sm:$0xff]
  %v3954 = vld [vmem:[#allocation3 + $0xd9] sm:$0xff]
  %v3955 = vld [vmem:[#allocation3 + $0xe1] sm:$0xff]
  %v3956 = vld [vmem:[#allocation3 + $0xf1] sm:$0xff]
  %v3957 = vld [vmem:[#allocation3 + $0xf9] sm:$0xff]
  %v3958 = vld [vmem:[#allocation3 + $0x109] sm:$0xff]
  %v3959 = vld [vmem:[#allocation3 + $0x111] sm:$0xff]
  %v3960 = vld [vmem:[#allocation3 + $0x121] sm:$0xff]
  %v3961 = vld [vmem:[#allocation3 + $0x129] sm:$0xff]
  %v3962 = vld [vmem:[#allocation3 + $0x139] sm:$0xff]
  %v3963 = vld [vmem:[#allocation3 + $0x141] sm:$0xff]
  %v3964 = vld [vmem:[#allocation3 + $0x151] sm:$0xff]
  %v3965 = vld [vmem:[#allocation3 + $0x159] sm:$0xff]
  %v3966 = vld [vmem:[#allocation3 + $0x169] sm:$0xff]
  %v3967 = vld [vmem:[#allocation3 + $0x171] sm:$0xff]
  %v3968 = vld [vmem:[#allocation3 + $0x1b1] sm:$0xff]
  %v3969 = vld [vmem:[#allocation3 + $0x1b9] sm:$0xff]
  %v3970 = vld [vmem:[#allocation3 + $0x1c9] sm:$0xff]
  %v3971 = vld [vmem:[#allocation3 + $0x1d1] sm:$0xff]
  %v3972 = vld [vmem:[#allocation3 + $0x1e1] sm:$0xff]
  %v3973 = vld [vmem:[#allocation3 + $0x1e9] sm:$0xff]
  %v3974 = vld [vmem:[#allocation3 + $0x1f9] sm:$0xff]
  %v3975 = vld [vmem:[#allocation3 + $0x201] sm:$0xff]
  %v3976 = vld [vmem:[#allocation3 + $0x211] sm:$0xff]
  %v3977 = vld [vmem:[#allocation3 + $0x219] sm:$0xff]
  %v3978 = vld [vmem:[#allocation3 + $0x229] sm:$0xff]
  %v3979 = vld [vmem:[#allocation3 + $0x231] sm:$0xff]
  %v3980 = vld [vmem:[#allocation3 + $0x241] sm:$0xff]
  %v3981 = vld [vmem:[#allocation3 + $0x249] sm:$0xff]
  %v3982 = vld [vmem:[#allocation3 + $0x259] sm:$0xff]
  %v3983 = vld [vmem:[#allocation3 + $0x261] sm:$0xff]
  %v3984 = vld [vmem:[#allocation3 + $0x271] sm:$0xff]
  %v3985 = vld [vmem:[#allocation3 + $0x279] sm:$0xff]
  %v3986 = vld [vmem:[#allocation3 + $0x289] sm:$0xff]
  %v3987 = vld [vmem:[#allocation3 + $0x291] sm:$0xff]
  %v3988 = vld [vmem:[#allocation3 + $0x2a1] sm:$0xff]
  %v3989 = vld [vmem:[#allocation3 + $0x2a9] sm:$0xff]
  %v3990 = vld [vmem:[#allocation3 + $0x2b9] sm:$0xff]
  %v3991 = vld [vmem:[#allocation3 + $0x2c1] sm:$0xff]
  %v3992 = vld [vmem:[#allocation3 + $0x2d1] sm:$0xff]
  %v3993 = vld [vmem:[#allocation3 + $0x2d9] sm:$0xff]
  %v3994 = vld [vmem:[#allocation3 + $0x2e9] sm:$0xff]
  %v3995 = vld [vmem:[#allocation3 + $0x2f1] sm:$0xff]
  %v3996 = vld [vmem:[#allocation3 + $0x301] sm:$0xff]
  %v3997 = vld [vmem:[#allocation3 + $0x309] sm:$0xff]
  %v3998 = vld [vmem:[#allocation3 + $0x319] sm:$0xff]
  %v3999 = vld [vmem:[#allocation3 + $0x321] sm:$0xff]
  %v4000 = vpack.c.bf16 %v3937, %v3936
  %v4001 = vpack.c.bf16 %v3939, %v3938
  %v4002 = vpack.c.bf16 %v3941, %v3940
  %v4003 = vpack.c.bf16 %v3943, %v3942
  %v4004 = vpack.c.bf16 %v3945, %v3944
  %v4005 = vpack.c.bf16 %v3947, %v3946
  %v4006 = vpack.c.bf16 %v3949, %v3948
  %v4007 = vpack.c.bf16 %v3951, %v3950
  %v4008 = vpack.c.bf16 %v3953, %v3952
  %v4009 = vpack.c.bf16 %v3955, %v3954
  %v4010 = vpack.c.bf16 %v3957, %v3956
  %v4011 = vpack.c.bf16 %v3959, %v3958
  %v4012 = vpack.c.bf16 %v3961, %v3960
  %v4013 = vpack.c.bf16 %v3963, %v3962
  %v4014 = vpack.c.bf16 %v3965, %v3964
  %v4015 = vpack.c.bf16 %v3967, %v3966
  %v4016 = vpack.c.bf16 %v3969, %v3968
  %v4017 = vpack.c.bf16 %v3971, %v3970
  %v4018 = vpack.c.bf16 %v3973, %v3972
  %v4019 = vpack.c.bf16 %v3975, %v3974
  %v4020 = vpack.c.bf16 %v3977, %v3976
  %v4021 = vpack.c.bf16 %v3979, %v3978
  %v4022 = vpack.c.bf16 %v3981, %v3980
  %v4023 = vpack.c.bf16 %v3983, %v3982
  %v4024 = vpack.c.bf16 %v3985, %v3984
  %v4025 = vpack.c.bf16 %v3987, %v3986
  %v4026 = vpack.c.bf16 %v3989, %v3988
  %v4027 = vpack.c.bf16 %v3991, %v3990
  %v4028 = vpack.c.bf16 %v3993, %v3992
  %v4029 = vpack.c.bf16 %v3995, %v3994
  %v4030 = vpack.c.bf16 %v3997, %v3996
  %v4031 = vpack.c.bf16 %v3999, %v3998
  %v4032 = vld [vmem:[%s11 + $0x8] sm:$0xf]
  %v4033 = vld [vmem:[%s11 + $0xc] sm:$0xf]
  %v4036 = vunpack.c.l.b16 %v4032
  %v4037 = vunpack.c.l.b16 %v4033
  %v4038 = vpack.c.b16 %v4037, %v4036
  %v4041 = vsel %vm230, %v4000, 0
  %v4044 = vsel %vm230, %v4001, 0
  %v4047 = vsel %vm230, %v4002, 0
  %v4050 = vsel %vm230, %v4003, 0
  %v4053 = vsel %vm230, %v4004, 0
  %v4056 = vsel %vm230, %v4005, 0
  %v4059 = vsel %vm230, %v4006, 0
  %v4062 = vsel %vm230, %v4007, 0
  %v4065 = vsel %vm230, %v4008, 0
  %v4068 = vsel %vm230, %v4009, 0
  %v4071 = vsel %vm230, %v4010, 0
  %v4074 = vsel %vm230, %v4011, 0
  %v4077 = vsel %vm230, %v4012, 0
  %v4080 = vsel %vm230, %v4013, 0
  %v4083 = vsel %vm230, %v4014, 0
  %v4086 = vsel %vm230, %v4015, 0
  %v4089 = vsel %vm230, %v4016, 0
  %v4092 = vsel %vm230, %v4017, 0
  %v4095 = vsel %vm230, %v4018, 0
  %v4098 = vsel %vm230, %v4019, 0
  %v4101 = vsel %vm230, %v4020, 0
  %v4104 = vsel %vm230, %v4021, 0
  %v4107 = vsel %vm230, %v4022, 0
  %v4110 = vsel %vm230, %v4023, 0
  %v4113 = vsel %vm230, %v4024, 0
  %v4116 = vsel %vm230, %v4025, 0
  %v4119 = vsel %vm230, %v4026, 0
  %v4122 = vsel %vm230, %v4027, 0
  %v4125 = vsel %vm230, %v4028, 0
  %v4128 = vsel %vm230, %v4029, 0
  %v4131 = vsel %vm230, %v4030, 0
  %v4134 = vsel %vm230, %v4031, 0
  %4136 = vmatprep.subr.bf16.mxu0 0
  %4137 = vmatpush1.bf16.msra.mxu0 %v4038
  %4138 = vmatprep.subr.bf16.mxu0 0
  %4139 = vmatpush1.bf16.msra.mxu0 0
  %4140 = vmatprep.subr.bf16.mxu0 0
  %4141 = vmatpush1.bf16.msra.mxu0 0
  %4142 = vmatprep.subr.bf16.mxu0 0
  %4143 = vmatpush1.bf16.msra.mxu0 0
  %4144 = vmatprep.subr.bf16.mxu0 0
  %4145 = vmatpush1.bf16.msra.mxu0 0
  %4146 = vmatprep.subr.bf16.mxu0 0
  %4147 = vmatpush1.bf16.msra.mxu0 0
  %4148 = vmatprep.subr.bf16.mxu0 0
  %4149 = vmatpush1.bf16.msra.mxu0 0
  %4150 = vmatprep.subr.bf16.mxu0 0
  %4151 = vmatpush1.bf16.msra.mxu0 0
  %4152 = vmatprep.subr.bf16.mxu0 0
  %4153 = vmatpush1.bf16.msra.mxu0 0
  %4154 = vmatprep.subr.bf16.mxu0 0
  %4155 = vmatpush1.bf16.msra.mxu0 0
  %4156 = vmatprep.subr.bf16.mxu0 0
  %4157 = vmatpush1.bf16.msra.mxu0 0
  %4158 = vmatprep.subr.bf16.mxu0 0
  %4159 = vmatpush1.bf16.msra.mxu0 0
  %4160 = vmatprep.subr.bf16.mxu0 0
  %4161 = vmatpush1.bf16.msra.mxu0 0
  %4162 = vmatprep.subr.bf16.mxu0 0
  %4163 = vmatpush1.bf16.msra.mxu0 0
  %4164 = vmatprep.subr.bf16.mxu0 0
  %4165 = vmatpush1.bf16.msra.mxu0 0
  %4166 = vmatprep.subr.bf16.mxu0 0
  %4167 = vmatpush1.bf16.msra.mxu0 0
  %4168 = vmatprep.mubr.bf16.mxu0 0
  %4169 = vmatmul.mubr.bf16.gmra.mrb[0].mxu0 %v4041
  %v4170 = vpop.f32.mrb[0].mxu0
  %v4171 = vadd.f32 0.0, %v4170
  %v4172 = vpop.f32.mrb[0].mxu0
  %v4173 = vpop.f32.mrb[0].mxu0
  %v4174 = vadd.f32 0.0, %v4173
  %v4175 = vpop.f32.mrb[0].mxu0
  %4176 = vmatprep.mubr.bf16.mxu0 0
  %4177 = vmatmul.mubr.bf16.gmra.mrb[0].mxu0 %v4044
  %v4178 = vpop.f32.mrb[0].mxu0
  %v4179 = vadd.f32 0.0, %v4178
  %v4180 = vpop.f32.mrb[0].mxu0
  %v4181 = vpop.f32.mrb[0].mxu0
  %v4182 = vadd.f32 0.0, %v4181
  %v4183 = vpop.f32.mrb[0].mxu0
  %4184 = vmatprep.mubr.bf16.mxu0 0
  %4185 = vmatmul.mubr.bf16.gmra.mrb[0].mxu0 %v4047
  %v4186 = vpop.f32.mrb[0].mxu0
  %v4187 = vadd.f32 0.0, %v4186
  %v4188 = vpop.f32.mrb[0].mxu0
  %v4189 = vpop.f32.mrb[0].mxu0
  %v4190 = vadd.f32 0.0, %v4189
  %v4191 = vpop.f32.mrb[0].mxu0
  %4192 = vmatprep.mubr.bf16.mxu0 0
  %4193 = vmatmul.mubr.bf16.gmra.mrb[0].mxu0 %v4050
  %v4194 = vpop.f32.mrb[0].mxu0
  %v4195 = vadd.f32 0.0, %v4194
  %v4196 = vpop.f32.mrb[0].mxu0
  %v4197 = vpop.f32.mrb[0].mxu0
  %v4198 = vadd.f32 0.0, %v4197
  %v4199 = vpop.f32.mrb[0].mxu0
  %4200 = vmatprep.mubr.bf16.mxu0 0
  %4201 = vmatmul.mubr.bf16.gmra.mrb[0].mxu0 %v4053
  %v4202 = vpop.f32.mrb[0].mxu0
  %v4203 = vadd.f32 0.0, %v4202
  %v4204 = vpop.f32.mrb[0].mxu0
  %v4205 = vpop.f32.mrb[0].mxu0
  %v4206 = vadd.f32 0.0, %v4205
  %v4207 = vpop.f32.mrb[0].mxu0
  %4208 = vmatprep.mubr.bf16.mxu0 0
  %4209 = vmatmul.mubr.bf16.gmra.mrb[0].mxu0 %v4056
  %v4210 = vpop.f32.mrb[0].mxu0
  %v4211 = vadd.f32 0.0, %v4210
  %v4212 = vpop.f32.mrb[0].mxu0
  %v4213 = vpop.f32.mrb[0].mxu0
  %v4214 = vadd.f32 0.0, %v4213
  %v4215 = vpop.f32.mrb[0].mxu0
  %4216 = vmatprep.mubr.bf16.mxu0 0
  %4217 = vmatmul.mubr.bf16.gmra.mrb[0].mxu0 %v4059
  %v4218 = vpop.f32.mrb[0].mxu0
  %v4219 = vadd.f32 0.0, %v4218
  %v4220 = vpop.f32.mrb[0].mxu0
  %v4221 = vpop.f32.mrb[0].mxu0
  %v4222 = vadd.f32 0.0, %v4221
  %v4223 = vpop.f32.mrb[0].mxu0
  %4224 = vmatprep.mubr.bf16.mxu0 0
  %4225 = vmatmul.mubr.bf16.gmra.mrb[0].mxu0 %v4062
  %v4226 = vpop.f32.mrb[0].mxu0
  %v4227 = vadd.f32 0.0, %v4226
  %v4228 = vpop.f32.mrb[0].mxu0
  %v4229 = vpop.f32.mrb[0].mxu0
  %v4230 = vadd.f32 0.0, %v4229
  %v4231 = vpop.f32.mrb[0].mxu0
  %4232 = vmatprep.mubr.bf16.mxu0 0
  %4233 = vmatmul.mubr.bf16.gmra.mrb[0].mxu0 %v4065
  %v4234 = vpop.f32.mrb[0].mxu0
  %v4235 = vadd.f32 0.0, %v4234
  %v4236 = vpop.f32.mrb[0].mxu0
  %v4237 = vpop.f32.mrb[0].mxu0
  %v4238 = vadd.f32 0.0, %v4237
  %v4239 = vpop.f32.mrb[0].mxu0
  %4240 = vmatprep.mubr.bf16.mxu0 0
  %4241 = vmatmul.mubr.bf16.gmra.mrb[0].mxu0 %v4068
  %v4242 = vpop.f32.mrb[0].mxu0
  %v4243 = vadd.f32 0.0, %v4242
  %v4244 = vpop.f32.mrb[0].mxu0
  %v4245 = vpop.f32.mrb[0].mxu0
  %v4246 = vadd.f32 0.0, %v4245
  %v4247 = vpop.f32.mrb[0].mxu0
  %4248 = vmatprep.mubr.bf16.mxu0 0
  %4249 = vmatmul.mubr.bf16.gmra.mrb[0].mxu0 %v4071
  %v4250 = vpop.f32.mrb[0].mxu0
  %v4251 = vadd.f32 0.0, %v4250
  %v4252 = vpop.f32.mrb[0].mxu0
  %v4253 = vpop.f32.mrb[0].mxu0
  %v4254 = vadd.f32 0.0, %v4253
  %v4255 = vpop.f32.mrb[0].mxu0
  %4256 = vmatprep.mubr.bf16.mxu0 0
  %4257 = vmatmul.mubr.bf16.gmra.mrb[0].mxu0 %v4074
  %v4258 = vpop.f32.mrb[0].mxu0
  %v4259 = vadd.f32 0.0, %v4258
  %v4260 = vpop.f32.mrb[0].mxu0
  %v4261 = vpop.f32.mrb[0].mxu0
  %v4262 = vadd.f32 0.0, %v4261
  %v4263 = vpop.f32.mrb[0].mxu0
  %4264 = vmatprep.mubr.bf16.mxu0 0
  %4265 = vmatmul.mubr.bf16.gmra.mrb[0].mxu0 %v4077
  %v4266 = vpop.f32.mrb[0].mxu0
  %v4267 = vadd.f32 0.0, %v4266
  %v4268 = vpop.f32.mrb[0].mxu0
  %v4269 = vpop.f32.mrb[0].mxu0
  %v4270 = vadd.f32 0.0, %v4269
  %v4271 = vpop.f32.mrb[0].mxu0
  %4272 = vmatprep.mubr.bf16.mxu0 0
  %4273 = vmatmul.mubr.bf16.gmra.mrb[0].mxu0 %v4080
  %v4274 = vpop.f32.mrb[0].mxu0
  %v4275 = vadd.f32 0.0, %v4274
  %v4276 = vpop.f32.mrb[0].mxu0
  %v4277 = vpop.f32.mrb[0].mxu0
  %v4278 = vadd.f32 0.0, %v4277
  %v4279 = vpop.f32.mrb[0].mxu0
  %4280 = vmatprep.mubr.bf16.mxu0 0
  %4281 = vmatmul.mubr.bf16.gmra.mrb[0].mxu0 %v4083
  %v4282 = vpop.f32.mrb[0].mxu0
  %v4283 = vadd.f32 0.0, %v4282
  %v4284 = vpop.f32.mrb[0].mxu0
  %v4285 = vpop.f32.mrb[0].mxu0
  %v4286 = vadd.f32 0.0, %v4285
  %v4287 = vpop.f32.mrb[0].mxu0
  %4288 = vmatprep.mubr.bf16.mxu0 0
  %4289 = vmatmul.mubr.bf16.gmra.mrb[0].mxu0 %v4086
  %v4290 = vpop.f32.mrb[0].mxu0
  %v4291 = vadd.f32 0.0, %v4290
  %v4292 = vpop.f32.mrb[0].mxu0
  %v4293 = vpop.f32.mrb[0].mxu0
  %v4294 = vadd.f32 0.0, %v4293
  %v4295 = vpop.f32.mrb[0].mxu0
  %4296 = vmatprep.mubr.bf16.mxu0 0
  %4297 = vmatmul.mubr.bf16.gmra.mrb[0].mxu0 %v4089
  %v4298 = vpop.f32.mrb[0].mxu0
  %v4299 = vadd.f32 0.0, %v4298
  %v4300 = vpop.f32.mrb[0].mxu0
  %v4301 = vpop.f32.mrb[0].mxu0
  %v4302 = vadd.f32 0.0, %v4301
  %v4303 = vpop.f32.mrb[0].mxu0
  %4304 = vmatprep.mubr.bf16.mxu0 0
  %4305 = vmatmul.mubr.bf16.gmra.mrb[0].mxu0 %v4092
  %v4306 = vpop.f32.mrb[0].mxu0
  %v4307 = vadd.f32 0.0, %v4306
  %v4308 = vpop.f32.mrb[0].mxu0
  %v4309 = vpop.f32.mrb[0].mxu0
  %v4310 = vadd.f32 0.0, %v4309
  %v4311 = vpop.f32.mrb[0].mxu0
  %4312 = vmatprep.mubr.bf16.mxu0 0
  %4313 = vmatmul.mubr.bf16.gmra.mrb[0].mxu0 %v4095
  %v4314 = vpop.f32.mrb[0].mxu0
  %v4315 = vadd.f32 0.0, %v4314
  %v4316 = vpop.f32.mrb[0].mxu0
  %v4317 = vpop.f32.mrb[0].mxu0
  %v4318 = vadd.f32 0.0, %v4317
  %v4319 = vpop.f32.mrb[0].mxu0
  %4320 = vmatprep.mubr.bf16.mxu0 0
  %4321 = vmatmul.mubr.bf16.gmra.mrb[0].mxu0 %v4098
  %v4322 = vpop.f32.mrb[0].mxu0
  %v4323 = vadd.f32 0.0, %v4322
  %v4324 = vpop.f32.mrb[0].mxu0
  %v4325 = vpop.f32.mrb[0].mxu0
  %v4326 = vadd.f32 0.0, %v4325
  %v4327 = vpop.f32.mrb[0].mxu0
  %4328 = vmatprep.mubr.bf16.mxu0 0
  %4329 = vmatmul.mubr.bf16.gmra.mrb[0].mxu0 %v4101
  %v4330 = vpop.f32.mrb[0].mxu0
  %v4331 = vadd.f32 0.0, %v4330
  %v4332 = vpop.f32.mrb[0].mxu0
  %v4333 = vpop.f32.mrb[0].mxu0
  %v4334 = vadd.f32 0.0, %v4333
  %v4335 = vpop.f32.mrb[0].mxu0
  %4336 = vmatprep.mubr.bf16.mxu0 0
  %4337 = vmatmul.mubr.bf16.gmra.mrb[0].mxu0 %v4104
  %v4338 = vpop.f32.mrb[0].mxu0
  %v4339 = vadd.f32 0.0, %v4338
  %v4340 = vpop.f32.mrb[0].mxu0
  %v4341 = vpop.f32.mrb[0].mxu0
  %v4342 = vadd.f32 0.0, %v4341
  %v4343 = vpop.f32.mrb[0].mxu0
  %4344 = vmatprep.mubr.bf16.mxu0 0
  %4345 = vmatmul.mubr.bf16.gmra.mrb[0].mxu0 %v4107
  %v4346 = vpop.f32.mrb[0].mxu0
  %v4347 = vadd.f32 0.0, %v4346
  %v4348 = vpop.f32.mrb[0].mxu0
  %v4349 = vpop.f32.mrb[0].mxu0
  %v4350 = vadd.f32 0.0, %v4349
  %v4351 = vpop.f32.mrb[0].mxu0
  %4352 = vmatprep.mubr.bf16.mxu0 0
  %4353 = vmatmul.mubr.bf16.gmra.mrb[0].mxu0 %v4110
  %v4354 = vpop.f32.mrb[0].mxu0
  %v4355 = vadd.f32 0.0, %v4354
  %v4356 = vpop.f32.mrb[0].mxu0
  %v4357 = vpop.f32.mrb[0].mxu0
  %v4358 = vadd.f32 0.0, %v4357
  %v4359 = vpop.f32.mrb[0].mxu0
  %4360 = vmatprep.mubr.bf16.mxu0 0
  %4361 = vmatmul.mubr.bf16.gmra.mrb[0].mxu0 %v4113
  %v4362 = vpop.f32.mrb[0].mxu0
  %v4363 = vadd.f32 0.0, %v4362
  %v4364 = vpop.f32.mrb[0].mxu0
  %v4365 = vpop.f32.mrb[0].mxu0
  %v4366 = vadd.f32 0.0, %v4365
  %v4367 = vpop.f32.mrb[0].mxu0
  %4368 = vmatprep.mubr.bf16.mxu0 0
  %4369 = vmatmul.mubr.bf16.gmra.mrb[0].mxu0 %v4116
  %v4370 = vpop.f32.mrb[0].mxu0
  %v4371 = vadd.f32 0.0, %v4370
  %v4372 = vpop.f32.mrb[0].mxu0
  %v4373 = vpop.f32.mrb[0].mxu0
  %v4374 = vadd.f32 0.0, %v4373
  %v4375 = vpop.f32.mrb[0].mxu0
  %4376 = vmatprep.mubr.bf16.mxu0 0
  %4377 = vmatmul.mubr.bf16.gmra.mrb[0].mxu0 %v4119
  %v4378 = vpop.f32.mrb[0].mxu0
  %v4379 = vadd.f32 0.0, %v4378
  %v4380 = vpop.f32.mrb[0].mxu0
  %v4381 = vpop.f32.mrb[0].mxu0
  %v4382 = vadd.f32 0.0, %v4381
  %v4383 = vpop.f32.mrb[0].mxu0
  %4384 = vmatprep.mubr.bf16.mxu0 0
  %4385 = vmatmul.mubr.bf16.gmra.mrb[0].mxu0 %v4122
  %v4386 = vpop.f32.mrb[0].mxu0
  %v4387 = vadd.f32 0.0, %v4386
  %v4388 = vpop.f32.mrb[0].mxu0
  %v4389 = vpop.f32.mrb[0].mxu0
  %v4390 = vadd.f32 0.0, %v4389
  %v4391 = vpop.f32.mrb[0].mxu0
  %4392 = vmatprep.mubr.bf16.mxu0 0
  %4393 = vmatmul.mubr.bf16.gmra.mrb[0].mxu0 %v4125
  %v4394 = vpop.f32.mrb[0].mxu0
  %v4395 = vadd.f32 0.0, %v4394
  %v4396 = vpop.f32.mrb[0].mxu0
  %v4397 = vpop.f32.mrb[0].mxu0
  %v4398 = vadd.f32 0.0, %v4397
  %v4399 = vpop.f32.mrb[0].mxu0
  %4400 = vmatprep.mubr.bf16.mxu0 0
  %4401 = vmatmul.mubr.bf16.gmra.mrb[0].mxu0 %v4128
  %v4402 = vpop.f32.mrb[0].mxu0
  %v4403 = vadd.f32 0.0, %v4402
  %v4404 = vpop.f32.mrb[0].mxu0
  %v4405 = vpop.f32.mrb[0].mxu0
  %v4406 = vadd.f32 0.0, %v4405
  %v4407 = vpop.f32.mrb[0].mxu0
  %4408 = vmatprep.mubr.bf16.mxu0 0
  %4409 = vmatmul.mubr.bf16.gmra.mrb[0].mxu0 %v4131
  %v4410 = vpop.f32.mrb[0].mxu0
  %v4411 = vadd.f32 0.0, %v4410
  %v4412 = vpop.f32.mrb[0].mxu0
  %v4413 = vpop.f32.mrb[0].mxu0
  %v4414 = vadd.f32 0.0, %v4413
  %v4415 = vpop.f32.mrb[0].mxu0
  %4416 = vmatprep.mubr.bf16.mxu0 0
  %4417 = vmatmul.mubr.bf16.gmra.mrb[0].mxu0 %v4134
  %v4418 = vpop.f32.mrb[0].mxu0
  %v4419 = vadd.f32 0.0, %v4418
  %v4420 = vpop.f32.mrb[0].mxu0
  %v4421 = vpop.f32.mrb[0].mxu0
  %v4422 = vadd.f32 0.0, %v4421
  %v4423 = vpop.f32.mrb[0].mxu0
  %4424 = vdwg.mxu0
  %v4427 = vunpack.c.l.b16 %v3934
  %v4428 = vunpack.c.l.b16 %v3935
  %v4429 = vpack.c.b16 %v4428, %v4427
  %v4432 = vsel %vm230, %v3902, 0
  %v4435 = vsel %vm230, %v3903, 0
  %v4438 = vsel %vm230, %v3904, 0
  %v4441 = vsel %vm230, %v3905, 0
  %v4444 = vsel %vm230, %v3906, 0
  %v4447 = vsel %vm230, %v3907, 0
  %v4450 = vsel %vm230, %v3908, 0
  %v4453 = vsel %vm230, %v3909, 0
  %v4456 = vsel %vm230, %v3910, 0
  %v4459 = vsel %vm230, %v3911, 0
  %v4462 = vsel %vm230, %v3912, 0
  %v4465 = vsel %vm230, %v3913, 0
  %v4468 = vsel %vm230, %v3914, 0
  %v4471 = vsel %vm230, %v3915, 0
  %v4474 = vsel %vm230, %v3916, 0
  %v4477 = vsel %vm230, %v3917, 0
  %v4480 = vsel %vm230, %v3918, 0
  %v4483 = vsel %vm230, %v3919, 0
  %v4486 = vsel %vm230, %v3920, 0
  %v4489 = vsel %vm230, %v3921, 0
  %v4492 = vsel %vm230, %v3922, 0
  %v4495 = vsel %vm230, %v3923, 0
  %v4498 = vsel %vm230, %v3924, 0
  %v4501 = vsel %vm230, %v3925, 0
  %v4504 = vsel %vm230, %v3926, 0
  %v4507 = vsel %vm230, %v3927, 0
  %v4510 = vsel %vm230, %v3928, 0
  %v4513 = vsel %vm230, %v3929, 0
  %v4516 = vsel %vm230, %v3930, 0
  %v4519 = vsel %vm230, %v3931, 0
  %v4522 = vsel %vm230, %v3932, 0
  %v4525 = vsel %vm230, %v3933, 0
  %4527 = vmatprep.subr.bf16.mxu0 0
  %4528 = vmatpush1.bf16.msra.mxu0 %v4429
  %4529 = vmatprep.subr.bf16.mxu0 0
  %4530 = vmatpush1.bf16.msra.mxu0 0
  %4531 = vmatprep.subr.bf16.mxu0 0
  %4532 = vmatpush1.bf16.msra.mxu0 0
  %4533 = vmatprep.subr.bf16.mxu0 0
  %4534 = vmatpush1.bf16.msra.mxu0 0
  %4535 = vmatprep.subr.bf16.mxu0 0
  %4536 = vmatpush1.bf16.msra.mxu0 0
  %4537 = vmatprep.subr.bf16.mxu0 0
  %4538 = vmatpush1.bf16.msra.mxu0 0
  %4539 = vmatprep.subr.bf16.mxu0 0
  %4540 = vmatpush1.bf16.msra.mxu0 0
  %4541 = vmatprep.subr.bf16.mxu0 0
  %4542 = vmatpush1.bf16.msra.mxu0 0
  %4543 = vmatprep.subr.bf16.mxu0 0
  %4544 = vmatpush1.bf16.msra.mxu0 0
  %4545 = vmatprep.subr.bf16.mxu0 0
  %4546 = vmatpush1.bf16.msra.mxu0 0
  %4547 = vmatprep.subr.bf16.mxu0 0
  %4548 = vmatpush1.bf16.msra.mxu0 0
  %4549 = vmatprep.subr.bf16.mxu0 0
  %4550 = vmatpush1.bf16.msra.mxu0 0
  %4551 = vmatprep.subr.bf16.mxu0 0
  %4552 = vmatpush1.bf16.msra.mxu0 0
  %4553 = vmatprep.subr.bf16.mxu0 0
  %4554 = vmatpush1.bf16.msra.mxu0 0
  %4555 = vmatprep.subr.bf16.mxu0 0
  %4556 = vmatpush1.bf16.msra.mxu0 0
  %4557 = vmatprep.subr.bf16.mxu0 0
  %4558 = vmatpush1.bf16.msra.mxu0 0
  %4559 = vmatprep.mubr.bf16.mxu0 0
  %4560 = vmatmul.mubr.bf16.gmra.mrb[0].mxu0 %v4432
  %v4561 = vpop.f32.mrb[0].mxu0
  %v4562 = vadd.f32 %v4171, %v4561
  %v4563 = vpop.f32.mrb[0].mxu0
  %v4564 = vpop.f32.mrb[0].mxu0
  %v4565 = vadd.f32 %v4174, %v4564
  %v4566 = vpop.f32.mrb[0].mxu0
  %4567 = vmatprep.mubr.bf16.mxu0 0
  %4568 = vmatmul.mubr.bf16.gmra.mrb[0].mxu0 %v4435
  %v4569 = vpop.f32.mrb[0].mxu0
  %v4570 = vadd.f32 %v4179, %v4569
  %v4571 = vpop.f32.mrb[0].mxu0
  %v4572 = vpop.f32.mrb[0].mxu0
  %v4573 = vadd.f32 %v4182, %v4572
  %v4574 = vpop.f32.mrb[0].mxu0
  %4575 = vmatprep.mubr.bf16.mxu0 0
  %4576 = vmatmul.mubr.bf16.gmra.mrb[0].mxu0 %v4438
  %v4577 = vpop.f32.mrb[0].mxu0
  %v4578 = vadd.f32 %v4187, %v4577
  %v4579 = vpop.f32.mrb[0].mxu0
  %v4580 = vpop.f32.mrb[0].mxu0
  %v4581 = vadd.f32 %v4190, %v4580
  %v4582 = vpop.f32.mrb[0].mxu0
  %4583 = vmatprep.mubr.bf16.mxu0 0
  %4584 = vmatmul.mubr.bf16.gmra.mrb[0].mxu0 %v4441
  %v4585 = vpop.f32.mrb[0].mxu0
  %v4586 = vadd.f32 %v4195, %v4585
  %v4587 = vpop.f32.mrb[0].mxu0
  %v4588 = vpop.f32.mrb[0].mxu0
  %v4589 = vadd.f32 %v4198, %v4588
  %v4590 = vpop.f32.mrb[0].mxu0
  %4591 = vmatprep.mubr.bf16.mxu0 0
  %4592 = vmatmul.mubr.bf16.gmra.mrb[0].mxu0 %v4444
  %v4593 = vpop.f32.mrb[0].mxu0
  %v4594 = vadd.f32 %v4203, %v4593
  %v4595 = vpop.f32.mrb[0].mxu0
  %v4596 = vpop.f32.mrb[0].mxu0
  %v4597 = vadd.f32 %v4206, %v4596
  %v4598 = vpop.f32.mrb[0].mxu0
  %4599 = vmatprep.mubr.bf16.mxu0 0
  %4600 = vmatmul.mubr.bf16.gmra.mrb[0].mxu0 %v4447
  %v4601 = vpop.f32.mrb[0].mxu0
  %v4602 = vadd.f32 %v4211, %v4601
  %v4603 = vpop.f32.mrb[0].mxu0
  %v4604 = vpop.f32.mrb[0].mxu0
  %v4605 = vadd.f32 %v4214, %v4604
  %v4606 = vpop.f32.mrb[0].mxu0
  %4607 = vmatprep.mubr.bf16.mxu0 0
  %4608 = vmatmul.mubr.bf16.gmra.mrb[0].mxu0 %v4450
  %v4609 = vpop.f32.mrb[0].mxu0
  %v4610 = vadd.f32 %v4219, %v4609
  %v4611 = vpop.f32.mrb[0].mxu0
  %v4612 = vpop.f32.mrb[0].mxu0
  %v4613 = vadd.f32 %v4222, %v4612
  %v4614 = vpop.f32.mrb[0].mxu0
  %4615 = vmatprep.mubr.bf16.mxu0 0
  %4616 = vmatmul.mubr.bf16.gmra.mrb[0].mxu0 %v4453
  %v4617 = vpop.f32.mrb[0].mxu0
  %v4618 = vadd.f32 %v4227, %v4617
  %v4619 = vpop.f32.mrb[0].mxu0
  %v4620 = vpop.f32.mrb[0].mxu0
  %v4621 = vadd.f32 %v4230, %v4620
  %v4622 = vpop.f32.mrb[0].mxu0
  %4623 = vmatprep.mubr.bf16.mxu0 0
  %4624 = vmatmul.mubr.bf16.gmra.mrb[0].mxu0 %v4456
  %v4625 = vpop.f32.mrb[0].mxu0
  %v4626 = vadd.f32 %v4235, %v4625
  %v4627 = vpop.f32.mrb[0].mxu0
  %v4628 = vpop.f32.mrb[0].mxu0
  %v4629 = vadd.f32 %v4238, %v4628
  %v4630 = vpop.f32.mrb[0].mxu0
  %4631 = vmatprep.mubr.bf16.mxu0 0
  %4632 = vmatmul.mubr.bf16.gmra.mrb[0].mxu0 %v4459
  %v4633 = vpop.f32.mrb[0].mxu0
  %v4634 = vadd.f32 %v4243, %v4633
  %v4635 = vpop.f32.mrb[0].mxu0
  %v4636 = vpop.f32.mrb[0].mxu0
  %v4637 = vadd.f32 %v4246, %v4636
  %v4638 = vpop.f32.mrb[0].mxu0
  %4639 = vmatprep.mubr.bf16.mxu0 0
  %4640 = vmatmul.mubr.bf16.gmra.mrb[0].mxu0 %v4462
  %v4641 = vpop.f32.mrb[0].mxu0
  %v4642 = vadd.f32 %v4251, %v4641
  %v4643 = vpop.f32.mrb[0].mxu0
  %v4644 = vpop.f32.mrb[0].mxu0
  %v4645 = vadd.f32 %v4254, %v4644
  %v4646 = vpop.f32.mrb[0].mxu0
  %4647 = vmatprep.mubr.bf16.mxu0 0
  %4648 = vmatmul.mubr.bf16.gmra.mrb[0].mxu0 %v4465
  %v4649 = vpop.f32.mrb[0].mxu0
  %v4650 = vadd.f32 %v4259, %v4649
  %v4651 = vpop.f32.mrb[0].mxu0
  %v4652 = vpop.f32.mrb[0].mxu0
  %v4653 = vadd.f32 %v4262, %v4652
  %v4654 = vpop.f32.mrb[0].mxu0
  %4655 = vmatprep.mubr.bf16.mxu0 0
  %4656 = vmatmul.mubr.bf16.gmra.mrb[0].mxu0 %v4468
  %v4657 = vpop.f32.mrb[0].mxu0
  %v4658 = vadd.f32 %v4267, %v4657
  %v4659 = vpop.f32.mrb[0].mxu0
  %v4660 = vpop.f32.mrb[0].mxu0
  %v4661 = vadd.f32 %v4270, %v4660
  %v4662 = vpop.f32.mrb[0].mxu0
  %4663 = vmatprep.mubr.bf16.mxu0 0
  %4664 = vmatmul.mubr.bf16.gmra.mrb[0].mxu0 %v4471
  %v4665 = vpop.f32.mrb[0].mxu0
  %v4666 = vadd.f32 %v4275, %v4665
  %v4667 = vpop.f32.mrb[0].mxu0
  %v4668 = vpop.f32.mrb[0].mxu0
  %v4669 = vadd.f32 %v4278, %v4668
  %v4670 = vpop.f32.mrb[0].mxu0
  %4671 = vmatprep.mubr.bf16.mxu0 0
  %4672 = vmatmul.mubr.bf16.gmra.mrb[0].mxu0 %v4474
  %v4673 = vpop.f32.mrb[0].mxu0
  %v4674 = vadd.f32 %v4283, %v4673
  %v4675 = vpop.f32.mrb[0].mxu0
  %v4676 = vpop.f32.mrb[0].mxu0
  %v4677 = vadd.f32 %v4286, %v4676
  %v4678 = vpop.f32.mrb[0].mxu0
  %4679 = vmatprep.mubr.bf16.mxu0 0
  %4680 = vmatmul.mubr.bf16.gmra.mrb[0].mxu0 %v4477
  %v4681 = vpop.f32.mrb[0].mxu0
  %v4682 = vadd.f32 %v4291, %v4681
  %v4683 = vpop.f32.mrb[0].mxu0
  %v4684 = vpop.f32.mrb[0].mxu0
  %v4685 = vadd.f32 %v4294, %v4684
  %v4686 = vpop.f32.mrb[0].mxu0
  %4687 = vmatprep.mubr.bf16.mxu0 0
  %4688 = vmatmul.mubr.bf16.gmra.mrb[0].mxu0 %v4480
  %v4689 = vpop.f32.mrb[0].mxu0
  %v4690 = vadd.f32 %v4299, %v4689
  %v4691 = vpop.f32.mrb[0].mxu0
  %v4692 = vpop.f32.mrb[0].mxu0
  %v4693 = vadd.f32 %v4302, %v4692
  %v4694 = vpop.f32.mrb[0].mxu0
  %4695 = vmatprep.mubr.bf16.mxu0 0
  %4696 = vmatmul.mubr.bf16.gmra.mrb[0].mxu0 %v4483
  %v4697 = vpop.f32.mrb[0].mxu0
  %v4698 = vadd.f32 %v4307, %v4697
  %v4699 = vpop.f32.mrb[0].mxu0
  %v4700 = vpop.f32.mrb[0].mxu0
  %v4701 = vadd.f32 %v4310, %v4700
  %v4702 = vpop.f32.mrb[0].mxu0
  %4703 = vmatprep.mubr.bf16.mxu0 0
  %4704 = vmatmul.mubr.bf16.gmra.mrb[0].mxu0 %v4486
  %v4705 = vpop.f32.mrb[0].mxu0
  %v4706 = vadd.f32 %v4315, %v4705
  %v4707 = vpop.f32.mrb[0].mxu0
  %v4708 = vpop.f32.mrb[0].mxu0
  %v4709 = vadd.f32 %v4318, %v4708
  %v4710 = vpop.f32.mrb[0].mxu0
  %4711 = vmatprep.mubr.bf16.mxu0 0
  %4712 = vmatmul.mubr.bf16.gmra.mrb[0].mxu0 %v4489
  %v4713 = vpop.f32.mrb[0].mxu0
  %v4714 = vadd.f32 %v4323, %v4713
  %v4715 = vpop.f32.mrb[0].mxu0
  %v4716 = vpop.f32.mrb[0].mxu0
  %v4717 = vadd.f32 %v4326, %v4716
  %v4718 = vpop.f32.mrb[0].mxu0
  %4719 = vmatprep.mubr.bf16.mxu0 0
  %4720 = vmatmul.mubr.bf16.gmra.mrb[0].mxu0 %v4492
  %v4721 = vpop.f32.mrb[0].mxu0
  %v4722 = vadd.f32 %v4331, %v4721
  %v4723 = vpop.f32.mrb[0].mxu0
  %v4724 = vpop.f32.mrb[0].mxu0
  %v4725 = vadd.f32 %v4334, %v4724
  %v4726 = vpop.f32.mrb[0].mxu0
  %4727 = vmatprep.mubr.bf16.mxu0 0
  %4728 = vmatmul.mubr.bf16.gmra.mrb[0].mxu0 %v4495
  %v4729 = vpop.f32.mrb[0].mxu0
  %v4730 = vadd.f32 %v4339, %v4729
  %v4731 = vpop.f32.mrb[0].mxu0
  %v4732 = vpop.f32.mrb[0].mxu0
  %v4733 = vadd.f32 %v4342, %v4732
  %v4734 = vpop.f32.mrb[0].mxu0
  %4735 = vmatprep.mubr.bf16.mxu0 0
  %4736 = vmatmul.mubr.bf16.gmra.mrb[0].mxu0 %v4498
  %v4737 = vpop.f32.mrb[0].mxu0
  %v4738 = vadd.f32 %v4347, %v4737
  %v4739 = vpop.f32.mrb[0].mxu0
  %v4740 = vpop.f32.mrb[0].mxu0
  %v4741 = vadd.f32 %v4350, %v4740
  %v4742 = vpop.f32.mrb[0].mxu0
  %4743 = vmatprep.mubr.bf16.mxu0 0
  %4744 = vmatmul.mubr.bf16.gmra.mrb[0].mxu0 %v4501
  %v4745 = vpop.f32.mrb[0].mxu0
  %v4746 = vadd.f32 %v4355, %v4745
  %v4747 = vpop.f32.mrb[0].mxu0
  %v4748 = vpop.f32.mrb[0].mxu0
  %v4749 = vadd.f32 %v4358, %v4748
  %v4750 = vpop.f32.mrb[0].mxu0
  %4751 = vmatprep.mubr.bf16.mxu0 0
  %4752 = vmatmul.mubr.bf16.gmra.mrb[0].mxu0 %v4504
  %v4753 = vpop.f32.mrb[0].mxu0
  %v4754 = vadd.f32 %v4363, %v4753
  %v4755 = vpop.f32.mrb[0].mxu0
  %v4756 = vpop.f32.mrb[0].mxu0
  %v4757 = vadd.f32 %v4366, %v4756
  %v4758 = vpop.f32.mrb[0].mxu0
  %4759 = vmatprep.mubr.bf16.mxu0 0
  %4760 = vmatmul.mubr.bf16.gmra.mrb[0].mxu0 %v4507
  %v4761 = vpop.f32.mrb[0].mxu0
  %v4762 = vadd.f32 %v4371, %v4761
  %v4763 = vpop.f32.mrb[0].mxu0
  %v4764 = vpop.f32.mrb[0].mxu0
  %v4765 = vadd.f32 %v4374, %v4764
  %v4766 = vpop.f32.mrb[0].mxu0
  %4767 = vmatprep.mubr.bf16.mxu0 0
  %4768 = vmatmul.mubr.bf16.gmra.mrb[0].mxu0 %v4510
  %v4769 = vpop.f32.mrb[0].mxu0
  %v4770 = vadd.f32 %v4379, %v4769
  %v4771 = vpop.f32.mrb[0].mxu0
  %v4772 = vpop.f32.mrb[0].mxu0
  %v4773 = vadd.f32 %v4382, %v4772
  %v4774 = vpop.f32.mrb[0].mxu0
  %4775 = vmatprep.mubr.bf16.mxu0 0
  %4776 = vmatmul.mubr.bf16.gmra.mrb[0].mxu0 %v4513
  %v4777 = vpop.f32.mrb[0].mxu0
  %v4778 = vadd.f32 %v4387, %v4777
  %v4779 = vpop.f32.mrb[0].mxu0
  %v4780 = vpop.f32.mrb[0].mxu0
  %v4781 = vadd.f32 %v4390, %v4780
  %v4782 = vpop.f32.mrb[0].mxu0
  %4783 = vmatprep.mubr.bf16.mxu0 0
  %4784 = vmatmul.mubr.bf16.gmra.mrb[0].mxu0 %v4516
  %v4785 = vpop.f32.mrb[0].mxu0
  %v4786 = vadd.f32 %v4395, %v4785
  %v4787 = vpop.f32.mrb[0].mxu0
  %v4788 = vpop.f32.mrb[0].mxu0
  %v4789 = vadd.f32 %v4398, %v4788
  %v4790 = vpop.f32.mrb[0].mxu0
  %4791 = vmatprep.mubr.bf16.mxu0 0
  %4792 = vmatmul.mubr.bf16.gmra.mrb[0].mxu0 %v4519
  %v4793 = vpop.f32.mrb[0].mxu0
  %v4794 = vadd.f32 %v4403, %v4793
  %v4795 = vpop.f32.mrb[0].mxu0
  %v4796 = vpop.f32.mrb[0].mxu0
  %v4797 = vadd.f32 %v4406, %v4796
  %v4798 = vpop.f32.mrb[0].mxu0
  %4799 = vmatprep.mubr.bf16.mxu0 0
  %4800 = vmatmul.mubr.bf16.gmra.mrb[0].mxu0 %v4522
  %v4801 = vpop.f32.mrb[0].mxu0
  %v4802 = vadd.f32 %v4411, %v4801
  %v4803 = vpop.f32.mrb[0].mxu0
  %v4804 = vpop.f32.mrb[0].mxu0
  %v4805 = vadd.f32 %v4414, %v4804
  %v4806 = vpop.f32.mrb[0].mxu0
  %4807 = vmatprep.mubr.bf16.mxu0 0
  %4808 = vmatmul.mubr.bf16.gmra.mrb[0].mxu0 %v4525
  %v4809 = vpop.f32.mrb[0].mxu0
  %v4810 = vadd.f32 %v4419, %v4809
  %v4811 = vpop.f32.mrb[0].mxu0
  %v4812 = vpop.f32.mrb[0].mxu0
  %v4813 = vadd.f32 %v4422, %v4812
  %v4814 = vpop.f32.mrb[0].mxu0
  %4815 = vdwg.mxu0
  %v4816 = vld [vmem:[#allocation3 + $0x2] sm:$0xff]
  %v4817 = vld [vmem:[#allocation3 + $0xa] sm:$0xff]
  %v4818 = vld [vmem:[#allocation3 + $0x1a] sm:$0xff]
  %v4819 = vld [vmem:[#allocation3 + $0x22] sm:$0xff]
  %v4820 = vld [vmem:[#allocation3 + $0x32] sm:$0xff]
  %v4821 = vld [vmem:[#allocation3 + $0x3a] sm:$0xff]
  %v4822 = vld [vmem:[#allocation3 + $0x4a] sm:$0xff]
  %v4823 = vld [vmem:[#allocation3 + $0x52] sm:$0xff]
  %v4824 = vld [vmem:[#allocation3 + $0x62] sm:$0xff]
  %v4825 = vld [vmem:[#allocation3 + $0x6a] sm:$0xff]
  %v4826 = vld [vmem:[#allocation3 + $0x7a] sm:$0xff]
  %v4827 = vld [vmem:[#allocation3 + $0x82] sm:$0xff]
  %v4828 = vld [vmem:[#allocation3 + $0x92] sm:$0xff]
  %v4829 = vld [vmem:[#allocation3 + $0x9a] sm:$0xff]
  %v4830 = vld [vmem:[#allocation3 + $0xaa] sm:$0xff]
  %v4831 = vld [vmem:[#allocation3 + $0xb2] sm:$0xff]
  %v4832 = vld [vmem:[#allocation3 + $0xc2] sm:$0xff]
  %v4833 = vld [vmem:[#allocation3 + $0xca] sm:$0xff]
  %v4834 = vld [vmem:[#allocation3 + $0xda] sm:$0xff]
  %v4835 = vld [vmem:[#allocation3 + $0xe2] sm:$0xff]
  %v4836 = vld [vmem:[#allocation3 + $0xf2] sm:$0xff]
  %v4837 = vld [vmem:[#allocation3 + $0xfa] sm:$0xff]
  %v4838 = vld [vmem:[#allocation3 + $0x10a] sm:$0xff]
  %v4839 = vld [vmem:[#allocation3 + $0x112] sm:$0xff]
  %v4840 = vld [vmem:[#allocation3 + $0x122] sm:$0xff]
  %v4841 = vld [vmem:[#allocation3 + $0x12a] sm:$0xff]
  %v4842 = vld [vmem:[#allocation3 + $0x13a] sm:$0xff]
  %v4843 = vld [vmem:[#allocation3 + $0x142] sm:$0xff]
  %v4844 = vld [vmem:[#allocation3 + $0x152] sm:$0xff]
  %v4845 = vld [vmem:[#allocation3 + $0x15a] sm:$0xff]
  %v4846 = vld [vmem:[#allocation3 + $0x16a] sm:$0xff]
  %v4847 = vld [vmem:[#allocation3 + $0x172] sm:$0xff]
  %v4848 = vld [vmem:[#allocation3 + $0x1b2] sm:$0xff]
  %v4849 = vld [vmem:[#allocation3 + $0x1ba] sm:$0xff]
  %v4850 = vld [vmem:[#allocation3 + $0x1ca] sm:$0xff]
  %v4851 = vld [vmem:[#allocation3 + $0x1d2] sm:$0xff]
  %v4852 = vld [vmem:[#allocation3 + $0x1e2] sm:$0xff]
  %v4853 = vld [vmem:[#allocation3 + $0x1ea] sm:$0xff]
  %v4854 = vld [vmem:[#allocation3 + $0x1fa] sm:$0xff]
  %v4855 = vld [vmem:[#allocation3 + $0x202] sm:$0xff]
  %v4856 = vld [vmem:[#allocation3 + $0x212] sm:$0xff]
  %v4857 = vld [vmem:[#allocation3 + $0x21a] sm:$0xff]
  %v4858 = vld [vmem:[#allocation3 + $0x22a] sm:$0xff]
  %v4859 = vld [vmem:[#allocation3 + $0x232] sm:$0xff]
  %v4860 = vld [vmem:[#allocation3 + $0x242] sm:$0xff]
  %v4861 = vld [vmem:[#allocation3 + $0x24a] sm:$0xff]
  %v4862 = vld [vmem:[#allocation3 + $0x25a] sm:$0xff]
  %v4863 = vld [vmem:[#allocation3 + $0x262] sm:$0xff]
  %v4864 = vld [vmem:[#allocation3 + $0x272] sm:$0xff]
  %v4865 = vld [vmem:[#allocation3 + $0x27a] sm:$0xff]
  %v4866 = vld [vmem:[#allocation3 + $0x28a] sm:$0xff]
  %v4867 = vld [vmem:[#allocation3 + $0x292] sm:$0xff]
  %v4868 = vld [vmem:[#allocation3 + $0x2a2] sm:$0xff]
  %v4869 = vld [vmem:[#allocation3 + $0x2aa] sm:$0xff]
  %v4870 = vld [vmem:[#allocation3 + $0x2ba] sm:$0xff]
  %v4871 = vld [vmem:[#allocation3 + $0x2c2] sm:$0xff]
  %v4872 = vld [vmem:[#allocation3 + $0x2d2] sm:$0xff]
  %v4873 = vld [vmem:[#allocation3 + $0x2da] sm:$0xff]
  %v4874 = vld [vmem:[#allocation3 + $0x2ea] sm:$0xff]
  %v4875 = vld [vmem:[#allocation3 + $0x2f2] sm:$0xff]
  %v4876 = vld [vmem:[#allocation3 + $0x302] sm:$0xff]
  %v4877 = vld [vmem:[#allocation3 + $0x30a] sm:$0xff]
  %v4878 = vld [vmem:[#allocation3 + $0x31a] sm:$0xff]
  %v4879 = vld [vmem:[#allocation3 + $0x322] sm:$0xff]
  %v4880 = vpack.c.bf16 %v4817, %v4816
  %v4881 = vpack.c.bf16 %v4819, %v4818
  %v4882 = vpack.c.bf16 %v4821, %v4820
  %v4883 = vpack.c.bf16 %v4823, %v4822
  %v4884 = vpack.c.bf16 %v4825, %v4824
  %v4885 = vpack.c.bf16 %v4827, %v4826
  %v4886 = vpack.c.bf16 %v4829, %v4828
  %v4887 = vpack.c.bf16 %v4831, %v4830
  %v4888 = vpack.c.bf16 %v4833, %v4832
  %v4889 = vpack.c.bf16 %v4835, %v4834
  %v4890 = vpack.c.bf16 %v4837, %v4836
  %v4891 = vpack.c.bf16 %v4839, %v4838
  %v4892 = vpack.c.bf16 %v4841, %v4840
  %v4893 = vpack.c.bf16 %v4843, %v4842
  %v4894 = vpack.c.bf16 %v4845, %v4844
  %v4895 = vpack.c.bf16 %v4847, %v4846
  %v4896 = vpack.c.bf16 %v4849, %v4848
  %v4897 = vpack.c.bf16 %v4851, %v4850
  %v4898 = vpack.c.bf16 %v4853, %v4852
  %v4899 = vpack.c.bf16 %v4855, %v4854
  %v4900 = vpack.c.bf16 %v4857, %v4856
  %v4901 = vpack.c.bf16 %v4859, %v4858
  %v4902 = vpack.c.bf16 %v4861, %v4860
  %v4903 = vpack.c.bf16 %v4863, %v4862
  %v4904 = vpack.c.bf16 %v4865, %v4864
  %v4905 = vpack.c.bf16 %v4867, %v4866
  %v4906 = vpack.c.bf16 %v4869, %v4868
  %v4907 = vpack.c.bf16 %v4871, %v4870
  %v4908 = vpack.c.bf16 %v4873, %v4872
  %v4909 = vpack.c.bf16 %v4875, %v4874
  %v4910 = vpack.c.bf16 %v4877, %v4876
  %v4911 = vpack.c.bf16 %v4879, %v4878
  %v4912 = vld [vmem:[%s11 + $0x10] sm:$0xf]
  %v4913 = vld [vmem:[%s11 + $0x14] sm:$0xf]
  %v4916 = vunpack.c.l.b16 %v4912
  %v4917 = vunpack.c.l.b16 %v4913
  %v4918 = vpack.c.b16 %v4917, %v4916
  %v4921 = vsel %vm230, %v4880, 0
  %v4924 = vsel %vm230, %v4881, 0
  %v4927 = vsel %vm230, %v4882, 0
  %v4930 = vsel %vm230, %v4883, 0
  %v4933 = vsel %vm230, %v4884, 0
  %v4936 = vsel %vm230, %v4885, 0
  %v4939 = vsel %vm230, %v4886, 0
  %v4942 = vsel %vm230, %v4887, 0
  %v4945 = vsel %vm230, %v4888, 0
  %v4948 = vsel %vm230, %v4889, 0
  %v4951 = vsel %vm230, %v4890, 0
  %v4954 = vsel %vm230, %v4891, 0
  %v4957 = vsel %vm230, %v4892, 0
  %v4960 = vsel %vm230, %v4893, 0
  %v4963 = vsel %vm230, %v4894, 0
  %v4966 = vsel %vm230, %v4895, 0
  %v4969 = vsel %vm230, %v4896, 0
  %v4972 = vsel %vm230, %v4897, 0
  %v4975 = vsel %vm230, %v4898, 0
  %v4978 = vsel %vm230, %v4899, 0
  %v4981 = vsel %vm230, %v4900, 0
  %v4984 = vsel %vm230, %v4901, 0
  %v4987 = vsel %vm230, %v4902, 0
  %v4990 = vsel %vm230, %v4903, 0
  %v4993 = vsel %vm230, %v4904, 0
  %v4996 = vsel %vm230, %v4905, 0
  %v4999 = vsel %vm230, %v4906, 0
  %v5002 = vsel %vm230, %v4907, 0
  %v5005 = vsel %vm230, %v4908, 0
  %v5008 = vsel %vm230, %v4909, 0
  %v5011 = vsel %vm230, %v4910, 0
  %v5014 = vsel %vm230, %v4911, 0
  %5016 = vmatprep.subr.bf16.mxu0 0
  %5017 = vmatpush1.bf16.msra.mxu0 %v4918
  %5018 = vmatprep.subr.bf16.mxu0 0
  %5019 = vmatpush1.bf16.msra.mxu0 0
  %5020 = vmatprep.subr.bf16.mxu0 0
  %5021 = vmatpush1.bf16.msra.mxu0 0
  %5022 = vmatprep.subr.bf16.mxu0 0
  %5023 = vmatpush1.bf16.msra.mxu0 0
  %5024 = vmatprep.subr.bf16.mxu0 0
  %5025 = vmatpush1.bf16.msra.mxu0 0
  %5026 = vmatprep.subr.bf16.mxu0 0
  %5027 = vmatpush1.bf16.msra.mxu0 0
  %5028 = vmatprep.subr.bf16.mxu0 0
  %5029 = vmatpush1.bf16.msra.mxu0 0
  %5030 = vmatprep.subr.bf16.mxu0 0
  %5031 = vmatpush1.bf16.msra.mxu0 0
  %5032 = vmatprep.subr.bf16.mxu0 0
  %5033 = vmatpush1.bf16.msra.mxu0 0
  %5034 = vmatprep.subr.bf16.mxu0 0
  %5035 = vmatpush1.bf16.msra.mxu0 0
  %5036 = vmatprep.subr.bf16.mxu0 0
  %5037 = vmatpush1.bf16.msra.mxu0 0
  %5038 = vmatprep.subr.bf16.mxu0 0
  %5039 = vmatpush1.bf16.msra.mxu0 0
  %5040 = vmatprep.subr.bf16.mxu0 0
  %5041 = vmatpush1.bf16.msra.mxu0 0
  %5042 = vmatprep.subr.bf16.mxu0 0
  %5043 = vmatpush1.bf16.msra.mxu0 0
  %5044 = vmatprep.subr.bf16.mxu0 0
  %5045 = vmatpush1.bf16.msra.mxu0 0
  %5046 = vmatprep.subr.bf16.mxu0 0
  %5047 = vmatpush1.bf16.msra.mxu0 0
  %5048 = vmatprep.mubr.bf16.mxu0 0
  %5049 = vmatmul.mubr.bf16.gmra.mrb[0].mxu0 %v4921
  %v5050 = vpop.f32.mrb[0].mxu0
  %v5051 = vadd.f32 0.0, %v5050
  %v5052 = vpop.f32.mrb[0].mxu0
  %v5053 = vpop.f32.mrb[0].mxu0
  %v5054 = vadd.f32 0.0, %v5053
  %v5055 = vpop.f32.mrb[0].mxu0
  %5056 = vmatprep.mubr.bf16.mxu0 0
  %5057 = vmatmul.mubr.bf16.gmra.mrb[0].mxu0 %v4924
  %v5058 = vpop.f32.mrb[0].mxu0
  %v5059 = vadd.f32 0.0, %v5058
  %v5060 = vpop.f32.mrb[0].mxu0
  %v5061 = vpop.f32.mrb[0].mxu0
  %v5062 = vadd.f32 0.0, %v5061
  %v5063 = vpop.f32.mrb[0].mxu0
  %5064 = vmatprep.mubr.bf16.mxu0 0
  %5065 = vmatmul.mubr.bf16.gmra.mrb[0].mxu0 %v4927
  %v5066 = vpop.f32.mrb[0].mxu0
  %v5067 = vadd.f32 0.0, %v5066
  %v5068 = vpop.f32.mrb[0].mxu0
  %v5069 = vpop.f32.mrb[0].mxu0
  %v5070 = vadd.f32 0.0, %v5069
  %v5071 = vpop.f32.mrb[0].mxu0
  %5072 = vmatprep.mubr.bf16.mxu0 0
  %5073 = vmatmul.mubr.bf16.gmra.mrb[0].mxu0 %v4930
  %v5074 = vpop.f32.mrb[0].mxu0
  %v5075 = vadd.f32 0.0, %v5074
  %v5076 = vpop.f32.mrb[0].mxu0
  %v5077 = vpop.f32.mrb[0].mxu0
  %v5078 = vadd.f32 0.0, %v5077
  %v5079 = vpop.f32.mrb[0].mxu0
  %5080 = vmatprep.mubr.bf16.mxu0 0
  %5081 = vmatmul.mubr.bf16.gmra.mrb[0].mxu0 %v4933
  %v5082 = vpop.f32.mrb[0].mxu0
  %v5083 = vadd.f32 0.0, %v5082
  %v5084 = vpop.f32.mrb[0].mxu0
  %v5085 = vpop.f32.mrb[0].mxu0
  %v5086 = vadd.f32 0.0, %v5085
  %v5087 = vpop.f32.mrb[0].mxu0
  %5088 = vmatprep.mubr.bf16.mxu0 0
  %5089 = vmatmul.mubr.bf16.gmra.mrb[0].mxu0 %v4936
  %v5090 = vpop.f32.mrb[0].mxu0
  %v5091 = vadd.f32 0.0, %v5090
  %v5092 = vpop.f32.mrb[0].mxu0
  %v5093 = vpop.f32.mrb[0].mxu0
  %v5094 = vadd.f32 0.0, %v5093
  %v5095 = vpop.f32.mrb[0].mxu0
  %5096 = vmatprep.mubr.bf16.mxu0 0
  %5097 = vmatmul.mubr.bf16.gmra.mrb[0].mxu0 %v4939
  %v5098 = vpop.f32.mrb[0].mxu0
  %v5099 = vadd.f32 0.0, %v5098
  %v5100 = vpop.f32.mrb[0].mxu0
  %v5101 = vpop.f32.mrb[0].mxu0
  %v5102 = vadd.f32 0.0, %v5101
  %v5103 = vpop.f32.mrb[0].mxu0
  %5104 = vmatprep.mubr.bf16.mxu0 0
  %5105 = vmatmul.mubr.bf16.gmra.mrb[0].mxu0 %v4942
  %v5106 = vpop.f32.mrb[0].mxu0
  %v5107 = vadd.f32 0.0, %v5106
  %v5108 = vpop.f32.mrb[0].mxu0
  %v5109 = vpop.f32.mrb[0].mxu0
  %v5110 = vadd.f32 0.0, %v5109
  %v5111 = vpop.f32.mrb[0].mxu0
  %5112 = vmatprep.mubr.bf16.mxu0 0
  %5113 = vmatmul.mubr.bf16.gmra.mrb[0].mxu0 %v4945
  %v5114 = vpop.f32.mrb[0].mxu0
  %v5115 = vadd.f32 0.0, %v5114
  %v5116 = vpop.f32.mrb[0].mxu0
  %v5117 = vpop.f32.mrb[0].mxu0
  %v5118 = vadd.f32 0.0, %v5117
  %v5119 = vpop.f32.mrb[0].mxu0
  %5120 = vmatprep.mubr.bf16.mxu0 0
  %5121 = vmatmul.mubr.bf16.gmra.mrb[0].mxu0 %v4948
  %v5122 = vpop.f32.mrb[0].mxu0
  %v5123 = vadd.f32 0.0, %v5122
  %v5124 = vpop.f32.mrb[0].mxu0
  %v5125 = vpop.f32.mrb[0].mxu0
  %v5126 = vadd.f32 0.0, %v5125
  %v5127 = vpop.f32.mrb[0].mxu0
  %5128 = vmatprep.mubr.bf16.mxu0 0
  %5129 = vmatmul.mubr.bf16.gmra.mrb[0].mxu0 %v4951
  %v5130 = vpop.f32.mrb[0].mxu0
  %v5131 = vadd.f32 0.0, %v5130
  %v5132 = vpop.f32.mrb[0].mxu0
  %v5133 = vpop.f32.mrb[0].mxu0
  %v5134 = vadd.f32 0.0, %v5133
  %v5135 = vpop.f32.mrb[0].mxu0
  %5136 = vmatprep.mubr.bf16.mxu0 0
  %5137 = vmatmul.mubr.bf16.gmra.mrb[0].mxu0 %v4954
  %v5138 = vpop.f32.mrb[0].mxu0
  %v5139 = vadd.f32 0.0, %v5138
  %v5140 = vpop.f32.mrb[0].mxu0
  %v5141 = vpop.f32.mrb[0].mxu0
  %v5142 = vadd.f32 0.0, %v5141
  %v5143 = vpop.f32.mrb[0].mxu0
  %5144 = vmatprep.mubr.bf16.mxu0 0
  %5145 = vmatmul.mubr.bf16.gmra.mrb[0].mxu0 %v4957
  %v5146 = vpop.f32.mrb[0].mxu0
  %v5147 = vadd.f32 0.0, %v5146
  %v5148 = vpop.f32.mrb[0].mxu0
  %v5149 = vpop.f32.mrb[0].mxu0
  %v5150 = vadd.f32 0.0, %v5149
  %v5151 = vpop.f32.mrb[0].mxu0
  %5152 = vmatprep.mubr.bf16.mxu0 0
  %5153 = vmatmul.mubr.bf16.gmra.mrb[0].mxu0 %v4960
  %v5154 = vpop.f32.mrb[0].mxu0
  %v5155 = vadd.f32 0.0, %v5154
  %v5156 = vpop.f32.mrb[0].mxu0
  %v5157 = vpop.f32.mrb[0].mxu0
  %v5158 = vadd.f32 0.0, %v5157
  %v5159 = vpop.f32.mrb[0].mxu0
  %5160 = vmatprep.mubr.bf16.mxu0 0
  %5161 = vmatmul.mubr.bf16.gmra.mrb[0].mxu0 %v4963
  %v5162 = vpop.f32.mrb[0].mxu0
  %v5163 = vadd.f32 0.0, %v5162
  %v5164 = vpop.f32.mrb[0].mxu0
  %v5165 = vpop.f32.mrb[0].mxu0
  %v5166 = vadd.f32 0.0, %v5165
  %v5167 = vpop.f32.mrb[0].mxu0
  %5168 = vmatprep.mubr.bf16.mxu0 0
  %5169 = vmatmul.mubr.bf16.gmra.mrb[0].mxu0 %v4966
  %v5170 = vpop.f32.mrb[0].mxu0
  %v5171 = vadd.f32 0.0, %v5170
  %v5172 = vpop.f32.mrb[0].mxu0
  %v5173 = vpop.f32.mrb[0].mxu0
  %v5174 = vadd.f32 0.0, %v5173
  %v5175 = vpop.f32.mrb[0].mxu0
  %5176 = vmatprep.mubr.bf16.mxu0 0
  %5177 = vmatmul.mubr.bf16.gmra.mrb[0].mxu0 %v4969
  %v5178 = vpop.f32.mrb[0].mxu0
  %v5179 = vadd.f32 0.0, %v5178
  %v5180 = vpop.f32.mrb[0].mxu0
  %v5181 = vpop.f32.mrb[0].mxu0
  %v5182 = vadd.f32 0.0, %v5181
  %v5183 = vpop.f32.mrb[0].mxu0
  %5184 = vmatprep.mubr.bf16.mxu0 0
  %5185 = vmatmul.mubr.bf16.gmra.mrb[0].mxu0 %v4972
  %v5186 = vpop.f32.mrb[0].mxu0
  %v5187 = vadd.f32 0.0, %v5186
  %v5188 = vpop.f32.mrb[0].mxu0
  %v5189 = vpop.f32.mrb[0].mxu0
  %v5190 = vadd.f32 0.0, %v5189
  %v5191 = vpop.f32.mrb[0].mxu0
  %5192 = vmatprep.mubr.bf16.mxu0 0
  %5193 = vmatmul.mubr.bf16.gmra.mrb[0].mxu0 %v4975
  %v5194 = vpop.f32.mrb[0].mxu0
  %v5195 = vadd.f32 0.0, %v5194
  %v5196 = vpop.f32.mrb[0].mxu0
  %v5197 = vpop.f32.mrb[0].mxu0
  %v5198 = vadd.f32 0.0, %v5197
  %v5199 = vpop.f32.mrb[0].mxu0
  %5200 = vmatprep.mubr.bf16.mxu0 0
  %5201 = vmatmul.mubr.bf16.gmra.mrb[0].mxu0 %v4978
  %v5202 = vpop.f32.mrb[0].mxu0
  %v5203 = vadd.f32 0.0, %v5202
  %v5204 = vpop.f32.mrb[0].mxu0
  %v5205 = vpop.f32.mrb[0].mxu0
  %v5206 = vadd.f32 0.0, %v5205
  %v5207 = vpop.f32.mrb[0].mxu0
  %5208 = vmatprep.mubr.bf16.mxu0 0
  %5209 = vmatmul.mubr.bf16.gmra.mrb[0].mxu0 %v4981
  %v5210 = vpop.f32.mrb[0].mxu0
  %v5211 = vadd.f32 0.0, %v5210
  %v5212 = vpop.f32.mrb[0].mxu0
  %v5213 = vpop.f32.mrb[0].mxu0
  %v5214 = vadd.f32 0.0, %v5213
  %v5215 = vpop.f32.mrb[0].mxu0
  %5216 = vmatprep.mubr.bf16.mxu0 0
  %5217 = vmatmul.mubr.bf16.gmra.mrb[0].mxu0 %v4984
  %v5218 = vpop.f32.mrb[0].mxu0
  %v5219 = vadd.f32 0.0, %v5218
  %v5220 = vpop.f32.mrb[0].mxu0
  %v5221 = vpop.f32.mrb[0].mxu0
  %v5222 = vadd.f32 0.0, %v5221
  %v5223 = vpop.f32.mrb[0].mxu0
  %5224 = vmatprep.mubr.bf16.mxu0 0
  %5225 = vmatmul.mubr.bf16.gmra.mrb[0].mxu0 %v4987
  %v5226 = vpop.f32.mrb[0].mxu0
  %v5227 = vadd.f32 0.0, %v5226
  %v5228 = vpop.f32.mrb[0].mxu0
  %v5229 = vpop.f32.mrb[0].mxu0
  %v5230 = vadd.f32 0.0, %v5229
  %v5231 = vpop.f32.mrb[0].mxu0
  %5232 = vmatprep.mubr.bf16.mxu0 0
  %5233 = vmatmul.mubr.bf16.gmra.mrb[0].mxu0 %v4990
  %v5234 = vpop.f32.mrb[0].mxu0
  %v5235 = vadd.f32 0.0, %v5234
  %v5236 = vpop.f32.mrb[0].mxu0
  %v5237 = vpop.f32.mrb[0].mxu0
  %v5238 = vadd.f32 0.0, %v5237
  %v5239 = vpop.f32.mrb[0].mxu0
  %5240 = vmatprep.mubr.bf16.mxu0 0
  %5241 = vmatmul.mubr.bf16.gmra.mrb[0].mxu0 %v4993
  %v5242 = vpop.f32.mrb[0].mxu0
  %v5243 = vadd.f32 0.0, %v5242
  %v5244 = vpop.f32.mrb[0].mxu0
  %v5245 = vpop.f32.mrb[0].mxu0
  %v5246 = vadd.f32 0.0, %v5245
  %v5247 = vpop.f32.mrb[0].mxu0
  %5248 = vmatprep.mubr.bf16.mxu0 0
  %5249 = vmatmul.mubr.bf16.gmra.mrb[0].mxu0 %v4996
  %v5250 = vpop.f32.mrb[0].mxu0
  %v5251 = vadd.f32 0.0, %v5250
  %v5252 = vpop.f32.mrb[0].mxu0
  %v5253 = vpop.f32.mrb[0].mxu0
  %v5254 = vadd.f32 0.0, %v5253
  %v5255 = vpop.f32.mrb[0].mxu0
  %5256 = vmatprep.mubr.bf16.mxu0 0
  %5257 = vmatmul.mubr.bf16.gmra.mrb[0].mxu0 %v4999
  %v5258 = vpop.f32.mrb[0].mxu0
  %v5259 = vadd.f32 0.0, %v5258
  %v5260 = vpop.f32.mrb[0].mxu0
  %v5261 = vpop.f32.mrb[0].mxu0
  %v5262 = vadd.f32 0.0, %v5261
  %v5263 = vpop.f32.mrb[0].mxu0
  %5264 = vmatprep.mubr.bf16.mxu0 0
  %5265 = vmatmul.mubr.bf16.gmra.mrb[0].mxu0 %v5002
  %v5266 = vpop.f32.mrb[0].mxu0
  %v5267 = vadd.f32 0.0, %v5266
  %v5268 = vpop.f32.mrb[0].mxu0
  %v5269 = vpop.f32.mrb[0].mxu0
  %v5270 = vadd.f32 0.0, %v5269
  %v5271 = vpop.f32.mrb[0].mxu0
  %5272 = vmatprep.mubr.bf16.mxu0 0
  %5273 = vmatmul.mubr.bf16.gmra.mrb[0].mxu0 %v5005
  %v5274 = vpop.f32.mrb[0].mxu0
  %v5275 = vadd.f32 0.0, %v5274
  %v5276 = vpop.f32.mrb[0].mxu0
  %v5277 = vpop.f32.mrb[0].mxu0
  %v5278 = vadd.f32 0.0, %v5277
  %v5279 = vpop.f32.mrb[0].mxu0
  %5280 = vmatprep.mubr.bf16.mxu0 0
  %5281 = vmatmul.mubr.bf16.gmra.mrb[0].mxu0 %v5008
  %v5282 = vpop.f32.mrb[0].mxu0
  %v5283 = vadd.f32 0.0, %v5282
  %v5284 = vpop.f32.mrb[0].mxu0
  %v5285 = vpop.f32.mrb[0].mxu0
  %v5286 = vadd.f32 0.0, %v5285
  %v5287 = vpop.f32.mrb[0].mxu0
  %5288 = vmatprep.mubr.bf16.mxu0 0
  %5289 = vmatmul.mubr.bf16.gmra.mrb[0].mxu0 %v5011
  %v5290 = vpop.f32.mrb[0].mxu0
  %v5291 = vadd.f32 0.0, %v5290
  %v5292 = vpop.f32.mrb[0].mxu0
  %v5293 = vpop.f32.mrb[0].mxu0
  %v5294 = vadd.f32 0.0, %v5293
  %v5295 = vpop.f32.mrb[0].mxu0
  %5296 = vmatprep.mubr.bf16.mxu0 0
  %5297 = vmatmul.mubr.bf16.gmra.mrb[0].mxu0 %v5014
  %v5298 = vpop.f32.mrb[0].mxu0
  %v5299 = vadd.f32 0.0, %v5298
  %v5300 = vpop.f32.mrb[0].mxu0
  %v5301 = vpop.f32.mrb[0].mxu0
  %v5302 = vadd.f32 0.0, %v5301
  %v5303 = vpop.f32.mrb[0].mxu0
  %5304 = vdwg.mxu0
  %v5305 = vadd.f32 %v4562, %v5051
  %v5306 = vadd.f32 %v4565, %v5054
  %v5307 = vadd.f32 %v4570, %v5059
  %v5308 = vadd.f32 %v4573, %v5062
  %v5309 = vadd.f32 %v4578, %v5067
  %v5310 = vadd.f32 %v4581, %v5070
  %v5311 = vadd.f32 %v4586, %v5075
  %v5312 = vadd.f32 %v4589, %v5078
  %v5313 = vadd.f32 %v4594, %v5083
  %v5314 = vadd.f32 %v4597, %v5086
  %v5315 = vadd.f32 %v4602, %v5091
  %v5316 = vadd.f32 %v4605, %v5094
  %v5317 = vadd.f32 %v4610, %v5099
  %v5318 = vadd.f32 %v4613, %v5102
  %v5319 = vadd.f32 %v4618, %v5107
  %v5320 = vadd.f32 %v4621, %v5110
  %v5321 = vadd.f32 %v4626, %v5115
  %v5322 = vadd.f32 %v4629, %v5118
  %v5323 = vadd.f32 %v4634, %v5123
  %v5324 = vadd.f32 %v4637, %v5126
  %v5325 = vadd.f32 %v4642, %v5131
  %v5326 = vadd.f32 %v4645, %v5134
  %v5327 = vadd.f32 %v4650, %v5139
  %v5328 = vadd.f32 %v4653, %v5142
  %v5329 = vadd.f32 %v4658, %v5147
  %v5330 = vadd.f32 %v4661, %v5150
  %v5331 = vadd.f32 %v4666, %v5155
  %v5332 = vadd.f32 %v4669, %v5158
  %v5333 = vadd.f32 %v4674, %v5163
  %v5334 = vadd.f32 %v4677, %v5166
  %v5335 = vadd.f32 %v4682, %v5171
  %v5336 = vadd.f32 %v4685, %v5174
  %v5337 = vadd.f32 %v4690, %v5179
  %v5338 = vadd.f32 %v4693, %v5182
  %v5339 = vadd.f32 %v4698, %v5187
  %v5340 = vadd.f32 %v4701, %v5190
  %v5341 = vadd.f32 %v4706, %v5195
  %v5342 = vadd.f32 %v4709, %v5198
  %v5343 = vadd.f32 %v4714, %v5203
  %v5344 = vadd.f32 %v4717, %v5206
  %v5345 = vadd.f32 %v4722, %v5211
  %v5346 = vadd.f32 %v4725, %v5214
  %v5347 = vadd.f32 %v4730, %v5219
  %v5348 = vadd.f32 %v4733, %v5222
  %v5349 = vadd.f32 %v4738, %v5227
  %v5350 = vadd.f32 %v4741, %v5230
  %v5351 = vadd.f32 %v4746, %v5235
  %v5352 = vadd.f32 %v4749, %v5238
  %v5353 = vadd.f32 %v4754, %v5243
  %v5354 = vadd.f32 %v4757, %v5246
  %v5355 = vadd.f32 %v4762, %v5251
  %v5356 = vadd.f32 %v4765, %v5254
  %v5357 = vadd.f32 %v4770, %v5259
  %v5358 = vadd.f32 %v4773, %v5262
  %v5359 = vadd.f32 %v4778, %v5267
  %v5360 = vadd.f32 %v4781, %v5270
  %v5361 = vadd.f32 %v4786, %v5275
  %v5362 = vadd.f32 %v4789, %v5278
  %v5363 = vadd.f32 %v4794, %v5283
  %v5364 = vadd.f32 %v4797, %v5286
  %v5365 = vadd.f32 %v4802, %v5291
  %v5366 = vadd.f32 %v4805, %v5294
  %v5367 = vadd.f32 %v4810, %v5299
  %v5368 = vadd.f32 %v4813, %v5302
  %v5369 = vld [vmem:[%s3773] sm:$0xff]
  %v5370 = vld [vmem:[%s3773 + $0x8] sm:$0xff]
  %v5371 = vld [vmem:[%s3773 + $0x18] sm:$0xff]
  %v5372 = vld [vmem:[%s3773 + $0x20] sm:$0xff]
  %v5373 = vld [vmem:[%s3773 + $0x30] sm:$0xff]
  %v5374 = vld [vmem:[%s3773 + $0x38] sm:$0xff]
  %v5375 = vld [vmem:[%s3773 + $0x48] sm:$0xff]
  %v5376 = vld [vmem:[%s3773 + $0x50] sm:$0xff]
  %v5377 = vld [vmem:[%s3773 + $0x60] sm:$0xff]
  %v5378 = vld [vmem:[%s3773 + $0x68] sm:$0xff]
  %v5379 = vld [vmem:[%s3773 + $0x78] sm:$0xff]
  %v5380 = vld [vmem:[%s3773 + $0x80] sm:$0xff]
  %v5381 = vld [vmem:[%s3773 + $0x90] sm:$0xff]
  %v5382 = vld [vmem:[%s3773 + $0x98] sm:$0xff]
  %v5383 = vld [vmem:[%s3773 + $0xa8] sm:$0xff]
  %v5384 = vld [vmem:[%s3773 + $0xb0] sm:$0xff]
  %v5385 = vld [vmem:[%s3773 + $0xc0] sm:$0xff]
  %v5386 = vld [vmem:[%s3773 + $0xc8] sm:$0xff]
  %v5387 = vld [vmem:[%s3773 + $0xd8] sm:$0xff]
  %v5388 = vld [vmem:[%s3773 + $0xe0] sm:$0xff]
  %v5389 = vld [vmem:[%s3773 + $0xf0] sm:$0xff]
  %v5390 = vld [vmem:[%s3773 + $0xf8] sm:$0xff]
  %v5391 = vld [vmem:[%s3773 + $0x108] sm:$0xff]
  %v5392 = vld [vmem:[%s3773 + $0x110] sm:$0xff]
  %v5393 = vld [vmem:[%s3773 + $0x120] sm:$0xff]
  %v5394 = vld [vmem:[%s3773 + $0x128] sm:$0xff]
  %v5395 = vld [vmem:[%s3773 + $0x138] sm:$0xff]
  %v5396 = vld [vmem:[%s3773 + $0x140] sm:$0xff]
  %v5397 = vld [vmem:[%s3773 + $0x150] sm:$0xff]
  %v5398 = vld [vmem:[%s3773 + $0x158] sm:$0xff]
  %v5399 = vld [vmem:[%s3773 + $0x168] sm:$0xff]
  %v5400 = vld [vmem:[%s3773 + $0x170] sm:$0xff]
  %v5401 = vld [vmem:[%s3773 + $0x1b0] sm:$0xff]
  %v5402 = vld [vmem:[%s3773 + $0x1b8] sm:$0xff]
  %v5403 = vld [vmem:[%s3773 + $0x1c8] sm:$0xff]
  %v5404 = vld [vmem:[%s3773 + $0x1d0] sm:$0xff]
  %v5405 = vld [vmem:[%s3773 + $0x1e0] sm:$0xff]
  %v5406 = vld [vmem:[%s3773 + $0x1e8] sm:$0xff]
  %v5407 = vld [vmem:[%s3773 + $0x1f8] sm:$0xff]
  %v5408 = vld [vmem:[%s3773 + $0x200] sm:$0xff]
  %v5409 = vld [vmem:[%s3773 + $0x210] sm:$0xff]
  %v5410 = vld [vmem:[%s3773 + $0x218] sm:$0xff]
  %v5411 = vld [vmem:[%s3773 + $0x228] sm:$0xff]
  %v5412 = vld [vmem:[%s3773 + $0x230] sm:$0xff]
  %v5413 = vld [vmem:[%s3773 + $0x240] sm:$0xff]
  %v5414 = vld [vmem:[%s3773 + $0x248] sm:$0xff]
  %v5415 = vld [vmem:[%s3773 + $0x258] sm:$0xff]
  %v5416 = vld [vmem:[%s3773 + $0x260] sm:$0xff]
  %v5417 = vld [vmem:[%s3773 + $0x270] sm:$0xff]
  %v5418 = vld [vmem:[%s3773 + $0x278] sm:$0xff]
  %v5419 = vld [vmem:[%s3773 + $0x288] sm:$0xff]
  %v5420 = vld [vmem:[%s3773 + $0x290] sm:$0xff]
  %v5421 = vld [vmem:[%s3773 + $0x2a0] sm:$0xff]
  %v5422 = vld [vmem:[%s3773 + $0x2a8] sm:$0xff]
  %v5423 = vld [vmem:[%s3773 + $0x2b8] sm:$0xff]
  %v5424 = vld [vmem:[%s3773 + $0x2c0] sm:$0xff]
  %v5425 = vld [vmem:[%s3773 + $0x2d0] sm:$0xff]
  %v5426 = vld [vmem:[%s3773 + $0x2d8] sm:$0xff]
  %v5427 = vld [vmem:[%s3773 + $0x2e8] sm:$0xff]
  %v5428 = vld [vmem:[%s3773 + $0x2f0] sm:$0xff]
  %v5429 = vld [vmem:[%s3773 + $0x300] sm:$0xff]
  %v5430 = vld [vmem:[%s3773 + $0x308] sm:$0xff]
  %v5431 = vld [vmem:[%s3773 + $0x318] sm:$0xff]
  %v5432 = vld [vmem:[%s3773 + $0x320] sm:$0xff]
  %v5433 = vpack.c.bf16 %v5370, %v5369
  %v5434 = vpack.c.bf16 %v5372, %v5371
  %v5435 = vpack.c.bf16 %v5374, %v5373
  %v5436 = vpack.c.bf16 %v5376, %v5375
  %v5437 = vpack.c.bf16 %v5378, %v5377
  %v5438 = vpack.c.bf16 %v5380, %v5379
  %v5439 = vpack.c.bf16 %v5382, %v5381
  %v5440 = vpack.c.bf16 %v5384, %v5383
  %v5441 = vpack.c.bf16 %v5386, %v5385
  %v5442 = vpack.c.bf16 %v5388, %v5387
  %v5443 = vpack.c.bf16 %v5390, %v5389
  %v5444 = vpack.c.bf16 %v5392, %v5391
  %v5445 = vpack.c.bf16 %v5394, %v5393
  %v5446 = vpack.c.bf16 %v5396, %v5395
  %v5447 = vpack.c.bf16 %v5398, %v5397
  %v5448 = vpack.c.bf16 %v5400, %v5399
  %v5449 = vpack.c.bf16 %v5402, %v5401
  %v5450 = vpack.c.bf16 %v5404, %v5403
  %v5451 = vpack.c.bf16 %v5406, %v5405
  %v5452 = vpack.c.bf16 %v5408, %v5407
  %v5453 = vpack.c.bf16 %v5410, %v5409
  %v5454 = vpack.c.bf16 %v5412, %v5411
  %v5455 = vpack.c.bf16 %v5414, %v5413
  %v5456 = vpack.c.bf16 %v5416, %v5415
  %v5457 = vpack.c.bf16 %v5418, %v5417
  %v5458 = vpack.c.bf16 %v5420, %v5419
  %v5459 = vpack.c.bf16 %v5422, %v5421
  %v5460 = vpack.c.bf16 %v5424, %v5423
  %v5461 = vpack.c.bf16 %v5426, %v5425
  %v5462 = vpack.c.bf16 %v5428, %v5427
  %v5463 = vpack.c.bf16 %v5430, %v5429
  %v5464 = vpack.c.bf16 %v5432, %v5431
  %v5465 = vld [vmem:[%s11 + $0x18] sm:$0xf]
  %v5466 = vld [vmem:[%s11 + $0x1c] sm:$0xf]
  %v5469 = vunpack.c.l.b16 %v5465
  %v5470 = vunpack.c.l.b16 %v5466
  %v5471 = vpack.c.b16 %v5470, %v5469
  %v5474 = vsel %vm230, %v5433, 0
  %v5477 = vsel %vm230, %v5434, 0
  %v5480 = vsel %vm230, %v5435, 0
  %v5483 = vsel %vm230, %v5436, 0
  %v5486 = vsel %vm230, %v5437, 0
  %v5489 = vsel %vm230, %v5438, 0
  %v5492 = vsel %vm230, %v5439, 0
  %v5495 = vsel %vm230, %v5440, 0
  %v5498 = vsel %vm230, %v5441, 0
  %v5501 = vsel %vm230, %v5442, 0
  %v5504 = vsel %vm230, %v5443, 0
  %v5507 = vsel %vm230, %v5444, 0
  %v5510 = vsel %vm230, %v5445, 0
  %v5513 = vsel %vm230, %v5446, 0
  %v5516 = vsel %vm230, %v5447, 0
  %v5519 = vsel %vm230, %v5448, 0
  %v5522 = vsel %vm230, %v5449, 0
  %v5525 = vsel %vm230, %v5450, 0
  %v5528 = vsel %vm230, %v5451, 0
  %v5531 = vsel %vm230, %v5452, 0
  %v5534 = vsel %vm230, %v5453, 0
  %v5537 = vsel %vm230, %v5454, 0
  %v5540 = vsel %vm230, %v5455, 0
  %v5543 = vsel %vm230, %v5456, 0
  %v5546 = vsel %vm230, %v5457, 0
  %v5549 = vsel %vm230, %v5458, 0
  %v5552 = vsel %vm230, %v5459, 0
  %v5555 = vsel %vm230, %v5460, 0
  %v5558 = vsel %vm230, %v5461, 0
  %v5561 = vsel %vm230, %v5462, 0
  %v5564 = vsel %vm230, %v5463, 0
  %v5567 = vsel %vm230, %v5464, 0
  %5569 = vmatprep.subr.bf16.mxu0 0
  %5570 = vmatpush1.bf16.msra.mxu0 %v5471
  %5571 = vmatprep.subr.bf16.mxu0 0
  %5572 = vmatpush1.bf16.msra.mxu0 0
  %5573 = vmatprep.subr.bf16.mxu0 0
  %5574 = vmatpush1.bf16.msra.mxu0 0
  %5575 = vmatprep.subr.bf16.mxu0 0
  %5576 = vmatpush1.bf16.msra.mxu0 0
  %5577 = vmatprep.subr.bf16.mxu0 0
  %5578 = vmatpush1.bf16.msra.mxu0 0
  %5579 = vmatprep.subr.bf16.mxu0 0
  %5580 = vmatpush1.bf16.msra.mxu0 0
  %5581 = vmatprep.subr.bf16.mxu0 0
  %5582 = vmatpush1.bf16.msra.mxu0 0
  %5583 = vmatprep.subr.bf16.mxu0 0
  %5584 = vmatpush1.bf16.msra.mxu0 0
  %5585 = vmatprep.subr.bf16.mxu0 0
  %5586 = vmatpush1.bf16.msra.mxu0 0
  %5587 = vmatprep.subr.bf16.mxu0 0
  %5588 = vmatpush1.bf16.msra.mxu0 0
  %5589 = vmatprep.subr.bf16.mxu0 0
  %5590 = vmatpush1.bf16.msra.mxu0 0
  %5591 = vmatprep.subr.bf16.mxu0 0
  %5592 = vmatpush1.bf16.msra.mxu0 0
  %5593 = vmatprep.subr.bf16.mxu0 0
  %5594 = vmatpush1.bf16.msra.mxu0 0
  %5595 = vmatprep.subr.bf16.mxu0 0
  %5596 = vmatpush1.bf16.msra.mxu0 0
  %5597 = vmatprep.subr.bf16.mxu0 0
  %5598 = vmatpush1.bf16.msra.mxu0 0
  %5599 = vmatprep.subr.bf16.mxu0 0
  %5600 = vmatpush1.bf16.msra.mxu0 0
  %5601 = vmatprep.mubr.bf16.mxu0 0
  %5602 = vmatmul.mubr.bf16.gmra.mrb[0].mxu0 %v5474
  %v5603 = vpop.f32.mrb[0].mxu0
  %v5604 = vadd.f32 0.0, %v5603
  %v5605 = vpop.f32.mrb[0].mxu0
  %v5606 = vpop.f32.mrb[0].mxu0
  %v5607 = vadd.f32 0.0, %v5606
  %v5608 = vpop.f32.mrb[0].mxu0
  %5609 = vmatprep.mubr.bf16.mxu0 0
  %5610 = vmatmul.mubr.bf16.gmra.mrb[0].mxu0 %v5477
  %v5611 = vpop.f32.mrb[0].mxu0
  %v5612 = vadd.f32 0.0, %v5611
  %v5613 = vpop.f32.mrb[0].mxu0
  %v5614 = vpop.f32.mrb[0].mxu0
  %v5615 = vadd.f32 0.0, %v5614
  %v5616 = vpop.f32.mrb[0].mxu0
  %5617 = vmatprep.mubr.bf16.mxu0 0
  %5618 = vmatmul.mubr.bf16.gmra.mrb[0].mxu0 %v5480
  %v5619 = vpop.f32.mrb[0].mxu0
  %v5620 = vadd.f32 0.0, %v5619
  %v5621 = vpop.f32.mrb[0].mxu0
  %v5622 = vpop.f32.mrb[0].mxu0
  %v5623 = vadd.f32 0.0, %v5622
  %v5624 = vpop.f32.mrb[0].mxu0
  %5625 = vmatprep.mubr.bf16.mxu0 0
  %5626 = vmatmul.mubr.bf16.gmra.mrb[0].mxu0 %v5483
  %v5627 = vpop.f32.mrb[0].mxu0
  %v5628 = vadd.f32 0.0, %v5627
  %v5629 = vpop.f32.mrb[0].mxu0
  %v5630 = vpop.f32.mrb[0].mxu0
  %v5631 = vadd.f32 0.0, %v5630
  %v5632 = vpop.f32.mrb[0].mxu0
  %5633 = vmatprep.mubr.bf16.mxu0 0
  %5634 = vmatmul.mubr.bf16.gmra.mrb[0].mxu0 %v5486
  %v5635 = vpop.f32.mrb[0].mxu0
  %v5636 = vadd.f32 0.0, %v5635
  %v5637 = vpop.f32.mrb[0].mxu0
  %v5638 = vpop.f32.mrb[0].mxu0
  %v5639 = vadd.f32 0.0, %v5638
  %v5640 = vpop.f32.mrb[0].mxu0
  %5641 = vmatprep.mubr.bf16.mxu0 0
  %5642 = vmatmul.mubr.bf16.gmra.mrb[0].mxu0 %v5489
  %v5643 = vpop.f32.mrb[0].mxu0
  %v5644 = vadd.f32 0.0, %v5643
  %v5645 = vpop.f32.mrb[0].mxu0
  %v5646 = vpop.f32.mrb[0].mxu0
  %v5647 = vadd.f32 0.0, %v5646
  %v5648 = vpop.f32.mrb[0].mxu0
  %5649 = vmatprep.mubr.bf16.mxu0 0
  %5650 = vmatmul.mubr.bf16.gmra.mrb[0].mxu0 %v5492
  %v5651 = vpop.f32.mrb[0].mxu0
  %v5652 = vadd.f32 0.0, %v5651
  %v5653 = vpop.f32.mrb[0].mxu0
  %v5654 = vpop.f32.mrb[0].mxu0
  %v5655 = vadd.f32 0.0, %v5654
  %v5656 = vpop.f32.mrb[0].mxu0
  %5657 = vmatprep.mubr.bf16.mxu0 0
  %5658 = vmatmul.mubr.bf16.gmra.mrb[0].mxu0 %v5495
  %v5659 = vpop.f32.mrb[0].mxu0
  %v5660 = vadd.f32 0.0, %v5659
  %v5661 = vpop.f32.mrb[0].mxu0
  %v5662 = vpop.f32.mrb[0].mxu0
  %v5663 = vadd.f32 0.0, %v5662
  %v5664 = vpop.f32.mrb[0].mxu0
  %5665 = vmatprep.mubr.bf16.mxu0 0
  %5666 = vmatmul.mubr.bf16.gmra.mrb[0].mxu0 %v5498
  %v5667 = vpop.f32.mrb[0].mxu0
  %v5668 = vadd.f32 0.0, %v5667
  %v5669 = vpop.f32.mrb[0].mxu0
  %v5670 = vpop.f32.mrb[0].mxu0
  %v5671 = vadd.f32 0.0, %v5670
  %v5672 = vpop.f32.mrb[0].mxu0
  %5673 = vmatprep.mubr.bf16.mxu0 0
  %5674 = vmatmul.mubr.bf16.gmra.mrb[0].mxu0 %v5501
  %v5675 = vpop.f32.mrb[0].mxu0
  %v5676 = vadd.f32 0.0, %v5675
  %v5677 = vpop.f32.mrb[0].mxu0
  %v5678 = vpop.f32.mrb[0].mxu0
  %v5679 = vadd.f32 0.0, %v5678
  %v5680 = vpop.f32.mrb[0].mxu0
  %5681 = vmatprep.mubr.bf16.mxu0 0
  %5682 = vmatmul.mubr.bf16.gmra.mrb[0].mxu0 %v5504
  %v5683 = vpop.f32.mrb[0].mxu0
  %v5684 = vadd.f32 0.0, %v5683
  %v5685 = vpop.f32.mrb[0].mxu0
  %v5686 = vpop.f32.mrb[0].mxu0
  %v5687 = vadd.f32 0.0, %v5686
  %v5688 = vpop.f32.mrb[0].mxu0
  %5689 = vmatprep.mubr.bf16.mxu0 0
  %5690 = vmatmul.mubr.bf16.gmra.mrb[0].mxu0 %v5507
  %v5691 = vpop.f32.mrb[0].mxu0
  %v5692 = vadd.f32 0.0, %v5691
  %v5693 = vpop.f32.mrb[0].mxu0
  %v5694 = vpop.f32.mrb[0].mxu0
  %v5695 = vadd.f32 0.0, %v5694
  %v5696 = vpop.f32.mrb[0].mxu0
  %5697 = vmatprep.mubr.bf16.mxu0 0
  %5698 = vmatmul.mubr.bf16.gmra.mrb[0].mxu0 %v5510
  %v5699 = vpop.f32.mrb[0].mxu0
  %v5700 = vadd.f32 0.0, %v5699
  %v5701 = vpop.f32.mrb[0].mxu0
  %v5702 = vpop.f32.mrb[0].mxu0
  %v5703 = vadd.f32 0.0, %v5702
  %v5704 = vpop.f32.mrb[0].mxu0
  %5705 = vmatprep.mubr.bf16.mxu0 0
  %5706 = vmatmul.mubr.bf16.gmra.mrb[0].mxu0 %v5513
  %v5707 = vpop.f32.mrb[0].mxu0
  %v5708 = vadd.f32 0.0, %v5707
  %v5709 = vpop.f32.mrb[0].mxu0
  %v5710 = vpop.f32.mrb[0].mxu0
  %v5711 = vadd.f32 0.0, %v5710
  %v5712 = vpop.f32.mrb[0].mxu0
  %5713 = vmatprep.mubr.bf16.mxu0 0
  %5714 = vmatmul.mubr.bf16.gmra.mrb[0].mxu0 %v5516
  %v5715 = vpop.f32.mrb[0].mxu0
  %v5716 = vadd.f32 0.0, %v5715
  %v5717 = vpop.f32.mrb[0].mxu0
  %v5718 = vpop.f32.mrb[0].mxu0
  %v5719 = vadd.f32 0.0, %v5718
  %v5720 = vpop.f32.mrb[0].mxu0
  %5721 = vmatprep.mubr.bf16.mxu0 0
  %5722 = vmatmul.mubr.bf16.gmra.mrb[0].mxu0 %v5519
  %v5723 = vpop.f32.mrb[0].mxu0
  %v5724 = vadd.f32 0.0, %v5723
  %v5725 = vpop.f32.mrb[0].mxu0
  %v5726 = vpop.f32.mrb[0].mxu0
  %v5727 = vadd.f32 0.0, %v5726
  %v5728 = vpop.f32.mrb[0].mxu0
  %5729 = vmatprep.mubr.bf16.mxu0 0
  %5730 = vmatmul.mubr.bf16.gmra.mrb[0].mxu0 %v5522
  %v5731 = vpop.f32.mrb[0].mxu0
  %v5732 = vadd.f32 0.0, %v5731
  %v5733 = vpop.f32.mrb[0].mxu0
  %v5734 = vpop.f32.mrb[0].mxu0
  %v5735 = vadd.f32 0.0, %v5734
  %v5736 = vpop.f32.mrb[0].mxu0
  %5737 = vmatprep.mubr.bf16.mxu0 0
  %5738 = vmatmul.mubr.bf16.gmra.mrb[0].mxu0 %v5525
  %v5739 = vpop.f32.mrb[0].mxu0
  %v5740 = vadd.f32 0.0, %v5739
  %v5741 = vpop.f32.mrb[0].mxu0
  %v5742 = vpop.f32.mrb[0].mxu0
  %v5743 = vadd.f32 0.0, %v5742
  %v5744 = vpop.f32.mrb[0].mxu0
  %5745 = vmatprep.mubr.bf16.mxu0 0
  %5746 = vmatmul.mubr.bf16.gmra.mrb[0].mxu0 %v5528
  %v5747 = vpop.f32.mrb[0].mxu0
  %v5748 = vadd.f32 0.0, %v5747
  %v5749 = vpop.f32.mrb[0].mxu0
  %v5750 = vpop.f32.mrb[0].mxu0
  %v5751 = vadd.f32 0.0, %v5750
  %v5752 = vpop.f32.mrb[0].mxu0
  %5753 = vmatprep.mubr.bf16.mxu0 0
  %5754 = vmatmul.mubr.bf16.gmra.mrb[0].mxu0 %v5531
  %v5755 = vpop.f32.mrb[0].mxu0
  %v5756 = vadd.f32 0.0, %v5755
  %v5757 = vpop.f32.mrb[0].mxu0
  %v5758 = vpop.f32.mrb[0].mxu0
  %v5759 = vadd.f32 0.0, %v5758
  %v5760 = vpop.f32.mrb[0].mxu0
  %5761 = vmatprep.mubr.bf16.mxu0 0
  %5762 = vmatmul.mubr.bf16.gmra.mrb[0].mxu0 %v5534
  %v5763 = vpop.f32.mrb[0].mxu0
  %v5764 = vadd.f32 0.0, %v5763
  %v5765 = vpop.f32.mrb[0].mxu0
  %v5766 = vpop.f32.mrb[0].mxu0
  %v5767 = vadd.f32 0.0, %v5766
  %v5768 = vpop.f32.mrb[0].mxu0
  %5769 = vmatprep.mubr.bf16.mxu0 0
  %5770 = vmatmul.mubr.bf16.gmra.mrb[0].mxu0 %v5537
  %v5771 = vpop.f32.mrb[0].mxu0
  %v5772 = vadd.f32 0.0, %v5771
  %v5773 = vpop.f32.mrb[0].mxu0
  %v5774 = vpop.f32.mrb[0].mxu0
  %v5775 = vadd.f32 0.0, %v5774
  %v5776 = vpop.f32.mrb[0].mxu0
  %5777 = vmatprep.mubr.bf16.mxu0 0
  %5778 = vmatmul.mubr.bf16.gmra.mrb[0].mxu0 %v5540
  %v5779 = vpop.f32.mrb[0].mxu0
  %v5780 = vadd.f32 0.0, %v5779
  %v5781 = vpop.f32.mrb[0].mxu0
  %v5782 = vpop.f32.mrb[0].mxu0
  %v5783 = vadd.f32 0.0, %v5782
  %v5784 = vpop.f32.mrb[0].mxu0
  %5785 = vmatprep.mubr.bf16.mxu0 0
  %5786 = vmatmul.mubr.bf16.gmra.mrb[0].mxu0 %v5543
  %v5787 = vpop.f32.mrb[0].mxu0
  %v5788 = vadd.f32 0.0, %v5787
  %v5789 = vpop.f32.mrb[0].mxu0
  %v5790 = vpop.f32.mrb[0].mxu0
  %v5791 = vadd.f32 0.0, %v5790
  %v5792 = vpop.f32.mrb[0].mxu0
  %5793 = vmatprep.mubr.bf16.mxu0 0
  %5794 = vmatmul.mubr.bf16.gmra.mrb[0].mxu0 %v5546
  %v5795 = vpop.f32.mrb[0].mxu0
  %v5796 = vadd.f32 0.0, %v5795
  %v5797 = vpop.f32.mrb[0].mxu0
  %v5798 = vpop.f32.mrb[0].mxu0
  %v5799 = vadd.f32 0.0, %v5798
  %v5800 = vpop.f32.mrb[0].mxu0
  %5801 = vmatprep.mubr.bf16.mxu0 0
  %5802 = vmatmul.mubr.bf16.gmra.mrb[0].mxu0 %v5549
  %v5803 = vpop.f32.mrb[0].mxu0
  %v5804 = vadd.f32 0.0, %v5803
  %v5805 = vpop.f32.mrb[0].mxu0
  %v5806 = vpop.f32.mrb[0].mxu0
  %v5807 = vadd.f32 0.0, %v5806
  %v5808 = vpop.f32.mrb[0].mxu0
  %5809 = vmatprep.mubr.bf16.mxu0 0
  %5810 = vmatmul.mubr.bf16.gmra.mrb[0].mxu0 %v5552
  %v5811 = vpop.f32.mrb[0].mxu0
  %v5812 = vadd.f32 0.0, %v5811
  %v5813 = vpop.f32.mrb[0].mxu0
  %v5814 = vpop.f32.mrb[0].mxu0
  %v5815 = vadd.f32 0.0, %v5814
  %v5816 = vpop.f32.mrb[0].mxu0
  %5817 = vmatprep.mubr.bf16.mxu0 0
  %5818 = vmatmul.mubr.bf16.gmra.mrb[0].mxu0 %v5555
  %v5819 = vpop.f32.mrb[0].mxu0
  %v5820 = vadd.f32 0.0, %v5819
  %v5821 = vpop.f32.mrb[0].mxu0
  %v5822 = vpop.f32.mrb[0].mxu0
  %v5823 = vadd.f32 0.0, %v5822
  %v5824 = vpop.f32.mrb[0].mxu0
  %5825 = vmatprep.mubr.bf16.mxu0 0
  %5826 = vmatmul.mubr.bf16.gmra.mrb[0].mxu0 %v5558
  %v5827 = vpop.f32.mrb[0].mxu0
  %v5828 = vadd.f32 0.0, %v5827
  %v5829 = vpop.f32.mrb[0].mxu0
  %v5830 = vpop.f32.mrb[0].mxu0
  %v5831 = vadd.f32 0.0, %v5830
  %v5832 = vpop.f32.mrb[0].mxu0
  %5833 = vmatprep.mubr.bf16.mxu0 0
  %5834 = vmatmul.mubr.bf16.gmra.mrb[0].mxu0 %v5561
  %v5835 = vpop.f32.mrb[0].mxu0
  %v5836 = vadd.f32 0.0, %v5835
  %v5837 = vpop.f32.mrb[0].mxu0
  %v5838 = vpop.f32.mrb[0].mxu0
  %v5839 = vadd.f32 0.0, %v5838
  %v5840 = vpop.f32.mrb[0].mxu0
  %5841 = vmatprep.mubr.bf16.mxu0 0
  %5842 = vmatmul.mubr.bf16.gmra.mrb[0].mxu0 %v5564
  %v5843 = vpop.f32.mrb[0].mxu0
  %v5844 = vadd.f32 0.0, %v5843
  %v5845 = vpop.f32.mrb[0].mxu0
  %v5846 = vpop.f32.mrb[0].mxu0
  %v5847 = vadd.f32 0.0, %v5846
  %v5848 = vpop.f32.mrb[0].mxu0
  %5849 = vmatprep.mubr.bf16.mxu0 0
  %5850 = vmatmul.mubr.bf16.gmra.mrb[0].mxu0 %v5567
  %v5851 = vpop.f32.mrb[0].mxu0
  %v5852 = vadd.f32 0.0, %v5851
  %v5853 = vpop.f32.mrb[0].mxu0
  %v5854 = vpop.f32.mrb[0].mxu0
  %v5855 = vadd.f32 0.0, %v5854
  %v5856 = vpop.f32.mrb[0].mxu0
  %5857 = vdwg.mxu0
  %v5858 = vadd.f32 %v5305, %v5604
  %v5859 = vadd.f32 %v5306, %v5607
  %v5860 = vadd.f32 %v5307, %v5612
  %v5861 = vadd.f32 %v5308, %v5615
  %v5862 = vadd.f32 %v5309, %v5620
  %v5863 = vadd.f32 %v5310, %v5623
  %v5864 = vadd.f32 %v5311, %v5628
  %v5865 = vadd.f32 %v5312, %v5631
  %v5866 = vadd.f32 %v5313, %v5636
  %v5867 = vadd.f32 %v5314, %v5639
  %v5868 = vadd.f32 %v5315, %v5644
  %v5869 = vadd.f32 %v5316, %v5647
  %v5870 = vadd.f32 %v5317, %v5652
  %v5871 = vadd.f32 %v5318, %v5655
  %v5872 = vadd.f32 %v5319, %v5660
  %v5873 = vadd.f32 %v5320, %v5663
  %v5874 = vadd.f32 %v5321, %v5668
  %v5875 = vadd.f32 %v5322, %v5671
  %v5876 = vadd.f32 %v5323, %v5676
  %v5877 = vadd.f32 %v5324, %v5679
  %v5878 = vadd.f32 %v5325, %v5684
  %v5879 = vadd.f32 %v5326, %v5687
  %v5880 = vadd.f32 %v5327, %v5692
  %v5881 = vadd.f32 %v5328, %v5695
  %v5882 = vadd.f32 %v5329, %v5700
  %v5883 = vadd.f32 %v5330, %v5703
  %v5884 = vadd.f32 %v5331, %v5708
  %v5885 = vadd.f32 %v5332, %v5711
  %v5886 = vadd.f32 %v5333, %v5716
  %v5887 = vadd.f32 %v5334, %v5719
  %v5888 = vadd.f32 %v5335, %v5724
  %v5889 = vadd.f32 %v5336, %v5727
  %v5890 = vadd.f32 %v5337, %v5732
  %v5891 = vadd.f32 %v5338, %v5735
  %v5892 = vadd.f32 %v5339, %v5740
  %v5893 = vadd.f32 %v5340, %v5743
  %v5894 = vadd.f32 %v5341, %v5748
  %v5895 = vadd.f32 %v5342, %v5751
  %v5896 = vadd.f32 %v5343, %v5756
  %v5897 = vadd.f32 %v5344, %v5759
  %v5898 = vadd.f32 %v5345, %v5764
  %v5899 = vadd.f32 %v5346, %v5767
  %v5900 = vadd.f32 %v5347, %v5772
  %v5901 = vadd.f32 %v5348, %v5775
  %v5902 = vadd.f32 %v5349, %v5780
  %v5903 = vadd.f32 %v5350, %v5783
  %v5904 = vadd.f32 %v5351, %v5788
  %v5905 = vadd.f32 %v5352, %v5791
  %v5906 = vadd.f32 %v5353, %v5796
  %v5907 = vadd.f32 %v5354, %v5799
  %v5908 = vadd.f32 %v5355, %v5804
  %v5909 = vadd.f32 %v5356, %v5807
  %v5910 = vadd.f32 %v5357, %v5812
  %v5911 = vadd.f32 %v5358, %v5815
  %v5912 = vadd.f32 %v5359, %v5820
  %v5913 = vadd.f32 %v5360, %v5823
  %v5914 = vadd.f32 %v5361, %v5828
  %v5915 = vadd.f32 %v5362, %v5831
  %v5916 = vadd.f32 %v5363, %v5836
  %v5917 = vadd.f32 %v5364, %v5839
  %v5918 = vadd.f32 %v5365, %v5844
  %v5919 = vadd.f32 %v5366, %v5847
  %v5920 = vadd.f32 %v5367, %v5852
  %v5921 = vadd.f32 %v5368, %v5855
  %v5922 = vld [vmem:[%s3773 + $0x1] sm:$0xff]
  %v5923 = vld [vmem:[%s3773 + $0x9] sm:$0xff]
  %v5924 = vld [vmem:[%s3773 + $0x19] sm:$0xff]
  %v5925 = vld [vmem:[%s3773 + $0x21] sm:$0xff]
  %v5926 = vld [vmem:[%s3773 + $0x31] sm:$0xff]
  %v5927 = vld [vmem:[%s3773 + $0x39] sm:$0xff]
  %v5928 = vld [vmem:[%s3773 + $0x49] sm:$0xff]
  %v5929 = vld [vmem:[%s3773 + $0x51] sm:$0xff]
  %v5930 = vld [vmem:[%s3773 + $0x61] sm:$0xff]
  %v5931 = vld [vmem:[%s3773 + $0x69] sm:$0xff]
  %v5932 = vld [vmem:[%s3773 + $0x79] sm:$0xff]
  %v5933 = vld [vmem:[%s3773 + $0x81] sm:$0xff]
  %v5934 = vld [vmem:[%s3773 + $0x91] sm:$0xff]
  %v5935 = vld [vmem:[%s3773 + $0x99] sm:$0xff]
  %v5936 = vld [vmem:[%s3773 + $0xa9] sm:$0xff]
  %v5937 = vld [vmem:[%s3773 + $0xb1] sm:$0xff]
  %v5938 = vld [vmem:[%s3773 + $0xc1] sm:$0xff]
  %v5939 = vld [vmem:[%s3773 + $0xc9] sm:$0xff]
  %v5940 = vld [vmem:[%s3773 + $0xd9] sm:$0xff]
  %v5941 = vld [vmem:[%s3773 + $0xe1] sm:$0xff]
  %v5942 = vld [vmem:[%s3773 + $0xf1] sm:$0xff]
  %v5943 = vld [vmem:[%s3773 + $0xf9] sm:$0xff]
  %v5944 = vld [vmem:[%s3773 + $0x109] sm:$0xff]
  %v5945 = vld [vmem:[%s3773 + $0x111] sm:$0xff]
  %v5946 = vld [vmem:[%s3773 + $0x121] sm:$0xff]
  %v5947 = vld [vmem:[%s3773 + $0x129] sm:$0xff]
  %v5948 = vld [vmem:[%s3773 + $0x139] sm:$0xff]
  %v5949 = vld [vmem:[%s3773 + $0x141] sm:$0xff]
  %v5950 = vld [vmem:[%s3773 + $0x151] sm:$0xff]
  %v5951 = vld [vmem:[%s3773 + $0x159] sm:$0xff]
  %v5952 = vld [vmem:[%s3773 + $0x169] sm:$0xff]
  %v5953 = vld [vmem:[%s3773 + $0x171] sm:$0xff]
  %v5954 = vld [vmem:[%s3773 + $0x1b1] sm:$0xff]
  %v5955 = vld [vmem:[%s3773 + $0x1b9] sm:$0xff]
  %v5956 = vld [vmem:[%s3773 + $0x1c9] sm:$0xff]
  %v5957 = vld [vmem:[%s3773 + $0x1d1] sm:$0xff]
  %v5958 = vld [vmem:[%s3773 + $0x1e1] sm:$0xff]
  %v5959 = vld [vmem:[%s3773 + $0x1e9] sm:$0xff]
  %v5960 = vld [vmem:[%s3773 + $0x1f9] sm:$0xff]
  %v5961 = vld [vmem:[%s3773 + $0x201] sm:$0xff]
  %v5962 = vld [vmem:[%s3773 + $0x211] sm:$0xff]
  %v5963 = vld [vmem:[%s3773 + $0x219] sm:$0xff]
  %v5964 = vld [vmem:[%s3773 + $0x229] sm:$0xff]
  %v5965 = vld [vmem:[%s3773 + $0x231] sm:$0xff]
  %v5966 = vld [vmem:[%s3773 + $0x241] sm:$0xff]
  %v5967 = vld [vmem:[%s3773 + $0x249] sm:$0xff]
  %v5968 = vld [vmem:[%s3773 + $0x259] sm:$0xff]
  %v5969 = vld [vmem:[%s3773 + $0x261] sm:$0xff]
  %v5970 = vld [vmem:[%s3773 + $0x271] sm:$0xff]
  %v5971 = vld [vmem:[%s3773 + $0x279] sm:$0xff]
  %v5972 = vld [vmem:[%s3773 + $0x289] sm:$0xff]
  %v5973 = vld [vmem:[%s3773 + $0x291] sm:$0xff]
  %v5974 = vld [vmem:[%s3773 + $0x2a1] sm:$0xff]
  %v5975 = vld [vmem:[%s3773 + $0x2a9] sm:$0xff]
  %v5976 = vld [vmem:[%s3773 + $0x2b9] sm:$0xff]
  %v5977 = vld [vmem:[%s3773 + $0x2c1] sm:$0xff]
  %v5978 = vld [vmem:[%s3773 + $0x2d1] sm:$0xff]
  %v5979 = vld [vmem:[%s3773 + $0x2d9] sm:$0xff]
  %v5980 = vld [vmem:[%s3773 + $0x2e9] sm:$0xff]
  %v5981 = vld [vmem:[%s3773 + $0x2f1] sm:$0xff]
  %v5982 = vld [vmem:[%s3773 + $0x301] sm:$0xff]
  %v5983 = vld [vmem:[%s3773 + $0x309] sm:$0xff]
  %v5984 = vld [vmem:[%s3773 + $0x319] sm:$0xff]
  %v5985 = vld [vmem:[%s3773 + $0x321] sm:$0xff]
  %v5986 = vpack.c.bf16 %v5923, %v5922
  %v5987 = vpack.c.bf16 %v5925, %v5924
  %v5988 = vpack.c.bf16 %v5927, %v5926
  %v5989 = vpack.c.bf16 %v5929, %v5928
  %v5990 = vpack.c.bf16 %v5931, %v5930
  %v5991 = vpack.c.bf16 %v5933, %v5932
  %v5992 = vpack.c.bf16 %v5935, %v5934
  %v5993 = vpack.c.bf16 %v5937, %v5936
  %v5994 = vpack.c.bf16 %v5939, %v5938
  %v5995 = vpack.c.bf16 %v5941, %v5940
  %v5996 = vpack.c.bf16 %v5943, %v5942
  %v5997 = vpack.c.bf16 %v5945, %v5944
  %v5998 = vpack.c.bf16 %v5947, %v5946
  %v5999 = vpack.c.bf16 %v5949, %v5948
  %v6000 = vpack.c.bf16 %v5951, %v5950
  %v6001 = vpack.c.bf16 %v5953, %v5952
  %v6002 = vpack.c.bf16 %v5955, %v5954
  %v6003 = vpack.c.bf16 %v5957, %v5956
  %v6004 = vpack.c.bf16 %v5959, %v5958
  %v6005 = vpack.c.bf16 %v5961, %v5960
  %v6006 = vpack.c.bf16 %v5963, %v5962
  %v6007 = vpack.c.bf16 %v5965, %v5964
  %v6008 = vpack.c.bf16 %v5967, %v5966
  %v6009 = vpack.c.bf16 %v5969, %v5968
  %v6010 = vpack.c.bf16 %v5971, %v5970
  %v6011 = vpack.c.bf16 %v5973, %v5972
  %v6012 = vpack.c.bf16 %v5975, %v5974
  %v6013 = vpack.c.bf16 %v5977, %v5976
  %v6014 = vpack.c.bf16 %v5979, %v5978
  %v6015 = vpack.c.bf16 %v5981, %v5980
  %v6016 = vpack.c.bf16 %v5983, %v5982
  %v6017 = vpack.c.bf16 %v5985, %v5984
  %v6018 = vld [vmem:[%s11 + $0x20] sm:$0xf]
  %v6019 = vld [vmem:[%s11 + $0x24] sm:$0xf]
  %v6022 = vunpack.c.l.b16 %v6018
  %v6023 = vunpack.c.l.b16 %v6019
  %v6024 = vpack.c.b16 %v6023, %v6022
  %v6027 = vsel %vm230, %v5986, 0
  %v6030 = vsel %vm230, %v5987, 0
  %v6033 = vsel %vm230, %v5988, 0
  %v6036 = vsel %vm230, %v5989, 0
  %v6039 = vsel %vm230, %v5990, 0
  %v6042 = vsel %vm230, %v5991, 0
  %v6045 = vsel %vm230, %v5992, 0
  %v6048 = vsel %vm230, %v5993, 0
  %v6051 = vsel %vm230, %v5994, 0
  %v6054 = vsel %vm230, %v5995, 0
  %v6057 = vsel %vm230, %v5996, 0
  %v6060 = vsel %vm230, %v5997, 0
  %v6063 = vsel %vm230, %v5998, 0
  %v6066 = vsel %vm230, %v5999, 0
  %v6069 = vsel %vm230, %v6000, 0
  %v6072 = vsel %vm230, %v6001, 0
  %v6075 = vsel %vm230, %v6002, 0
  %v6078 = vsel %vm230, %v6003, 0
  %v6081 = vsel %vm230, %v6004, 0
  %v6084 = vsel %vm230, %v6005, 0
  %v6087 = vsel %vm230, %v6006, 0
  %v6090 = vsel %vm230, %v6007, 0
  %v6093 = vsel %vm230, %v6008, 0
  %v6096 = vsel %vm230, %v6009, 0
  %v6099 = vsel %vm230, %v6010, 0
  %v6102 = vsel %vm230, %v6011, 0
  %v6105 = vsel %vm230, %v6012, 0
  %v6108 = vsel %vm230, %v6013, 0
  %v6111 = vsel %vm230, %v6014, 0
  %v6114 = vsel %vm230, %v6015, 0
  %v6117 = vsel %vm230, %v6016, 0
  %v6120 = vsel %vm230, %v6017, 0
  %6122 = vmatprep.subr.bf16.mxu0 0
  %6123 = vmatpush1.bf16.msra.mxu0 %v6024
  %6124 = vmatprep.subr.bf16.mxu0 0
  %6125 = vmatpush1.bf16.msra.mxu0 0
  %6126 = vmatprep.subr.bf16.mxu0 0
  %6127 = vmatpush1.bf16.msra.mxu0 0
  %6128 = vmatprep.subr.bf16.mxu0 0
  %6129 = vmatpush1.bf16.msra.mxu0 0
  %6130 = vmatprep.subr.bf16.mxu0 0
  %6131 = vmatpush1.bf16.msra.mxu0 0
  %6132 = vmatprep.subr.bf16.mxu0 0
  %6133 = vmatpush1.bf16.msra.mxu0 0
  %6134 = vmatprep.subr.bf16.mxu0 0
  %6135 = vmatpush1.bf16.msra.mxu0 0
  %6136 = vmatprep.subr.bf16.mxu0 0
  %6137 = vmatpush1.bf16.msra.mxu0 0
  %6138 = vmatprep.subr.bf16.mxu0 0
  %6139 = vmatpush1.bf16.msra.mxu0 0
  %6140 = vmatprep.subr.bf16.mxu0 0
  %6141 = vmatpush1.bf16.msra.mxu0 0
  %6142 = vmatprep.subr.bf16.mxu0 0
  %6143 = vmatpush1.bf16.msra.mxu0 0
  %6144 = vmatprep.subr.bf16.mxu0 0
  %6145 = vmatpush1.bf16.msra.mxu0 0
  %6146 = vmatprep.subr.bf16.mxu0 0
  %6147 = vmatpush1.bf16.msra.mxu0 0
  %6148 = vmatprep.subr.bf16.mxu0 0
  %6149 = vmatpush1.bf16.msra.mxu0 0
  %6150 = vmatprep.subr.bf16.mxu0 0
  %6151 = vmatpush1.bf16.msra.mxu0 0
  %6152 = vmatprep.subr.bf16.mxu0 0
  %6153 = vmatpush1.bf16.msra.mxu0 0
  %6154 = vmatprep.mubr.bf16.mxu0 0
  %6155 = vmatmul.mubr.bf16.gmra.mrb[0].mxu0 %v6027
  %v6156 = vpop.f32.mrb[0].mxu0
  %v6157 = vadd.f32 0.0, %v6156
  %v6158 = vpop.f32.mrb[0].mxu0
  %v6159 = vpop.f32.mrb[0].mxu0
  %v6160 = vadd.f32 0.0, %v6159
  %v6161 = vpop.f32.mrb[0].mxu0
  %6162 = vmatprep.mubr.bf16.mxu0 0
  %6163 = vmatmul.mubr.bf16.gmra.mrb[0].mxu0 %v6030
  %v6164 = vpop.f32.mrb[0].mxu0
  %v6165 = vadd.f32 0.0, %v6164
  %v6166 = vpop.f32.mrb[0].mxu0
  %v6167 = vpop.f32.mrb[0].mxu0
  %v6168 = vadd.f32 0.0, %v6167
  %v6169 = vpop.f32.mrb[0].mxu0
  %6170 = vmatprep.mubr.bf16.mxu0 0
  %6171 = vmatmul.mubr.bf16.gmra.mrb[0].mxu0 %v6033
  %v6172 = vpop.f32.mrb[0].mxu0
  %v6173 = vadd.f32 0.0, %v6172
  %v6174 = vpop.f32.mrb[0].mxu0
  %v6175 = vpop.f32.mrb[0].mxu0
  %v6176 = vadd.f32 0.0, %v6175
  %v6177 = vpop.f32.mrb[0].mxu0
  %6178 = vmatprep.mubr.bf16.mxu0 0
  %6179 = vmatmul.mubr.bf16.gmra.mrb[0].mxu0 %v6036
  %v6180 = vpop.f32.mrb[0].mxu0
  %v6181 = vadd.f32 0.0, %v6180
  %v6182 = vpop.f32.mrb[0].mxu0
  %v6183 = vpop.f32.mrb[0].mxu0
  %v6184 = vadd.f32 0.0, %v6183
  %v6185 = vpop.f32.mrb[0].mxu0
  %6186 = vmatprep.mubr.bf16.mxu0 0
  %6187 = vmatmul.mubr.bf16.gmra.mrb[0].mxu0 %v6039
  %v6188 = vpop.f32.mrb[0].mxu0
  %v6189 = vadd.f32 0.0, %v6188
  %v6190 = vpop.f32.mrb[0].mxu0
  %v6191 = vpop.f32.mrb[0].mxu0
  %v6192 = vadd.f32 0.0, %v6191
  %v6193 = vpop.f32.mrb[0].mxu0
  %6194 = vmatprep.mubr.bf16.mxu0 0
  %6195 = vmatmul.mubr.bf16.gmra.mrb[0].mxu0 %v6042
  %v6196 = vpop.f32.mrb[0].mxu0
  %v6197 = vadd.f32 0.0, %v6196
  %v6198 = vpop.f32.mrb[0].mxu0
  %v6199 = vpop.f32.mrb[0].mxu0
  %v6200 = vadd.f32 0.0, %v6199
  %v6201 = vpop.f32.mrb[0].mxu0
  %6202 = vmatprep.mubr.bf16.mxu0 0
  %6203 = vmatmul.mubr.bf16.gmra.mrb[0].mxu0 %v6045
  %v6204 = vpop.f32.mrb[0].mxu0
  %v6205 = vadd.f32 0.0, %v6204
  %v6206 = vpop.f32.mrb[0].mxu0
  %v6207 = vpop.f32.mrb[0].mxu0
  %v6208 = vadd.f32 0.0, %v6207
  %v6209 = vpop.f32.mrb[0].mxu0
  %6210 = vmatprep.mubr.bf16.mxu0 0
  %6211 = vmatmul.mubr.bf16.gmra.mrb[0].mxu0 %v6048
  %v6212 = vpop.f32.mrb[0].mxu0
  %v6213 = vadd.f32 0.0, %v6212
  %v6214 = vpop.f32.mrb[0].mxu0
  %v6215 = vpop.f32.mrb[0].mxu0
  %v6216 = vadd.f32 0.0, %v6215
  %v6217 = vpop.f32.mrb[0].mxu0
  %6218 = vmatprep.mubr.bf16.mxu0 0
  %6219 = vmatmul.mubr.bf16.gmra.mrb[0].mxu0 %v6051
  %v6220 = vpop.f32.mrb[0].mxu0
  %v6221 = vadd.f32 0.0, %v6220
  %v6222 = vpop.f32.mrb[0].mxu0
  %v6223 = vpop.f32.mrb[0].mxu0
  %v6224 = vadd.f32 0.0, %v6223
  %v6225 = vpop.f32.mrb[0].mxu0
  %6226 = vmatprep.mubr.bf16.mxu0 0
  %6227 = vmatmul.mubr.bf16.gmra.mrb[0].mxu0 %v6054
  %v6228 = vpop.f32.mrb[0].mxu0
  %v6229 = vadd.f32 0.0, %v6228
  %v6230 = vpop.f32.mrb[0].mxu0
  %v6231 = vpop.f32.mrb[0].mxu0
  %v6232 = vadd.f32 0.0, %v6231
  %v6233 = vpop.f32.mrb[0].mxu0
  %6234 = vmatprep.mubr.bf16.mxu0 0
  %6235 = vmatmul.mubr.bf16.gmra.mrb[0].mxu0 %v6057
  %v6236 = vpop.f32.mrb[0].mxu0
  %v6237 = vadd.f32 0.0, %v6236
  %v6238 = vpop.f32.mrb[0].mxu0
  %v6239 = vpop.f32.mrb[0].mxu0
  %v6240 = vadd.f32 0.0, %v6239
  %v6241 = vpop.f32.mrb[0].mxu0
  %6242 = vmatprep.mubr.bf16.mxu0 0
  %6243 = vmatmul.mubr.bf16.gmra.mrb[0].mxu0 %v6060
  %v6244 = vpop.f32.mrb[0].mxu0
  %v6245 = vadd.f32 0.0, %v6244
  %v6246 = vpop.f32.mrb[0].mxu0
  %v6247 = vpop.f32.mrb[0].mxu0
  %v6248 = vadd.f32 0.0, %v6247
  %v6249 = vpop.f32.mrb[0].mxu0
  %6250 = vmatprep.mubr.bf16.mxu0 0
  %6251 = vmatmul.mubr.bf16.gmra.mrb[0].mxu0 %v6063
  %v6252 = vpop.f32.mrb[0].mxu0
  %v6253 = vadd.f32 0.0, %v6252
  %v6254 = vpop.f32.mrb[0].mxu0
  %v6255 = vpop.f32.mrb[0].mxu0
  %v6256 = vadd.f32 0.0, %v6255
  %v6257 = vpop.f32.mrb[0].mxu0
  %6258 = vmatprep.mubr.bf16.mxu0 0
  %6259 = vmatmul.mubr.bf16.gmra.mrb[0].mxu0 %v6066
  %v6260 = vpop.f32.mrb[0].mxu0
  %v6261 = vadd.f32 0.0, %v6260
  %v6262 = vpop.f32.mrb[0].mxu0
  %v6263 = vpop.f32.mrb[0].mxu0
  %v6264 = vadd.f32 0.0, %v6263
  %v6265 = vpop.f32.mrb[0].mxu0
  %6266 = vmatprep.mubr.bf16.mxu0 0
  %6267 = vmatmul.mubr.bf16.gmra.mrb[0].mxu0 %v6069
  %v6268 = vpop.f32.mrb[0].mxu0
  %v6269 = vadd.f32 0.0, %v6268
  %v6270 = vpop.f32.mrb[0].mxu0
  %v6271 = vpop.f32.mrb[0].mxu0
  %v6272 = vadd.f32 0.0, %v6271
  %v6273 = vpop.f32.mrb[0].mxu0
  %6274 = vmatprep.mubr.bf16.mxu0 0
  %6275 = vmatmul.mubr.bf16.gmra.mrb[0].mxu0 %v6072
  %v6276 = vpop.f32.mrb[0].mxu0
  %v6277 = vadd.f32 0.0, %v6276
  %v6278 = vpop.f32.mrb[0].mxu0
  %v6279 = vpop.f32.mrb[0].mxu0
  %v6280 = vadd.f32 0.0, %v6279
  %v6281 = vpop.f32.mrb[0].mxu0
  %6282 = vmatprep.mubr.bf16.mxu0 0
  %6283 = vmatmul.mubr.bf16.gmra.mrb[0].mxu0 %v6075
  %v6284 = vpop.f32.mrb[0].mxu0
  %v6285 = vadd.f32 0.0, %v6284
  %v6286 = vpop.f32.mrb[0].mxu0
  %v6287 = vpop.f32.mrb[0].mxu0
  %v6288 = vadd.f32 0.0, %v6287
  %v6289 = vpop.f32.mrb[0].mxu0
  %6290 = vmatprep.mubr.bf16.mxu0 0
  %6291 = vmatmul.mubr.bf16.gmra.mrb[0].mxu0 %v6078
  %v6292 = vpop.f32.mrb[0].mxu0
  %v6293 = vadd.f32 0.0, %v6292
  %v6294 = vpop.f32.mrb[0].mxu0
  %v6295 = vpop.f32.mrb[0].mxu0
  %v6296 = vadd.f32 0.0, %v6295
  %v6297 = vpop.f32.mrb[0].mxu0
  %6298 = vmatprep.mubr.bf16.mxu0 0
  %6299 = vmatmul.mubr.bf16.gmra.mrb[0].mxu0 %v6081
  %v6300 = vpop.f32.mrb[0].mxu0
  %v6301 = vadd.f32 0.0, %v6300
  %v6302 = vpop.f32.mrb[0].mxu0
  %v6303 = vpop.f32.mrb[0].mxu0
  %v6304 = vadd.f32 0.0, %v6303
  %v6305 = vpop.f32.mrb[0].mxu0
  %6306 = vmatprep.mubr.bf16.mxu0 0
  %6307 = vmatmul.mubr.bf16.gmra.mrb[0].mxu0 %v6084
  %v6308 = vpop.f32.mrb[0].mxu0
  %v6309 = vadd.f32 0.0, %v6308
  %v6310 = vpop.f32.mrb[0].mxu0
  %v6311 = vpop.f32.mrb[0].mxu0
  %v6312 = vadd.f32 0.0, %v6311
  %v6313 = vpop.f32.mrb[0].mxu0
  %6314 = vmatprep.mubr.bf16.mxu0 0
  %6315 = vmatmul.mubr.bf16.gmra.mrb[0].mxu0 %v6087
  %v6316 = vpop.f32.mrb[0].mxu0
  %v6317 = vadd.f32 0.0, %v6316
  %v6318 = vpop.f32.mrb[0].mxu0
  %v6319 = vpop.f32.mrb[0].mxu0
  %v6320 = vadd.f32 0.0, %v6319
  %v6321 = vpop.f32.mrb[0].mxu0
  %6322 = vmatprep.mubr.bf16.mxu0 0
  %6323 = vmatmul.mubr.bf16.gmra.mrb[0].mxu0 %v6090
  %v6324 = vpop.f32.mrb[0].mxu0
  %v6325 = vadd.f32 0.0, %v6324
  %v6326 = vpop.f32.mrb[0].mxu0
  %v6327 = vpop.f32.mrb[0].mxu0
  %v6328 = vadd.f32 0.0, %v6327
  %v6329 = vpop.f32.mrb[0].mxu0
  %6330 = vmatprep.mubr.bf16.mxu0 0
  %6331 = vmatmul.mubr.bf16.gmra.mrb[0].mxu0 %v6093
  %v6332 = vpop.f32.mrb[0].mxu0
  %v6333 = vadd.f32 0.0, %v6332
  %v6334 = vpop.f32.mrb[0].mxu0
  %v6335 = vpop.f32.mrb[0].mxu0
  %v6336 = vadd.f32 0.0, %v6335
  %v6337 = vpop.f32.mrb[0].mxu0
  %6338 = vmatprep.mubr.bf16.mxu0 0
  %6339 = vmatmul.mubr.bf16.gmra.mrb[0].mxu0 %v6096
  %v6340 = vpop.f32.mrb[0].mxu0
  %v6341 = vadd.f32 0.0, %v6340
  %v6342 = vpop.f32.mrb[0].mxu0
  %v6343 = vpop.f32.mrb[0].mxu0
  %v6344 = vadd.f32 0.0, %v6343
  %v6345 = vpop.f32.mrb[0].mxu0
  %6346 = vmatprep.mubr.bf16.mxu0 0
  %6347 = vmatmul.mubr.bf16.gmra.mrb[0].mxu0 %v6099
  %v6348 = vpop.f32.mrb[0].mxu0
  %v6349 = vadd.f32 0.0, %v6348
  %v6350 = vpop.f32.mrb[0].mxu0
  %v6351 = vpop.f32.mrb[0].mxu0
  %v6352 = vadd.f32 0.0, %v6351
  %v6353 = vpop.f32.mrb[0].mxu0
  %6354 = vmatprep.mubr.bf16.mxu0 0
  %6355 = vmatmul.mubr.bf16.gmra.mrb[0].mxu0 %v6102
  %v6356 = vpop.f32.mrb[0].mxu0
  %v6357 = vadd.f32 0.0, %v6356
  %v6358 = vpop.f32.mrb[0].mxu0
  %v6359 = vpop.f32.mrb[0].mxu0
  %v6360 = vadd.f32 0.0, %v6359
  %v6361 = vpop.f32.mrb[0].mxu0
  %6362 = vmatprep.mubr.bf16.mxu0 0
  %6363 = vmatmul.mubr.bf16.gmra.mrb[0].mxu0 %v6105
  %v6364 = vpop.f32.mrb[0].mxu0
  %v6365 = vadd.f32 0.0, %v6364
  %v6366 = vpop.f32.mrb[0].mxu0
  %v6367 = vpop.f32.mrb[0].mxu0
  %v6368 = vadd.f32 0.0, %v6367
  %v6369 = vpop.f32.mrb[0].mxu0
  %6370 = vmatprep.mubr.bf16.mxu0 0
  %6371 = vmatmul.mubr.bf16.gmra.mrb[0].mxu0 %v6108
  %v6372 = vpop.f32.mrb[0].mxu0
  %v6373 = vadd.f32 0.0, %v6372
  %v6374 = vpop.f32.mrb[0].mxu0
  %v6375 = vpop.f32.mrb[0].mxu0
  %v6376 = vadd.f32 0.0, %v6375
  %v6377 = vpop.f32.mrb[0].mxu0
  %6378 = vmatprep.mubr.bf16.mxu0 0
  %6379 = vmatmul.mubr.bf16.gmra.mrb[0].mxu0 %v6111
  %v6380 = vpop.f32.mrb[0].mxu0
  %v6381 = vadd.f32 0.0, %v6380
  %v6382 = vpop.f32.mrb[0].mxu0
  %v6383 = vpop.f32.mrb[0].mxu0
  %v6384 = vadd.f32 0.0, %v6383
  %v6385 = vpop.f32.mrb[0].mxu0
  %6386 = vmatprep.mubr.bf16.mxu0 0
  %6387 = vmatmul.mubr.bf16.gmra.mrb[0].mxu0 %v6114
  %v6388 = vpop.f32.mrb[0].mxu0
  %v6389 = vadd.f32 0.0, %v6388
  %v6390 = vpop.f32.mrb[0].mxu0
  %v6391 = vpop.f32.mrb[0].mxu0
  %v6392 = vadd.f32 0.0, %v6391
  %v6393 = vpop.f32.mrb[0].mxu0
  %6394 = vmatprep.mubr.bf16.mxu0 0
  %6395 = vmatmul.mubr.bf16.gmra.mrb[0].mxu0 %v6117
  %v6396 = vpop.f32.mrb[0].mxu0
  %v6397 = vadd.f32 0.0, %v6396
  %v6398 = vpop.f32.mrb[0].mxu0
  %v6399 = vpop.f32.mrb[0].mxu0
  %v6400 = vadd.f32 0.0, %v6399
  %v6401 = vpop.f32.mrb[0].mxu0
  %6402 = vmatprep.mubr.bf16.mxu0 0
  %6403 = vmatmul.mubr.bf16.gmra.mrb[0].mxu0 %v6120
  %v6404 = vpop.f32.mrb[0].mxu0
  %v6405 = vadd.f32 0.0, %v6404
  %v6406 = vpop.f32.mrb[0].mxu0
  %v6407 = vpop.f32.mrb[0].mxu0
  %v6408 = vadd.f32 0.0, %v6407
  %v6409 = vpop.f32.mrb[0].mxu0
  %6410 = vdwg.mxu0
  %v6411 = vadd.f32 %v5858, %v6157
  %v6412 = vadd.f32 %v5859, %v6160
  %v6413 = vadd.f32 %v5860, %v6165
  %v6414 = vadd.f32 %v5861, %v6168
  %v6415 = vadd.f32 %v5862, %v6173
  %v6416 = vadd.f32 %v5863, %v6176
  %v6417 = vadd.f32 %v5864, %v6181
  %v6418 = vadd.f32 %v5865, %v6184
  %v6419 = vadd.f32 %v5866, %v6189
  %v6420 = vadd.f32 %v5867, %v6192
  %v6421 = vadd.f32 %v5868, %v6197
  %v6422 = vadd.f32 %v5869, %v6200
  %v6423 = vadd.f32 %v5870, %v6205
  %v6424 = vadd.f32 %v5871, %v6208
  %v6425 = vadd.f32 %v5872, %v6213
  %v6426 = vadd.f32 %v5873, %v6216
  %v6427 = vadd.f32 %v5874, %v6221
  %v6428 = vadd.f32 %v5875, %v6224
  %v6429 = vadd.f32 %v5876, %v6229
  %v6430 = vadd.f32 %v5877, %v6232
  %v6431 = vadd.f32 %v5878, %v6237
  %v6432 = vadd.f32 %v5879, %v6240
  %v6433 = vadd.f32 %v5880, %v6245
  %v6434 = vadd.f32 %v5881, %v6248
  %v6435 = vadd.f32 %v5882, %v6253
  %v6436 = vadd.f32 %v5883, %v6256
  %v6437 = vadd.f32 %v5884, %v6261
  %v6438 = vadd.f32 %v5885, %v6264
  %v6439 = vadd.f32 %v5886, %v6269
  %v6440 = vadd.f32 %v5887, %v6272
  %v6441 = vadd.f32 %v5888, %v6277
  %v6442 = vadd.f32 %v5889, %v6280
  %v6443 = vadd.f32 %v5890, %v6285
  %v6444 = vadd.f32 %v5891, %v6288
  %v6445 = vadd.f32 %v5892, %v6293
  %v6446 = vadd.f32 %v5893, %v6296
  %v6447 = vadd.f32 %v5894, %v6301
  %v6448 = vadd.f32 %v5895, %v6304
  %v6449 = vadd.f32 %v5896, %v6309
  %v6450 = vadd.f32 %v5897, %v6312
  %v6451 = vadd.f32 %v5898, %v6317
  %v6452 = vadd.f32 %v5899, %v6320
  %v6453 = vadd.f32 %v5900, %v6325
  %v6454 = vadd.f32 %v5901, %v6328
  %v6455 = vadd.f32 %v5902, %v6333
  %v6456 = vadd.f32 %v5903, %v6336
  %v6457 = vadd.f32 %v5904, %v6341
  %v6458 = vadd.f32 %v5905, %v6344
  %v6459 = vadd.f32 %v5906, %v6349
  %v6460 = vadd.f32 %v5907, %v6352
  %v6461 = vadd.f32 %v5908, %v6357
  %v6462 = vadd.f32 %v5909, %v6360
  %v6463 = vadd.f32 %v5910, %v6365
  %v6464 = vadd.f32 %v5911, %v6368
  %v6465 = vadd.f32 %v5912, %v6373
  %v6466 = vadd.f32 %v5913, %v6376
  %v6467 = vadd.f32 %v5914, %v6381
  %v6468 = vadd.f32 %v5915, %v6384
  %v6469 = vadd.f32 %v5916, %v6389
  %v6470 = vadd.f32 %v5917, %v6392
  %v6471 = vadd.f32 %v5918, %v6397
  %v6472 = vadd.f32 %v5919, %v6400
  %v6473 = vadd.f32 %v5920, %v6405
  %v6474 = vadd.f32 %v5921, %v6408
  %v6475 = vld [vmem:[%s3773 + $0x2] sm:$0xff]
  %v6476 = vld [vmem:[%s3773 + $0xa] sm:$0xff]
  %v6477 = vld [vmem:[%s3773 + $0x1a] sm:$0xff]
  %v6478 = vld [vmem:[%s3773 + $0x22] sm:$0xff]
  %v6479 = vld [vmem:[%s3773 + $0x32] sm:$0xff]
  %v6480 = vld [vmem:[%s3773 + $0x3a] sm:$0xff]
  %v6481 = vld [vmem:[%s3773 + $0x4a] sm:$0xff]
  %v6482 = vld [vmem:[%s3773 + $0x52] sm:$0xff]
  %v6483 = vld [vmem:[%s3773 + $0x62] sm:$0xff]
  %v6484 = vld [vmem:[%s3773 + $0x6a] sm:$0xff]
  %v6485 = vld [vmem:[%s3773 + $0x7a] sm:$0xff]
  %v6486 = vld [vmem:[%s3773 + $0x82] sm:$0xff]
  %v6487 = vld [vmem:[%s3773 + $0x92] sm:$0xff]
  %v6488 = vld [vmem:[%s3773 + $0x9a] sm:$0xff]
  %v6489 = vld [vmem:[%s3773 + $0xaa] sm:$0xff]
  %v6490 = vld [vmem:[%s3773 + $0xb2] sm:$0xff]
  %v6491 = vld [vmem:[%s3773 + $0xc2] sm:$0xff]
  %v6492 = vld [vmem:[%s3773 + $0xca] sm:$0xff]
  %v6493 = vld [vmem:[%s3773 + $0xda] sm:$0xff]
  %v6494 = vld [vmem:[%s3773 + $0xe2] sm:$0xff]
  %v6495 = vld [vmem:[%s3773 + $0xf2] sm:$0xff]
  %v6496 = vld [vmem:[%s3773 + $0xfa] sm:$0xff]
  %v6497 = vld [vmem:[%s3773 + $0x10a] sm:$0xff]
  %v6498 = vld [vmem:[%s3773 + $0x112] sm:$0xff]
  %v6499 = vld [vmem:[%s3773 + $0x122] sm:$0xff]
  %v6500 = vld [vmem:[%s3773 + $0x12a] sm:$0xff]
  %v6501 = vld [vmem:[%s3773 + $0x13a] sm:$0xff]
  %v6502 = vld [vmem:[%s3773 + $0x142] sm:$0xff]
  %v6503 = vld [vmem:[%s3773 + $0x152] sm:$0xff]
  %v6504 = vld [vmem:[%s3773 + $0x15a] sm:$0xff]
  %v6505 = vld [vmem:[%s3773 + $0x16a] sm:$0xff]
  %v6506 = vld [vmem:[%s3773 + $0x172] sm:$0xff]
  %v6507 = vld [vmem:[%s3773 + $0x1b2] sm:$0xff]
  %v6508 = vld [vmem:[%s3773 + $0x1ba] sm:$0xff]
  %v6509 = vld [vmem:[%s3773 + $0x1ca] sm:$0xff]
  %v6510 = vld [vmem:[%s3773 + $0x1d2] sm:$0xff]
  %v6511 = vld [vmem:[%s3773 + $0x1e2] sm:$0xff]
  %v6512 = vld [vmem:[%s3773 + $0x1ea] sm:$0xff]
  %v6513 = vld [vmem:[%s3773 + $0x1fa] sm:$0xff]
  %v6514 = vld [vmem:[%s3773 + $0x202] sm:$0xff]
  %v6515 = vld [vmem:[%s3773 + $0x212] sm:$0xff]
  %v6516 = vld [vmem:[%s3773 + $0x21a] sm:$0xff]
  %v6517 = vld [vmem:[%s3773 + $0x22a] sm:$0xff]
  %v6518 = vld [vmem:[%s3773 + $0x232] sm:$0xff]
  %v6519 = vld [vmem:[%s3773 + $0x242] sm:$0xff]
  %v6520 = vld [vmem:[%s3773 + $0x24a] sm:$0xff]
  %v6521 = vld [vmem:[%s3773 + $0x25a] sm:$0xff]
  %v6522 = vld [vmem:[%s3773 + $0x262] sm:$0xff]
  %v6523 = vld [vmem:[%s3773 + $0x272] sm:$0xff]
  %v6524 = vld [vmem:[%s3773 + $0x27a] sm:$0xff]
  %v6525 = vld [vmem:[%s3773 + $0x28a] sm:$0xff]
  %v6526 = vld [vmem:[%s3773 + $0x292] sm:$0xff]
  %v6527 = vld [vmem:[%s3773 + $0x2a2] sm:$0xff]
  %v6528 = vld [vmem:[%s3773 + $0x2aa] sm:$0xff]
  %v6529 = vld [vmem:[%s3773 + $0x2ba] sm:$0xff]
  %v6530 = vld [vmem:[%s3773 + $0x2c2] sm:$0xff]
  %v6531 = vld [vmem:[%s3773 + $0x2d2] sm:$0xff]
  %v6532 = vld [vmem:[%s3773 + $0x2da] sm:$0xff]
  %v6533 = vld [vmem:[%s3773 + $0x2ea] sm:$0xff]
  %v6534 = vld [vmem:[%s3773 + $0x2f2] sm:$0xff]
  %v6535 = vld [vmem:[%s3773 + $0x302] sm:$0xff]
  %v6536 = vld [vmem:[%s3773 + $0x30a] sm:$0xff]
  %v6537 = vld [vmem:[%s3773 + $0x31a] sm:$0xff]
  %v6538 = vld [vmem:[%s3773 + $0x322] sm:$0xff]
  %v6539 = vpack.c.bf16 %v6476, %v6475
  %v6540 = vpack.c.bf16 %v6478, %v6477
  %v6541 = vpack.c.bf16 %v6480, %v6479
  %v6542 = vpack.c.bf16 %v6482, %v6481
  %v6543 = vpack.c.bf16 %v6484, %v6483
  %v6544 = vpack.c.bf16 %v6486, %v6485
  %v6545 = vpack.c.bf16 %v6488, %v6487
  %v6546 = vpack.c.bf16 %v6490, %v6489
  %v6547 = vpack.c.bf16 %v6492, %v6491
  %v6548 = vpack.c.bf16 %v6494, %v6493
  %v6549 = vpack.c.bf16 %v6496, %v6495
  %v6550 = vpack.c.bf16 %v6498, %v6497
  %v6551 = vpack.c.bf16 %v6500, %v6499
  %v6552 = vpack.c.bf16 %v6502, %v6501
  %v6553 = vpack.c.bf16 %v6504, %v6503
  %v6554 = vpack.c.bf16 %v6506, %v6505
  %v6555 = vpack.c.bf16 %v6508, %v6507
  %v6556 = vpack.c.bf16 %v6510, %v6509
  %v6557 = vpack.c.bf16 %v6512, %v6511
  %v6558 = vpack.c.bf16 %v6514, %v6513
  %v6559 = vpack.c.bf16 %v6516, %v6515
  %v6560 = vpack.c.bf16 %v6518, %v6517
  %v6561 = vpack.c.bf16 %v6520, %v6519
  %v6562 = vpack.c.bf16 %v6522, %v6521
  %v6563 = vpack.c.bf16 %v6524, %v6523
  %v6564 = vpack.c.bf16 %v6526, %v6525
  %v6565 = vpack.c.bf16 %v6528, %v6527
  %v6566 = vpack.c.bf16 %v6530, %v6529
  %v6567 = vpack.c.bf16 %v6532, %v6531
  %v6568 = vpack.c.bf16 %v6534, %v6533
  %v6569 = vpack.c.bf16 %v6536, %v6535
  %v6570 = vpack.c.bf16 %v6538, %v6537
  %v6571 = vld [vmem:[%s11 + $0x28] sm:$0xf]
  %v6572 = vld [vmem:[%s11 + $0x2c] sm:$0xf]
  %v6575 = vunpack.c.l.b16 %v6571
  %v6576 = vunpack.c.l.b16 %v6572
  %v6577 = vpack.c.b16 %v6576, %v6575
  %v6580 = vsel %vm230, %v6539, 0
  %v6583 = vsel %vm230, %v6540, 0
  %v6586 = vsel %vm230, %v6541, 0
  %v6589 = vsel %vm230, %v6542, 0
  %v6592 = vsel %vm230, %v6543, 0
  %v6595 = vsel %vm230, %v6544, 0
  %v6598 = vsel %vm230, %v6545, 0
  %v6601 = vsel %vm230, %v6546, 0
  %v6604 = vsel %vm230, %v6547, 0
  %v6607 = vsel %vm230, %v6548, 0
  %v6610 = vsel %vm230, %v6549, 0
  %v6613 = vsel %vm230, %v6550, 0
  %v6616 = vsel %vm230, %v6551, 0
  %v6619 = vsel %vm230, %v6552, 0
  %v6622 = vsel %vm230, %v6553, 0
  %v6625 = vsel %vm230, %v6554, 0
  %v6628 = vsel %vm230, %v6555, 0
  %v6631 = vsel %vm230, %v6556, 0
  %v6634 = vsel %vm230, %v6557, 0
  %v6637 = vsel %vm230, %v6558, 0
  %v6640 = vsel %vm230, %v6559, 0
  %v6643 = vsel %vm230, %v6560, 0
  %v6646 = vsel %vm230, %v6561, 0
  %v6649 = vsel %vm230, %v6562, 0
  %v6652 = vsel %vm230, %v6563, 0
  %v6655 = vsel %vm230, %v6564, 0
  %v6658 = vsel %vm230, %v6565, 0
  %v6661 = vsel %vm230, %v6566, 0
  %v6664 = vsel %vm230, %v6567, 0
  %v6667 = vsel %vm230, %v6568, 0
  %v6670 = vsel %vm230, %v6569, 0
  %v6673 = vsel %vm230, %v6570, 0
  %6675 = vmatprep.subr.bf16.mxu0 0
  %6676 = vmatpush1.bf16.msra.mxu0 %v6577
  %6677 = vmatprep.subr.bf16.mxu0 0
  %6678 = vmatpush1.bf16.msra.mxu0 0
  %6679 = vmatprep.subr.bf16.mxu0 0
  %6680 = vmatpush1.bf16.msra.mxu0 0
  %6681 = vmatprep.subr.bf16.mxu0 0
  %6682 = vmatpush1.bf16.msra.mxu0 0
  %6683 = vmatprep.subr.bf16.mxu0 0
  %6684 = vmatpush1.bf16.msra.mxu0 0
  %6685 = vmatprep.subr.bf16.mxu0 0
  %6686 = vmatpush1.bf16.msra.mxu0 0
  %6687 = vmatprep.subr.bf16.mxu0 0
  %6688 = vmatpush1.bf16.msra.mxu0 0
  %6689 = vmatprep.subr.bf16.mxu0 0
  %6690 = vmatpush1.bf16.msra.mxu0 0
  %6691 = vmatprep.subr.bf16.mxu0 0
  %6692 = vmatpush1.bf16.msra.mxu0 0
  %6693 = vmatprep.subr.bf16.mxu0 0
  %6694 = vmatpush1.bf16.msra.mxu0 0
  %6695 = vmatprep.subr.bf16.mxu0 0
  %6696 = vmatpush1.bf16.msra.mxu0 0
  %6697 = vmatprep.subr.bf16.mxu0 0
  %6698 = vmatpush1.bf16.msra.mxu0 0
  %6699 = vmatprep.subr.bf16.mxu0 0
  %6700 = vmatpush1.bf16.msra.mxu0 0
  %6701 = vmatprep.subr.bf16.mxu0 0
  %6702 = vmatpush1.bf16.msra.mxu0 0
  %6703 = vmatprep.subr.bf16.mxu0 0
  %6704 = vmatpush1.bf16.msra.mxu0 0
  %6705 = vmatprep.subr.bf16.mxu0 0
  %6706 = vmatpush1.bf16.msra.mxu0 0
  %6707 = vmatprep.mubr.bf16.mxu0 0
  %6708 = vmatmul.mubr.bf16.gmra.mrb[0].mxu0 %v6580
  %v6709 = vpop.f32.mrb[0].mxu0
  %v6710 = vadd.f32 0.0, %v6709
  %v6711 = vpop.f32.mrb[0].mxu0
  %v6712 = vpop.f32.mrb[0].mxu0
  %v6713 = vadd.f32 0.0, %v6712
  %v6714 = vpop.f32.mrb[0].mxu0
  %6715 = vmatprep.mubr.bf16.mxu0 0
  %6716 = vmatmul.mubr.bf16.gmra.mrb[0].mxu0 %v6583
  %v6717 = vpop.f32.mrb[0].mxu0
  %v6718 = vadd.f32 0.0, %v6717
  %v6719 = vpop.f32.mrb[0].mxu0
  %v6720 = vpop.f32.mrb[0].mxu0
  %v6721 = vadd.f32 0.0, %v6720
  %v6722 = vpop.f32.mrb[0].mxu0
  %6723 = vmatprep.mubr.bf16.mxu0 0
  %6724 = vmatmul.mubr.bf16.gmra.mrb[0].mxu0 %v6586
  %v6725 = vpop.f32.mrb[0].mxu0
  %v6726 = vadd.f32 0.0, %v6725
  %v6727 = vpop.f32.mrb[0].mxu0
  %v6728 = vpop.f32.mrb[0].mxu0
  %v6729 = vadd.f32 0.0, %v6728
  %v6730 = vpop.f32.mrb[0].mxu0
  %6731 = vmatprep.mubr.bf16.mxu0 0
  %6732 = vmatmul.mubr.bf16.gmra.mrb[0].mxu0 %v6589
  %v6733 = vpop.f32.mrb[0].mxu0
  %v6734 = vadd.f32 0.0, %v6733
  %v6735 = vpop.f32.mrb[0].mxu0
  %v6736 = vpop.f32.mrb[0].mxu0
  %v6737 = vadd.f32 0.0, %v6736
  %v6738 = vpop.f32.mrb[0].mxu0
  %6739 = vmatprep.mubr.bf16.mxu0 0
  %6740 = vmatmul.mubr.bf16.gmra.mrb[0].mxu0 %v6592
  %v6741 = vpop.f32.mrb[0].mxu0
  %v6742 = vadd.f32 0.0, %v6741
  %v6743 = vpop.f32.mrb[0].mxu0
  %v6744 = vpop.f32.mrb[0].mxu0
  %v6745 = vadd.f32 0.0, %v6744
  %v6746 = vpop.f32.mrb[0].mxu0
  %6747 = vmatprep.mubr.bf16.mxu0 0
  %6748 = vmatmul.mubr.bf16.gmra.mrb[0].mxu0 %v6595
  %v6749 = vpop.f32.mrb[0].mxu0
  %v6750 = vadd.f32 0.0, %v6749
  %v6751 = vpop.f32.mrb[0].mxu0
  %v6752 = vpop.f32.mrb[0].mxu0
  %v6753 = vadd.f32 0.0, %v6752
  %v6754 = vpop.f32.mrb[0].mxu0
  %6755 = vmatprep.mubr.bf16.mxu0 0
  %6756 = vmatmul.mubr.bf16.gmra.mrb[0].mxu0 %v6598
  %v6757 = vpop.f32.mrb[0].mxu0
  %v6758 = vadd.f32 0.0, %v6757
  %v6759 = vpop.f32.mrb[0].mxu0
  %v6760 = vpop.f32.mrb[0].mxu0
  %v6761 = vadd.f32 0.0, %v6760
  %v6762 = vpop.f32.mrb[0].mxu0
  %6763 = vmatprep.mubr.bf16.mxu0 0
  %6764 = vmatmul.mubr.bf16.gmra.mrb[0].mxu0 %v6601
  %v6765 = vpop.f32.mrb[0].mxu0
  %v6766 = vadd.f32 0.0, %v6765
  %v6767 = vpop.f32.mrb[0].mxu0
  %v6768 = vpop.f32.mrb[0].mxu0
  %v6769 = vadd.f32 0.0, %v6768
  %v6770 = vpop.f32.mrb[0].mxu0
  %6771 = vmatprep.mubr.bf16.mxu0 0
  %6772 = vmatmul.mubr.bf16.gmra.mrb[0].mxu0 %v6604
  %v6773 = vpop.f32.mrb[0].mxu0
  %v6774 = vadd.f32 0.0, %v6773
  %v6775 = vpop.f32.mrb[0].mxu0
  %v6776 = vpop.f32.mrb[0].mxu0
  %v6777 = vadd.f32 0.0, %v6776
  %v6778 = vpop.f32.mrb[0].mxu0
  %6779 = vmatprep.mubr.bf16.mxu0 0
  %6780 = vmatmul.mubr.bf16.gmra.mrb[0].mxu0 %v6607
  %v6781 = vpop.f32.mrb[0].mxu0
  %v6782 = vadd.f32 0.0, %v6781
  %v6783 = vpop.f32.mrb[0].mxu0
  %v6784 = vpop.f32.mrb[0].mxu0
  %v6785 = vadd.f32 0.0, %v6784
  %v6786 = vpop.f32.mrb[0].mxu0
  %6787 = vmatprep.mubr.bf16.mxu0 0
  %6788 = vmatmul.mubr.bf16.gmra.mrb[0].mxu0 %v6610
  %v6789 = vpop.f32.mrb[0].mxu0
  %v6790 = vadd.f32 0.0, %v6789
  %v6791 = vpop.f32.mrb[0].mxu0
  %v6792 = vpop.f32.mrb[0].mxu0
  %v6793 = vadd.f32 0.0, %v6792
  %v6794 = vpop.f32.mrb[0].mxu0
  %6795 = vmatprep.mubr.bf16.mxu0 0
  %6796 = vmatmul.mubr.bf16.gmra.mrb[0].mxu0 %v6613
  %v6797 = vpop.f32.mrb[0].mxu0
  %v6798 = vadd.f32 0.0, %v6797
  %v6799 = vpop.f32.mrb[0].mxu0
  %v6800 = vpop.f32.mrb[0].mxu0
  %v6801 = vadd.f32 0.0, %v6800
  %v6802 = vpop.f32.mrb[0].mxu0
  %6803 = vmatprep.mubr.bf16.mxu0 0
  %6804 = vmatmul.mubr.bf16.gmra.mrb[0].mxu0 %v6616
  %v6805 = vpop.f32.mrb[0].mxu0
  %v6806 = vadd.f32 0.0, %v6805
  %v6807 = vpop.f32.mrb[0].mxu0
  %v6808 = vpop.f32.mrb[0].mxu0
  %v6809 = vadd.f32 0.0, %v6808
  %v6810 = vpop.f32.mrb[0].mxu0
  %6811 = vmatprep.mubr.bf16.mxu0 0
  %6812 = vmatmul.mubr.bf16.gmra.mrb[0].mxu0 %v6619
  %v6813 = vpop.f32.mrb[0].mxu0
  %v6814 = vadd.f32 0.0, %v6813
  %v6815 = vpop.f32.mrb[0].mxu0
  %v6816 = vpop.f32.mrb[0].mxu0
  %v6817 = vadd.f32 0.0, %v6816
  %v6818 = vpop.f32.mrb[0].mxu0
  %6819 = vmatprep.mubr.bf16.mxu0 0
  %6820 = vmatmul.mubr.bf16.gmra.mrb[0].mxu0 %v6622
  %v6821 = vpop.f32.mrb[0].mxu0
  %v6822 = vadd.f32 0.0, %v6821
  %v6823 = vpop.f32.mrb[0].mxu0
  %v6824 = vpop.f32.mrb[0].mxu0
  %v6825 = vadd.f32 0.0, %v6824
  %v6826 = vpop.f32.mrb[0].mxu0
  %6827 = vmatprep.mubr.bf16.mxu0 0
  %6828 = vmatmul.mubr.bf16.gmra.mrb[0].mxu0 %v6625
  %v6829 = vpop.f32.mrb[0].mxu0
  %v6830 = vadd.f32 0.0, %v6829
  %v6831 = vpop.f32.mrb[0].mxu0
  %v6832 = vpop.f32.mrb[0].mxu0
  %v6833 = vadd.f32 0.0, %v6832
  %v6834 = vpop.f32.mrb[0].mxu0
  %6835 = vmatprep.mubr.bf16.mxu0 0
  %6836 = vmatmul.mubr.bf16.gmra.mrb[0].mxu0 %v6628
  %v6837 = vpop.f32.mrb[0].mxu0
  %v6838 = vadd.f32 0.0, %v6837
  %v6839 = vpop.f32.mrb[0].mxu0
  %v6840 = vpop.f32.mrb[0].mxu0
  %v6841 = vadd.f32 0.0, %v6840
  %v6842 = vpop.f32.mrb[0].mxu0
  %6843 = vmatprep.mubr.bf16.mxu0 0
  %6844 = vmatmul.mubr.bf16.gmra.mrb[0].mxu0 %v6631
  %v6845 = vpop.f32.mrb[0].mxu0
  %v6846 = vadd.f32 0.0, %v6845
  %v6847 = vpop.f32.mrb[0].mxu0
  %v6848 = vpop.f32.mrb[0].mxu0
  %v6849 = vadd.f32 0.0, %v6848
  %v6850 = vpop.f32.mrb[0].mxu0
  %6851 = vmatprep.mubr.bf16.mxu0 0
  %6852 = vmatmul.mubr.bf16.gmra.mrb[0].mxu0 %v6634
  %v6853 = vpop.f32.mrb[0].mxu0
  %v6854 = vadd.f32 0.0, %v6853
  %v6855 = vpop.f32.mrb[0].mxu0
  %v6856 = vpop.f32.mrb[0].mxu0
  %v6857 = vadd.f32 0.0, %v6856
  %v6858 = vpop.f32.mrb[0].mxu0
  %6859 = vmatprep.mubr.bf16.mxu0 0
  %6860 = vmatmul.mubr.bf16.gmra.mrb[0].mxu0 %v6637
  %v6861 = vpop.f32.mrb[0].mxu0
  %v6862 = vadd.f32 0.0, %v6861
  %v6863 = vpop.f32.mrb[0].mxu0
  %v6864 = vpop.f32.mrb[0].mxu0
  %v6865 = vadd.f32 0.0, %v6864
  %v6866 = vpop.f32.mrb[0].mxu0
  %6867 = vmatprep.mubr.bf16.mxu0 0
  %6868 = vmatmul.mubr.bf16.gmra.mrb[0].mxu0 %v6640
  %v6869 = vpop.f32.mrb[0].mxu0
  %v6870 = vadd.f32 0.0, %v6869
  %v6871 = vpop.f32.mrb[0].mxu0
  %v6872 = vpop.f32.mrb[0].mxu0
  %v6873 = vadd.f32 0.0, %v6872
  %v6874 = vpop.f32.mrb[0].mxu0
  %6875 = vmatprep.mubr.bf16.mxu0 0
  %6876 = vmatmul.mubr.bf16.gmra.mrb[0].mxu0 %v6643
  %v6877 = vpop.f32.mrb[0].mxu0
  %v6878 = vadd.f32 0.0, %v6877
  %v6879 = vpop.f32.mrb[0].mxu0
  %v6880 = vpop.f32.mrb[0].mxu0
  %v6881 = vadd.f32 0.0, %v6880
  %v6882 = vpop.f32.mrb[0].mxu0
  %6883 = vmatprep.mubr.bf16.mxu0 0
  %6884 = vmatmul.mubr.bf16.gmra.mrb[0].mxu0 %v6646
  %v6885 = vpop.f32.mrb[0].mxu0
  %v6886 = vadd.f32 0.0, %v6885
  %v6887 = vpop.f32.mrb[0].mxu0
  %v6888 = vpop.f32.mrb[0].mxu0
  %v6889 = vadd.f32 0.0, %v6888
  %v6890 = vpop.f32.mrb[0].mxu0
  %6891 = vmatprep.mubr.bf16.mxu0 0
  %6892 = vmatmul.mubr.bf16.gmra.mrb[0].mxu0 %v6649
  %v6893 = vpop.f32.mrb[0].mxu0
  %v6894 = vadd.f32 0.0, %v6893
  %v6895 = vpop.f32.mrb[0].mxu0
  %v6896 = vpop.f32.mrb[0].mxu0
  %v6897 = vadd.f32 0.0, %v6896
  %v6898 = vpop.f32.mrb[0].mxu0
  %6899 = vmatprep.mubr.bf16.mxu0 0
  %6900 = vmatmul.mubr.bf16.gmra.mrb[0].mxu0 %v6652
  %v6901 = vpop.f32.mrb[0].mxu0
  %v6902 = vadd.f32 0.0, %v6901
  %v6903 = vpop.f32.mrb[0].mxu0
  %v6904 = vpop.f32.mrb[0].mxu0
  %v6905 = vadd.f32 0.0, %v6904
  %v6906 = vpop.f32.mrb[0].mxu0
  %6907 = vmatprep.mubr.bf16.mxu0 0
  %6908 = vmatmul.mubr.bf16.gmra.mrb[0].mxu0 %v6655
  %v6909 = vpop.f32.mrb[0].mxu0
  %v6910 = vadd.f32 0.0, %v6909
  %v6911 = vpop.f32.mrb[0].mxu0
  %v6912 = vpop.f32.mrb[0].mxu0
  %v6913 = vadd.f32 0.0, %v6912
  %v6914 = vpop.f32.mrb[0].mxu0
  %6915 = vmatprep.mubr.bf16.mxu0 0
  %6916 = vmatmul.mubr.bf16.gmra.mrb[0].mxu0 %v6658
  %v6917 = vpop.f32.mrb[0].mxu0
  %v6918 = vadd.f32 0.0, %v6917
  %v6919 = vpop.f32.mrb[0].mxu0
  %v6920 = vpop.f32.mrb[0].mxu0
  %v6921 = vadd.f32 0.0, %v6920
  %v6922 = vpop.f32.mrb[0].mxu0
  %6923 = vmatprep.mubr.bf16.mxu0 0
  %6924 = vmatmul.mubr.bf16.gmra.mrb[0].mxu0 %v6661
  %v6925 = vpop.f32.mrb[0].mxu0
  %v6926 = vadd.f32 0.0, %v6925
  %v6927 = vpop.f32.mrb[0].mxu0
  %v6928 = vpop.f32.mrb[0].mxu0
  %v6929 = vadd.f32 0.0, %v6928
  %v6930 = vpop.f32.mrb[0].mxu0
  %6931 = vmatprep.mubr.bf16.mxu0 0
  %6932 = vmatmul.mubr.bf16.gmra.mrb[0].mxu0 %v6664
  %v6933 = vpop.f32.mrb[0].mxu0
  %v6934 = vadd.f32 0.0, %v6933
  %v6935 = vpop.f32.mrb[0].mxu0
  %v6936 = vpop.f32.mrb[0].mxu0
  %v6937 = vadd.f32 0.0, %v6936
  %v6938 = vpop.f32.mrb[0].mxu0
  %6939 = vmatprep.mubr.bf16.mxu0 0
  %6940 = vmatmul.mubr.bf16.gmra.mrb[0].mxu0 %v6667
  %v6941 = vpop.f32.mrb[0].mxu0
  %v6942 = vadd.f32 0.0, %v6941
  %v6943 = vpop.f32.mrb[0].mxu0
  %v6944 = vpop.f32.mrb[0].mxu0
  %v6945 = vadd.f32 0.0, %v6944
  %v6946 = vpop.f32.mrb[0].mxu0
  %6947 = vmatprep.mubr.bf16.mxu0 0
  %6948 = vmatmul.mubr.bf16.gmra.mrb[0].mxu0 %v6670
  %v6949 = vpop.f32.mrb[0].mxu0
  %v6950 = vadd.f32 0.0, %v6949
  %v6951 = vpop.f32.mrb[0].mxu0
  %v6952 = vpop.f32.mrb[0].mxu0
  %v6953 = vadd.f32 0.0, %v6952
  %v6954 = vpop.f32.mrb[0].mxu0
  %6955 = vmatprep.mubr.bf16.mxu0 0
  %6956 = vmatmul.mubr.bf16.gmra.mrb[0].mxu0 %v6673
  %v6957 = vpop.f32.mrb[0].mxu0
  %v6958 = vadd.f32 0.0, %v6957
  %v6959 = vpop.f32.mrb[0].mxu0
  %v6960 = vpop.f32.mrb[0].mxu0
  %v6961 = vadd.f32 0.0, %v6960
  %v6962 = vpop.f32.mrb[0].mxu0
  %6963 = vdwg.mxu0
  %v6964 = vadd.f32 %v6411, %v6710
  %v6965 = vadd.f32 %v6412, %v6713
  %v6966 = vadd.f32 %v6413, %v6718
  %v6967 = vadd.f32 %v6414, %v6721
  %v6968 = vadd.f32 %v6415, %v6726
  %v6969 = vadd.f32 %v6416, %v6729
  %v6970 = vadd.f32 %v6417, %v6734
  %v6971 = vadd.f32 %v6418, %v6737
  %v6972 = vadd.f32 %v6419, %v6742
  %v6973 = vadd.f32 %v6420, %v6745
  %v6974 = vadd.f32 %v6421, %v6750
  %v6975 = vadd.f32 %v6422, %v6753
  %v6976 = vadd.f32 %v6423, %v6758
  %v6977 = vadd.f32 %v6424, %v6761
  %v6978 = vadd.f32 %v6425, %v6766
  %v6979 = vadd.f32 %v6426, %v6769
  %v6980 = vadd.f32 %v6427, %v6774
  %v6981 = vadd.f32 %v6428, %v6777
  %v6982 = vadd.f32 %v6429, %v6782
  %v6983 = vadd.f32 %v6430, %v6785
  %v6984 = vadd.f32 %v6431, %v6790
  %v6985 = vadd.f32 %v6432, %v6793
  %v6986 = vadd.f32 %v6433, %v6798
  %v6987 = vadd.f32 %v6434, %v6801
  %v6988 = vadd.f32 %v6435, %v6806
  %v6989 = vadd.f32 %v6436, %v6809
  %v6990 = vadd.f32 %v6437, %v6814
  %v6991 = vadd.f32 %v6438, %v6817
  %v6992 = vadd.f32 %v6439, %v6822
  %v6993 = vadd.f32 %v6440, %v6825
  %v6994 = vadd.f32 %v6441, %v6830
  %v6995 = vadd.f32 %v6442, %v6833
  %v6996 = vadd.f32 %v6443, %v6838
  %v6997 = vadd.f32 %v6444, %v6841
  %v6998 = vadd.f32 %v6445, %v6846
  %v6999 = vadd.f32 %v6446, %v6849
  %v7000 = vadd.f32 %v6447, %v6854
  %v7001 = vadd.f32 %v6448, %v6857
  %v7002 = vadd.f32 %v6449, %v6862
  %v7003 = vadd.f32 %v6450, %v6865
  %v7004 = vadd.f32 %v6451, %v6870
  %v7005 = vadd.f32 %v6452, %v6873
  %v7006 = vadd.f32 %v6453, %v6878
  %v7007 = vadd.f32 %v6454, %v6881
  %v7008 = vadd.f32 %v6455, %v6886
  %v7009 = vadd.f32 %v6456, %v6889
  %v7010 = vadd.f32 %v6457, %v6894
  %v7011 = vadd.f32 %v6458, %v6897
  %v7012 = vadd.f32 %v6459, %v6902
  %v7013 = vadd.f32 %v6460, %v6905
  %v7014 = vadd.f32 %v6461, %v6910
  %v7015 = vadd.f32 %v6462, %v6913
  %v7016 = vadd.f32 %v6463, %v6918
  %v7017 = vadd.f32 %v6464, %v6921
  %v7018 = vadd.f32 %v6465, %v6926
  %v7019 = vadd.f32 %v6466, %v6929
  %v7020 = vadd.f32 %v6467, %v6934
  %v7021 = vadd.f32 %v6468, %v6937
  %v7022 = vadd.f32 %v6469, %v6942
  %v7023 = vadd.f32 %v6470, %v6945
  %v7024 = vadd.f32 %v6471, %v6950
  %v7025 = vadd.f32 %v6472, %v6953
  %v7026 = vadd.f32 %v6473, %v6958
  %v7027 = vadd.f32 %v6474, %v6961
  %s7028 = scalar_lea.vmem [#allocation3], 48
  %v7029 = vld [vmem:[%s7028] sm:$0xff]
  %v7030 = vld [vmem:[%s7028 + $0x8] sm:$0xff]
  %v7031 = vld [vmem:[%s7028 + $0x18] sm:$0xff]
  %v7032 = vld [vmem:[%s7028 + $0x20] sm:$0xff]
  %v7033 = vld [vmem:[%s7028 + $0x30] sm:$0xff]
  %v7034 = vld [vmem:[%s7028 + $0x38] sm:$0xff]
  %v7035 = vld [vmem:[%s7028 + $0x48] sm:$0xff]
  %v7036 = vld [vmem:[%s7028 + $0x50] sm:$0xff]
  %v7037 = vld [vmem:[%s7028 + $0x60] sm:$0xff]
  %v7038 = vld [vmem:[%s7028 + $0x68] sm:$0xff]
  %v7039 = vld [vmem:[%s7028 + $0x78] sm:$0xff]
  %v7040 = vld [vmem:[%s7028 + $0x80] sm:$0xff]
  %v7041 = vld [vmem:[%s7028 + $0x90] sm:$0xff]
  %v7042 = vld [vmem:[%s7028 + $0x98] sm:$0xff]
  %v7043 = vld [vmem:[%s7028 + $0xa8] sm:$0xff]
  %v7044 = vld [vmem:[%s7028 + $0xb0] sm:$0xff]
  %v7045 = vld [vmem:[%s7028 + $0xc0] sm:$0xff]
  %v7046 = vld [vmem:[%s7028 + $0xc8] sm:$0xff]
  %v7047 = vld [vmem:[%s7028 + $0xd8] sm:$0xff]
  %v7048 = vld [vmem:[%s7028 + $0xe0] sm:$0xff]
  %v7049 = vld [vmem:[%s7028 + $0xf0] sm:$0xff]
  %v7050 = vld [vmem:[%s7028 + $0xf8] sm:$0xff]
  %v7051 = vld [vmem:[%s7028 + $0x108] sm:$0xff]
  %v7052 = vld [vmem:[%s7028 + $0x110] sm:$0xff]
  %v7053 = vld [vmem:[%s7028 + $0x120] sm:$0xff]
  %v7054 = vld [vmem:[%s7028 + $0x128] sm:$0xff]
  %v7055 = vld [vmem:[%s7028 + $0x138] sm:$0xff]
  %v7056 = vld [vmem:[%s7028 + $0x140] sm:$0xff]
  %v7057 = vld [vmem:[%s7028 + $0x150] sm:$0xff]
  %v7058 = vld [vmem:[%s7028 + $0x158] sm:$0xff]
  %v7059 = vld [vmem:[%s7028 + $0x168] sm:$0xff]
  %v7060 = vld [vmem:[%s7028 + $0x170] sm:$0xff]
  %v7061 = vld [vmem:[%s7028 + $0x1b0] sm:$0xff]
  %v7062 = vld [vmem:[%s7028 + $0x1b8] sm:$0xff]
  %v7063 = vld [vmem:[%s7028 + $0x1c8] sm:$0xff]
  %v7064 = vld [vmem:[%s7028 + $0x1d0] sm:$0xff]
  %v7065 = vld [vmem:[%s7028 + $0x1e0] sm:$0xff]
  %v7066 = vld [vmem:[%s7028 + $0x1e8] sm:$0xff]
  %v7067 = vld [vmem:[%s7028 + $0x1f8] sm:$0xff]
  %v7068 = vld [vmem:[%s7028 + $0x200] sm:$0xff]
  %v7069 = vld [vmem:[%s7028 + $0x210] sm:$0xff]
  %v7070 = vld [vmem:[%s7028 + $0x218] sm:$0xff]
  %v7071 = vld [vmem:[%s7028 + $0x228] sm:$0xff]
  %v7072 = vld [vmem:[%s7028 + $0x230] sm:$0xff]
  %v7073 = vld [vmem:[%s7028 + $0x240] sm:$0xff]
  %v7074 = vld [vmem:[%s7028 + $0x248] sm:$0xff]
  %v7075 = vld [vmem:[%s7028 + $0x258] sm:$0xff]
  %v7076 = vld [vmem:[%s7028 + $0x260] sm:$0xff]
  %v7077 = vld [vmem:[%s7028 + $0x270] sm:$0xff]
  %v7078 = vld [vmem:[%s7028 + $0x278] sm:$0xff]
  %v7079 = vld [vmem:[%s7028 + $0x288] sm:$0xff]
  %v7080 = vld [vmem:[%s7028 + $0x290] sm:$0xff]
  %v7081 = vld [vmem:[%s7028 + $0x2a0] sm:$0xff]
  %v7082 = vld [vmem:[%s7028 + $0x2a8] sm:$0xff]
  %v7083 = vld [vmem:[%s7028 + $0x2b8] sm:$0xff]
  %v7084 = vld [vmem:[%s7028 + $0x2c0] sm:$0xff]
  %v7085 = vld [vmem:[%s7028 + $0x2d0] sm:$0xff]
  %v7086 = vld [vmem:[%s7028 + $0x2d8] sm:$0xff]
  %v7087 = vld [vmem:[%s7028 + $0x2e8] sm:$0xff]
  %v7088 = vld [vmem:[%s7028 + $0x2f0] sm:$0xff]
  %v7089 = vld [vmem:[%s7028 + $0x300] sm:$0xff]
  %v7090 = vld [vmem:[%s7028 + $0x308] sm:$0xff]
  %v7091 = vld [vmem:[%s7028 + $0x318] sm:$0xff]
  %v7092 = vld [vmem:[%s7028 + $0x320] sm:$0xff]
  %v7093 = vpack.c.bf16 %v7030, %v7029
  %v7094 = vpack.c.bf16 %v7032, %v7031
  %v7095 = vpack.c.bf16 %v7034, %v7033
  %v7096 = vpack.c.bf16 %v7036, %v7035
  %v7097 = vpack.c.bf16 %v7038, %v7037
  %v7098 = vpack.c.bf16 %v7040, %v7039
  %v7099 = vpack.c.bf16 %v7042, %v7041
  %v7100 = vpack.c.bf16 %v7044, %v7043
  %v7101 = vpack.c.bf16 %v7046, %v7045
  %v7102 = vpack.c.bf16 %v7048, %v7047
  %v7103 = vpack.c.bf16 %v7050, %v7049
  %v7104 = vpack.c.bf16 %v7052, %v7051
  %v7105 = vpack.c.bf16 %v7054, %v7053
  %v7106 = vpack.c.bf16 %v7056, %v7055
  %v7107 = vpack.c.bf16 %v7058, %v7057
  %v7108 = vpack.c.bf16 %v7060, %v7059
  %v7109 = vpack.c.bf16 %v7062, %v7061
  %v7110 = vpack.c.bf16 %v7064, %v7063
  %v7111 = vpack.c.bf16 %v7066, %v7065
  %v7112 = vpack.c.bf16 %v7068, %v7067
  %v7113 = vpack.c.bf16 %v7070, %v7069
  %v7114 = vpack.c.bf16 %v7072, %v7071
  %v7115 = vpack.c.bf16 %v7074, %v7073
  %v7116 = vpack.c.bf16 %v7076, %v7075
  %v7117 = vpack.c.bf16 %v7078, %v7077
  %v7118 = vpack.c.bf16 %v7080, %v7079
  %v7119 = vpack.c.bf16 %v7082, %v7081
  %v7120 = vpack.c.bf16 %v7084, %v7083
  %v7121 = vpack.c.bf16 %v7086, %v7085
  %v7122 = vpack.c.bf16 %v7088, %v7087
  %v7123 = vpack.c.bf16 %v7090, %v7089
  %v7124 = vpack.c.bf16 %v7092, %v7091
  %v7125 = vld [vmem:[%s11 + $0x30] sm:$0xf]
  %v7126 = vld [vmem:[%s11 + $0x34] sm:$0xf]
  %v7129 = vunpack.c.l.b16 %v7125
  %v7130 = vunpack.c.l.b16 %v7126
  %v7131 = vpack.c.b16 %v7130, %v7129
  %v7134 = vsel %vm230, %v7093, 0
  %v7137 = vsel %vm230, %v7094, 0
  %v7140 = vsel %vm230, %v7095, 0
  %v7143 = vsel %vm230, %v7096, 0
  %v7146 = vsel %vm230, %v7097, 0
  %v7149 = vsel %vm230, %v7098, 0
  %v7152 = vsel %vm230, %v7099, 0
  %v7155 = vsel %vm230, %v7100, 0
  %v7158 = vsel %vm230, %v7101, 0
  %v7161 = vsel %vm230, %v7102, 0
  %v7164 = vsel %vm230, %v7103, 0
  %v7167 = vsel %vm230, %v7104, 0
  %v7170 = vsel %vm230, %v7105, 0
  %v7173 = vsel %vm230, %v7106, 0
  %v7176 = vsel %vm230, %v7107, 0
  %v7179 = vsel %vm230, %v7108, 0
  %v7182 = vsel %vm230, %v7109, 0
  %v7185 = vsel %vm230, %v7110, 0
  %v7188 = vsel %vm230, %v7111, 0
  %v7191 = vsel %vm230, %v7112, 0
  %v7194 = vsel %vm230, %v7113, 0
  %v7197 = vsel %vm230, %v7114, 0
  %v7200 = vsel %vm230, %v7115, 0
  %v7203 = vsel %vm230, %v7116, 0
  %v7206 = vsel %vm230, %v7117, 0
  %v7209 = vsel %vm230, %v7118, 0
  %v7212 = vsel %vm230, %v7119, 0
  %v7215 = vsel %vm230, %v7120, 0
  %v7218 = vsel %vm230, %v7121, 0
  %v7221 = vsel %vm230, %v7122, 0
  %v7224 = vsel %vm230, %v7123, 0
  %v7227 = vsel %vm230, %v7124, 0
  %7229 = vmatprep.subr.bf16.mxu0 0
  %7230 = vmatpush1.bf16.msra.mxu0 %v7131
  %7231 = vmatprep.subr.bf16.mxu0 0
  %7232 = vmatpush1.bf16.msra.mxu0 0
  %7233 = vmatprep.subr.bf16.mxu0 0
  %7234 = vmatpush1.bf16.msra.mxu0 0
  %7235 = vmatprep.subr.bf16.mxu0 0
  %7236 = vmatpush1.bf16.msra.mxu0 0
  %7237 = vmatprep.subr.bf16.mxu0 0
  %7238 = vmatpush1.bf16.msra.mxu0 0
  %7239 = vmatprep.subr.bf16.mxu0 0
  %7240 = vmatpush1.bf16.msra.mxu0 0
  %7241 = vmatprep.subr.bf16.mxu0 0
  %7242 = vmatpush1.bf16.msra.mxu0 0
  %7243 = vmatprep.subr.bf16.mxu0 0
  %7244 = vmatpush1.bf16.msra.mxu0 0
  %7245 = vmatprep.subr.bf16.mxu0 0
  %7246 = vmatpush1.bf16.msra.mxu0 0
  %7247 = vmatprep.subr.bf16.mxu0 0
  %7248 = vmatpush1.bf16.msra.mxu0 0
  %7249 = vmatprep.subr.bf16.mxu0 0
  %7250 = vmatpush1.bf16.msra.mxu0 0
  %7251 = vmatprep.subr.bf16.mxu0 0
  %7252 = vmatpush1.bf16.msra.mxu0 0
  %7253 = vmatprep.subr.bf16.mxu0 0
  %7254 = vmatpush1.bf16.msra.mxu0 0
  %7255 = vmatprep.subr.bf16.mxu0 0
  %7256 = vmatpush1.bf16.msra.mxu0 0
  %7257 = vmatprep.subr.bf16.mxu0 0
  %7258 = vmatpush1.bf16.msra.mxu0 0
  %7259 = vmatprep.subr.bf16.mxu0 0
  %7260 = vmatpush1.bf16.msra.mxu0 0
  %7261 = vmatprep.mubr.bf16.mxu0 0
  %7262 = vmatmul.mubr.bf16.gmra.mrb[0].mxu0 %v7134
  %v7263 = vpop.f32.mrb[0].mxu0
  %v7264 = vadd.f32 0.0, %v7263
  %v7265 = vpop.f32.mrb[0].mxu0
  %v7266 = vpop.f32.mrb[0].mxu0
  %v7267 = vadd.f32 0.0, %v7266
  %v7268 = vpop.f32.mrb[0].mxu0
  %7269 = vmatprep.mubr.bf16.mxu0 0
  %7270 = vmatmul.mubr.bf16.gmra.mrb[0].mxu0 %v7137
  %v7271 = vpop.f32.mrb[0].mxu0
  %v7272 = vadd.f32 0.0, %v7271
  %v7273 = vpop.f32.mrb[0].mxu0
  %v7274 = vpop.f32.mrb[0].mxu0
  %v7275 = vadd.f32 0.0, %v7274
  %v7276 = vpop.f32.mrb[0].mxu0
  %7277 = vmatprep.mubr.bf16.mxu0 0
  %7278 = vmatmul.mubr.bf16.gmra.mrb[0].mxu0 %v7140
  %v7279 = vpop.f32.mrb[0].mxu0
  %v7280 = vadd.f32 0.0, %v7279
  %v7281 = vpop.f32.mrb[0].mxu0
  %v7282 = vpop.f32.mrb[0].mxu0
  %v7283 = vadd.f32 0.0, %v7282
  %v7284 = vpop.f32.mrb[0].mxu0
  %7285 = vmatprep.mubr.bf16.mxu0 0
  %7286 = vmatmul.mubr.bf16.gmra.mrb[0].mxu0 %v7143
  %v7287 = vpop.f32.mrb[0].mxu0
  %v7288 = vadd.f32 0.0, %v7287
  %v7289 = vpop.f32.mrb[0].mxu0
  %v7290 = vpop.f32.mrb[0].mxu0
  %v7291 = vadd.f32 0.0, %v7290
  %v7292 = vpop.f32.mrb[0].mxu0
  %7293 = vmatprep.mubr.bf16.mxu0 0
  %7294 = vmatmul.mubr.bf16.gmra.mrb[0].mxu0 %v7146
  %v7295 = vpop.f32.mrb[0].mxu0
  %v7296 = vadd.f32 0.0, %v7295
  %v7297 = vpop.f32.mrb[0].mxu0
  %v7298 = vpop.f32.mrb[0].mxu0
  %v7299 = vadd.f32 0.0, %v7298
  %v7300 = vpop.f32.mrb[0].mxu0
  %7301 = vmatprep.mubr.bf16.mxu0 0
  %7302 = vmatmul.mubr.bf16.gmra.mrb[0].mxu0 %v7149
  %v7303 = vpop.f32.mrb[0].mxu0
  %v7304 = vadd.f32 0.0, %v7303
  %v7305 = vpop.f32.mrb[0].mxu0
  %v7306 = vpop.f32.mrb[0].mxu0
  %v7307 = vadd.f32 0.0, %v7306
  %v7308 = vpop.f32.mrb[0].mxu0
  %7309 = vmatprep.mubr.bf16.mxu0 0
  %7310 = vmatmul.mubr.bf16.gmra.mrb[0].mxu0 %v7152
  %v7311 = vpop.f32.mrb[0].mxu0
  %v7312 = vadd.f32 0.0, %v7311
  %v7313 = vpop.f32.mrb[0].mxu0
  %v7314 = vpop.f32.mrb[0].mxu0
  %v7315 = vadd.f32 0.0, %v7314
  %v7316 = vpop.f32.mrb[0].mxu0
  %7317 = vmatprep.mubr.bf16.mxu0 0
  %7318 = vmatmul.mubr.bf16.gmra.mrb[0].mxu0 %v7155
  %v7319 = vpop.f32.mrb[0].mxu0
  %v7320 = vadd.f32 0.0, %v7319
  %v7321 = vpop.f32.mrb[0].mxu0
  %v7322 = vpop.f32.mrb[0].mxu0
  %v7323 = vadd.f32 0.0, %v7322
  %v7324 = vpop.f32.mrb[0].mxu0
  %7325 = vmatprep.mubr.bf16.mxu0 0
  %7326 = vmatmul.mubr.bf16.gmra.mrb[0].mxu0 %v7158
  %v7327 = vpop.f32.mrb[0].mxu0
  %v7328 = vadd.f32 0.0, %v7327
  %v7329 = vpop.f32.mrb[0].mxu0
  %v7330 = vpop.f32.mrb[0].mxu0
  %v7331 = vadd.f32 0.0, %v7330
  %v7332 = vpop.f32.mrb[0].mxu0
  %7333 = vmatprep.mubr.bf16.mxu0 0
  %7334 = vmatmul.mubr.bf16.gmra.mrb[0].mxu0 %v7161
  %v7335 = vpop.f32.mrb[0].mxu0
  %v7336 = vadd.f32 0.0, %v7335
  %v7337 = vpop.f32.mrb[0].mxu0
  %v7338 = vpop.f32.mrb[0].mxu0
  %v7339 = vadd.f32 0.0, %v7338
  %v7340 = vpop.f32.mrb[0].mxu0
  %7341 = vmatprep.mubr.bf16.mxu0 0
  %7342 = vmatmul.mubr.bf16.gmra.mrb[0].mxu0 %v7164
  %v7343 = vpop.f32.mrb[0].mxu0
  %v7344 = vadd.f32 0.0, %v7343
  %v7345 = vpop.f32.mrb[0].mxu0
  %v7346 = vpop.f32.mrb[0].mxu0
  %v7347 = vadd.f32 0.0, %v7346
  %v7348 = vpop.f32.mrb[0].mxu0
  %7349 = vmatprep.mubr.bf16.mxu0 0
  %7350 = vmatmul.mubr.bf16.gmra.mrb[0].mxu0 %v7167
  %v7351 = vpop.f32.mrb[0].mxu0
  %v7352 = vadd.f32 0.0, %v7351
  %v7353 = vpop.f32.mrb[0].mxu0
  %v7354 = vpop.f32.mrb[0].mxu0
  %v7355 = vadd.f32 0.0, %v7354
  %v7356 = vpop.f32.mrb[0].mxu0
  %7357 = vmatprep.mubr.bf16.mxu0 0
  %7358 = vmatmul.mubr.bf16.gmra.mrb[0].mxu0 %v7170
  %v7359 = vpop.f32.mrb[0].mxu0
  %v7360 = vadd.f32 0.0, %v7359
  %v7361 = vpop.f32.mrb[0].mxu0
  %v7362 = vpop.f32.mrb[0].mxu0
  %v7363 = vadd.f32 0.0, %v7362
  %v7364 = vpop.f32.mrb[0].mxu0
  %7365 = vmatprep.mubr.bf16.mxu0 0
  %7366 = vmatmul.mubr.bf16.gmra.mrb[0].mxu0 %v7173
  %v7367 = vpop.f32.mrb[0].mxu0
  %v7368 = vadd.f32 0.0, %v7367
  %v7369 = vpop.f32.mrb[0].mxu0
  %v7370 = vpop.f32.mrb[0].mxu0
  %v7371 = vadd.f32 0.0, %v7370
  %v7372 = vpop.f32.mrb[0].mxu0
  %7373 = vmatprep.mubr.bf16.mxu0 0
  %7374 = vmatmul.mubr.bf16.gmra.mrb[0].mxu0 %v7176
  %v7375 = vpop.f32.mrb[0].mxu0
  %v7376 = vadd.f32 0.0, %v7375
  %v7377 = vpop.f32.mrb[0].mxu0
  %v7378 = vpop.f32.mrb[0].mxu0
  %v7379 = vadd.f32 0.0, %v7378
  %v7380 = vpop.f32.mrb[0].mxu0
  %7381 = vmatprep.mubr.bf16.mxu0 0
  %7382 = vmatmul.mubr.bf16.gmra.mrb[0].mxu0 %v7179
  %v7383 = vpop.f32.mrb[0].mxu0
  %v7384 = vadd.f32 0.0, %v7383
  %v7385 = vpop.f32.mrb[0].mxu0
  %v7386 = vpop.f32.mrb[0].mxu0
  %v7387 = vadd.f32 0.0, %v7386
  %v7388 = vpop.f32.mrb[0].mxu0
  %7389 = vmatprep.mubr.bf16.mxu0 0
  %7390 = vmatmul.mubr.bf16.gmra.mrb[0].mxu0 %v7182
  %v7391 = vpop.f32.mrb[0].mxu0
  %v7392 = vadd.f32 0.0, %v7391
  %v7393 = vpop.f32.mrb[0].mxu0
  %v7394 = vpop.f32.mrb[0].mxu0
  %v7395 = vadd.f32 0.0, %v7394
  %v7396 = vpop.f32.mrb[0].mxu0
  %7397 = vmatprep.mubr.bf16.mxu0 0
  %7398 = vmatmul.mubr.bf16.gmra.mrb[0].mxu0 %v7185
  %v7399 = vpop.f32.mrb[0].mxu0
  %v7400 = vadd.f32 0.0, %v7399
  %v7401 = vpop.f32.mrb[0].mxu0
  %v7402 = vpop.f32.mrb[0].mxu0
  %v7403 = vadd.f32 0.0, %v7402
  %v7404 = vpop.f32.mrb[0].mxu0
  %7405 = vmatprep.mubr.bf16.mxu0 0
  %7406 = vmatmul.mubr.bf16.gmra.mrb[0].mxu0 %v7188
  %v7407 = vpop.f32.mrb[0].mxu0
  %v7408 = vadd.f32 0.0, %v7407
  %v7409 = vpop.f32.mrb[0].mxu0
  %v7410 = vpop.f32.mrb[0].mxu0
  %v7411 = vadd.f32 0.0, %v7410
  %v7412 = vpop.f32.mrb[0].mxu0
  %7413 = vmatprep.mubr.bf16.mxu0 0
  %7414 = vmatmul.mubr.bf16.gmra.mrb[0].mxu0 %v7191
  %v7415 = vpop.f32.mrb[0].mxu0
  %v7416 = vadd.f32 0.0, %v7415
  %v7417 = vpop.f32.mrb[0].mxu0
  %v7418 = vpop.f32.mrb[0].mxu0
  %v7419 = vadd.f32 0.0, %v7418
  %v7420 = vpop.f32.mrb[0].mxu0
  %7421 = vmatprep.mubr.bf16.mxu0 0
  %7422 = vmatmul.mubr.bf16.gmra.mrb[0].mxu0 %v7194
  %v7423 = vpop.f32.mrb[0].mxu0
  %v7424 = vadd.f32 0.0, %v7423
  %v7425 = vpop.f32.mrb[0].mxu0
  %v7426 = vpop.f32.mrb[0].mxu0
  %v7427 = vadd.f32 0.0, %v7426
  %v7428 = vpop.f32.mrb[0].mxu0
  %7429 = vmatprep.mubr.bf16.mxu0 0
  %7430 = vmatmul.mubr.bf16.gmra.mrb[0].mxu0 %v7197
  %v7431 = vpop.f32.mrb[0].mxu0
  %v7432 = vadd.f32 0.0, %v7431
  %v7433 = vpop.f32.mrb[0].mxu0
  %v7434 = vpop.f32.mrb[0].mxu0
  %v7435 = vadd.f32 0.0, %v7434
  %v7436 = vpop.f32.mrb[0].mxu0
  %7437 = vmatprep.mubr.bf16.mxu0 0
  %7438 = vmatmul.mubr.bf16.gmra.mrb[0].mxu0 %v7200
  %v7439 = vpop.f32.mrb[0].mxu0
  %v7440 = vadd.f32 0.0, %v7439
  %v7441 = vpop.f32.mrb[0].mxu0
  %v7442 = vpop.f32.mrb[0].mxu0
  %v7443 = vadd.f32 0.0, %v7442
  %v7444 = vpop.f32.mrb[0].mxu0
  %7445 = vmatprep.mubr.bf16.mxu0 0
  %7446 = vmatmul.mubr.bf16.gmra.mrb[0].mxu0 %v7203
  %v7447 = vpop.f32.mrb[0].mxu0
  %v7448 = vadd.f32 0.0, %v7447
  %v7449 = vpop.f32.mrb[0].mxu0
  %v7450 = vpop.f32.mrb[0].mxu0
  %v7451 = vadd.f32 0.0, %v7450
  %v7452 = vpop.f32.mrb[0].mxu0
  %7453 = vmatprep.mubr.bf16.mxu0 0
  %7454 = vmatmul.mubr.bf16.gmra.mrb[0].mxu0 %v7206
  %v7455 = vpop.f32.mrb[0].mxu0
  %v7456 = vadd.f32 0.0, %v7455
  %v7457 = vpop.f32.mrb[0].mxu0
  %v7458 = vpop.f32.mrb[0].mxu0
  %v7459 = vadd.f32 0.0, %v7458
  %v7460 = vpop.f32.mrb[0].mxu0
  %7461 = vmatprep.mubr.bf16.mxu0 0
  %7462 = vmatmul.mubr.bf16.gmra.mrb[0].mxu0 %v7209
  %v7463 = vpop.f32.mrb[0].mxu0
  %v7464 = vadd.f32 0.0, %v7463
  %v7465 = vpop.f32.mrb[0].mxu0
  %v7466 = vpop.f32.mrb[0].mxu0
  %v7467 = vadd.f32 0.0, %v7466
  %v7468 = vpop.f32.mrb[0].mxu0
  %7469 = vmatprep.mubr.bf16.mxu0 0
  %7470 = vmatmul.mubr.bf16.gmra.mrb[0].mxu0 %v7212
  %v7471 = vpop.f32.mrb[0].mxu0
  %v7472 = vadd.f32 0.0, %v7471
  %v7473 = vpop.f32.mrb[0].mxu0
  %v7474 = vpop.f32.mrb[0].mxu0
  %v7475 = vadd.f32 0.0, %v7474
  %v7476 = vpop.f32.mrb[0].mxu0
  %7477 = vmatprep.mubr.bf16.mxu0 0
  %7478 = vmatmul.mubr.bf16.gmra.mrb[0].mxu0 %v7215
  %v7479 = vpop.f32.mrb[0].mxu0
  %v7480 = vadd.f32 0.0, %v7479
  %v7481 = vpop.f32.mrb[0].mxu0
  %v7482 = vpop.f32.mrb[0].mxu0
  %v7483 = vadd.f32 0.0, %v7482
  %v7484 = vpop.f32.mrb[0].mxu0
  %7485 = vmatprep.mubr.bf16.mxu0 0
  %7486 = vmatmul.mubr.bf16.gmra.mrb[0].mxu0 %v7218
  %v7487 = vpop.f32.mrb[0].mxu0
  %v7488 = vadd.f32 0.0, %v7487
  %v7489 = vpop.f32.mrb[0].mxu0
  %v7490 = vpop.f32.mrb[0].mxu0
  %v7491 = vadd.f32 0.0, %v7490
  %v7492 = vpop.f32.mrb[0].mxu0
  %7493 = vmatprep.mubr.bf16.mxu0 0
  %7494 = vmatmul.mubr.bf16.gmra.mrb[0].mxu0 %v7221
  %v7495 = vpop.f32.mrb[0].mxu0
  %v7496 = vadd.f32 0.0, %v7495
  %v7497 = vpop.f32.mrb[0].mxu0
  %v7498 = vpop.f32.mrb[0].mxu0
  %v7499 = vadd.f32 0.0, %v7498
  %v7500 = vpop.f32.mrb[0].mxu0
  %7501 = vmatprep.mubr.bf16.mxu0 0
  %7502 = vmatmul.mubr.bf16.gmra.mrb[0].mxu0 %v7224
  %v7503 = vpop.f32.mrb[0].mxu0
  %v7504 = vadd.f32 0.0, %v7503
  %v7505 = vpop.f32.mrb[0].mxu0
  %v7506 = vpop.f32.mrb[0].mxu0
  %v7507 = vadd.f32 0.0, %v7506
  %v7508 = vpop.f32.mrb[0].mxu0
  %7509 = vmatprep.mubr.bf16.mxu0 0
  %7510 = vmatmul.mubr.bf16.gmra.mrb[0].mxu0 %v7227
  %v7511 = vpop.f32.mrb[0].mxu0
  %v7512 = vadd.f32 0.0, %v7511
  %v7513 = vpop.f32.mrb[0].mxu0
  %v7514 = vpop.f32.mrb[0].mxu0
  %v7515 = vadd.f32 0.0, %v7514
  %v7516 = vpop.f32.mrb[0].mxu0
  %7517 = vdwg.mxu0
  %v7518 = vadd.f32 %v6964, %v7264
  %v7519 = vadd.f32 %v6965, %v7267
  %v7520 = vadd.f32 %v6966, %v7272
  %v7521 = vadd.f32 %v6967, %v7275
  %v7522 = vadd.f32 %v6968, %v7280
  %v7523 = vadd.f32 %v6969, %v7283
  %v7524 = vadd.f32 %v6970, %v7288
  %v7525 = vadd.f32 %v6971, %v7291
  %v7526 = vadd.f32 %v6972, %v7296
  %v7527 = vadd.f32 %v6973, %v7299
  %v7528 = vadd.f32 %v6974, %v7304
  %v7529 = vadd.f32 %v6975, %v7307
  %v7530 = vadd.f32 %v6976, %v7312
  %v7531 = vadd.f32 %v6977, %v7315
  %v7532 = vadd.f32 %v6978, %v7320
  %v7533 = vadd.f32 %v6979, %v7323
  %v7534 = vadd.f32 %v6980, %v7328
  %v7535 = vadd.f32 %v6981, %v7331
  %v7536 = vadd.f32 %v6982, %v7336
  %v7537 = vadd.f32 %v6983, %v7339
  %v7538 = vadd.f32 %v6984, %v7344
  %v7539 = vadd.f32 %v6985, %v7347
  %v7540 = vadd.f32 %v6986, %v7352
  %v7541 = vadd.f32 %v6987, %v7355
  %v7542 = vadd.f32 %v6988, %v7360
  %v7543 = vadd.f32 %v6989, %v7363
  %v7544 = vadd.f32 %v6990, %v7368
  %v7545 = vadd.f32 %v6991, %v7371
  %v7546 = vadd.f32 %v6992, %v7376
  %v7547 = vadd.f32 %v6993, %v7379
  %v7548 = vadd.f32 %v6994, %v7384
  %v7549 = vadd.f32 %v6995, %v7387
  %v7550 = vadd.f32 %v6996, %v7392
  %v7551 = vadd.f32 %v6997, %v7395
  %v7552 = vadd.f32 %v6998, %v7400
  %v7553 = vadd.f32 %v6999, %v7403
  %v7554 = vadd.f32 %v7000, %v7408
  %v7555 = vadd.f32 %v7001, %v7411
  %v7556 = vadd.f32 %v7002, %v7416
  %v7557 = vadd.f32 %v7003, %v7419
  %v7558 = vadd.f32 %v7004, %v7424
  %v7559 = vadd.f32 %v7005, %v7427
  %v7560 = vadd.f32 %v7006, %v7432
  %v7561 = vadd.f32 %v7007, %v7435
  %v7562 = vadd.f32 %v7008, %v7440
  %v7563 = vadd.f32 %v7009, %v7443
  %v7564 = vadd.f32 %v7010, %v7448
  %v7565 = vadd.f32 %v7011, %v7451
  %v7566 = vadd.f32 %v7012, %v7456
  %v7567 = vadd.f32 %v7013, %v7459
  %v7568 = vadd.f32 %v7014, %v7464
  %v7569 = vadd.f32 %v7015, %v7467
  %v7570 = vadd.f32 %v7016, %v7472
  %v7571 = vadd.f32 %v7017, %v7475
  %v7572 = vadd.f32 %v7018, %v7480
  %v7573 = vadd.f32 %v7019, %v7483
  %v7574 = vadd.f32 %v7020, %v7488
  %v7575 = vadd.f32 %v7021, %v7491
  %v7576 = vadd.f32 %v7022, %v7496
  %v7577 = vadd.f32 %v7023, %v7499
  %v7578 = vadd.f32 %v7024, %v7504
  %v7579 = vadd.f32 %v7025, %v7507
  %v7580 = vadd.f32 %v7026, %v7512
  %v7581 = vadd.f32 %v7027, %v7515
  %v7582 = vld [vmem:[%s7028 + $0x1] sm:$0xff]
  %v7583 = vld [vmem:[%s7028 + $0x9] sm:$0xff]
  %v7584 = vld [vmem:[%s7028 + $0x19] sm:$0xff]
  %v7585 = vld [vmem:[%s7028 + $0x21] sm:$0xff]
  %v7586 = vld [vmem:[%s7028 + $0x31] sm:$0xff]
  %v7587 = vld [vmem:[%s7028 + $0x39] sm:$0xff]
  %v7588 = vld [vmem:[%s7028 + $0x49] sm:$0xff]
  %v7589 = vld [vmem:[%s7028 + $0x51] sm:$0xff]
  %v7590 = vld [vmem:[%s7028 + $0x61] sm:$0xff]
  %v7591 = vld [vmem:[%s7028 + $0x69] sm:$0xff]
  %v7592 = vld [vmem:[%s7028 + $0x79] sm:$0xff]
  %v7593 = vld [vmem:[%s7028 + $0x81] sm:$0xff]
  %v7594 = vld [vmem:[%s7028 + $0x91] sm:$0xff]
  %v7595 = vld [vmem:[%s7028 + $0x99] sm:$0xff]
  %v7596 = vld [vmem:[%s7028 + $0xa9] sm:$0xff]
  %v7597 = vld [vmem:[%s7028 + $0xb1] sm:$0xff]
  %v7598 = vld [vmem:[%s7028 + $0xc1] sm:$0xff]
  %v7599 = vld [vmem:[%s7028 + $0xc9] sm:$0xff]
  %v7600 = vld [vmem:[%s7028 + $0xd9] sm:$0xff]
  %v7601 = vld [vmem:[%s7028 + $0xe1] sm:$0xff]
  %v7602 = vld [vmem:[%s7028 + $0xf1] sm:$0xff]
  %v7603 = vld [vmem:[%s7028 + $0xf9] sm:$0xff]
  %v7604 = vld [vmem:[%s7028 + $0x109] sm:$0xff]
  %v7605 = vld [vmem:[%s7028 + $0x111] sm:$0xff]
  %v7606 = vld [vmem:[%s7028 + $0x121] sm:$0xff]
  %v7607 = vld [vmem:[%s7028 + $0x129] sm:$0xff]
  %v7608 = vld [vmem:[%s7028 + $0x139] sm:$0xff]
  %v7609 = vld [vmem:[%s7028 + $0x141] sm:$0xff]
  %v7610 = vld [vmem:[%s7028 + $0x151] sm:$0xff]
  %v7611 = vld [vmem:[%s7028 + $0x159] sm:$0xff]
  %v7612 = vld [vmem:[%s7028 + $0x169] sm:$0xff]
  %v7613 = vld [vmem:[%s7028 + $0x171] sm:$0xff]
  %v7614 = vld [vmem:[%s7028 + $0x1b1] sm:$0xff]
  %v7615 = vld [vmem:[%s7028 + $0x1b9] sm:$0xff]
  %v7616 = vld [vmem:[%s7028 + $0x1c9] sm:$0xff]
  %v7617 = vld [vmem:[%s7028 + $0x1d1] sm:$0xff]
  %v7618 = vld [vmem:[%s7028 + $0x1e1] sm:$0xff]
  %v7619 = vld [vmem:[%s7028 + $0x1e9] sm:$0xff]
  %v7620 = vld [vmem:[%s7028 + $0x1f9] sm:$0xff]
  %v7621 = vld [vmem:[%s7028 + $0x201] sm:$0xff]
  %v7622 = vld [vmem:[%s7028 + $0x211] sm:$0xff]
  %v7623 = vld [vmem:[%s7028 + $0x219] sm:$0xff]
  %v7624 = vld [vmem:[%s7028 + $0x229] sm:$0xff]
  %v7625 = vld [vmem:[%s7028 + $0x231] sm:$0xff]
  %v7626 = vld [vmem:[%s7028 + $0x241] sm:$0xff]
  %v7627 = vld [vmem:[%s7028 + $0x249] sm:$0xff]
  %v7628 = vld [vmem:[%s7028 + $0x259] sm:$0xff]
  %v7629 = vld [vmem:[%s7028 + $0x261] sm:$0xff]
  %v7630 = vld [vmem:[%s7028 + $0x271] sm:$0xff]
  %v7631 = vld [vmem:[%s7028 + $0x279] sm:$0xff]
  %v7632 = vld [vmem:[%s7028 + $0x289] sm:$0xff]
  %v7633 = vld [vmem:[%s7028 + $0x291] sm:$0xff]
  %v7634 = vld [vmem:[%s7028 + $0x2a1] sm:$0xff]
  %v7635 = vld [vmem:[%s7028 + $0x2a9] sm:$0xff]
  %v7636 = vld [vmem:[%s7028 + $0x2b9] sm:$0xff]
  %v7637 = vld [vmem:[%s7028 + $0x2c1] sm:$0xff]
  %v7638 = vld [vmem:[%s7028 + $0x2d1] sm:$0xff]
  %v7639 = vld [vmem:[%s7028 + $0x2d9] sm:$0xff]
  %v7640 = vld [vmem:[%s7028 + $0x2e9] sm:$0xff]
  %v7641 = vld [vmem:[%s7028 + $0x2f1] sm:$0xff]
  %v7642 = vld [vmem:[%s7028 + $0x301] sm:$0xff]
  %v7643 = vld [vmem:[%s7028 + $0x309] sm:$0xff]
  %v7644 = vld [vmem:[%s7028 + $0x319] sm:$0xff]
  %v7645 = vld [vmem:[%s7028 + $0x321] sm:$0xff]
  %v7646 = vpack.c.bf16 %v7583, %v7582
  %v7647 = vpack.c.bf16 %v7585, %v7584
  %v7648 = vpack.c.bf16 %v7587, %v7586
  %v7649 = vpack.c.bf16 %v7589, %v7588
  %v7650 = vpack.c.bf16 %v7591, %v7590
  %v7651 = vpack.c.bf16 %v7593, %v7592
  %v7652 = vpack.c.bf16 %v7595, %v7594
  %v7653 = vpack.c.bf16 %v7597, %v7596
  %v7654 = vpack.c.bf16 %v7599, %v7598
  %v7655 = vpack.c.bf16 %v7601, %v7600
  %v7656 = vpack.c.bf16 %v7603, %v7602
  %v7657 = vpack.c.bf16 %v7605, %v7604
  %v7658 = vpack.c.bf16 %v7607, %v7606
  %v7659 = vpack.c.bf16 %v7609, %v7608
  %v7660 = vpack.c.bf16 %v7611, %v7610
  %v7661 = vpack.c.bf16 %v7613, %v7612
  %v7662 = vpack.c.bf16 %v7615, %v7614
  %v7663 = vpack.c.bf16 %v7617, %v7616
  %v7664 = vpack.c.bf16 %v7619, %v7618
  %v7665 = vpack.c.bf16 %v7621, %v7620
  %v7666 = vpack.c.bf16 %v7623, %v7622
  %v7667 = vpack.c.bf16 %v7625, %v7624
  %v7668 = vpack.c.bf16 %v7627, %v7626
  %v7669 = vpack.c.bf16 %v7629, %v7628
  %v7670 = vpack.c.bf16 %v7631, %v7630
  %v7671 = vpack.c.bf16 %v7633, %v7632
  %v7672 = vpack.c.bf16 %v7635, %v7634
  %v7673 = vpack.c.bf16 %v7637, %v7636
  %v7674 = vpack.c.bf16 %v7639, %v7638
  %v7675 = vpack.c.bf16 %v7641, %v7640
  %v7676 = vpack.c.bf16 %v7643, %v7642
  %v7677 = vpack.c.bf16 %v7645, %v7644
  %v7678 = vld [vmem:[%s11 + $0x38] sm:$0xf]
  %v7679 = vld [vmem:[%s11 + $0x3c] sm:$0xf]
  %v7682 = vunpack.c.l.b16 %v7678
  %v7683 = vunpack.c.l.b16 %v7679
  %v7684 = vpack.c.b16 %v7683, %v7682
  %v7687 = vsel %vm230, %v7646, 0
  %v7690 = vsel %vm230, %v7647, 0
  %v7693 = vsel %vm230, %v7648, 0
  %v7696 = vsel %vm230, %v7649, 0
  %v7699 = vsel %vm230, %v7650, 0
  %v7702 = vsel %vm230, %v7651, 0
  %v7705 = vsel %vm230, %v7652, 0
  %v7708 = vsel %vm230, %v7653, 0
  %v7711 = vsel %vm230, %v7654, 0
  %v7714 = vsel %vm230, %v7655, 0
  %v7717 = vsel %vm230, %v7656, 0
  %v7720 = vsel %vm230, %v7657, 0
  %v7723 = vsel %vm230, %v7658, 0
  %v7726 = vsel %vm230, %v7659, 0
  %v7729 = vsel %vm230, %v7660, 0
  %v7732 = vsel %vm230, %v7661, 0
  %v7735 = vsel %vm230, %v7662, 0
  %v7738 = vsel %vm230, %v7663, 0
  %v7741 = vsel %vm230, %v7664, 0
  %v7744 = vsel %vm230, %v7665, 0
  %v7747 = vsel %vm230, %v7666, 0
  %v7750 = vsel %vm230, %v7667, 0
  %v7753 = vsel %vm230, %v7668, 0
  %v7756 = vsel %vm230, %v7669, 0
  %v7759 = vsel %vm230, %v7670, 0
  %v7762 = vsel %vm230, %v7671, 0
  %v7765 = vsel %vm230, %v7672, 0
  %v7768 = vsel %vm230, %v7673, 0
  %v7771 = vsel %vm230, %v7674, 0
  %v7774 = vsel %vm230, %v7675, 0
  %v7777 = vsel %vm230, %v7676, 0
  %v7780 = vsel %vm230, %v7677, 0
  %7782 = vmatprep.subr.bf16.mxu0 0
  %7783 = vmatpush1.bf16.msra.mxu0 %v7684
  %7784 = vmatprep.subr.bf16.mxu0 0
  %7785 = vmatpush1.bf16.msra.mxu0 0
  %7786 = vmatprep.subr.bf16.mxu0 0
  %7787 = vmatpush1.bf16.msra.mxu0 0
  %7788 = vmatprep.subr.bf16.mxu0 0
  %7789 = vmatpush1.bf16.msra.mxu0 0
  %7790 = vmatprep.subr.bf16.mxu0 0
  %7791 = vmatpush1.bf16.msra.mxu0 0
  %7792 = vmatprep.subr.bf16.mxu0 0
  %7793 = vmatpush1.bf16.msra.mxu0 0
  %7794 = vmatprep.subr.bf16.mxu0 0
  %7795 = vmatpush1.bf16.msra.mxu0 0
  %7796 = vmatprep.subr.bf16.mxu0 0
  %7797 = vmatpush1.bf16.msra.mxu0 0
  %7798 = vmatprep.subr.bf16.mxu0 0
  %7799 = vmatpush1.bf16.msra.mxu0 0
  %7800 = vmatprep.subr.bf16.mxu0 0
  %7801 = vmatpush1.bf16.msra.mxu0 0
  %7802 = vmatprep.subr.bf16.mxu0 0
  %7803 = vmatpush1.bf16.msra.mxu0 0
  %7804 = vmatprep.subr.bf16.mxu0 0
  %7805 = vmatpush1.bf16.msra.mxu0 0
  %7806 = vmatprep.subr.bf16.mxu0 0
  %7807 = vmatpush1.bf16.msra.mxu0 0
  %7808 = vmatprep.subr.bf16.mxu0 0
  %7809 = vmatpush1.bf16.msra.mxu0 0
  %7810 = vmatprep.subr.bf16.mxu0 0
  %7811 = vmatpush1.bf16.msra.mxu0 0
  %7812 = vmatprep.subr.bf16.mxu0 0
  %7813 = vmatpush1.bf16.msra.mxu0 0
  %7814 = vmatprep.mubr.bf16.mxu0 0
  %7815 = vmatmul.mubr.bf16.gmra.mrb[0].mxu0 %v7687
  %v7816 = vpop.f32.mrb[0].mxu0
  %v7817 = vadd.f32 0.0, %v7816
  %v7818 = vpop.f32.mrb[0].mxu0
  %v7819 = vpop.f32.mrb[0].mxu0
  %v7820 = vadd.f32 0.0, %v7819
  %v7821 = vpop.f32.mrb[0].mxu0
  %7822 = vmatprep.mubr.bf16.mxu0 0
  %7823 = vmatmul.mubr.bf16.gmra.mrb[0].mxu0 %v7690
  %v7824 = vpop.f32.mrb[0].mxu0
  %v7825 = vadd.f32 0.0, %v7824
  %v7826 = vpop.f32.mrb[0].mxu0
  %v7827 = vpop.f32.mrb[0].mxu0
  %v7828 = vadd.f32 0.0, %v7827
  %v7829 = vpop.f32.mrb[0].mxu0
  %7830 = vmatprep.mubr.bf16.mxu0 0
  %7831 = vmatmul.mubr.bf16.gmra.mrb[0].mxu0 %v7693
  %v7832 = vpop.f32.mrb[0].mxu0
  %v7833 = vadd.f32 0.0, %v7832
  %v7834 = vpop.f32.mrb[0].mxu0
  %v7835 = vpop.f32.mrb[0].mxu0
  %v7836 = vadd.f32 0.0, %v7835
  %v7837 = vpop.f32.mrb[0].mxu0
  %7838 = vmatprep.mubr.bf16.mxu0 0
  %7839 = vmatmul.mubr.bf16.gmra.mrb[0].mxu0 %v7696
  %v7840 = vpop.f32.mrb[0].mxu0
  %v7841 = vadd.f32 0.0, %v7840
  %v7842 = vpop.f32.mrb[0].mxu0
  %v7843 = vpop.f32.mrb[0].mxu0
  %v7844 = vadd.f32 0.0, %v7843
  %v7845 = vpop.f32.mrb[0].mxu0
  %7846 = vmatprep.mubr.bf16.mxu0 0
  %7847 = vmatmul.mubr.bf16.gmra.mrb[0].mxu0 %v7699
  %v7848 = vpop.f32.mrb[0].mxu0
  %v7849 = vadd.f32 0.0, %v7848
  %v7850 = vpop.f32.mrb[0].mxu0
  %v7851 = vpop.f32.mrb[0].mxu0
  %v7852 = vadd.f32 0.0, %v7851
  %v7853 = vpop.f32.mrb[0].mxu0
  %7854 = vmatprep.mubr.bf16.mxu0 0
  %7855 = vmatmul.mubr.bf16.gmra.mrb[0].mxu0 %v7702
  %v7856 = vpop.f32.mrb[0].mxu0
  %v7857 = vadd.f32 0.0, %v7856
  %v7858 = vpop.f32.mrb[0].mxu0
  %v7859 = vpop.f32.mrb[0].mxu0
  %v7860 = vadd.f32 0.0, %v7859
  %v7861 = vpop.f32.mrb[0].mxu0
  %7862 = vmatprep.mubr.bf16.mxu0 0
  %7863 = vmatmul.mubr.bf16.gmra.mrb[0].mxu0 %v7705
  %v7864 = vpop.f32.mrb[0].mxu0
  %v7865 = vadd.f32 0.0, %v7864
  %v7866 = vpop.f32.mrb[0].mxu0
  %v7867 = vpop.f32.mrb[0].mxu0
  %v7868 = vadd.f32 0.0, %v7867
  %v7869 = vpop.f32.mrb[0].mxu0
  %7870 = vmatprep.mubr.bf16.mxu0 0
  %7871 = vmatmul.mubr.bf16.gmra.mrb[0].mxu0 %v7708
  %v7872 = vpop.f32.mrb[0].mxu0
  %v7873 = vadd.f32 0.0, %v7872
  %v7874 = vpop.f32.mrb[0].mxu0
  %v7875 = vpop.f32.mrb[0].mxu0
  %v7876 = vadd.f32 0.0, %v7875
  %v7877 = vpop.f32.mrb[0].mxu0
  %7878 = vmatprep.mubr.bf16.mxu0 0
  %7879 = vmatmul.mubr.bf16.gmra.mrb[0].mxu0 %v7711
  %v7880 = vpop.f32.mrb[0].mxu0
  %v7881 = vadd.f32 0.0, %v7880
  %v7882 = vpop.f32.mrb[0].mxu0
  %v7883 = vpop.f32.mrb[0].mxu0
  %v7884 = vadd.f32 0.0, %v7883
  %v7885 = vpop.f32.mrb[0].mxu0
  %7886 = vmatprep.mubr.bf16.mxu0 0
  %7887 = vmatmul.mubr.bf16.gmra.mrb[0].mxu0 %v7714
  %v7888 = vpop.f32.mrb[0].mxu0
  %v7889 = vadd.f32 0.0, %v7888
  %v7890 = vpop.f32.mrb[0].mxu0
  %v7891 = vpop.f32.mrb[0].mxu0
  %v7892 = vadd.f32 0.0, %v7891
  %v7893 = vpop.f32.mrb[0].mxu0
  %7894 = vmatprep.mubr.bf16.mxu0 0
  %7895 = vmatmul.mubr.bf16.gmra.mrb[0].mxu0 %v7717
  %v7896 = vpop.f32.mrb[0].mxu0
  %v7897 = vadd.f32 0.0, %v7896
  %v7898 = vpop.f32.mrb[0].mxu0
  %v7899 = vpop.f32.mrb[0].mxu0
  %v7900 = vadd.f32 0.0, %v7899
  %v7901 = vpop.f32.mrb[0].mxu0
  %7902 = vmatprep.mubr.bf16.mxu0 0
  %7903 = vmatmul.mubr.bf16.gmra.mrb[0].mxu0 %v7720
  %v7904 = vpop.f32.mrb[0].mxu0
  %v7905 = vadd.f32 0.0, %v7904
  %v7906 = vpop.f32.mrb[0].mxu0
  %v7907 = vpop.f32.mrb[0].mxu0
  %v7908 = vadd.f32 0.0, %v7907
  %v7909 = vpop.f32.mrb[0].mxu0
  %7910 = vmatprep.mubr.bf16.mxu0 0
  %7911 = vmatmul.mubr.bf16.gmra.mrb[0].mxu0 %v7723
  %v7912 = vpop.f32.mrb[0].mxu0
  %v7913 = vadd.f32 0.0, %v7912
  %v7914 = vpop.f32.mrb[0].mxu0
  %v7915 = vpop.f32.mrb[0].mxu0
  %v7916 = vadd.f32 0.0, %v7915
  %v7917 = vpop.f32.mrb[0].mxu0
  %7918 = vmatprep.mubr.bf16.mxu0 0
  %7919 = vmatmul.mubr.bf16.gmra.mrb[0].mxu0 %v7726
  %v7920 = vpop.f32.mrb[0].mxu0
  %v7921 = vadd.f32 0.0, %v7920
  %v7922 = vpop.f32.mrb[0].mxu0
  %v7923 = vpop.f32.mrb[0].mxu0
  %v7924 = vadd.f32 0.0, %v7923
  %v7925 = vpop.f32.mrb[0].mxu0
  %7926 = vmatprep.mubr.bf16.mxu0 0
  %7927 = vmatmul.mubr.bf16.gmra.mrb[0].mxu0 %v7729
  %v7928 = vpop.f32.mrb[0].mxu0
  %v7929 = vadd.f32 0.0, %v7928
  %v7930 = vpop.f32.mrb[0].mxu0
  %v7931 = vpop.f32.mrb[0].mxu0
  %v7932 = vadd.f32 0.0, %v7931
  %v7933 = vpop.f32.mrb[0].mxu0
  %7934 = vmatprep.mubr.bf16.mxu0 0
  %7935 = vmatmul.mubr.bf16.gmra.mrb[0].mxu0 %v7732
  %v7936 = vpop.f32.mrb[0].mxu0
  %v7937 = vadd.f32 0.0, %v7936
  %v7938 = vpop.f32.mrb[0].mxu0
  %v7939 = vpop.f32.mrb[0].mxu0
  %v7940 = vadd.f32 0.0, %v7939
  %v7941 = vpop.f32.mrb[0].mxu0
  %7942 = vmatprep.mubr.bf16.mxu0 0
  %7943 = vmatmul.mubr.bf16.gmra.mrb[0].mxu0 %v7735
  %v7944 = vpop.f32.mrb[0].mxu0
  %v7945 = vadd.f32 0.0, %v7944
  %v7946 = vpop.f32.mrb[0].mxu0
  %v7947 = vpop.f32.mrb[0].mxu0
  %v7948 = vadd.f32 0.0, %v7947
  %v7949 = vpop.f32.mrb[0].mxu0
  %7950 = vmatprep.mubr.bf16.mxu0 0
  %7951 = vmatmul.mubr.bf16.gmra.mrb[0].mxu0 %v7738
  %v7952 = vpop.f32.mrb[0].mxu0
  %v7953 = vadd.f32 0.0, %v7952
  %v7954 = vpop.f32.mrb[0].mxu0
  %v7955 = vpop.f32.mrb[0].mxu0
  %v7956 = vadd.f32 0.0, %v7955
  %v7957 = vpop.f32.mrb[0].mxu0
  %7958 = vmatprep.mubr.bf16.mxu0 0
  %7959 = vmatmul.mubr.bf16.gmra.mrb[0].mxu0 %v7741
  %v7960 = vpop.f32.mrb[0].mxu0
  %v7961 = vadd.f32 0.0, %v7960
  %v7962 = vpop.f32.mrb[0].mxu0
  %v7963 = vpop.f32.mrb[0].mxu0
  %v7964 = vadd.f32 0.0, %v7963
  %v7965 = vpop.f32.mrb[0].mxu0
  %7966 = vmatprep.mubr.bf16.mxu0 0
  %7967 = vmatmul.mubr.bf16.gmra.mrb[0].mxu0 %v7744
  %v7968 = vpop.f32.mrb[0].mxu0
  %v7969 = vadd.f32 0.0, %v7968
  %v7970 = vpop.f32.mrb[0].mxu0
  %v7971 = vpop.f32.mrb[0].mxu0
  %v7972 = vadd.f32 0.0, %v7971
  %v7973 = vpop.f32.mrb[0].mxu0
  %7974 = vmatprep.mubr.bf16.mxu0 0
  %7975 = vmatmul.mubr.bf16.gmra.mrb[0].mxu0 %v7747
  %v7976 = vpop.f32.mrb[0].mxu0
  %v7977 = vadd.f32 0.0, %v7976
  %v7978 = vpop.f32.mrb[0].mxu0
  %v7979 = vpop.f32.mrb[0].mxu0
  %v7980 = vadd.f32 0.0, %v7979
  %v7981 = vpop.f32.mrb[0].mxu0
  %7982 = vmatprep.mubr.bf16.mxu0 0
  %7983 = vmatmul.mubr.bf16.gmra.mrb[0].mxu0 %v7750
  %v7984 = vpop.f32.mrb[0].mxu0
  %v7985 = vadd.f32 0.0, %v7984
  %v7986 = vpop.f32.mrb[0].mxu0
  %v7987 = vpop.f32.mrb[0].mxu0
  %v7988 = vadd.f32 0.0, %v7987
  %v7989 = vpop.f32.mrb[0].mxu0
  %7990 = vmatprep.mubr.bf16.mxu0 0
  %7991 = vmatmul.mubr.bf16.gmra.mrb[0].mxu0 %v7753
  %v7992 = vpop.f32.mrb[0].mxu0
  %v7993 = vadd.f32 0.0, %v7992
  %v7994 = vpop.f32.mrb[0].mxu0
  %v7995 = vpop.f32.mrb[0].mxu0
  %v7996 = vadd.f32 0.0, %v7995
  %v7997 = vpop.f32.mrb[0].mxu0
  %7998 = vmatprep.mubr.bf16.mxu0 0
  %7999 = vmatmul.mubr.bf16.gmra.mrb[0].mxu0 %v7756
  %v8000 = vpop.f32.mrb[0].mxu0
  %v8001 = vadd.f32 0.0, %v8000
  %v8002 = vpop.f32.mrb[0].mxu0
  %v8003 = vpop.f32.mrb[0].mxu0
  %v8004 = vadd.f32 0.0, %v8003
  %v8005 = vpop.f32.mrb[0].mxu0
  %8006 = vmatprep.mubr.bf16.mxu0 0
  %8007 = vmatmul.mubr.bf16.gmra.mrb[0].mxu0 %v7759
  %v8008 = vpop.f32.mrb[0].mxu0
  %v8009 = vadd.f32 0.0, %v8008
  %v8010 = vpop.f32.mrb[0].mxu0
  %v8011 = vpop.f32.mrb[0].mxu0
  %v8012 = vadd.f32 0.0, %v8011
  %v8013 = vpop.f32.mrb[0].mxu0
  %8014 = vmatprep.mubr.bf16.mxu0 0
  %8015 = vmatmul.mubr.bf16.gmra.mrb[0].mxu0 %v7762
  %v8016 = vpop.f32.mrb[0].mxu0
  %v8017 = vadd.f32 0.0, %v8016
  %v8018 = vpop.f32.mrb[0].mxu0
  %v8019 = vpop.f32.mrb[0].mxu0
  %v8020 = vadd.f32 0.0, %v8019
  %v8021 = vpop.f32.mrb[0].mxu0
  %8022 = vmatprep.mubr.bf16.mxu0 0
  %8023 = vmatmul.mubr.bf16.gmra.mrb[0].mxu0 %v7765
  %v8024 = vpop.f32.mrb[0].mxu0
  %v8025 = vadd.f32 0.0, %v8024
  %v8026 = vpop.f32.mrb[0].mxu0
  %v8027 = vpop.f32.mrb[0].mxu0
  %v8028 = vadd.f32 0.0, %v8027
  %v8029 = vpop.f32.mrb[0].mxu0
  %8030 = vmatprep.mubr.bf16.mxu0 0
  %8031 = vmatmul.mubr.bf16.gmra.mrb[0].mxu0 %v7768
  %v8032 = vpop.f32.mrb[0].mxu0
  %v8033 = vadd.f32 0.0, %v8032
  %v8034 = vpop.f32.mrb[0].mxu0
  %v8035 = vpop.f32.mrb[0].mxu0
  %v8036 = vadd.f32 0.0, %v8035
  %v8037 = vpop.f32.mrb[0].mxu0
  %8038 = vmatprep.mubr.bf16.mxu0 0
  %8039 = vmatmul.mubr.bf16.gmra.mrb[0].mxu0 %v7771
  %v8040 = vpop.f32.mrb[0].mxu0
  %v8041 = vadd.f32 0.0, %v8040
  %v8042 = vpop.f32.mrb[0].mxu0
  %v8043 = vpop.f32.mrb[0].mxu0
  %v8044 = vadd.f32 0.0, %v8043
  %v8045 = vpop.f32.mrb[0].mxu0
  %8046 = vmatprep.mubr.bf16.mxu0 0
  %8047 = vmatmul.mubr.bf16.gmra.mrb[0].mxu0 %v7774
  %v8048 = vpop.f32.mrb[0].mxu0
  %v8049 = vadd.f32 0.0, %v8048
  %v8050 = vpop.f32.mrb[0].mxu0
  %v8051 = vpop.f32.mrb[0].mxu0
  %v8052 = vadd.f32 0.0, %v8051
  %v8053 = vpop.f32.mrb[0].mxu0
  %8054 = vmatprep.mubr.bf16.mxu0 0
  %8055 = vmatmul.mubr.bf16.gmra.mrb[0].mxu0 %v7777
  %v8056 = vpop.f32.mrb[0].mxu0
  %v8057 = vadd.f32 0.0, %v8056
  %v8058 = vpop.f32.mrb[0].mxu0
  %v8059 = vpop.f32.mrb[0].mxu0
  %v8060 = vadd.f32 0.0, %v8059
  %v8061 = vpop.f32.mrb[0].mxu0
  %8062 = vmatprep.mubr.bf16.mxu0 0
  %8063 = vmatmul.mubr.bf16.gmra.mrb[0].mxu0 %v7780
  %v8064 = vpop.f32.mrb[0].mxu0
  %v8065 = vadd.f32 0.0, %v8064
  %v8066 = vpop.f32.mrb[0].mxu0
  %v8067 = vpop.f32.mrb[0].mxu0
  %v8068 = vadd.f32 0.0, %v8067
  %v8069 = vpop.f32.mrb[0].mxu0
  %8070 = vdwg.mxu0
  %v8071 = vadd.f32 %v7518, %v7817
  %v8072 = vadd.f32 %v7519, %v7820
  %v8073 = vadd.f32 %v7520, %v7825
  %v8074 = vadd.f32 %v7521, %v7828
  %v8075 = vadd.f32 %v7522, %v7833
  %v8076 = vadd.f32 %v7523, %v7836
  %v8077 = vadd.f32 %v7524, %v7841
  %v8078 = vadd.f32 %v7525, %v7844
  %v8079 = vadd.f32 %v7526, %v7849
  %v8080 = vadd.f32 %v7527, %v7852
  %v8081 = vadd.f32 %v7528, %v7857
  %v8082 = vadd.f32 %v7529, %v7860
  %v8083 = vadd.f32 %v7530, %v7865
  %v8084 = vadd.f32 %v7531, %v7868
  %v8085 = vadd.f32 %v7532, %v7873
  %v8086 = vadd.f32 %v7533, %v7876
  %v8087 = vadd.f32 %v7534, %v7881
  %v8088 = vadd.f32 %v7535, %v7884
  %v8089 = vadd.f32 %v7536, %v7889
  %v8090 = vadd.f32 %v7537, %v7892
  %v8091 = vadd.f32 %v7538, %v7897
  %v8092 = vadd.f32 %v7539, %v7900
  %v8093 = vadd.f32 %v7540, %v7905
  %v8094 = vadd.f32 %v7541, %v7908
  %v8095 = vadd.f32 %v7542, %v7913
  %v8096 = vadd.f32 %v7543, %v7916
  %v8097 = vadd.f32 %v7544, %v7921
  %v8098 = vadd.f32 %v7545, %v7924
  %v8099 = vadd.f32 %v7546, %v7929
  %v8100 = vadd.f32 %v7547, %v7932
  %v8101 = vadd.f32 %v7548, %v7937
  %v8102 = vadd.f32 %v7549, %v7940
  %v8103 = vadd.f32 %v7550, %v7945
  %v8104 = vadd.f32 %v7551, %v7948
  %v8105 = vadd.f32 %v7552, %v7953
  %v8106 = vadd.f32 %v7553, %v7956
  %v8107 = vadd.f32 %v7554, %v7961
  %v8108 = vadd.f32 %v7555, %v7964
  %v8109 = vadd.f32 %v7556, %v7969
  %v8110 = vadd.f32 %v7557, %v7972
  %v8111 = vadd.f32 %v7558, %v7977
  %v8112 = vadd.f32 %v7559, %v7980
  %v8113 = vadd.f32 %v7560, %v7985
  %v8114 = vadd.f32 %v7561, %v7988
  %v8115 = vadd.f32 %v7562, %v7993
  %v8116 = vadd.f32 %v7563, %v7996
  %v8117 = vadd.f32 %v7564, %v8001
  %v8118 = vadd.f32 %v7565, %v8004
  %v8119 = vadd.f32 %v7566, %v8009
  %v8120 = vadd.f32 %v7567, %v8012
  %v8121 = vadd.f32 %v7568, %v8017
  %v8122 = vadd.f32 %v7569, %v8020
  %v8123 = vadd.f32 %v7570, %v8025
  %v8124 = vadd.f32 %v7571, %v8028
  %v8125 = vadd.f32 %v7572, %v8033
  %v8126 = vadd.f32 %v7573, %v8036
  %v8127 = vadd.f32 %v7574, %v8041
  %v8128 = vadd.f32 %v7575, %v8044
  %v8129 = vadd.f32 %v7576, %v8049
  %v8130 = vadd.f32 %v7577, %v8052
  %v8131 = vadd.f32 %v7578, %v8057
  %v8132 = vadd.f32 %v7579, %v8060
  %v8133 = vadd.f32 %v7580, %v8065
  %v8134 = vadd.f32 %v7581, %v8068
  %v8135 = vld [vmem:[%s7028 + $0x2] sm:$0xff]
  %v8136 = vld [vmem:[%s7028 + $0xa] sm:$0xff]
  %v8137 = vld [vmem:[%s7028 + $0x1a] sm:$0xff]
  %v8138 = vld [vmem:[%s7028 + $0x22] sm:$0xff]
  %v8139 = vld [vmem:[%s7028 + $0x32] sm:$0xff]
  %v8140 = vld [vmem:[%s7028 + $0x3a] sm:$0xff]
  %v8141 = vld [vmem:[%s7028 + $0x4a] sm:$0xff]
  %v8142 = vld [vmem:[%s7028 + $0x52] sm:$0xff]
  %v8143 = vld [vmem:[%s7028 + $0x62] sm:$0xff]
  %v8144 = vld [vmem:[%s7028 + $0x6a] sm:$0xff]
  %v8145 = vld [vmem:[%s7028 + $0x7a] sm:$0xff]
  %v8146 = vld [vmem:[%s7028 + $0x82] sm:$0xff]
  %v8147 = vld [vmem:[%s7028 + $0x92] sm:$0xff]
  %v8148 = vld [vmem:[%s7028 + $0x9a] sm:$0xff]
  %v8149 = vld [vmem:[%s7028 + $0xaa] sm:$0xff]
  %v8150 = vld [vmem:[%s7028 + $0xb2] sm:$0xff]
  %v8151 = vld [vmem:[%s7028 + $0xc2] sm:$0xff]
  %v8152 = vld [vmem:[%s7028 + $0xca] sm:$0xff]
  %v8153 = vld [vmem:[%s7028 + $0xda] sm:$0xff]
  %v8154 = vld [vmem:[%s7028 + $0xe2] sm:$0xff]
  %v8155 = vld [vmem:[%s7028 + $0xf2] sm:$0xff]
  %v8156 = vld [vmem:[%s7028 + $0xfa] sm:$0xff]
  %v8157 = vld [vmem:[%s7028 + $0x10a] sm:$0xff]
  %v8158 = vld [vmem:[%s7028 + $0x112] sm:$0xff]
  %v8159 = vld [vmem:[%s7028 + $0x122] sm:$0xff]
  %v8160 = vld [vmem:[%s7028 + $0x12a] sm:$0xff]
  %v8161 = vld [vmem:[%s7028 + $0x13a] sm:$0xff]
  %v8162 = vld [vmem:[%s7028 + $0x142] sm:$0xff]
  %v8163 = vld [vmem:[%s7028 + $0x152] sm:$0xff]
  %v8164 = vld [vmem:[%s7028 + $0x15a] sm:$0xff]
  %v8165 = vld [vmem:[%s7028 + $0x16a] sm:$0xff]
  %v8166 = vld [vmem:[%s7028 + $0x172] sm:$0xff]
  %v8167 = vld [vmem:[%s7028 + $0x1b2] sm:$0xff]
  %v8168 = vld [vmem:[%s7028 + $0x1ba] sm:$0xff]
  %v8169 = vld [vmem:[%s7028 + $0x1ca] sm:$0xff]
  %v8170 = vld [vmem:[%s7028 + $0x1d2] sm:$0xff]
  %v8171 = vld [vmem:[%s7028 + $0x1e2] sm:$0xff]
  %v8172 = vld [vmem:[%s7028 + $0x1ea] sm:$0xff]
  %v8173 = vld [vmem:[%s7028 + $0x1fa] sm:$0xff]
  %v8174 = vld [vmem:[%s7028 + $0x202] sm:$0xff]
  %v8175 = vld [vmem:[%s7028 + $0x212] sm:$0xff]
  %v8176 = vld [vmem:[%s7028 + $0x21a] sm:$0xff]
  %v8177 = vld [vmem:[%s7028 + $0x22a] sm:$0xff]
  %v8178 = vld [vmem:[%s7028 + $0x232] sm:$0xff]
  %v8179 = vld [vmem:[%s7028 + $0x242] sm:$0xff]
  %v8180 = vld [vmem:[%s7028 + $0x24a] sm:$0xff]
  %v8181 = vld [vmem:[%s7028 + $0x25a] sm:$0xff]
  %v8182 = vld [vmem:[%s7028 + $0x262] sm:$0xff]
  %v8183 = vld [vmem:[%s7028 + $0x272] sm:$0xff]
  %v8184 = vld [vmem:[%s7028 + $0x27a] sm:$0xff]
  %v8185 = vld [vmem:[%s7028 + $0x28a] sm:$0xff]
  %v8186 = vld [vmem:[%s7028 + $0x292] sm:$0xff]
  %v8187 = vld [vmem:[%s7028 + $0x2a2] sm:$0xff]
  %v8188 = vld [vmem:[%s7028 + $0x2aa] sm:$0xff]
  %v8189 = vld [vmem:[%s7028 + $0x2ba] sm:$0xff]
  %v8190 = vld [vmem:[%s7028 + $0x2c2] sm:$0xff]
  %v8191 = vld [vmem:[%s7028 + $0x2d2] sm:$0xff]
  %v8192 = vld [vmem:[%s7028 + $0x2da] sm:$0xff]
  %v8193 = vld [vmem:[%s7028 + $0x2ea] sm:$0xff]
  %v8194 = vld [vmem:[%s7028 + $0x2f2] sm:$0xff]
  %v8195 = vld [vmem:[%s7028 + $0x302] sm:$0xff]
  %v8196 = vld [vmem:[%s7028 + $0x30a] sm:$0xff]
  %v8197 = vld [vmem:[%s7028 + $0x31a] sm:$0xff]
  %v8198 = vld [vmem:[%s7028 + $0x322] sm:$0xff]
  %v8199 = vpack.c.bf16 %v8136, %v8135
  %v8200 = vpack.c.bf16 %v8138, %v8137
  %v8201 = vpack.c.bf16 %v8140, %v8139
  %v8202 = vpack.c.bf16 %v8142, %v8141
  %v8203 = vpack.c.bf16 %v8144, %v8143
  %v8204 = vpack.c.bf16 %v8146, %v8145
  %v8205 = vpack.c.bf16 %v8148, %v8147
  %v8206 = vpack.c.bf16 %v8150, %v8149
  %v8207 = vpack.c.bf16 %v8152, %v8151
  %v8208 = vpack.c.bf16 %v8154, %v8153
  %v8209 = vpack.c.bf16 %v8156, %v8155
  %v8210 = vpack.c.bf16 %v8158, %v8157
  %v8211 = vpack.c.bf16 %v8160, %v8159
  %v8212 = vpack.c.bf16 %v8162, %v8161
  %v8213 = vpack.c.bf16 %v8164, %v8163
  %v8214 = vpack.c.bf16 %v8166, %v8165
  %v8215 = vpack.c.bf16 %v8168, %v8167
  %v8216 = vpack.c.bf16 %v8170, %v8169
  %v8217 = vpack.c.bf16 %v8172, %v8171
  %v8218 = vpack.c.bf16 %v8174, %v8173
  %v8219 = vpack.c.bf16 %v8176, %v8175
  %v8220 = vpack.c.bf16 %v8178, %v8177
  %v8221 = vpack.c.bf16 %v8180, %v8179
  %v8222 = vpack.c.bf16 %v8182, %v8181
  %v8223 = vpack.c.bf16 %v8184, %v8183
  %v8224 = vpack.c.bf16 %v8186, %v8185
  %v8225 = vpack.c.bf16 %v8188, %v8187
  %v8226 = vpack.c.bf16 %v8190, %v8189
  %v8227 = vpack.c.bf16 %v8192, %v8191
  %v8228 = vpack.c.bf16 %v8194, %v8193
  %v8229 = vpack.c.bf16 %v8196, %v8195
  %v8230 = vpack.c.bf16 %v8198, %v8197
  %v8231 = vld [vmem:[%s11 + $0x40] sm:$0xf]
  %v8232 = vld [vmem:[%s11 + $0x44] sm:$0xf]
  %v8235 = vunpack.c.l.b16 %v8231
  %v8236 = vunpack.c.l.b16 %v8232
  %v8237 = vpack.c.b16 %v8236, %v8235
  %v8240 = vsel %vm230, %v8199, 0
  %v8243 = vsel %vm230, %v8200, 0
  %v8246 = vsel %vm230, %v8201, 0
  %v8249 = vsel %vm230, %v8202, 0
  %v8252 = vsel %vm230, %v8203, 0
  %v8255 = vsel %vm230, %v8204, 0
  %v8258 = vsel %vm230, %v8205, 0
  %v8261 = vsel %vm230, %v8206, 0
  %v8264 = vsel %vm230, %v8207, 0
  %v8267 = vsel %vm230, %v8208, 0
  %v8270 = vsel %vm230, %v8209, 0
  %v8273 = vsel %vm230, %v8210, 0
  %v8276 = vsel %vm230, %v8211, 0
  %v8279 = vsel %vm230, %v8212, 0
  %v8282 = vsel %vm230, %v8213, 0
  %v8285 = vsel %vm230, %v8214, 0
  %v8288 = vsel %vm230, %v8215, 0
  %v8291 = vsel %vm230, %v8216, 0
  %v8294 = vsel %vm230, %v8217, 0
  %v8297 = vsel %vm230, %v8218, 0
  %v8300 = vsel %vm230, %v8219, 0
  %v8303 = vsel %vm230, %v8220, 0
  %v8306 = vsel %vm230, %v8221, 0
  %v8309 = vsel %vm230, %v8222, 0
  %v8312 = vsel %vm230, %v8223, 0
  %v8315 = vsel %vm230, %v8224, 0
  %v8318 = vsel %vm230, %v8225, 0
  %v8321 = vsel %vm230, %v8226, 0
  %v8324 = vsel %vm230, %v8227, 0
  %v8327 = vsel %vm230, %v8228, 0
  %v8330 = vsel %vm230, %v8229, 0
  %v8333 = vsel %vm230, %v8230, 0
  %8335 = vmatprep.subr.bf16.mxu0 0
  %8336 = vmatpush1.bf16.msra.mxu0 %v8237
  %8337 = vmatprep.subr.bf16.mxu0 0
  %8338 = vmatpush1.bf16.msra.mxu0 0
  %8339 = vmatprep.subr.bf16.mxu0 0
  %8340 = vmatpush1.bf16.msra.mxu0 0
  %8341 = vmatprep.subr.bf16.mxu0 0
  %8342 = vmatpush1.bf16.msra.mxu0 0
  %8343 = vmatprep.subr.bf16.mxu0 0
  %8344 = vmatpush1.bf16.msra.mxu0 0
  %8345 = vmatprep.subr.bf16.mxu0 0
  %8346 = vmatpush1.bf16.msra.mxu0 0
  %8347 = vmatprep.subr.bf16.mxu0 0
  %8348 = vmatpush1.bf16.msra.mxu0 0
  %8349 = vmatprep.subr.bf16.mxu0 0
  %8350 = vmatpush1.bf16.msra.mxu0 0
  %8351 = vmatprep.subr.bf16.mxu0 0
  %8352 = vmatpush1.bf16.msra.mxu0 0
  %8353 = vmatprep.subr.bf16.mxu0 0
  %8354 = vmatpush1.bf16.msra.mxu0 0
  %8355 = vmatprep.subr.bf16.mxu0 0
  %8356 = vmatpush1.bf16.msra.mxu0 0
  %8357 = vmatprep.subr.bf16.mxu0 0
  %8358 = vmatpush1.bf16.msra.mxu0 0
  %8359 = vmatprep.subr.bf16.mxu0 0
  %8360 = vmatpush1.bf16.msra.mxu0 0
  %8361 = vmatprep.subr.bf16.mxu0 0
  %8362 = vmatpush1.bf16.msra.mxu0 0
  %8363 = vmatprep.subr.bf16.mxu0 0
  %8364 = vmatpush1.bf16.msra.mxu0 0
  %8365 = vmatprep.subr.bf16.mxu0 0
  %8366 = vmatpush1.bf16.msra.mxu0 0
  %8367 = vmatprep.mubr.bf16.mxu0 0
  %8368 = vmatmul.mubr.bf16.gmra.mrb[0].mxu0 %v8240
  %v8369 = vpop.f32.mrb[0].mxu0
  %v8370 = vadd.f32 0.0, %v8369
  %v8371 = vpop.f32.mrb[0].mxu0
  %v8372 = vpop.f32.mrb[0].mxu0
  %v8373 = vadd.f32 0.0, %v8372
  %v8374 = vpop.f32.mrb[0].mxu0
  %8375 = vmatprep.mubr.bf16.mxu0 0
  %8376 = vmatmul.mubr.bf16.gmra.mrb[0].mxu0 %v8243
  %v8377 = vpop.f32.mrb[0].mxu0
  %v8378 = vadd.f32 0.0, %v8377
  %v8379 = vpop.f32.mrb[0].mxu0
  %v8380 = vpop.f32.mrb[0].mxu0
  %v8381 = vadd.f32 0.0, %v8380
  %v8382 = vpop.f32.mrb[0].mxu0
  %8383 = vmatprep.mubr.bf16.mxu0 0
  %8384 = vmatmul.mubr.bf16.gmra.mrb[0].mxu0 %v8246
  %v8385 = vpop.f32.mrb[0].mxu0
  %v8386 = vadd.f32 0.0, %v8385
  %v8387 = vpop.f32.mrb[0].mxu0
  %v8388 = vpop.f32.mrb[0].mxu0
  %v8389 = vadd.f32 0.0, %v8388
  %v8390 = vpop.f32.mrb[0].mxu0
  %8391 = vmatprep.mubr.bf16.mxu0 0
  %8392 = vmatmul.mubr.bf16.gmra.mrb[0].mxu0 %v8249
  %v8393 = vpop.f32.mrb[0].mxu0
  %v8394 = vadd.f32 0.0, %v8393
  %v8395 = vpop.f32.mrb[0].mxu0
  %v8396 = vpop.f32.mrb[0].mxu0
  %v8397 = vadd.f32 0.0, %v8396
  %v8398 = vpop.f32.mrb[0].mxu0
  %8399 = vmatprep.mubr.bf16.mxu0 0
  %8400 = vmatmul.mubr.bf16.gmra.mrb[0].mxu0 %v8252
  %v8401 = vpop.f32.mrb[0].mxu0
  %v8402 = vadd.f32 0.0, %v8401
  %v8403 = vpop.f32.mrb[0].mxu0
  %v8404 = vpop.f32.mrb[0].mxu0
  %v8405 = vadd.f32 0.0, %v8404
  %v8406 = vpop.f32.mrb[0].mxu0
  %8407 = vmatprep.mubr.bf16.mxu0 0
  %8408 = vmatmul.mubr.bf16.gmra.mrb[0].mxu0 %v8255
  %v8409 = vpop.f32.mrb[0].mxu0
  %v8410 = vadd.f32 0.0, %v8409
  %v8411 = vpop.f32.mrb[0].mxu0
  %v8412 = vpop.f32.mrb[0].mxu0
  %v8413 = vadd.f32 0.0, %v8412
  %v8414 = vpop.f32.mrb[0].mxu0
  %8415 = vmatprep.mubr.bf16.mxu0 0
  %8416 = vmatmul.mubr.bf16.gmra.mrb[0].mxu0 %v8258
  %v8417 = vpop.f32.mrb[0].mxu0
  %v8418 = vadd.f32 0.0, %v8417
  %v8419 = vpop.f32.mrb[0].mxu0
  %v8420 = vpop.f32.mrb[0].mxu0
  %v8421 = vadd.f32 0.0, %v8420
  %v8422 = vpop.f32.mrb[0].mxu0
  %8423 = vmatprep.mubr.bf16.mxu0 0
  %8424 = vmatmul.mubr.bf16.gmra.mrb[0].mxu0 %v8261
  %v8425 = vpop.f32.mrb[0].mxu0
  %v8426 = vadd.f32 0.0, %v8425
  %v8427 = vpop.f32.mrb[0].mxu0
  %v8428 = vpop.f32.mrb[0].mxu0
  %v8429 = vadd.f32 0.0, %v8428
  %v8430 = vpop.f32.mrb[0].mxu0
  %8431 = vmatprep.mubr.bf16.mxu0 0
  %8432 = vmatmul.mubr.bf16.gmra.mrb[0].mxu0 %v8264
  %v8433 = vpop.f32.mrb[0].mxu0
  %v8434 = vadd.f32 0.0, %v8433
  %v8435 = vpop.f32.mrb[0].mxu0
  %v8436 = vpop.f32.mrb[0].mxu0
  %v8437 = vadd.f32 0.0, %v8436
  %v8438 = vpop.f32.mrb[0].mxu0
  %8439 = vmatprep.mubr.bf16.mxu0 0
  %8440 = vmatmul.mubr.bf16.gmra.mrb[0].mxu0 %v8267
  %v8441 = vpop.f32.mrb[0].mxu0
  %v8442 = vadd.f32 0.0, %v8441
  %v8443 = vpop.f32.mrb[0].mxu0
  %v8444 = vpop.f32.mrb[0].mxu0
  %v8445 = vadd.f32 0.0, %v8444
  %v8446 = vpop.f32.mrb[0].mxu0
  %8447 = vmatprep.mubr.bf16.mxu0 0
  %8448 = vmatmul.mubr.bf16.gmra.mrb[0].mxu0 %v8270
  %v8449 = vpop.f32.mrb[0].mxu0
  %v8450 = vadd.f32 0.0, %v8449
  %v8451 = vpop.f32.mrb[0].mxu0
  %v8452 = vpop.f32.mrb[0].mxu0
  %v8453 = vadd.f32 0.0, %v8452
  %v8454 = vpop.f32.mrb[0].mxu0
  %8455 = vmatprep.mubr.bf16.mxu0 0
  %8456 = vmatmul.mubr.bf16.gmra.mrb[0].mxu0 %v8273
  %v8457 = vpop.f32.mrb[0].mxu0
  %v8458 = vadd.f32 0.0, %v8457
  %v8459 = vpop.f32.mrb[0].mxu0
  %v8460 = vpop.f32.mrb[0].mxu0
  %v8461 = vadd.f32 0.0, %v8460
  %v8462 = vpop.f32.mrb[0].mxu0
  %8463 = vmatprep.mubr.bf16.mxu0 0
  %8464 = vmatmul.mubr.bf16.gmra.mrb[0].mxu0 %v8276
  %v8465 = vpop.f32.mrb[0].mxu0
  %v8466 = vadd.f32 0.0, %v8465
  %v8467 = vpop.f32.mrb[0].mxu0
  %v8468 = vpop.f32.mrb[0].mxu0
  %v8469 = vadd.f32 0.0, %v8468
  %v8470 = vpop.f32.mrb[0].mxu0
  %8471 = vmatprep.mubr.bf16.mxu0 0
  %8472 = vmatmul.mubr.bf16.gmra.mrb[0].mxu0 %v8279
  %v8473 = vpop.f32.mrb[0].mxu0
  %v8474 = vadd.f32 0.0, %v8473
  %v8475 = vpop.f32.mrb[0].mxu0
  %v8476 = vpop.f32.mrb[0].mxu0
  %v8477 = vadd.f32 0.0, %v8476
  %v8478 = vpop.f32.mrb[0].mxu0
  %8479 = vmatprep.mubr.bf16.mxu0 0
  %8480 = vmatmul.mubr.bf16.gmra.mrb[0].mxu0 %v8282
  %v8481 = vpop.f32.mrb[0].mxu0
  %v8482 = vadd.f32 0.0, %v8481
  %v8483 = vpop.f32.mrb[0].mxu0
  %v8484 = vpop.f32.mrb[0].mxu0
  %v8485 = vadd.f32 0.0, %v8484
  %v8486 = vpop.f32.mrb[0].mxu0
  %8487 = vmatprep.mubr.bf16.mxu0 0
  %8488 = vmatmul.mubr.bf16.gmra.mrb[0].mxu0 %v8285
  %v8489 = vpop.f32.mrb[0].mxu0
  %v8490 = vadd.f32 0.0, %v8489
  %v8491 = vpop.f32.mrb[0].mxu0
  %v8492 = vpop.f32.mrb[0].mxu0
  %v8493 = vadd.f32 0.0, %v8492
  %v8494 = vpop.f32.mrb[0].mxu0
  %8495 = vmatprep.mubr.bf16.mxu0 0
  %8496 = vmatmul.mubr.bf16.gmra.mrb[0].mxu0 %v8288
  %v8497 = vpop.f32.mrb[0].mxu0
  %v8498 = vadd.f32 0.0, %v8497
  %v8499 = vpop.f32.mrb[0].mxu0
  %v8500 = vpop.f32.mrb[0].mxu0
  %v8501 = vadd.f32 0.0, %v8500
  %v8502 = vpop.f32.mrb[0].mxu0
  %8503 = vmatprep.mubr.bf16.mxu0 0
  %8504 = vmatmul.mubr.bf16.gmra.mrb[0].mxu0 %v8291
  %v8505 = vpop.f32.mrb[0].mxu0
  %v8506 = vadd.f32 0.0, %v8505
  %v8507 = vpop.f32.mrb[0].mxu0
  %v8508 = vpop.f32.mrb[0].mxu0
  %v8509 = vadd.f32 0.0, %v8508
  %v8510 = vpop.f32.mrb[0].mxu0
  %8511 = vmatprep.mubr.bf16.mxu0 0
  %8512 = vmatmul.mubr.bf16.gmra.mrb[0].mxu0 %v8294
  %v8513 = vpop.f32.mrb[0].mxu0
  %v8514 = vadd.f32 0.0, %v8513
  %v8515 = vpop.f32.mrb[0].mxu0
  %v8516 = vpop.f32.mrb[0].mxu0
  %v8517 = vadd.f32 0.0, %v8516
  %v8518 = vpop.f32.mrb[0].mxu0
  %8519 = vmatprep.mubr.bf16.mxu0 0
  %8520 = vmatmul.mubr.bf16.gmra.mrb[0].mxu0 %v8297
  %v8521 = vpop.f32.mrb[0].mxu0
  %v8522 = vadd.f32 0.0, %v8521
  %v8523 = vpop.f32.mrb[0].mxu0
  %v8524 = vpop.f32.mrb[0].mxu0
  %v8525 = vadd.f32 0.0, %v8524
  %v8526 = vpop.f32.mrb[0].mxu0
  %8527 = vmatprep.mubr.bf16.mxu0 0
  %8528 = vmatmul.mubr.bf16.gmra.mrb[0].mxu0 %v8300
  %v8529 = vpop.f32.mrb[0].mxu0
  %v8530 = vadd.f32 0.0, %v8529
  %v8531 = vpop.f32.mrb[0].mxu0
  %v8532 = vpop.f32.mrb[0].mxu0
  %v8533 = vadd.f32 0.0, %v8532
  %v8534 = vpop.f32.mrb[0].mxu0
  %8535 = vmatprep.mubr.bf16.mxu0 0
  %8536 = vmatmul.mubr.bf16.gmra.mrb[0].mxu0 %v8303
  %v8537 = vpop.f32.mrb[0].mxu0
  %v8538 = vadd.f32 0.0, %v8537
  %v8539 = vpop.f32.mrb[0].mxu0
  %v8540 = vpop.f32.mrb[0].mxu0
  %v8541 = vadd.f32 0.0, %v8540
  %v8542 = vpop.f32.mrb[0].mxu0
  %8543 = vmatprep.mubr.bf16.mxu0 0
  %8544 = vmatmul.mubr.bf16.gmra.mrb[0].mxu0 %v8306
  %v8545 = vpop.f32.mrb[0].mxu0
  %v8546 = vadd.f32 0.0, %v8545
  %v8547 = vpop.f32.mrb[0].mxu0
  %v8548 = vpop.f32.mrb[0].mxu0
  %v8549 = vadd.f32 0.0, %v8548
  %v8550 = vpop.f32.mrb[0].mxu0
  %8551 = vmatprep.mubr.bf16.mxu0 0
  %8552 = vmatmul.mubr.bf16.gmra.mrb[0].mxu0 %v8309
  %v8553 = vpop.f32.mrb[0].mxu0
  %v8554 = vadd.f32 0.0, %v8553
  %v8555 = vpop.f32.mrb[0].mxu0
  %v8556 = vpop.f32.mrb[0].mxu0
  %v8557 = vadd.f32 0.0, %v8556
  %v8558 = vpop.f32.mrb[0].mxu0
  %8559 = vmatprep.mubr.bf16.mxu0 0
  %8560 = vmatmul.mubr.bf16.gmra.mrb[0].mxu0 %v8312
  %v8561 = vpop.f32.mrb[0].mxu0
  %v8562 = vadd.f32 0.0, %v8561
  %v8563 = vpop.f32.mrb[0].mxu0
  %v8564 = vpop.f32.mrb[0].mxu0
  %v8565 = vadd.f32 0.0, %v8564
  %v8566 = vpop.f32.mrb[0].mxu0
  %8567 = vmatprep.mubr.bf16.mxu0 0
  %8568 = vmatmul.mubr.bf16.gmra.mrb[0].mxu0 %v8315
  %v8569 = vpop.f32.mrb[0].mxu0
  %v8570 = vadd.f32 0.0, %v8569
  %v8571 = vpop.f32.mrb[0].mxu0
  %v8572 = vpop.f32.mrb[0].mxu0
  %v8573 = vadd.f32 0.0, %v8572
  %v8574 = vpop.f32.mrb[0].mxu0
  %8575 = vmatprep.mubr.bf16.mxu0 0
  %8576 = vmatmul.mubr.bf16.gmra.mrb[0].mxu0 %v8318
  %v8577 = vpop.f32.mrb[0].mxu0
  %v8578 = vadd.f32 0.0, %v8577
  %v8579 = vpop.f32.mrb[0].mxu0
  %v8580 = vpop.f32.mrb[0].mxu0
  %v8581 = vadd.f32 0.0, %v8580
  %v8582 = vpop.f32.mrb[0].mxu0
  %8583 = vmatprep.mubr.bf16.mxu0 0
  %8584 = vmatmul.mubr.bf16.gmra.mrb[0].mxu0 %v8321
  %v8585 = vpop.f32.mrb[0].mxu0
  %v8586 = vadd.f32 0.0, %v8585
  %v8587 = vpop.f32.mrb[0].mxu0
  %v8588 = vpop.f32.mrb[0].mxu0
  %v8589 = vadd.f32 0.0, %v8588
  %v8590 = vpop.f32.mrb[0].mxu0
  %8591 = vmatprep.mubr.bf16.mxu0 0
  %8592 = vmatmul.mubr.bf16.gmra.mrb[0].mxu0 %v8324
  %v8593 = vpop.f32.mrb[0].mxu0
  %v8594 = vadd.f32 0.0, %v8593
  %v8595 = vpop.f32.mrb[0].mxu0
  %v8596 = vpop.f32.mrb[0].mxu0
  %v8597 = vadd.f32 0.0, %v8596
  %v8598 = vpop.f32.mrb[0].mxu0
  %8599 = vmatprep.mubr.bf16.mxu0 0
  %8600 = vmatmul.mubr.bf16.gmra.mrb[0].mxu0 %v8327
  %v8601 = vpop.f32.mrb[0].mxu0
  %v8602 = vadd.f32 0.0, %v8601
  %v8603 = vpop.f32.mrb[0].mxu0
  %v8604 = vpop.f32.mrb[0].mxu0
  %v8605 = vadd.f32 0.0, %v8604
  %v8606 = vpop.f32.mrb[0].mxu0
  %8607 = vmatprep.mubr.bf16.mxu0 0
  %8608 = vmatmul.mubr.bf16.gmra.mrb[0].mxu0 %v8330
  %v8609 = vpop.f32.mrb[0].mxu0
  %v8610 = vadd.f32 0.0, %v8609
  %v8611 = vpop.f32.mrb[0].mxu0
  %v8612 = vpop.f32.mrb[0].mxu0
  %v8613 = vadd.f32 0.0, %v8612
  %v8614 = vpop.f32.mrb[0].mxu0
  %8615 = vmatprep.mubr.bf16.mxu0 0
  %8616 = vmatmul.mubr.bf16.gmra.mrb[0].mxu0 %v8333
  %v8617 = vpop.f32.mrb[0].mxu0
  %v8618 = vadd.f32 0.0, %v8617
  %v8619 = vpop.f32.mrb[0].mxu0
  %v8620 = vpop.f32.mrb[0].mxu0
  %v8621 = vadd.f32 0.0, %v8620
  %v8622 = vpop.f32.mrb[0].mxu0
  %8623 = vdwg.mxu0
  %v8624 = vadd.f32 %v8071, %v8370
  %v8625 = vadd.f32 %v8072, %v8373
  %v8626 = vadd.f32 %v8073, %v8378
  %v8627 = vadd.f32 %v8074, %v8381
  %v8628 = vadd.f32 %v8075, %v8386
  %v8629 = vadd.f32 %v8076, %v8389
  %v8630 = vadd.f32 %v8077, %v8394
  %v8631 = vadd.f32 %v8078, %v8397
  %v8632 = vadd.f32 %v8079, %v8402
  %v8633 = vadd.f32 %v8080, %v8405
  %v8634 = vadd.f32 %v8081, %v8410
  %v8635 = vadd.f32 %v8082, %v8413
  %v8636 = vadd.f32 %v8083, %v8418
  %v8637 = vadd.f32 %v8084, %v8421
  %v8638 = vadd.f32 %v8085, %v8426
  %v8639 = vadd.f32 %v8086, %v8429
  %v8640 = vadd.f32 %v8087, %v8434
  %v8641 = vadd.f32 %v8088, %v8437
  %v8642 = vadd.f32 %v8089, %v8442
  %v8643 = vadd.f32 %v8090, %v8445
  %v8644 = vadd.f32 %v8091, %v8450
  %v8645 = vadd.f32 %v8092, %v8453
  %v8646 = vadd.f32 %v8093, %v8458
  %v8647 = vadd.f32 %v8094, %v8461
  %v8648 = vadd.f32 %v8095, %v8466
  %v8649 = vadd.f32 %v8096, %v8469
  %v8650 = vadd.f32 %v8097, %v8474
  %v8651 = vadd.f32 %v8098, %v8477
  %v8652 = vadd.f32 %v8099, %v8482
  %v8653 = vadd.f32 %v8100, %v8485
  %v8654 = vadd.f32 %v8101, %v8490
  %v8655 = vadd.f32 %v8102, %v8493
  %v8656 = vadd.f32 %v8103, %v8498
  %v8657 = vadd.f32 %v8104, %v8501
  %v8658 = vadd.f32 %v8105, %v8506
  %v8659 = vadd.f32 %v8106, %v8509
  %v8660 = vadd.f32 %v8107, %v8514
  %v8661 = vadd.f32 %v8108, %v8517
  %v8662 = vadd.f32 %v8109, %v8522
  %v8663 = vadd.f32 %v8110, %v8525
  %v8664 = vadd.f32 %v8111, %v8530
  %v8665 = vadd.f32 %v8112, %v8533
  %v8666 = vadd.f32 %v8113, %v8538
  %v8667 = vadd.f32 %v8114, %v8541
  %v8668 = vadd.f32 %v8115, %v8546
  %v8669 = vadd.f32 %v8116, %v8549
  %v8670 = vadd.f32 %v8117, %v8554
  %v8671 = vadd.f32 %v8118, %v8557
  %v8672 = vadd.f32 %v8119, %v8562
  %v8673 = vadd.f32 %v8120, %v8565
  %v8674 = vadd.f32 %v8121, %v8570
  %v8675 = vadd.f32 %v8122, %v8573
  %v8676 = vadd.f32 %v8123, %v8578
  %v8677 = vadd.f32 %v8124, %v8581
  %v8678 = vadd.f32 %v8125, %v8586
  %v8679 = vadd.f32 %v8126, %v8589
  %v8680 = vadd.f32 %v8127, %v8594
  %v8681 = vadd.f32 %v8128, %v8597
  %v8682 = vadd.f32 %v8129, %v8602
  %v8683 = vadd.f32 %v8130, %v8605
  %v8684 = vadd.f32 %v8131, %v8610
  %v8685 = vadd.f32 %v8132, %v8613
  %v8686 = vadd.f32 %v8133, %v8618
  %v8687 = vadd.f32 %v8134, %v8621
  %v8688 = vld [vmem:[%s12] sm:$0x1]
  %v8690 = vlaneseq
  %v8691 = vshrl.u32 %v8690, 7
  %v8692 = vsub.s32 0, %v8691
  %v8693 = vrot.slane %v8688, %v8692
  %v8695 = vadd.f32 %v8624, %v8693
  %v8696 = vadd.f32 %v8625, %v8693
  %v8697 = vadd.f32 %v8626, %v8693
  %v8698 = vadd.f32 %v8627, %v8693
  %v8699 = vadd.f32 %v8628, %v8693
  %v8700 = vadd.f32 %v8629, %v8693
  %v8701 = vadd.f32 %v8630, %v8693
  %v8702 = vadd.f32 %v8631, %v8693
  %v8703 = vadd.f32 %v8632, %v8693
  %v8704 = vadd.f32 %v8633, %v8693
  %v8705 = vadd.f32 %v8634, %v8693
  %v8706 = vadd.f32 %v8635, %v8693
  %v8707 = vadd.f32 %v8636, %v8693
  %v8708 = vadd.f32 %v8637, %v8693
  %v8709 = vadd.f32 %v8638, %v8693
  %v8710 = vadd.f32 %v8639, %v8693
  %v8711 = vadd.f32 %v8640, %v8693
  %v8712 = vadd.f32 %v8641, %v8693
  %v8713 = vadd.f32 %v8642, %v8693
  %v8714 = vadd.f32 %v8643, %v8693
  %v8715 = vadd.f32 %v8644, %v8693
  %v8716 = vadd.f32 %v8645, %v8693
  %v8717 = vadd.f32 %v8646, %v8693
  %v8718 = vadd.f32 %v8647, %v8693
  %v8719 = vadd.f32 %v8648, %v8693
  %v8720 = vadd.f32 %v8649, %v8693
  %v8721 = vadd.f32 %v8650, %v8693
  %v8722 = vadd.f32 %v8651, %v8693
  %v8723 = vadd.f32 %v8652, %v8693
  %v8724 = vadd.f32 %v8653, %v8693
  %v8725 = vadd.f32 %v8654, %v8693
  %v8726 = vadd.f32 %v8655, %v8693
  %v8727 = vadd.f32 %v8656, %v8693
  %v8728 = vadd.f32 %v8657, %v8693
  %v8729 = vadd.f32 %v8658, %v8693
  %v8730 = vadd.f32 %v8659, %v8693
  %v8731 = vadd.f32 %v8660, %v8693
  %v8732 = vadd.f32 %v8661, %v8693
  %v8733 = vadd.f32 %v8662, %v8693
  %v8734 = vadd.f32 %v8663, %v8693
  %v8735 = vadd.f32 %v8664, %v8693
  %v8736 = vadd.f32 %v8665, %v8693
  %v8737 = vadd.f32 %v8666, %v8693
  %v8738 = vadd.f32 %v8667, %v8693
  %v8739 = vadd.f32 %v8668, %v8693
  %v8740 = vadd.f32 %v8669, %v8693
  %v8741 = vadd.f32 %v8670, %v8693
  %v8742 = vadd.f32 %v8671, %v8693
  %v8743 = vadd.f32 %v8672, %v8693
  %v8744 = vadd.f32 %v8673, %v8693
  %v8745 = vadd.f32 %v8674, %v8693
  %v8746 = vadd.f32 %v8675, %v8693
  %v8747 = vadd.f32 %v8676, %v8693
  %v8748 = vadd.f32 %v8677, %v8693
  %v8749 = vadd.f32 %v8678, %v8693
  %v8750 = vadd.f32 %v8679, %v8693
  %v8751 = vadd.f32 %v8680, %v8693
  %v8752 = vadd.f32 %v8681, %v8693
  %v8753 = vadd.f32 %v8682, %v8693
  %v8754 = vadd.f32 %v8683, %v8693
  %v8755 = vadd.f32 %v8684, %v8693
  %v8756 = vadd.f32 %v8685, %v8693
  %v8757 = vadd.f32 %v8686, %v8693
  %v8758 = vadd.f32 %v8687, %v8693
  %vm8759 = vcmp.ge.f32.partialorder %v8695, 0.0
  %vm8760 = vcmp.ge.f32.partialorder %v8696, 0.0
  %vm8761 = vcmp.ge.f32.partialorder %v8697, 0.0
  %vm8762 = vcmp.ge.f32.partialorder %v8698, 0.0
  %vm8763 = vcmp.ge.f32.partialorder %v8699, 0.0
  %vm8764 = vcmp.ge.f32.partialorder %v8700, 0.0
  %vm8765 = vcmp.ge.f32.partialorder %v8701, 0.0
  %vm8766 = vcmp.ge.f32.partialorder %v8702, 0.0
  %vm8767 = vcmp.ge.f32.partialorder %v8703, 0.0
  %vm8768 = vcmp.ge.f32.partialorder %v8704, 0.0
  %vm8769 = vcmp.ge.f32.partialorder %v8705, 0.0
  %vm8770 = vcmp.ge.f32.partialorder %v8706, 0.0
  %vm8771 = vcmp.ge.f32.partialorder %v8707, 0.0
  %vm8772 = vcmp.ge.f32.partialorder %v8708, 0.0
  %vm8773 = vcmp.ge.f32.partialorder %v8709, 0.0
  %vm8774 = vcmp.ge.f32.partialorder %v8710, 0.0
  %vm8775 = vcmp.ge.f32.partialorder %v8711, 0.0
  %vm8776 = vcmp.ge.f32.partialorder %v8712, 0.0
  %vm8777 = vcmp.ge.f32.partialorder %v8713, 0.0
  %vm8778 = vcmp.ge.f32.partialorder %v8714, 0.0
  %vm8779 = vcmp.ge.f32.partialorder %v8715, 0.0
  %vm8780 = vcmp.ge.f32.partialorder %v8716, 0.0
  %vm8781 = vcmp.ge.f32.partialorder %v8717, 0.0
  %vm8782 = vcmp.ge.f32.partialorder %v8718, 0.0
  %vm8783 = vcmp.ge.f32.partialorder %v8719, 0.0
  %vm8784 = vcmp.ge.f32.partialorder %v8720, 0.0
  %vm8785 = vcmp.ge.f32.partialorder %v8721, 0.0
  %vm8786 = vcmp.ge.f32.partialorder %v8722, 0.0
  %vm8787 = vcmp.ge.f32.partialorder %v8723, 0.0
  %vm8788 = vcmp.ge.f32.partialorder %v8724, 0.0
  %vm8789 = vcmp.ge.f32.partialorder %v8725, 0.0
  %vm8790 = vcmp.ge.f32.partialorder %v8726, 0.0
  %vm8791 = vcmp.ge.f32.partialorder %v8727, 0.0
  %vm8792 = vcmp.ge.f32.partialorder %v8728, 0.0
  %vm8793 = vcmp.ge.f32.partialorder %v8729, 0.0
  %vm8794 = vcmp.ge.f32.partialorder %v8730, 0.0
  %vm8795 = vcmp.ge.f32.partialorder %v8731, 0.0
  %vm8796 = vcmp.ge.f32.partialorder %v8732, 0.0
  %vm8797 = vcmp.ge.f32.partialorder %v8733, 0.0
  %vm8798 = vcmp.ge.f32.partialorder %v8734, 0.0
  %vm8799 = vcmp.ge.f32.partialorder %v8735, 0.0
  %vm8800 = vcmp.ge.f32.partialorder %v8736, 0.0
  %vm8801 = vcmp.ge.f32.partialorder %v8737, 0.0
  %vm8802 = vcmp.ge.f32.partialorder %v8738, 0.0
  %vm8803 = vcmp.ge.f32.partialorder %v8739, 0.0
  %vm8804 = vcmp.ge.f32.partialorder %v8740, 0.0
  %vm8805 = vcmp.ge.f32.partialorder %v8741, 0.0
  %vm8806 = vcmp.ge.f32.partialorder %v8742, 0.0
  %vm8807 = vcmp.ge.f32.partialorder %v8743, 0.0
  %vm8808 = vcmp.ge.f32.partialorder %v8744, 0.0
  %vm8809 = vcmp.ge.f32.partialorder %v8745, 0.0
  %vm8810 = vcmp.ge.f32.partialorder %v8746, 0.0
  %vm8811 = vcmp.ge.f32.partialorder %v8747, 0.0
  %vm8812 = vcmp.ge.f32.partialorder %v8748, 0.0
  %vm8813 = vcmp.ge.f32.partialorder %v8749, 0.0
  %vm8814 = vcmp.ge.f32.partialorder %v8750, 0.0
  %vm8815 = vcmp.ge.f32.partialorder %v8751, 0.0
  %vm8816 = vcmp.ge.f32.partialorder %v8752, 0.0
  %vm8817 = vcmp.ge.f32.partialorder %v8753, 0.0
  %vm8818 = vcmp.ge.f32.partialorder %v8754, 0.0
  %vm8819 = vcmp.ge.f32.partialorder %v8755, 0.0
  %vm8820 = vcmp.ge.f32.partialorder %v8756, 0.0
  %vm8821 = vcmp.ge.f32.partialorder %v8757, 0.0
  %vm8822 = vcmp.ge.f32.partialorder %v8758, 0.0
  %v8823 = vmul.f32 %v8695, 0.1
  %v8824 = vmul.f32 %v8696, 0.1
  %v8825 = vmul.f32 %v8697, 0.1
  %v8826 = vmul.f32 %v8698, 0.1
  %v8827 = vmul.f32 %v8699, 0.1
  %v8828 = vmul.f32 %v8700, 0.1
  %v8829 = vmul.f32 %v8701, 0.1
  %v8830 = vmul.f32 %v8702, 0.1
  %v8831 = vmul.f32 %v8703, 0.1
  %v8832 = vmul.f32 %v8704, 0.1
  %v8833 = vmul.f32 %v8705, 0.1
  %v8834 = vmul.f32 %v8706, 0.1
  %v8835 = vmul.f32 %v8707, 0.1
  %v8836 = vmul.f32 %v8708, 0.1
  %v8837 = vmul.f32 %v8709, 0.1
  %v8838 = vmul.f32 %v8710, 0.1
  %v8839 = vmul.f32 %v8711, 0.1
  %v8840 = vmul.f32 %v8712, 0.1
  %v8841 = vmul.f32 %v8713, 0.1
  %v8842 = vmul.f32 %v8714, 0.1
  %v8843 = vmul.f32 %v8715, 0.1
  %v8844 = vmul.f32 %v8716, 0.1
  %v8845 = vmul.f32 %v8717, 0.1
  %v8846 = vmul.f32 %v8718, 0.1
  %v8847 = vmul.f32 %v8719, 0.1
  %v8848 = vmul.f32 %v8720, 0.1
  %v8849 = vmul.f32 %v8721, 0.1
  %v8850 = vmul.f32 %v8722, 0.1
  %v8851 = vmul.f32 %v8723, 0.1
  %v8852 = vmul.f32 %v8724, 0.1
  %v8853 = vmul.f32 %v8725, 0.1
  %v8854 = vmul.f32 %v8726, 0.1
  %v8855 = vmul.f32 %v8727, 0.1
  %v8856 = vmul.f32 %v8728, 0.1
  %v8857 = vmul.f32 %v8729, 0.1
  %v8858 = vmul.f32 %v8730, 0.1
  %v8859 = vmul.f32 %v8731, 0.1
  %v8860 = vmul.f32 %v8732, 0.1
  %v8861 = vmul.f32 %v8733, 0.1
  %v8862 = vmul.f32 %v8734, 0.1
  %v8863 = vmul.f32 %v8735, 0.1
  %v8864 = vmul.f32 %v8736, 0.1
  %v8865 = vmul.f32 %v8737, 0.1
  %v8866 = vmul.f32 %v8738, 0.1
  %v8867 = vmul.f32 %v8739, 0.1
  %v8868 = vmul.f32 %v8740, 0.1
  %v8869 = vmul.f32 %v8741, 0.1
  %v8870 = vmul.f32 %v8742, 0.1
  %v8871 = vmul.f32 %v8743, 0.1
  %v8872 = vmul.f32 %v8744, 0.1
  %v8873 = vmul.f32 %v8745, 0.1
  %v8874 = vmul.f32 %v8746, 0.1
  %v8875 = vmul.f32 %v8747, 0.1
  %v8876 = vmul.f32 %v8748, 0.1
  %v8877 = vmul.f32 %v8749, 0.1
  %v8878 = vmul.f32 %v8750, 0.1
  %v8879 = vmul.f32 %v8751, 0.1
  %v8880 = vmul.f32 %v8752, 0.1
  %v8881 = vmul.f32 %v8753, 0.1
  %v8882 = vmul.f32 %v8754, 0.1
  %v8883 = vmul.f32 %v8755, 0.1
  %v8884 = vmul.f32 %v8756, 0.1
  %v8885 = vmul.f32 %v8757, 0.1
  %v8886 = vmul.f32 %v8758, 0.1
  %v8887 = vsel %vm8759, %v8695, %v8823
  %v8888 = vsel %vm8760, %v8696, %v8824
  %v8889 = vsel %vm8761, %v8697, %v8825
  %v8890 = vsel %vm8762, %v8698, %v8826
  %v8891 = vsel %vm8763, %v8699, %v8827
  %v8892 = vsel %vm8764, %v8700, %v8828
  %v8893 = vsel %vm8765, %v8701, %v8829
  %v8894 = vsel %vm8766, %v8702, %v8830
  %v8895 = vsel %vm8767, %v8703, %v8831
  %v8896 = vsel %vm8768, %v8704, %v8832
  %v8897 = vsel %vm8769, %v8705, %v8833
  %v8898 = vsel %vm8770, %v8706, %v8834
  %v8899 = vsel %vm8771, %v8707, %v8835
  %v8900 = vsel %vm8772, %v8708, %v8836
  %v8901 = vsel %vm8773, %v8709, %v8837
  %v8902 = vsel %vm8774, %v8710, %v8838
  %v8903 = vsel %vm8775, %v8711, %v8839
  %v8904 = vsel %vm8776, %v8712, %v8840
  %v8905 = vsel %vm8777, %v8713, %v8841
  %v8906 = vsel %vm8778, %v8714, %v8842
  %v8907 = vsel %vm8779, %v8715, %v8843
  %v8908 = vsel %vm8780, %v8716, %v8844
  %v8909 = vsel %vm8781, %v8717, %v8845
  %v8910 = vsel %vm8782, %v8718, %v8846
  %v8911 = vsel %vm8783, %v8719, %v8847
  %v8912 = vsel %vm8784, %v8720, %v8848
  %v8913 = vsel %vm8785, %v8721, %v8849
  %v8914 = vsel %vm8786, %v8722, %v8850
  %v8915 = vsel %vm8787, %v8723, %v8851
  %v8916 = vsel %vm8788, %v8724, %v8852
  %v8917 = vsel %vm8789, %v8725, %v8853
  %v8918 = vsel %vm8790, %v8726, %v8854
  %v8919 = vsel %vm8791, %v8727, %v8855
  %v8920 = vsel %vm8792, %v8728, %v8856
  %v8921 = vsel %vm8793, %v8729, %v8857
  %v8922 = vsel %vm8794, %v8730, %v8858
  %v8923 = vsel %vm8795, %v8731, %v8859
  %v8924 = vsel %vm8796, %v8732, %v8860
  %v8925 = vsel %vm8797, %v8733, %v8861
  %v8926 = vsel %vm8798, %v8734, %v8862
  %v8927 = vsel %vm8799, %v8735, %v8863
  %v8928 = vsel %vm8800, %v8736, %v8864
  %v8929 = vsel %vm8801, %v8737, %v8865
  %v8930 = vsel %vm8802, %v8738, %v8866
  %v8931 = vsel %vm8803, %v8739, %v8867
  %v8932 = vsel %vm8804, %v8740, %v8868
  %v8933 = vsel %vm8805, %v8741, %v8869
  %v8934 = vsel %vm8806, %v8742, %v8870
  %v8935 = vsel %vm8807, %v8743, %v8871
  %v8936 = vsel %vm8808, %v8744, %v8872
  %v8937 = vsel %vm8809, %v8745, %v8873
  %v8938 = vsel %vm8810, %v8746, %v8874
  %v8939 = vsel %vm8811, %v8747, %v8875
  %v8940 = vsel %vm8812, %v8748, %v8876
  %v8941 = vsel %vm8813, %v8749, %v8877
  %v8942 = vsel %vm8814, %v8750, %v8878
  %v8943 = vsel %vm8815, %v8751, %v8879
  %v8944 = vsel %vm8816, %v8752, %v8880
  %v8945 = vsel %vm8817, %v8753, %v8881
  %v8946 = vsel %vm8818, %v8754, %v8882
  %v8947 = vsel %vm8819, %v8755, %v8883
  %v8948 = vsel %vm8820, %v8756, %v8884
  %v8949 = vsel %vm8821, %v8757, %v8885
  %v8950 = vsel %vm8822, %v8758, %v8886
  %8951 = vst.msk [vmem:[%s15] sm:$0xff] %vm230, %v8887
  %8952 = vst.msk [vmem:[%s15 + $0x8] sm:$0xff] %vm230, %v8888
  %8953 = vst.msk [vmem:[%s15 + $0x10] sm:$0xff] %vm230, %v8889
  %8954 = vst.msk [vmem:[%s15 + $0x18] sm:$0xff] %vm230, %v8890
  %8955 = vst.msk [vmem:[%s15 + $0x20] sm:$0xff] %vm230, %v8891
  %8956 = vst.msk [vmem:[%s15 + $0x28] sm:$0xff] %vm230, %v8892
  %8957 = vst.msk [vmem:[%s15 + $0x30] sm:$0xff] %vm230, %v8893
  %8958 = vst.msk [vmem:[%s15 + $0x38] sm:$0xff] %vm230, %v8894
  %8959 = vst.msk [vmem:[%s15 + $0x40] sm:$0xff] %vm230, %v8895
  %8960 = vst.msk [vmem:[%s15 + $0x48] sm:$0xff] %vm230, %v8896
  %8961 = vst.msk [vmem:[%s15 + $0x50] sm:$0xff] %vm230, %v8897
  %8962 = vst.msk [vmem:[%s15 + $0x58] sm:$0xff] %vm230, %v8898
  %8963 = vst.msk [vmem:[%s15 + $0x60] sm:$0xff] %vm230, %v8899
  %8964 = vst.msk [vmem:[%s15 + $0x68] sm:$0xff] %vm230, %v8900
  %8965 = vst.msk [vmem:[%s15 + $0x70] sm:$0xff] %vm230, %v8901
  %8966 = vst.msk [vmem:[%s15 + $0x78] sm:$0xff] %vm230, %v8902
  %8967 = vst.msk [vmem:[%s15 + $0x80] sm:$0xff] %vm230, %v8903
  %8968 = vst.msk [vmem:[%s15 + $0x88] sm:$0xff] %vm230, %v8904
  %8969 = vst.msk [vmem:[%s15 + $0x90] sm:$0xff] %vm230, %v8905
  %8970 = vst.msk [vmem:[%s15 + $0x98] sm:$0xff] %vm230, %v8906
  %8971 = vst.msk [vmem:[%s15 + $0xa0] sm:$0xff] %vm230, %v8907
  %8972 = vst.msk [vmem:[%s15 + $0xa8] sm:$0xff] %vm230, %v8908
  %8973 = vst.msk [vmem:[%s15 + $0xb0] sm:$0xff] %vm230, %v8909
  %8974 = vst.msk [vmem:[%s15 + $0xb8] sm:$0xff] %vm230, %v8910
  %8975 = vst.msk [vmem:[%s15 + $0xc0] sm:$0xff] %vm230, %v8911
  %8976 = vst.msk [vmem:[%s15 + $0xc8] sm:$0xff] %vm230, %v8912
  %8977 = vst.msk [vmem:[%s15 + $0xd0] sm:$0xff] %vm230, %v8913
  %8978 = vst.msk [vmem:[%s15 + $0xd8] sm:$0xff] %vm230, %v8914
  %8979 = vst.msk [vmem:[%s15 + $0xe0] sm:$0xff] %vm230, %v8915
  %8980 = vst.msk [vmem:[%s15 + $0xe8] sm:$0xff] %vm230, %v8916
  %8981 = vst.msk [vmem:[%s15 + $0xf0] sm:$0xff] %vm230, %v8917
  %8982 = vst.msk [vmem:[%s15 + $0xf8] sm:$0xff] %vm230, %v8918
  %8983 = vst.msk [vmem:[%s15 + $0x100] sm:$0xff] %vm230, %v8919
  %8984 = vst.msk [vmem:[%s15 + $0x108] sm:$0xff] %vm230, %v8920
  %8985 = vst.msk [vmem:[%s15 + $0x110] sm:$0xff] %vm230, %v8921
  %8986 = vst.msk [vmem:[%s15 + $0x118] sm:$0xff] %vm230, %v8922
  %8987 = vst.msk [vmem:[%s15 + $0x120] sm:$0xff] %vm230, %v8923
  %8988 = vst.msk [vmem:[%s15 + $0x128] sm:$0xff] %vm230, %v8924
  %8989 = vst.msk [vmem:[%s15 + $0x130] sm:$0xff] %vm230, %v8925
  %8990 = vst.msk [vmem:[%s15 + $0x138] sm:$0xff] %vm230, %v8926
  %8991 = vst.msk [vmem:[%s15 + $0x140] sm:$0xff] %vm230, %v8927
  %8992 = vst.msk [vmem:[%s15 + $0x148] sm:$0xff] %vm230, %v8928
  %8993 = vst.msk [vmem:[%s15 + $0x150] sm:$0xff] %vm230, %v8929
  %8994 = vst.msk [vmem:[%s15 + $0x158] sm:$0xff] %vm230, %v8930
  %8995 = vst.msk [vmem:[%s15 + $0x160] sm:$0xff] %vm230, %v8931
  %8996 = vst.msk [vmem:[%s15 + $0x168] sm:$0xff] %vm230, %v8932
  %8997 = vst.msk [vmem:[%s15 + $0x170] sm:$0xff] %vm230, %v8933
  %8998 = vst.msk [vmem:[%s15 + $0x178] sm:$0xff] %vm230, %v8934
  %8999 = vst.msk [vmem:[%s15 + $0x180] sm:$0xff] %vm230, %v8935
  %9000 = vst.msk [vmem:[%s15 + $0x188] sm:$0xff] %vm230, %v8936
  %9001 = vst.msk [vmem:[%s15 + $0x190] sm:$0xff] %vm230, %v8937
  %9002 = vst.msk [vmem:[%s15 + $0x198] sm:$0xff] %vm230, %v8938
  %9003 = vst.msk [vmem:[%s15 + $0x1a0] sm:$0xff] %vm230, %v8939
  %9004 = vst.msk [vmem:[%s15 + $0x1a8] sm:$0xff] %vm230, %v8940
  %9005 = vst.msk [vmem:[%s15 + $0x1b0] sm:$0xff] %vm230, %v8941
  %9006 = vst.msk [vmem:[%s15 + $0x1b8] sm:$0xff] %vm230, %v8942
  %9007 = vst.msk [vmem:[%s15 + $0x1c0] sm:$0xff] %vm230, %v8943
  %9008 = vst.msk [vmem:[%s15 + $0x1c8] sm:$0xff] %vm230, %v8944
  %9009 = vst.msk [vmem:[%s15 + $0x1d0] sm:$0xff] %vm230, %v8945
  %9010 = vst.msk [vmem:[%s15 + $0x1d8] sm:$0xff] %vm230, %v8946
  %9011 = vst.msk [vmem:[%s15 + $0x1e0] sm:$0xff] %vm230, %v8947
  %9012 = vst.msk [vmem:[%s15 + $0x1e8] sm:$0xff] %vm230, %v8948
  %9013 = vst.msk [vmem:[%s15 + $0x1f0] sm:$0xff] %vm230, %v8949
  %9014 = vst.msk [vmem:[%s15 + $0x1f8] sm:$0xff] %vm230, %v8950
  // Predicated region
  $region62: #{tpu_custom_call.1} parent=0 // pred_check
    _
  $region63: #{tpu_custom_call.1} parent=0 // pred_check_branch
    %9016 = sbr.rel (0) target = $region65
  $region64: #{tpu_custom_call.1} parent=0 // pred_region
    _
  $region65: #{tpu_custom_call.1} parent=0 // pred_fallthru
    _
  // Predicated region
  $region66: #{tpu_custom_call.1} parent=0 // pred_check
    _
  $region67: #{tpu_custom_call.1} parent=0 // pred_check_branch
    %9018 = sbr.rel (0) target = $region69
  $region68: #{tpu_custom_call.1} parent=0 // pred_region
    _
  $region69: #{tpu_custom_call.1} parent=0 // pred_fallthru
    _
  // Predicated region
  $region70: #{tpu_custom_call.1} parent=0 // pred_check
    _
  $region71: #{tpu_custom_call.1} parent=0 // pred_check_branch
    %9020 = sbr.rel (0) target = $region73
  $region72: #{tpu_custom_call.1} parent=0 // pred_region
    _
  $region73: #{tpu_custom_call.1} parent=0 // pred_fallthru
    _
  // Predicated region
  $region74: #{tpu_custom_call.1} parent=0 // pred_check
    _
  $region75: #{tpu_custom_call.1} parent=0 // pred_check_branch
    %9022 = sbr.rel (0) target = $region77
  $region76: #{tpu_custom_call.1} parent=0 // pred_region
    _
  $region77: #{tpu_custom_call.1} parent=0 // pred_fallthru
    _
  // Predicated region
  $region78: #{tpu_custom_call.1} parent=0 // pred_check
    _
  $region79: #{tpu_custom_call.1} parent=0 // pred_check_branch
    %9024 = sbr.rel (0) target = $region81
  $region80: #{tpu_custom_call.1} parent=0 // pred_region
    _
  $region81: #{tpu_custom_call.1} parent=0 // pred_fallthru
    _
  // Predicated region
  $region82: #{tpu_custom_call.1} parent=0 // pred_check
    _
  $region83: #{tpu_custom_call.1} parent=0 // pred_check_branch
    %9026 = sbr.rel (0) target = $region85
  $region84: #{tpu_custom_call.1} parent=0 // pred_region
    _
  $region85: #{tpu_custom_call.1} parent=0 // pred_fallthru
    _

</llo_original>
